<compile_context>
chip_gen: v5e
topology: v5e:2x2
jax: 0.10.0
libtpu: 0.0.40
codegen_flags: <defaults>
</compile_context>

<pallas_src>
import jax
import jax.numpy as jnp
from jax.experimental import pallas as pl
from jax.experimental.pallas import tpu as pltpu

D_MODEL = 32          # d_model (small test size; real ESM-3 uses a multiple of 128)
N_BINS = 16           # rbf bins
N_FUNC = 8            # function tracks
FUNC_VOCAB = 260
SEQ_VOCAB = 64
STRUCT_VOCAB = 4096 + 5
SS8_VOCAB = 8 + 3
SASA_VOCAB = 16 + 3
RES_VOCAB = 1478

# Column layout of the fused small-K feature matrix / table (128 wide):
#   [ seq one-hot | ss8 one-hot | sasa one-hot | rbf(avg_plddt) | rbf(per_res) | 1 | 0 ]
SS8_OFF = SEQ_VOCAB                      # 64
SASA_OFF = SS8_OFF + SS8_VOCAB           # 75
PLDDT_OFF = SASA_OFF + SASA_VOCAB        # 94
SP_OFF = PLDDT_OFF + N_BINS              # 110
ONES_COL = SP_OFF + N_BINS               # 126  (bias row = plddt_b + sp_b)
SMALL_K = 128                            # 127 used + 1 zero row


def _encode_inputs_kernel(packed_ref, func_tok_ref, res_tok_ref,
                          small_tab_ref, struct_tab_ref, res_tab_ref,
                          func_tab_ref, out_ref):
  TL = out_ref.shape[1]            # L tile
  D_OUT = out_ref.shape[2]         # lane-padded d_model (multiple of 128)
  DH = func_tab_ref.shape[2]       # d_model // 8
  D = DH * N_FUNC                  # true d_model

  packed = packed_ref[0]                                   # (TL, 8) f32
  seq_col = packed[:, 0:1].astype(jnp.int32)
  struct_col = packed[:, 1:2].astype(jnp.int32)
  ss8_col = packed[:, 2:3].astype(jnp.int32)
  sasa_col = packed[:, 3:4].astype(jnp.int32)
  avg_plddt = packed[:, 4:5]
  per_res_plddt = packed[:, 5:6]

  # ---- fused small-K pass: seq/ss8/sasa one-hots + two RBF blocks + biases ----
  iota_k = jax.lax.broadcasted_iota(jnp.int32, (TL, SMALL_K), 1)
  onehots = ((seq_col == iota_k)
             | ((ss8_col + SS8_OFF) == iota_k)
             | ((sasa_col + SASA_OFF) == iota_k)
             | (iota_k == ONES_COL))                       # bias column = 1

  inv_spacing = 1.0 / (N_BINS - 1)
  c1 = (iota_k - PLDDT_OFF).astype(jnp.float32) * inv_spacing
  z1 = (avg_plddt - c1) * float(N_BINS)                    # rbf_std = 1/16
  r1 = jnp.where((iota_k >= PLDDT_OFF) & (iota_k < SP_OFF),
                 jnp.exp(-z1 * z1), 0.0)
  c2 = (iota_k - SP_OFF).astype(jnp.float32) * inv_spacing
  z2 = (per_res_plddt - c2) * float(N_BINS)
  r2 = jnp.where((iota_k >= SP_OFF) & (iota_k < ONES_COL),
                 jnp.exp(-z2 * z2), 0.0)

  feats = (onehots.astype(jnp.float32) + r1 + r2).astype(jnp.bfloat16)
  acc = jnp.dot(feats, small_tab_ref[...], preferred_element_type=jnp.float32)

  # ---- structure token embedding ----------------------------------------------
  VS = struct_tab_ref.shape[0]
  iota_vs = jax.lax.broadcasted_iota(jnp.int32, (TL, VS), 1)
  struct_oh = (struct_col == iota_vs).astype(jnp.bfloat16)
  acc += jnp.dot(struct_oh, struct_tab_ref[...],
                 preferred_element_type=jnp.float32)

  # ---- residue EmbeddingBag(mode='sum', padding_idx=0) -------------------------
  # Padding tokens were remapped to -1 in the wrapper, so a plain compare
  # implements padding_idx.  Counts are small ints -> exact in bf16.
  VR = res_tab_ref.shape[0]
  iota_vr = jax.lax.broadcasted_iota(jnp.int32, (TL, VR), 1)
  res = res_tok_ref[0]                                     # (TL, N) int32
  counts = (res[:, 0:1] == iota_vr).astype(jnp.float32)
  for n in range(1, res.shape[1]):
    counts += (res[:, n:n + 1] == iota_vr).astype(jnp.float32)
  acc += jnp.dot(counts.astype(jnp.bfloat16), res_tab_ref[...],
                 preferred_element_type=jnp.float32)

  # ---- function tracks: 8 per-head lookups, concatenated once ------------------
  # NOTE: assumes every function token < 260 (PyTorch would raise otherwise);
  # padding_idx=0 is handled by the zero row 0 of each head's table.
  VF = func_tab_ref.shape[1]
  iota_vf = jax.lax.broadcasted_iota(jnp.int32, (TL, VF), 1)
  func = func_tok_ref[0]                                   # (TL, 8) int32
  pieces = []
  for h in range(N_FUNC):
    oh = (func[:, h:h + 1] == iota_vf).astype(jnp.bfloat16)
    pieces.append(jnp.dot(oh, func_tab_ref[h],
                          preferred_element_type=jnp.float32))
  if D_OUT > D:  # only in the lane-padded (tiny d_model) test config
    pieces.append(jnp.zeros((TL, D_OUT - D), jnp.float32))
  out_ref[0] = acc + jnp.concatenate(pieces, axis=-1)


def encode_inputs(tokens, params, tile_l=256):
  """tokens: dict of input arrays, params: dict of f32 parameter arrays.

  tile_l: 256 matches the v6e/v7x MXU row width; 128 is preferable on v5e.
  """
  seq = tokens["sequence_tokens"]
  B, L = seq.shape
  D = params["seq_table"].shape[1]
  N = tokens["residue_annotation_tokens"].shape[-1]
  assert D % N_FUNC == 0

  TILE_L = min(tile_l, L)
  num_l = pl.cdiv(L, TILE_L)
  D_OUT = pl.cdiv(D, 128) * 128            # lane-dense output / table width

  f32 = jnp.float32
  # Pack the six narrow per-position streams into one (B, L, 8) f32 input.
  # Token ids (< 2^24) round-trip exactly through f32.
  packed = jnp.stack(
      [seq.astype(f32),
       tokens["structure_tokens"].astype(f32),
       tokens["ss8_tokens"].astype(f32),
       tokens["sasa_tokens"].astype(f32),
       tokens["average_plddt"].astype(f32),
       tokens["per_res_plddt"].astype(f32),
       jnp.zeros((B, L), f32),
       jnp.zeros((B, L), f32)], axis=-1)                   # (B, L, 8)

  # Fold EmbeddingBag padding_idx=0 into the compare by remapping padding -> -1.
  res_tok = tokens["residue_annotation_tokens"]
  res_tok = jnp.where(res_tok == 0, -1, res_tok)

  # --- parameter prep (bf16, lane-dense D).  In a real model this is hoisted
  # --- to parameter-load time; here it runs once per call.
  def pad_d(t):
    pad = D_OUT - t.shape[-1]
    if pad > 0:
      t = jnp.pad(t, [(0, 0)] * (t.ndim - 1) + [(0, pad)])
    return t

  small_tab = jnp.concatenate(
      [params["seq_table"],                 # rows [0, 64)
       params["ss8_table"],                 # rows [64, 75)
       params["sasa_table"],                # rows [75, 94)
       params["plddt_w"],                   # rows [94, 110)
       params["sp_w"],                      # rows [110, 126)
       params["plddt_b"] + params["sp_b"],  # row 126 (bias)
       jnp.zeros((1, D), f32)], axis=0)     # row 127 (unused)
  assert small_tab.shape[0] == SMALL_K
  small_tab = pad_d(small_tab).astype(jnp.bfloat16)        # (128, D_OUT)
  struct_tab = pad_d(params["struct_table"]).astype(jnp.bfloat16)
  res_tab = pad_d(params["res_table"]).astype(jnp.bfloat16)
  func_tab = params["func_tables"].astype(jnp.bfloat16)    # (8, 260, D//8)

  tok_spec = lambda w: pl.BlockSpec((1, TILE_L, w), lambda b, l: (b, l, 0))

  try:
    vmem_cap = int(pltpu.get_tpu_info().vmem_capacity_bytes)
  except Exception:
    vmem_cap = 64 * 1024 * 1024
  # ~40 MB on v7x (64 MiB physical per TC), ~80-96 MB on v5e/v6e.
  vmem_limit = min(vmem_cap * 5 // 8, 96 * 1024 * 1024)

  def _build(single_buffer_params):
    extra = {"pipeline_mode": pl.Buffered(1)} if single_buffer_params else {}

    def pspec(a):
      zeros = (0,) * a.ndim
      return pl.BlockSpec(a.shape, lambda b, l: zeros, **extra)

    return pl.pallas_call(
        _encode_inputs_kernel,
        out_shape=jax.ShapeDtypeStruct((B, L, D_OUT), jnp.float32),
        grid=(B, num_l),
        in_specs=[tok_spec(8), tok_spec(N_FUNC), tok_spec(N),
                  pspec(small_tab), pspec(struct_tab), pspec(res_tab),
                  pspec(func_tab)],
        out_specs=pl.BlockSpec((1, TILE_L, D_OUT), lambda b, l: (b, l, 0)),
        compiler_params=pltpu.CompilerParams(
            dimension_semantics=("parallel", "parallel"),
            vmem_limit_bytes=vmem_limit),
    )

  args = (packed, tokens["function_tokens"], res_tok,
          small_tab, struct_tab, res_tab, func_tab)
  try:
    out = _build(True)(*args)        # single-buffered grid-invariant tables
  except Exception:
    out = _build(False)(*args)       # fallback: default double-buffering
  return out[..., :D] if D_OUT != D else out


# ----------------------------- pure-JAX reference -----------------------------
def _rbf_ref(x):
  centers = jnp.linspace(0.0, 1.0, N_BINS)
  z = (x[..., None] - centers) * float(N_BINS)
  return jnp.exp(-z * z)


def encode_inputs_ref(tokens, params):
  seq_e = params["seq_table"][tokens["sequence_tokens"]]
  plddt_e = _rbf_ref(tokens["average_plddt"]) @ params["plddt_w"] + params["plddt_b"][0]
  sp_e = _rbf_ref(tokens["per_res_plddt"]) @ params["sp_w"] + params["sp_b"][0]
  struct_e = params["struct_table"][tokens["structure_tokens"]]
  ss8_e = params["ss8_table"][tokens["ss8_tokens"]]
  sasa_e = params["sasa_table"][tokens["sasa_tokens"]]
  func_e = jnp.concatenate(
      [params["func_tables"][h][tokens["function_tokens"][..., h]]
       for h in range(N_FUNC)], axis=-1)
  res_tok = tokens["residue_annotation_tokens"]
  mask = (res_tok != 0).astype(jnp.float32)[..., None]
  res_e = (params["res_table"][res_tok] * mask).sum(axis=2)
  return seq_e + plddt_e + sp_e + struct_e + ss8_e + sasa_e + func_e + res_e


# --------------------------------- setup --------------------------------------
def make_params(key, d_model=D_MODEL):
  ks = jax.random.split(key, 10)
  init = lambda k, s: jax.random.normal(k, s, jnp.float32) * 0.02
  dh = d_model // N_FUNC
  # padding_idx=0 per function head (row 0 is zero, as in nn.Embedding).
  func_tables = init(ks[4], (N_FUNC, FUNC_VOCAB, dh)).at[:, 0, :].set(0.0)
  return {
      "seq_table": init(ks[0], (SEQ_VOCAB, d_model)),
      "struct_table": init(ks[1], (STRUCT_VOCAB, d_model)),
      "ss8_table": init(ks[2], (SS8_VOCAB, d_model)),
      "sasa_table": init(ks[3], (SASA_VOCAB, d_model)),
      "func_tables": func_tables,
      # EmbeddingBag padding_idx=0 is handled by the wrapper token remap, so
      # row 0 is left random here to exercise that path.
      "res_table": init(ks[5], (RES_VOCAB, d_model)),
      "plddt_w": init(ks[6], (N_BINS, d_model)),
      "plddt_b": init(ks[7], (1, d_model)),
      "sp_w": init(ks[8], (N_BINS, d_model)),
      "sp_b": init(ks[9], (1, d_model)),
  }


def make_inputs(key, B=2, L=8, N=4):
  ks = jax.random.split(key, 8)
  ri = lambda k, s, hi: jax.random.randint(k, s, 0, hi, dtype=jnp.int32)
  return {
      "sequence_tokens": ri(ks[0], (B, L), SEQ_VOCAB),
      "structure_tokens": ri(ks[1], (B, L), STRUCT_VOCAB),
      "ss8_tokens": ri(ks[2], (B, L), SS8_VOCAB),
      "sasa_tokens": ri(ks[3], (B, L), SASA_VOCAB),
      "function_tokens": ri(ks[4], (B, L, N_FUNC), FUNC_VOCAB),
      "residue_annotation_tokens": ri(ks[5], (B, L, N), RES_VOCAB),
      "average_plddt": jax.random.uniform(ks[6], (B, L), jnp.float32),
      "per_res_plddt": jax.random.uniform(ks[7], (B, L), jnp.float32),
  }


if __name__ == "__main__":
  params = make_params(jax.random.PRNGKey(0))
  tokens = make_inputs(jax.random.PRNGKey(0))

  out = encode_inputs(tokens, params)
  out = jax.block_until_ready(out)

  ref = encode_inputs_ref(tokens, params)
  assert out.shape == ref.shape == (2, 8, D_MODEL), out.shape
  max_err = float(jnp.max(jnp.abs(out - ref)))
  # Tables are bf16 in the kernel (f32 in the reference); error budget ~5e-4.
  assert max_err < 3e-3, max_err
  print("KERNEL_OK")
</pallas_src>

<mosaic_0001>
module attributes {stable_mosaic.version = 11 : i64} {
  func.func @_encode_inputs_kernel(%arg0: i32, %arg1: i32, %arg2: memref<1x8x8xf32, #tpu.memory_space<vmem>>, %arg3: memref<1x8x8xi32, #tpu.memory_space<vmem>>, %arg4: memref<1x8x4xi32, #tpu.memory_space<vmem>>, %arg5: memref<128x128xbf16, #tpu.memory_space<vmem>>, %arg6: memref<4101x128xbf16, #tpu.memory_space<vmem>>, %arg7: memref<1478x128xbf16, #tpu.memory_space<vmem>>, %arg8: memref<8x260x4xbf16, #tpu.memory_space<vmem>>, %arg9: memref<1x8x128xf32, #tpu.memory_space<vmem>>) attributes {dimension_semantics = [#tpu.dimension_semantics<parallel>, #tpu.dimension_semantics<parallel>], iteration_bounds = array<i64: 2, 1>, scalar_prefetch = 0 : i64, scratch_operands = 0 : i64, tpu.core_type = #tpu.core_type<tc>, window_params = [{transform_indices = @transform_0, window_bounds = array<i64: 1, 8, 8>}, {transform_indices = @transform_1, window_bounds = array<i64: 1, 8, 8>}, {transform_indices = @transform_2, window_bounds = array<i64: 1, 8, 4>}, {pipeline_mode = #tpu.pipeline_mode<synchronous>, transform_indices = @transform_3, window_bounds = array<i64: 128, 128>}, {pipeline_mode = #tpu.pipeline_mode<synchronous>, transform_indices = @transform_4, window_bounds = array<i64: 4101, 128>}, {pipeline_mode = #tpu.pipeline_mode<synchronous>, transform_indices = @transform_5, window_bounds = array<i64: 1478, 128>}, {pipeline_mode = #tpu.pipeline_mode<synchronous>, transform_indices = @transform_6, window_bounds = array<i64: 8, 260, 4>}, {transform_indices = @transform_7, window_bounds = array<i64: 1, 8, 128>}]} {
    %c0 = arith.constant 0 : index
    %c0_0 = arith.constant 0 : index
    %c0_1 = arith.constant 0 : index
    %0 = vector.load %arg2[%c0, %c0_0, %c0_1] : memref<1x8x8xf32, #tpu.memory_space<vmem>>, vector<1x8x8xf32>
    %1 = vector.shape_cast %0 : vector<1x8x8xf32> to vector<8x8xf32>
    %2 = vector.extract_strided_slice %1 {offsets = [0, 0], sizes = [8, 1], strides = [1, 1]} : vector<8x8xf32> to vector<8x1xf32>
    %3 = arith.fptosi %2 : vector<8x1xf32> to vector<8x1xi32>
    %4 = vector.extract_strided_slice %1 {offsets = [0, 1], sizes = [8, 1], strides = [1, 1]} : vector<8x8xf32> to vector<8x1xf32>
    %5 = arith.fptosi %4 : vector<8x1xf32> to vector<8x1xi32>
    %6 = vector.extract_strided_slice %1 {offsets = [0, 2], sizes = [8, 1], strides = [1, 1]} : vector<8x8xf32> to vector<8x1xf32>
    %7 = arith.fptosi %6 : vector<8x1xf32> to vector<8x1xi32>
    %8 = vector.extract_strided_slice %1 {offsets = [0, 3], sizes = [8, 1], strides = [1, 1]} : vector<8x8xf32> to vector<8x1xf32>
    %9 = arith.fptosi %8 : vector<8x1xf32> to vector<8x1xi32>
    %10 = vector.extract_strided_slice %1 {offsets = [0, 4], sizes = [8, 1], strides = [1, 1]} : vector<8x8xf32> to vector<8x1xf32>
    %11 = vector.extract_strided_slice %1 {offsets = [0, 5], sizes = [8, 1], strides = [1, 1]} : vector<8x8xf32> to vector<8x1xf32>
    %12 = tpu.iota {dimensions = array<i32: 1>} : vector<8x128xi32>
    %13 = vector.broadcast %3 : vector<8x1xi32> to vector<8x128xi32>
    %14 = arith.cmpi eq, %13, %12 : vector<8x128xi32>
    %c64_i32 = arith.constant 64 : i32
    %15 = vector.broadcast %c64_i32 : i32 to vector<8x1xi32>
    %16 = arith.addi %7, %15 : vector<8x1xi32>
    %17 = vector.broadcast %16 : vector<8x1xi32> to vector<8x128xi32>
    %18 = arith.cmpi eq, %17, %12 : vector<8x128xi32>
    %19 = arith.ori %14, %18 : vector<8x128xi1>
    %c75_i32 = arith.constant 75 : i32
    %20 = vector.broadcast %c75_i32 : i32 to vector<8x1xi32>
    %21 = arith.addi %9, %20 : vector<8x1xi32>
    %22 = vector.broadcast %21 : vector<8x1xi32> to vector<8x128xi32>
    %23 = arith.cmpi eq, %22, %12 : vector<8x128xi32>
    %24 = arith.ori %19, %23 : vector<8x128xi1>
    %c126_i32 = arith.constant 126 : i32
    %25 = vector.broadcast %c126_i32 : i32 to vector<8x128xi32>
    %26 = arith.cmpi eq, %12, %25 : vector<8x128xi32>
    %27 = arith.ori %24, %26 : vector<8x128xi1>
    %c94_i32 = arith.constant 94 : i32
    %28 = vector.broadcast %c94_i32 : i32 to vector<8x128xi32>
    %29 = arith.subi %12, %28 : vector<8x128xi32>
    %30 = arith.sitofp %29 : vector<8x128xi32> to vector<8x128xf32>
    %cst = arith.constant 0.0666666701 : f32
    %31 = vector.broadcast %cst : f32 to vector<8x128xf32>
    %32 = arith.mulf %30, %31 : vector<8x128xf32>
    %33 = vector.broadcast %10 : vector<8x1xf32> to vector<8x128xf32>
    %34 = arith.subf %33, %32 : vector<8x128xf32>
    %cst_2 = arith.constant 1.600000e+01 : f32
    %35 = vector.broadcast %cst_2 : f32 to vector<8x128xf32>
    %36 = arith.mulf %34, %35 : vector<8x128xf32>
    %c94_i32_3 = arith.constant 94 : i32
    %37 = vector.broadcast %c94_i32_3 : i32 to vector<8x128xi32>
    %38 = arith.cmpi sge, %12, %37 : vector<8x128xi32>
    %c110_i32 = arith.constant 110 : i32
    %39 = vector.broadcast %c110_i32 : i32 to vector<8x128xi32>
    %40 = arith.cmpi slt, %12, %39 : vector<8x128xi32>
    %41 = arith.andi %38, %40 : vector<8x128xi1>
    %cst_4 = arith.constant 0.000000e+00 : f32
    %42 = vector.broadcast %cst_4 : f32 to vector<8x128xf32>
    %43 = arith.subf %42, %36 : vector<8x128xf32>
    %44 = arith.mulf %43, %36 : vector<8x128xf32>
    %45 = math.exp %44 : vector<8x128xf32>
    %cst_5 = arith.constant 0.000000e+00 : f32
    %46 = vector.broadcast %cst_5 : f32 to vector<8x128xf32>
    %47 = arith.select %41, %45, %46 : vector<8x128xi1>, vector<8x128xf32>
    %c110_i32_6 = arith.constant 110 : i32
    %48 = vector.broadcast %c110_i32_6 : i32 to vector<8x128xi32>
    %49 = arith.subi %12, %48 : vector<8x128xi32>
    %50 = arith.sitofp %49 : vector<8x128xi32> to vector<8x128xf32>
    %cst_7 = arith.constant 0.0666666701 : f32
    %51 = vector.broadcast %cst_7 : f32 to vector<8x128xf32>
    %52 = arith.mulf %50, %51 : vector<8x128xf32>
    %53 = vector.broadcast %11 : vector<8x1xf32> to vector<8x128xf32>
    %54 = arith.subf %53, %52 : vector<8x128xf32>
    %cst_8 = arith.constant 1.600000e+01 : f32
    %55 = vector.broadcast %cst_8 : f32 to vector<8x128xf32>
    %56 = arith.mulf %54, %55 : vector<8x128xf32>
    %c110_i32_9 = arith.constant 110 : i32
    %57 = vector.broadcast %c110_i32_9 : i32 to vector<8x128xi32>
    %58 = arith.cmpi sge, %12, %57 : vector<8x128xi32>
    %c126_i32_10 = arith.constant 126 : i32
    %59 = vector.broadcast %c126_i32_10 : i32 to vector<8x128xi32>
    %60 = arith.cmpi slt, %12, %59 : vector<8x128xi32>
    %61 = arith.andi %58, %60 : vector<8x128xi1>
    %cst_11 = arith.constant 0.000000e+00 : f32
    %62 = vector.broadcast %cst_11 : f32 to vector<8x128xf32>
    %63 = arith.subf %62, %56 : vector<8x128xf32>
    %64 = arith.mulf %63, %56 : vector<8x128xf32>
    %65 = math.exp %64 : vector<8x128xf32>
    %cst_12 = arith.constant 0.000000e+00 : f32
    %66 = vector.broadcast %cst_12 : f32 to vector<8x128xf32>
    %67 = arith.select %61, %65, %66 : vector<8x128xi1>, vector<8x128xf32>
    %68 = arith.extui %27 : vector<8x128xi1> to vector<8x128xi32>
    %69 = arith.sitofp %68 : vector<8x128xi32> to vector<8x128xf32>
    %70 = arith.addf %69, %47 : vector<8x128xf32>
    %71 = arith.addf %70, %67 : vector<8x128xf32>
    %72 = arith.truncf %71 : vector<8x128xf32> to vector<8x128xbf16>
    %c0_13 = arith.constant 0 : index
    %c0_14 = arith.constant 0 : index
    %73 = vector.load %arg5[%c0_13, %c0_14] : memref<128x128xbf16, #tpu.memory_space<vmem>>, vector<128x128xbf16>
    %cst_15 = arith.constant dense<0.000000e+00> : vector<8x128xf32>
    %74 = tpu.matmul %72, %73, %cst_15 {dimension_numbers = #tpu.dot_dimension_numbers<[1], [0], [0], [1], [0, 0, 1, 1], [], []>} : vector<8x128xbf16>, vector<128x128xbf16>, vector<8x128xf32> -> vector<8x128xf32>
    %75 = tpu.iota {dimensions = array<i32: 1>} : vector<8x4101xi32>
    %76 = vector.broadcast %5 : vector<8x1xi32> to vector<8x4101xi32>
    %77 = arith.cmpi eq, %76, %75 : vector<8x4101xi32>
    %78 = arith.extui %77 : vector<8x4101xi1> to vector<8x4101xi32>
    %79 = arith.sitofp %78 : vector<8x4101xi32> to vector<8x4101xf32>
    %80 = arith.truncf %79 : vector<8x4101xf32> to vector<8x4101xbf16>
    %c0_16 = arith.constant 0 : index
    %c0_17 = arith.constant 0 : index
    %81 = vector.load %arg6[%c0_16, %c0_17] : memref<4101x128xbf16, #tpu.memory_space<vmem>>, vector<4101x128xbf16>
    %cst_18 = arith.constant dense<0.000000e+00> : vector<8x128xf32>
    %82 = tpu.matmul %80, %81, %cst_18 {dimension_numbers = #tpu.dot_dimension_numbers<[1], [0], [0], [1], [0, 0, 1, 1], [], []>} : vector<8x4101xbf16>, vector<4101x128xbf16>, vector<8x128xf32> -> vector<8x128xf32>
    %83 = arith.addf %74, %82 : vector<8x128xf32>
    %84 = tpu.iota {dimensions = array<i32: 1>} : vector<8x1478xi32>
    %c0_19 = arith.constant 0 : index
    %c0_20 = arith.constant 0 : index
    %c0_21 = arith.constant 0 : index
    %85 = vector.load %arg4[%c0_19, %c0_20, %c0_21] : memref<1x8x4xi32, #tpu.memory_space<vmem>>, vector<1x8x4xi32>
    %86 = vector.shape_cast %85 : vector<1x8x4xi32> to vector<8x4xi32>
    %87 = vector.extract_strided_slice %86 {offsets = [0, 0], sizes = [8, 1], strides = [1, 1]} : vector<8x4xi32> to vector<8x1xi32>
    %88 = vector.broadcast %87 : vector<8x1xi32> to vector<8x1478xi32>
    %89 = arith.cmpi eq, %88, %84 : vector<8x1478xi32>
    %90 = arith.extui %89 : vector<8x1478xi1> to vector<8x1478xi32>
    %91 = arith.sitofp %90 : vector<8x1478xi32> to vector<8x1478xf32>
    %92 = vector.extract_strided_slice %86 {offsets = [0, 1], sizes = [8, 1], strides = [1, 1]} : vector<8x4xi32> to vector<8x1xi32>
    %93 = vector.broadcast %92 : vector<8x1xi32> to vector<8x1478xi32>
    %94 = arith.cmpi eq, %93, %84 : vector<8x1478xi32>
    %95 = arith.extui %94 : vector<8x1478xi1> to vector<8x1478xi32>
    %96 = arith.sitofp %95 : vector<8x1478xi32> to vector<8x1478xf32>
    %97 = arith.addf %91, %96 : vector<8x1478xf32>
    %98 = vector.extract_strided_slice %86 {offsets = [0, 2], sizes = [8, 1], strides = [1, 1]} : vector<8x4xi32> to vector<8x1xi32>
    %99 = vector.broadcast %98 : vector<8x1xi32> to vector<8x1478xi32>
    %100 = arith.cmpi eq, %99, %84 : vector<8x1478xi32>
    %101 = arith.extui %100 : vector<8x1478xi1> to vector<8x1478xi32>
    %102 = arith.sitofp %101 : vector<8x1478xi32> to vector<8x1478xf32>
    %103 = arith.addf %97, %102 : vector<8x1478xf32>
    %104 = vector.extract_strided_slice %86 {offsets = [0, 3], sizes = [8, 1], strides = [1, 1]} : vector<8x4xi32> to vector<8x1xi32>
    %105 = vector.broadcast %104 : vector<8x1xi32> to vector<8x1478xi32>
    %106 = arith.cmpi eq, %105, %84 : vector<8x1478xi32>
    %107 = arith.extui %106 : vector<8x1478xi1> to vector<8x1478xi32>
    %108 = arith.sitofp %107 : vector<8x1478xi32> to vector<8x1478xf32>
    %109 = arith.addf %103, %108 : vector<8x1478xf32>
    %110 = arith.truncf %109 : vector<8x1478xf32> to vector<8x1478xbf16>
    %c0_22 = arith.constant 0 : index
    %c0_23 = arith.constant 0 : index
    %111 = vector.load %arg7[%c0_22, %c0_23] : memref<1478x128xbf16, #tpu.memory_space<vmem>>, vector<1478x128xbf16>
    %cst_24 = arith.constant dense<0.000000e+00> : vector<8x128xf32>
    %112 = tpu.matmul %110, %111, %cst_24 {dimension_numbers = #tpu.dot_dimension_numbers<[1], [0], [0], [1], [0, 0, 1, 1], [], []>} : vector<8x1478xbf16>, vector<1478x128xbf16>, vector<8x128xf32> -> vector<8x128xf32>
    %113 = arith.addf %83, %112 : vector<8x128xf32>
    %114 = tpu.iota {dimensions = array<i32: 1>} : vector<8x260xi32>
    %c0_25 = arith.constant 0 : index
    %c0_26 = arith.constant 0 : index
    %c0_27 = arith.constant 0 : index
    %115 = vector.load %arg3[%c0_25, %c0_26, %c0_27] : memref<1x8x8xi32, #tpu.memory_space<vmem>>, vector<1x8x8xi32>
    %116 = vector.shape_cast %115 : vector<1x8x8xi32> to vector<8x8xi32>
    %117 = vector.extract_strided_slice %116 {offsets = [0, 0], sizes = [8, 1], strides = [1, 1]} : vector<8x8xi32> to vector<8x1xi32>
    %118 = vector.broadcast %117 : vector<8x1xi32> to vector<8x260xi32>
    %119 = arith.cmpi eq, %118, %114 : vector<8x260xi32>
    %120 = arith.extui %119 : vector<8x260xi1> to vector<8x260xi32>
    %121 = arith.sitofp %120 : vector<8x260xi32> to vector<8x260xf32>
    %122 = arith.truncf %121 : vector<8x260xf32> to vector<8x260xbf16>
    %c0_28 = arith.constant 0 : index
    %c0_29 = arith.constant 0 : index
    %c0_30 = arith.constant 0 : index
    %123 = vector.load %arg8[%c0_28, %c0_29, %c0_30] : memref<8x260x4xbf16, #tpu.memory_space<vmem>>, vector<1x260x4xbf16>
    %124 = vector.shape_cast %123 : vector<1x260x4xbf16> to vector<260x4xbf16>
    %cst_31 = arith.constant dense<0.000000e+00> : vector<8x4xf32>
    %125 = tpu.matmul %122, %124, %cst_31 {dimension_numbers = #tpu.dot_dimension_numbers<[1], [0], [0], [1], [0, 0, 1, 1], [], []>} : vector<8x260xbf16>, vector<260x4xbf16>, vector<8x4xf32> -> vector<8x4xf32>
    %126 = vector.extract_strided_slice %116 {offsets = [0, 1], sizes = [8, 1], strides = [1, 1]} : vector<8x8xi32> to vector<8x1xi32>
    %127 = vector.broadcast %126 : vector<8x1xi32> to vector<8x260xi32>
    %128 = arith.cmpi eq, %127, %114 : vector<8x260xi32>
    %129 = arith.extui %128 : vector<8x260xi1> to vector<8x260xi32>
    %130 = arith.sitofp %129 : vector<8x260xi32> to vector<8x260xf32>
    %131 = arith.truncf %130 : vector<8x260xf32> to vector<8x260xbf16>
    %c1 = arith.constant 1 : index
    %c0_32 = arith.constant 0 : index
    %c0_33 = arith.constant 0 : index
    %132 = vector.load %arg8[%c1, %c0_32, %c0_33] : memref<8x260x4xbf16, #tpu.memory_space<vmem>>, vector<1x260x4xbf16>
    %133 = vector.shape_cast %132 : vector<1x260x4xbf16> to vector<260x4xbf16>
    %cst_34 = arith.constant dense<0.000000e+00> : vector<8x4xf32>
    %134 = tpu.matmul %131, %133, %cst_34 {dimension_numbers = #tpu.dot_dimension_numbers<[1], [0], [0], [1], [0, 0, 1, 1], [], []>} : vector<8x260xbf16>, vector<260x4xbf16>, vector<8x4xf32> -> vector<8x4xf32>
    %135 = vector.extract_strided_slice %116 {offsets = [0, 2], sizes = [8, 1], strides = [1, 1]} : vector<8x8xi32> to vector<8x1xi32>
    %136 = vector.broadcast %135 : vector<8x1xi32> to vector<8x260xi32>
    %137 = arith.cmpi eq, %136, %114 : vector<8x260xi32>
    %138 = arith.extui %137 : vector<8x260xi1> to vector<8x260xi32>
    %139 = arith.sitofp %138 : vector<8x260xi32> to vector<8x260xf32>
    %140 = arith.truncf %139 : vector<8x260xf32> to vector<8x260xbf16>
    %c2 = arith.constant 2 : index
    %c0_35 = arith.constant 0 : index
    %c0_36 = arith.constant 0 : index
    %141 = vector.load %arg8[%c2, %c0_35, %c0_36] : memref<8x260x4xbf16, #tpu.memory_space<vmem>>, vector<1x260x4xbf16>
    %142 = vector.shape_cast %141 : vector<1x260x4xbf16> to vector<260x4xbf16>
    %cst_37 = arith.constant dense<0.000000e+00> : vector<8x4xf32>
    %143 = tpu.matmul %140, %142, %cst_37 {dimension_numbers = #tpu.dot_dimension_numbers<[1], [0], [0], [1], [0, 0, 1, 1], [], []>} : vector<8x260xbf16>, vector<260x4xbf16>, vector<8x4xf32> -> vector<8x4xf32>
    %144 = vector.extract_strided_slice %116 {offsets = [0, 3], sizes = [8, 1], strides = [1, 1]} : vector<8x8xi32> to vector<8x1xi32>
    %145 = vector.broadcast %144 : vector<8x1xi32> to vector<8x260xi32>
    %146 = arith.cmpi eq, %145, %114 : vector<8x260xi32>
    %147 = arith.extui %146 : vector<8x260xi1> to vector<8x260xi32>
    %148 = arith.sitofp %147 : vector<8x260xi32> to vector<8x260xf32>
    %149 = arith.truncf %148 : vector<8x260xf32> to vector<8x260xbf16>
    %c3 = arith.constant 3 : index
    %c0_38 = arith.constant 0 : index
    %c0_39 = arith.constant 0 : index
    %150 = vector.load %arg8[%c3, %c0_38, %c0_39] : memref<8x260x4xbf16, #tpu.memory_space<vmem>>, vector<1x260x4xbf16>
    %151 = vector.shape_cast %150 : vector<1x260x4xbf16> to vector<260x4xbf16>
    %cst_40 = arith.constant dense<0.000000e+00> : vector<8x4xf32>
    %152 = tpu.matmul %149, %151, %cst_40 {dimension_numbers = #tpu.dot_dimension_numbers<[1], [0], [0], [1], [0, 0, 1, 1], [], []>} : vector<8x260xbf16>, vector<260x4xbf16>, vector<8x4xf32> -> vector<8x4xf32>
    %153 = vector.extract_strided_slice %116 {offsets = [0, 4], sizes = [8, 1], strides = [1, 1]} : vector<8x8xi32> to vector<8x1xi32>
    %154 = vector.broadcast %153 : vector<8x1xi32> to vector<8x260xi32>
    %155 = arith.cmpi eq, %154, %114 : vector<8x260xi32>
    %156 = arith.extui %155 : vector<8x260xi1> to vector<8x260xi32>
    %157 = arith.sitofp %156 : vector<8x260xi32> to vector<8x260xf32>
    %158 = arith.truncf %157 : vector<8x260xf32> to vector<8x260xbf16>
    %c4 = arith.constant 4 : index
    %c0_41 = arith.constant 0 : index
    %c0_42 = arith.constant 0 : index
    %159 = vector.load %arg8[%c4, %c0_41, %c0_42] : memref<8x260x4xbf16, #tpu.memory_space<vmem>>, vector<1x260x4xbf16>
    %160 = vector.shape_cast %159 : vector<1x260x4xbf16> to vector<260x4xbf16>
    %cst_43 = arith.constant dense<0.000000e+00> : vector<8x4xf32>
    %161 = tpu.matmul %158, %160, %cst_43 {dimension_numbers = #tpu.dot_dimension_numbers<[1], [0], [0], [1], [0, 0, 1, 1], [], []>} : vector<8x260xbf16>, vector<260x4xbf16>, vector<8x4xf32> -> vector<8x4xf32>
    %162 = vector.extract_strided_slice %116 {offsets = [0, 5], sizes = [8, 1], strides = [1, 1]} : vector<8x8xi32> to vector<8x1xi32>
    %163 = vector.broadcast %162 : vector<8x1xi32> to vector<8x260xi32>
    %164 = arith.cmpi eq, %163, %114 : vector<8x260xi32>
    %165 = arith.extui %164 : vector<8x260xi1> to vector<8x260xi32>
    %166 = arith.sitofp %165 : vector<8x260xi32> to vector<8x260xf32>
    %167 = arith.truncf %166 : vector<8x260xf32> to vector<8x260xbf16>
    %c5 = arith.constant 5 : index
    %c0_44 = arith.constant 0 : index
    %c0_45 = arith.constant 0 : index
    %168 = vector.load %arg8[%c5, %c0_44, %c0_45] : memref<8x260x4xbf16, #tpu.memory_space<vmem>>, vector<1x260x4xbf16>
    %169 = vector.shape_cast %168 : vector<1x260x4xbf16> to vector<260x4xbf16>
    %cst_46 = arith.constant dense<0.000000e+00> : vector<8x4xf32>
    %170 = tpu.matmul %167, %169, %cst_46 {dimension_numbers = #tpu.dot_dimension_numbers<[1], [0], [0], [1], [0, 0, 1, 1], [], []>} : vector<8x260xbf16>, vector<260x4xbf16>, vector<8x4xf32> -> vector<8x4xf32>
    %171 = vector.extract_strided_slice %116 {offsets = [0, 6], sizes = [8, 1], strides = [1, 1]} : vector<8x8xi32> to vector<8x1xi32>
    %172 = vector.broadcast %171 : vector<8x1xi32> to vector<8x260xi32>
    %173 = arith.cmpi eq, %172, %114 : vector<8x260xi32>
    %174 = arith.extui %173 : vector<8x260xi1> to vector<8x260xi32>
    %175 = arith.sitofp %174 : vector<8x260xi32> to vector<8x260xf32>
    %176 = arith.truncf %175 : vector<8x260xf32> to vector<8x260xbf16>
    %c6 = arith.constant 6 : index
    %c0_47 = arith.constant 0 : index
    %c0_48 = arith.constant 0 : index
    %177 = vector.load %arg8[%c6, %c0_47, %c0_48] : memref<8x260x4xbf16, #tpu.memory_space<vmem>>, vector<1x260x4xbf16>
    %178 = vector.shape_cast %177 : vector<1x260x4xbf16> to vector<260x4xbf16>
    %cst_49 = arith.constant dense<0.000000e+00> : vector<8x4xf32>
    %179 = tpu.matmul %176, %178, %cst_49 {dimension_numbers = #tpu.dot_dimension_numbers<[1], [0], [0], [1], [0, 0, 1, 1], [], []>} : vector<8x260xbf16>, vector<260x4xbf16>, vector<8x4xf32> -> vector<8x4xf32>
    %180 = vector.extract_strided_slice %116 {offsets = [0, 7], sizes = [8, 1], strides = [1, 1]} : vector<8x8xi32> to vector<8x1xi32>
    %181 = vector.broadcast %180 : vector<8x1xi32> to vector<8x260xi32>
    %182 = arith.cmpi eq, %181, %114 : vector<8x260xi32>
    %183 = arith.extui %182 : vector<8x260xi1> to vector<8x260xi32>
    %184 = arith.sitofp %183 : vector<8x260xi32> to vector<8x260xf32>
    %185 = arith.truncf %184 : vector<8x260xf32> to vector<8x260xbf16>
    %c7 = arith.constant 7 : index
    %c0_50 = arith.constant 0 : index
    %c0_51 = arith.constant 0 : index
    %186 = vector.load %arg8[%c7, %c0_50, %c0_51] : memref<8x260x4xbf16, #tpu.memory_space<vmem>>, vector<1x260x4xbf16>
    %187 = vector.shape_cast %186 : vector<1x260x4xbf16> to vector<260x4xbf16>
    %cst_52 = arith.constant dense<0.000000e+00> : vector<8x4xf32>
    %188 = tpu.matmul %185, %187, %cst_52 {dimension_numbers = #tpu.dot_dimension_numbers<[1], [0], [0], [1], [0, 0, 1, 1], [], []>} : vector<8x260xbf16>, vector<260x4xbf16>, vector<8x4xf32> -> vector<8x4xf32>
    %cst_53 = arith.constant 0.000000e+00 : f32
    %189 = vector.broadcast %cst_53 : f32 to vector<8x96xf32>
    %190 = tpu.concatenate %125, %134, %143, %152, %161, %170, %179, %188, %189 in 1 : vector<8x4xf32>, vector<8x4xf32>, vector<8x4xf32>, vector<8x4xf32>, vector<8x4xf32>, vector<8x4xf32>, vector<8x4xf32>, vector<8x4xf32>, vector<8x96xf32> -> vector<8x128xf32>
    %191 = arith.addf %113, %190 : vector<8x128xf32>
    %c0_54 = arith.constant 0 : index
    %c0_55 = arith.constant 0 : index
    %c0_56 = arith.constant 0 : index
    %192 = vector.load %arg9[%c0_54, %c0_55, %c0_56] : memref<1x8x128xf32, #tpu.memory_space<vmem>>, vector<1x8x128xf32>
    %193 = vector.shape_cast %192 : vector<1x8x128xf32> to vector<8x128xf32>
    %194 = vector.shape_cast %191 : vector<8x128xf32> to vector<1x8x128xf32>
    tpu.vector_store %arg9[%c0_54, %c0_55, %c0_56], %194 {strides = array<i32>} : memref<1x8x128xf32, #tpu.memory_space<vmem>>, vector<1x8x128xf32>,
    return
  }
  func.func @transform_0(%arg0: i32, %arg1: i32) -> (i32, i32, i32) {
    %c0_i32 = arith.constant 0 : i32
    %c0_i32_0 = arith.constant 0 : i32
    return %arg0, %arg1, %c0_i32 : i32, i32, i32
  }
  func.func @transform_1(%arg0: i32, %arg1: i32) -> (i32, i32, i32) {
    %c0_i32 = arith.constant 0 : i32
    %c0_i32_0 = arith.constant 0 : i32
    return %arg0, %arg1, %c0_i32 : i32, i32, i32
  }
  func.func @transform_2(%arg0: i32, %arg1: i32) -> (i32, i32, i32) {
    %c0_i32 = arith.constant 0 : i32
    %c0_i32_0 = arith.constant 0 : i32
    return %arg0, %arg1, %c0_i32 : i32, i32, i32
  }
  func.func @transform_3(%arg0: i32, %arg1: i32) -> (i32, i32) {
    %c0_i32 = arith.constant 0 : i32
    %c0_i32_0 = arith.constant 0 : i32
    %c0_i32_1 = arith.constant 0 : i32
    return %c0_i32, %c0_i32_0 : i32, i32
  }
  func.func @transform_4(%arg0: i32, %arg1: i32) -> (i32, i32) {
    %c0_i32 = arith.constant 0 : i32
    %c0_i32_0 = arith.constant 0 : i32
    %c0_i32_1 = arith.constant 0 : i32
    return %c0_i32, %c0_i32_0 : i32, i32
  }
  func.func @transform_5(%arg0: i32, %arg1: i32) -> (i32, i32) {
    %c0_i32 = arith.constant 0 : i32
    %c0_i32_0 = arith.constant 0 : i32
    %c0_i32_1 = arith.constant 0 : i32
    return %c0_i32, %c0_i32_0 : i32, i32
  }
  func.func @transform_6(%arg0: i32, %arg1: i32) -> (i32, i32, i32) {
    %c0_i32 = arith.constant 0 : i32
    %c0_i32_0 = arith.constant 0 : i32
    %c0_i32_1 = arith.constant 0 : i32
    %c0_i32_2 = arith.constant 0 : i32
    return %c0_i32, %c0_i32_0, %c0_i32_1 : i32, i32, i32
  }
  func.func @transform_7(%arg0: i32, %arg1: i32) -> (i32, i32, i32) {
    %c0_i32 = arith.constant 0 : i32
    %c0_i32_0 = arith.constant 0 : i32
    return %arg0, %arg1, %c0_i32 : i32, i32, i32
  }
}

module attributes {stable_mosaic.version = 11 : i64} {
  func.func @_encode_inputs_kernel(%arg0: i32, %arg1: i32, %arg2: memref<1x8x8xf32, #tpu.memory_space<vmem>>, %arg3: memref<1x8x8xi32, #tpu.memory_space<vmem>>, %arg4: memref<1x8x4xi32, #tpu.memory_space<vmem>>, %arg5: memref<128x128xbf16, #tpu.memory_space<vmem>>, %arg6: memref<4101x128xbf16, #tpu.memory_space<vmem>>, %arg7: memref<1478x128xbf16, #tpu.memory_space<vmem>>, %arg8: memref<8x260x4xbf16, #tpu.memory_space<vmem>>, %arg9: memref<1x8x128xf32, #tpu.memory_space<vmem>>) attributes {dimension_semantics = [#tpu.dimension_semantics<parallel>, #tpu.dimension_semantics<parallel>], iteration_bounds = array<i64: 2, 1>, scalar_prefetch = 0 : i64, scratch_operands = 0 : i64, tpu.core_type = #tpu.core_type<tc>, window_params = [{transform_indices = @transform_0, window_bounds = array<i64: 1, 8, 8>}, {transform_indices = @transform_1, window_bounds = array<i64: 1, 8, 8>}, {transform_indices = @transform_2, window_bounds = array<i64: 1, 8, 4>}, {pipeline_mode = #tpu.pipeline_mode<synchronous>, transform_indices = @transform_3, window_bounds = array<i64: 128, 128>}, {pipeline_mode = #tpu.pipeline_mode<synchronous>, transform_indices = @transform_4, window_bounds = array<i64: 4101, 128>}, {pipeline_mode = #tpu.pipeline_mode<synchronous>, transform_indices = @transform_5, window_bounds = array<i64: 1478, 128>}, {pipeline_mode = #tpu.pipeline_mode<synchronous>, transform_indices = @transform_6, window_bounds = array<i64: 8, 260, 4>}, {transform_indices = @transform_7, window_bounds = array<i64: 1, 8, 128>}]} {
    %c0 = arith.constant 0 : index
    %c0_0 = arith.constant 0 : index
    %c0_1 = arith.constant 0 : index
    %0 = vector.load %arg2[%c0, %c0_0, %c0_1] : memref<1x8x8xf32, #tpu.memory_space<vmem>>, vector<1x8x8xf32>
    %1 = vector.shape_cast %0 : vector<1x8x8xf32> to vector<8x8xf32>
    %2 = vector.extract_strided_slice %1 {offsets = [0, 0], sizes = [8, 1], strides = [1, 1]} : vector<8x8xf32> to vector<8x1xf32>
    %3 = arith.fptosi %2 : vector<8x1xf32> to vector<8x1xi32>
    %4 = vector.extract_strided_slice %1 {offsets = [0, 1], sizes = [8, 1], strides = [1, 1]} : vector<8x8xf32> to vector<8x1xf32>
    %5 = arith.fptosi %4 : vector<8x1xf32> to vector<8x1xi32>
    %6 = vector.extract_strided_slice %1 {offsets = [0, 2], sizes = [8, 1], strides = [1, 1]} : vector<8x8xf32> to vector<8x1xf32>
    %7 = arith.fptosi %6 : vector<8x1xf32> to vector<8x1xi32>
    %8 = vector.extract_strided_slice %1 {offsets = [0, 3], sizes = [8, 1], strides = [1, 1]} : vector<8x8xf32> to vector<8x1xf32>
    %9 = arith.fptosi %8 : vector<8x1xf32> to vector<8x1xi32>
    %10 = vector.extract_strided_slice %1 {offsets = [0, 4], sizes = [8, 1], strides = [1, 1]} : vector<8x8xf32> to vector<8x1xf32>
    %11 = vector.extract_strided_slice %1 {offsets = [0, 5], sizes = [8, 1], strides = [1, 1]} : vector<8x8xf32> to vector<8x1xf32>
    %12 = tpu.iota {dimensions = array<i32: 1>} : vector<8x128xi32>
    %13 = vector.broadcast %3 : vector<8x1xi32> to vector<8x128xi32>
    %14 = arith.cmpi eq, %13, %12 : vector<8x128xi32>
    %c64_i32 = arith.constant 64 : i32
    %15 = vector.broadcast %c64_i32 : i32 to vector<8x1xi32>
    %16 = arith.addi %7, %15 : vector<8x1xi32>
    %17 = vector.broadcast %16 : vector<8x1xi32> to vector<8x128xi32>
    %18 = arith.cmpi eq, %17, %12 : vector<8x128xi32>
    %19 = arith.ori %14, %18 : vector<8x128xi1>
    %c75_i32 = arith.constant 75 : i32
    %20 = vector.broadcast %c75_i32 : i32 to vector<8x1xi32>
    %21 = arith.addi %9, %20 : vector<8x1xi32>
    %22 = vector.broadcast %21 : vector<8x1xi32> to vector<8x128xi32>
    %23 = arith.cmpi eq, %22, %12 : vector<8x128xi32>
    %24 = arith.ori %19, %23 : vector<8x128xi1>
    %c126_i32 = arith.constant 126 : i32
    %25 = vector.broadcast %c126_i32 : i32 to vector<8x128xi32>
    %26 = arith.cmpi eq, %12, %25 : vector<8x128xi32>
    %27 = arith.ori %24, %26 : vector<8x128xi1>
    %c94_i32 = arith.constant 94 : i32
    %28 = vector.broadcast %c94_i32 : i32 to vector<8x128xi32>
    %29 = arith.subi %12, %28 : vector<8x128xi32>
    %30 = arith.sitofp %29 : vector<8x128xi32> to vector<8x128xf32>
    %cst = arith.constant 0.0666666701 : f32
    %31 = vector.broadcast %cst : f32 to vector<8x128xf32>
    %32 = arith.mulf %30, %31 : vector<8x128xf32>
    %33 = vector.broadcast %10 : vector<8x1xf32> to vector<8x128xf32>
    %34 = arith.subf %33, %32 : vector<8x128xf32>
    %cst_2 = arith.constant 1.600000e+01 : f32
    %35 = vector.broadcast %cst_2 : f32 to vector<8x128xf32>
    %36 = arith.mulf %34, %35 : vector<8x128xf32>
    %c94_i32_3 = arith.constant 94 : i32
    %37 = vector.broadcast %c94_i32_3 : i32 to vector<8x128xi32>
    %38 = arith.cmpi sge, %12, %37 : vector<8x128xi32>
    %c110_i32 = arith.constant 110 : i32
    %39 = vector.broadcast %c110_i32 : i32 to vector<8x128xi32>
    %40 = arith.cmpi slt, %12, %39 : vector<8x128xi32>
    %41 = arith.andi %38, %40 : vector<8x128xi1>
    %cst_4 = arith.constant 0.000000e+00 : f32
    %42 = vector.broadcast %cst_4 : f32 to vector<8x128xf32>
    %43 = arith.subf %42, %36 : vector<8x128xf32>
    %44 = arith.mulf %43, %36 : vector<8x128xf32>
    %45 = math.exp %44 : vector<8x128xf32>
    %cst_5 = arith.constant 0.000000e+00 : f32
    %46 = vector.broadcast %cst_5 : f32 to vector<8x128xf32>
    %47 = arith.select %41, %45, %46 : vector<8x128xi1>, vector<8x128xf32>
    %c110_i32_6 = arith.constant 110 : i32
    %48 = vector.broadcast %c110_i32_6 : i32 to vector<8x128xi32>
    %49 = arith.subi %12, %48 : vector<8x128xi32>
    %50 = arith.sitofp %49 : vector<8x128xi32> to vector<8x128xf32>
    %cst_7 = arith.constant 0.0666666701 : f32
    %51 = vector.broadcast %cst_7 : f32 to vector<8x128xf32>
    %52 = arith.mulf %50, %51 : vector<8x128xf32>
    %53 = vector.broadcast %11 : vector<8x1xf32> to vector<8x128xf32>
    %54 = arith.subf %53, %52 : vector<8x128xf32>
    %cst_8 = arith.constant 1.600000e+01 : f32
    %55 = vector.broadcast %cst_8 : f32 to vector<8x128xf32>
    %56 = arith.mulf %54, %55 : vector<8x128xf32>
    %c110_i32_9 = arith.constant 110 : i32
    %57 = vector.broadcast %c110_i32_9 : i32 to vector<8x128xi32>
    %58 = arith.cmpi sge, %12, %57 : vector<8x128xi32>
    %c126_i32_10 = arith.constant 126 : i32
    %59 = vector.broadcast %c126_i32_10 : i32 to vector<8x128xi32>
    %60 = arith.cmpi slt, %12, %59 : vector<8x128xi32>
    %61 = arith.andi %58, %60 : vector<8x128xi1>
    %cst_11 = arith.constant 0.000000e+00 : f32
    %62 = vector.broadcast %cst_11 : f32 to vector<8x128xf32>
    %63 = arith.subf %62, %56 : vector<8x128xf32>
    %64 = arith.mulf %63, %56 : vector<8x128xf32>
    %65 = math.exp %64 : vector<8x128xf32>
    %cst_12 = arith.constant 0.000000e+00 : f32
    %66 = vector.broadcast %cst_12 : f32 to vector<8x128xf32>
    %67 = arith.select %61, %65, %66 : vector<8x128xi1>, vector<8x128xf32>
    %68 = arith.extui %27 : vector<8x128xi1> to vector<8x128xi32>
    %69 = arith.sitofp %68 : vector<8x128xi32> to vector<8x128xf32>
    %70 = arith.addf %69, %47 : vector<8x128xf32>
    %71 = arith.addf %70, %67 : vector<8x128xf32>
    %72 = arith.truncf %71 : vector<8x128xf32> to vector<8x128xbf16>
    %c0_13 = arith.constant 0 : index
    %c0_14 = arith.constant 0 : index
    %73 = vector.load %arg5[%c0_13, %c0_14] : memref<128x128xbf16, #tpu.memory_space<vmem>>, vector<128x128xbf16>
    %cst_15 = arith.constant dense<0.000000e+00> : vector<8x128xf32>
    %74 = tpu.matmul %72, %73, %cst_15 {dimension_numbers = #tpu.dot_dimension_numbers<[1], [0], [0], [1], [0, 0, 1, 1], [], []>} : vector<8x128xbf16>, vector<128x128xbf16>, vector<8x128xf32> -> vector<8x128xf32>
    %75 = tpu.iota {dimensions = array<i32: 1>} : vector<8x4101xi32>
    %76 = vector.broadcast %5 : vector<8x1xi32> to vector<8x4101xi32>
    %77 = arith.cmpi eq, %76, %75 : vector<8x4101xi32>
    %78 = arith.extui %77 : vector<8x4101xi1> to vector<8x4101xi32>
    %79 = arith.sitofp %78 : vector<8x4101xi32> to vector<8x4101xf32>
    %80 = arith.truncf %79 : vector<8x4101xf32> to vector<8x4101xbf16>
    %c0_16 = arith.constant 0 : index
    %c0_17 = arith.constant 0 : index
    %81 = vector.load %arg6[%c0_16, %c0_17] : memref<4101x128xbf16, #tpu.memory_space<vmem>>, vector<4101x128xbf16>
    %cst_18 = arith.constant dense<0.000000e+00> : vector<8x128xf32>
    %82 = tpu.matmul %80, %81, %cst_18 {dimension_numbers = #tpu.dot_dimension_numbers<[1], [0], [0], [1], [0, 0, 1, 1], [], []>} : vector<8x4101xbf16>, vector<4101x128xbf16>, vector<8x128xf32> -> vector<8x128xf32>
    %83 = arith.addf %74, %82 : vector<8x128xf32>
    %84 = tpu.iota {dimensions = array<i32: 1>} : vector<8x1478xi32>
    %c0_19 = arith.constant 0 : index
    %c0_20 = arith.constant 0 : index
    %c0_21 = arith.constant 0 : index
    %85 = vector.load %arg4[%c0_19, %c0_20, %c0_21] : memref<1x8x4xi32, #tpu.memory_space<vmem>>, vector<1x8x4xi32>
    %86 = vector.shape_cast %85 : vector<1x8x4xi32> to vector<8x4xi32>
    %87 = vector.extract_strided_slice %86 {offsets = [0, 0], sizes = [8, 1], strides = [1, 1]} : vector<8x4xi32> to vector<8x1xi32>
    %88 = vector.broadcast %87 : vector<8x1xi32> to vector<8x1478xi32>
    %89 = arith.cmpi eq, %88, %84 : vector<8x1478xi32>
    %90 = arith.extui %89 : vector<8x1478xi1> to vector<8x1478xi32>
    %91 = arith.sitofp %90 : vector<8x1478xi32> to vector<8x1478xf32>
    %92 = vector.extract_strided_slice %86 {offsets = [0, 1], sizes = [8, 1], strides = [1, 1]} : vector<8x4xi32> to vector<8x1xi32>
    %93 = vector.broadcast %92 : vector<8x1xi32> to vector<8x1478xi32>
    %94 = arith.cmpi eq, %93, %84 : vector<8x1478xi32>
    %95 = arith.extui %94 : vector<8x1478xi1> to vector<8x1478xi32>
    %96 = arith.sitofp %95 : vector<8x1478xi32> to vector<8x1478xf32>
    %97 = arith.addf %91, %96 : vector<8x1478xf32>
    %98 = vector.extract_strided_slice %86 {offsets = [0, 2], sizes = [8, 1], strides = [1, 1]} : vector<8x4xi32> to vector<8x1xi32>
    %99 = vector.broadcast %98 : vector<8x1xi32> to vector<8x1478xi32>
    %100 = arith.cmpi eq, %99, %84 : vector<8x1478xi32>
    %101 = arith.extui %100 : vector<8x1478xi1> to vector<8x1478xi32>
    %102 = arith.sitofp %101 : vector<8x1478xi32> to vector<8x1478xf32>
    %103 = arith.addf %97, %102 : vector<8x1478xf32>
    %104 = vector.extract_strided_slice %86 {offsets = [0, 3], sizes = [8, 1], strides = [1, 1]} : vector<8x4xi32> to vector<8x1xi32>
    %105 = vector.broadcast %104 : vector<8x1xi32> to vector<8x1478xi32>
    %106 = arith.cmpi eq, %105, %84 : vector<8x1478xi32>
    %107 = arith.extui %106 : vector<8x1478xi1> to vector<8x1478xi32>
    %108 = arith.sitofp %107 : vector<8x1478xi32> to vector<8x1478xf32>
    %109 = arith.addf %103, %108 : vector<8x1478xf32>
    %110 = arith.truncf %109 : vector<8x1478xf32> to vector<8x1478xbf16>
    %c0_22 = arith.constant 0 : index
    %c0_23 = arith.constant 0 : index
    %111 = vector.load %arg7[%c0_22, %c0_23] : memref<1478x128xbf16, #tpu.memory_space<vmem>>, vector<1478x128xbf16>
    %cst_24 = arith.constant dense<0.000000e+00> : vector<8x128xf32>
    %112 = tpu.matmul %110, %111, %cst_24 {dimension_numbers = #tpu.dot_dimension_numbers<[1], [0], [0], [1], [0, 0, 1, 1], [], []>} : vector<8x1478xbf16>, vector<1478x128xbf16>, vector<8x128xf32> -> vector<8x128xf32>
    %113 = arith.addf %83, %112 : vector<8x128xf32>
    %114 = tpu.iota {dimensions = array<i32: 1>} : vector<8x260xi32>
    %c0_25 = arith.constant 0 : index
    %c0_26 = arith.constant 0 : index
    %c0_27 = arith.constant 0 : index
    %115 = vector.load %arg3[%c0_25, %c0_26, %c0_27] : memref<1x8x8xi32, #tpu.memory_space<vmem>>, vector<1x8x8xi32>
    %116 = vector.shape_cast %115 : vector<1x8x8xi32> to vector<8x8xi32>
    %117 = vector.extract_strided_slice %116 {offsets = [0, 0], sizes = [8, 1], strides = [1, 1]} : vector<8x8xi32> to vector<8x1xi32>
    %118 = vector.broadcast %117 : vector<8x1xi32> to vector<8x260xi32>
    %119 = arith.cmpi eq, %118, %114 : vector<8x260xi32>
    %120 = arith.extui %119 : vector<8x260xi1> to vector<8x260xi32>
    %121 = arith.sitofp %120 : vector<8x260xi32> to vector<8x260xf32>
    %122 = arith.truncf %121 : vector<8x260xf32> to vector<8x260xbf16>
    %c0_28 = arith.constant 0 : index
    %c0_29 = arith.constant 0 : index
    %c0_30 = arith.constant 0 : index
    %123 = vector.load %arg8[%c0_28, %c0_29, %c0_30] : memref<8x260x4xbf16, #tpu.memory_space<vmem>>, vector<1x260x4xbf16>
    %124 = vector.shape_cast %123 : vector<1x260x4xbf16> to vector<260x4xbf16>
    %cst_31 = arith.constant dense<0.000000e+00> : vector<8x4xf32>
    %125 = tpu.matmul %122, %124, %cst_31 {dimension_numbers = #tpu.dot_dimension_numbers<[1], [0], [0], [1], [0, 0, 1, 1], [], []>} : vector<8x260xbf16>, vector<260x4xbf16>, vector<8x4xf32> -> vector<8x4xf32>
    %126 = vector.extract_strided_slice %116 {offsets = [0, 1], sizes = [8, 1], strides = [1, 1]} : vector<8x8xi32> to vector<8x1xi32>
    %127 = vector.broadcast %126 : vector<8x1xi32> to vector<8x260xi32>
    %128 = arith.cmpi eq, %127, %114 : vector<8x260xi32>
    %129 = arith.extui %128 : vector<8x260xi1> to vector<8x260xi32>
    %130 = arith.sitofp %129 : vector<8x260xi32> to vector<8x260xf32>
    %131 = arith.truncf %130 : vector<8x260xf32> to vector<8x260xbf16>
    %c1 = arith.constant 1 : index
    %c0_32 = arith.constant 0 : index
    %c0_33 = arith.constant 0 : index
    %132 = vector.load %arg8[%c1, %c0_32, %c0_33] : memref<8x260x4xbf16, #tpu.memory_space<vmem>>, vector<1x260x4xbf16>
    %133 = vector.shape_cast %132 : vector<1x260x4xbf16> to vector<260x4xbf16>
    %cst_34 = arith.constant dense<0.000000e+00> : vector<8x4xf32>
    %134 = tpu.matmul %131, %133, %cst_34 {dimension_numbers = #tpu.dot_dimension_numbers<[1], [0], [0], [1], [0, 0, 1, 1], [], []>} : vector<8x260xbf16>, vector<260x4xbf16>, vector<8x4xf32> -> vector<8x4xf32>
    %135 = vector.extract_strided_slice %116 {offsets = [0, 2], sizes = [8, 1], strides = [1, 1]} : vector<8x8xi32> to vector<8x1xi32>
    %136 = vector.broadcast %135 : vector<8x1xi32> to vector<8x260xi32>
    %137 = arith.cmpi eq, %136, %114 : vector<8x260xi32>
    %138 = arith.extui %137 : vector<8x260xi1> to vector<8x260xi32>
    %139 = arith.sitofp %138 : vector<8x260xi32> to vector<8x260xf32>
    %140 = arith.truncf %139 : vector<8x260xf32> to vector<8x260xbf16>
    %c2 = arith.constant 2 : index
    %c0_35 = arith.constant 0 : index
    %c0_36 = arith.constant 0 : index
    %141 = vector.load %arg8[%c2, %c0_35, %c0_36] : memref<8x260x4xbf16, #tpu.memory_space<vmem>>, vector<1x260x4xbf16>
    %142 = vector.shape_cast %141 : vector<1x260x4xbf16> to vector<260x4xbf16>
    %cst_37 = arith.constant dense<0.000000e+00> : vector<8x4xf32>
    %143 = tpu.matmul %140, %142, %cst_37 {dimension_numbers = #tpu.dot_dimension_numbers<[1], [0], [0], [1], [0, 0, 1, 1], [], []>} : vector<8x260xbf16>, vector<260x4xbf16>, vector<8x4xf32> -> vector<8x4xf32>
    %144 = vector.extract_strided_slice %116 {offsets = [0, 3], sizes = [8, 1], strides = [1, 1]} : vector<8x8xi32> to vector<8x1xi32>
    %145 = vector.broadcast %144 : vector<8x1xi32> to vector<8x260xi32>
    %146 = arith.cmpi eq, %145, %114 : vector<8x260xi32>
    %147 = arith.extui %146 : vector<8x260xi1> to vector<8x260xi32>
    %148 = arith.sitofp %147 : vector<8x260xi32> to vector<8x260xf32>
    %149 = arith.truncf %148 : vector<8x260xf32> to vector<8x260xbf16>
    %c3 = arith.constant 3 : index
    %c0_38 = arith.constant 0 : index
    %c0_39 = arith.constant 0 : index
    %150 = vector.load %arg8[%c3, %c0_38, %c0_39] : memref<8x260x4xbf16, #tpu.memory_space<vmem>>, vector<1x260x4xbf16>
    %151 = vector.shape_cast %150 : vector<1x260x4xbf16> to vector<260x4xbf16>
    %cst_40 = arith.constant dense<0.000000e+00> : vector<8x4xf32>
    %152 = tpu.matmul %149, %151, %cst_40 {dimension_numbers = #tpu.dot_dimension_numbers<[1], [0], [0], [1], [0, 0, 1, 1], [], []>} : vector<8x260xbf16>, vector<260x4xbf16>, vector<8x4xf32> -> vector<8x4xf32>
    %153 = vector.extract_strided_slice %116 {offsets = [0, 4], sizes = [8, 1], strides = [1, 1]} : vector<8x8xi32> to vector<8x1xi32>
    %154 = vector.broadcast %153 : vector<8x1xi32> to vector<8x260xi32>
    %155 = arith.cmpi eq, %154, %114 : vector<8x260xi32>
    %156 = arith.extui %155 : vector<8x260xi1> to vector<8x260xi32>
    %157 = arith.sitofp %156 : vector<8x260xi32> to vector<8x260xf32>
    %158 = arith.truncf %157 : vector<8x260xf32> to vector<8x260xbf16>
    %c4 = arith.constant 4 : index
    %c0_41 = arith.constant 0 : index
    %c0_42 = arith.constant 0 : index
    %159 = vector.load %arg8[%c4, %c0_41, %c0_42] : memref<8x260x4xbf16, #tpu.memory_space<vmem>>, vector<1x260x4xbf16>
    %160 = vector.shape_cast %159 : vector<1x260x4xbf16> to vector<260x4xbf16>
    %cst_43 = arith.constant dense<0.000000e+00> : vector<8x4xf32>
    %161 = tpu.matmul %158, %160, %cst_43 {dimension_numbers = #tpu.dot_dimension_numbers<[1], [0], [0], [1], [0, 0, 1, 1], [], []>} : vector<8x260xbf16>, vector<260x4xbf16>, vector<8x4xf32> -> vector<8x4xf32>
    %162 = vector.extract_strided_slice %116 {offsets = [0, 5], sizes = [8, 1], strides = [1, 1]} : vector<8x8xi32> to vector<8x1xi32>
    %163 = vector.broadcast %162 : vector<8x1xi32> to vector<8x260xi32>
    %164 = arith.cmpi eq, %163, %114 : vector<8x260xi32>
    %165 = arith.extui %164 : vector<8x260xi1> to vector<8x260xi32>
    %166 = arith.sitofp %165 : vector<8x260xi32> to vector<8x260xf32>
    %167 = arith.truncf %166 : vector<8x260xf32> to vector<8x260xbf16>
    %c5 = arith.constant 5 : index
    %c0_44 = arith.constant 0 : index
    %c0_45 = arith.constant 0 : index
    %168 = vector.load %arg8[%c5, %c0_44, %c0_45] : memref<8x260x4xbf16, #tpu.memory_space<vmem>>, vector<1x260x4xbf16>
    %169 = vector.shape_cast %168 : vector<1x260x4xbf16> to vector<260x4xbf16>
    %cst_46 = arith.constant dense<0.000000e+00> : vector<8x4xf32>
    %170 = tpu.matmul %167, %169, %cst_46 {dimension_numbers = #tpu.dot_dimension_numbers<[1], [0], [0], [1], [0, 0, 1, 1], [], []>} : vector<8x260xbf16>, vector<260x4xbf16>, vector<8x4xf32> -> vector<8x4xf32>
    %171 = vector.extract_strided_slice %116 {offsets = [0, 6], sizes = [8, 1], strides = [1, 1]} : vector<8x8xi32> to vector<8x1xi32>
    %172 = vector.broadcast %171 : vector<8x1xi32> to vector<8x260xi32>
    %173 = arith.cmpi eq, %172, %114 : vector<8x260xi32>
    %174 = arith.extui %173 : vector<8x260xi1> to vector<8x260xi32>
    %175 = arith.sitofp %174 : vector<8x260xi32> to vector<8x260xf32>
    %176 = arith.truncf %175 : vector<8x260xf32> to vector<8x260xbf16>
    %c6 = arith.constant 6 : index
    %c0_47 = arith.constant 0 : index
    %c0_48 = arith.constant 0 : index
    %177 = vector.load %arg8[%c6, %c0_47, %c0_48] : memref<8x260x4xbf16, #tpu.memory_space<vmem>>, vector<1x260x4xbf16>
    %178 = vector.shape_cast %177 : vector<1x260x4xbf16> to vector<260x4xbf16>
    %cst_49 = arith.constant dense<0.000000e+00> : vector<8x4xf32>
    %179 = tpu.matmul %176, %178, %cst_49 {dimension_numbers = #tpu.dot_dimension_numbers<[1], [0], [0], [1], [0, 0, 1, 1], [], []>} : vector<8x260xbf16>, vector<260x4xbf16>, vector<8x4xf32> -> vector<8x4xf32>
    %180 = vector.extract_strided_slice %116 {offsets = [0, 7], sizes = [8, 1], strides = [1, 1]} : vector<8x8xi32> to vector<8x1xi32>
    %181 = vector.broadcast %180 : vector<8x1xi32> to vector<8x260xi32>
    %182 = arith.cmpi eq, %181, %114 : vector<8x260xi32>
    %183 = arith.extui %182 : vector<8x260xi1> to vector<8x260xi32>
    %184 = arith.sitofp %183 : vector<8x260xi32> to vector<8x260xf32>
    %185 = arith.truncf %184 : vector<8x260xf32> to vector<8x260xbf16>
    %c7 = arith.constant 7 : index
    %c0_50 = arith.constant 0 : index
    %c0_51 = arith.constant 0 : index
    %186 = vector.load %arg8[%c7, %c0_50, %c0_51] : memref<8x260x4xbf16, #tpu.memory_space<vmem>>, vector<1x260x4xbf16>
    %187 = vector.shape_cast %186 : vector<1x260x4xbf16> to vector<260x4xbf16>
    %cst_52 = arith.constant dense<0.000000e+00> : vector<8x4xf32>
    %188 = tpu.matmul %185, %187, %cst_52 {dimension_numbers = #tpu.dot_dimension_numbers<[1], [0], [0], [1], [0, 0, 1, 1], [], []>} : vector<8x260xbf16>, vector<260x4xbf16>, vector<8x4xf32> -> vector<8x4xf32>
    %cst_53 = arith.constant 0.000000e+00 : f32
    %189 = vector.broadcast %cst_53 : f32 to vector<8x96xf32>
    %190 = tpu.concatenate %125, %134, %143, %152, %161, %170, %179, %188, %189 in 1 : vector<8x4xf32>, vector<8x4xf32>, vector<8x4xf32>, vector<8x4xf32>, vector<8x4xf32>, vector<8x4xf32>, vector<8x4xf32>, vector<8x4xf32>, vector<8x96xf32> -> vector<8x128xf32>
    %191 = arith.addf %113, %190 : vector<8x128xf32>
    %c0_54 = arith.constant 0 : index
    %c0_55 = arith.constant 0 : index
    %c0_56 = arith.constant 0 : index
    %192 = vector.load %arg9[%c0_54, %c0_55, %c0_56] : memref<1x8x128xf32, #tpu.memory_space<vmem>>, vector<1x8x128xf32>
    %193 = vector.shape_cast %192 : vector<1x8x128xf32> to vector<8x128xf32>
    %194 = vector.shape_cast %191 : vector<8x128xf32> to vector<1x8x128xf32>
    tpu.vector_store %arg9[%c0_54, %c0_55, %c0_56], %194 {strides = array<i32>} : memref<1x8x128xf32, #tpu.memory_space<vmem>>, vector<1x8x128xf32>,
    return
  }
  func.func @transform_0(%arg0: i32, %arg1: i32) -> (i32, i32, i32) {
    %c0_i32 = arith.constant 0 : i32
    %c0_i32_0 = arith.constant 0 : i32
    return %arg0, %arg1, %c0_i32 : i32, i32, i32
  }
  func.func @transform_1(%arg0: i32, %arg1: i32) -> (i32, i32, i32) {
    %c0_i32 = arith.constant 0 : i32
    %c0_i32_0 = arith.constant 0 : i32
    return %arg0, %arg1, %c0_i32 : i32, i32, i32
  }
  func.func @transform_2(%arg0: i32, %arg1: i32) -> (i32, i32, i32) {
    %c0_i32 = arith.constant 0 : i32
    %c0_i32_0 = arith.constant 0 : i32
    return %arg0, %arg1, %c0_i32 : i32, i32, i32
  }
  func.func @transform_3(%arg0: i32, %arg1: i32) -> (i32, i32) {
    %c0_i32 = arith.constant 0 : i32
    %c0_i32_0 = arith.constant 0 : i32
    %c0_i32_1 = arith.constant 0 : i32
    return %c0_i32, %c0_i32_0 : i32, i32
  }
  func.func @transform_4(%arg0: i32, %arg1: i32) -> (i32, i32) {
    %c0_i32 = arith.constant 0 : i32
    %c0_i32_0 = arith.constant 0 : i32
    %c0_i32_1 = arith.constant 0 : i32
    return %c0_i32, %c0_i32_0 : i32, i32
  }
  func.func @transform_5(%arg0: i32, %arg1: i32) -> (i32, i32) {
    %c0_i32 = arith.constant 0 : i32
    %c0_i32_0 = arith.constant 0 : i32
    %c0_i32_1 = arith.constant 0 : i32
    return %c0_i32, %c0_i32_0 : i32, i32
  }
  func.func @transform_6(%arg0: i32, %arg1: i32) -> (i32, i32, i32) {
    %c0_i32 = arith.constant 0 : i32
    %c0_i32_0 = arith.constant 0 : i32
    %c0_i32_1 = arith.constant 0 : i32
    %c0_i32_2 = arith.constant 0 : i32
    return %c0_i32, %c0_i32_0, %c0_i32_1 : i32, i32, i32
  }
  func.func @transform_7(%arg0: i32, %arg1: i32) -> (i32, i32, i32) {
    %c0_i32 = arith.constant 0 : i32
    %c0_i32_0 = arith.constant 0 : i32
    return %arg0, %arg1, %c0_i32 : i32, i32, i32
  }
}

</mosaic_0001>

<llo_original>
// kernel: tpu_custom_call.1
$region0: #{tpu_custom_call.1}
  #allocation0 [shape = 'u32[]', space=smem, size = 0x4, offset = 0x4, fixed_abs, tag = 'smem constant byte address 0x4 - core index']
  #allocation1 [shape = 'u32[72,128]{1,0:T(1,128)}', space=vmem, size = 0x9000, scoped, tag = 'internal scratch']
  %s0 = inlined_call_operand.hbm [shape: f32[2,8,8], index: 0, kind: input, shape index: {}]
  %s1 = inlined_call_operand.hbm [shape: s32[2,8,8], index: 1, kind: input, shape index: {}]
  %s2 = inlined_call_operand.vmem [shape: s32[2,8,4], index: 2, kind: input, shape index: {}]
  %s3 = inlined_call_operand.hbm [shape: bf16[128,128], index: 3, kind: input, shape index: {}]
  %s4 = inlined_call_operand.hbm [shape: bf16[4101,128], index: 4, kind: input, shape index: {}]
  %s5 = inlined_call_operand.hbm [shape: bf16[1478,128], index: 5, kind: input, shape index: {}]
  %s6 = inlined_call_operand.vmem [shape: bf16[8,260,4], index: 6, kind: input, shape index: {}]
  %s7 = inlined_call_operand.hbm [shape: f32[2,8,128], index: 7, kind: output, shape index: {}]
  %s8 = sld [smem:[#allocation0]]
  $region81: #{tpu_custom_call.1} parent=0
    _
  %s10 = ssub.s32 1, %s8
  %s11 = scalar_select 0, %s10, %s8
  $region1: #{tpu_custom_call.1} parent=0
    #allocation2 [shape = 'u8[8192]{0}', space=vmem, size = 0x2000, scoped, tag = 'input window, operand 0']
    #allocation3 [shape = 's32[2]{0}', space=sflag, size = 0x8, scoped, tag = 'scoped memory for tpu_custom_call.1']
    #allocation4 [shape = 's32[2]{0}', space=sflag, size = 0x8, scoped, tag = 'scoped memory for tpu_custom_call.1']
    #allocation5 [shape = 'u8[8192]{0}', space=vmem, size = 0x2000, scoped, tag = 'input window, operand 1']
    #allocation6 [shape = 's32[2]{0}', space=sflag, size = 0x8, scoped, tag = 'scoped memory for tpu_custom_call.1']
    #allocation7 [shape = 'u8[32768]{0}', space=vmem, size = 0x8000, scoped, tag = 'input window, operand 3, single buffered']
    #allocation8 [shape = 'u8[1050624]{0}', space=vmem, size = 0x100800, scoped, tag = 'input window, operand 4, single buffered']
    #allocation9 [shape = 's32[1]{0}', space=sflag, size = 0x4, scoped, tag = 'scoped memory for tpu_custom_call.1']
    #allocation10 [shape = 'u8[378880]{0}', space=vmem, size = 0x5c800, scoped, tag = 'input window, operand 5, single buffered']
    #allocation11 [shape = 'u8[8192]{0}', space=vmem, size = 0x2000, scoped, tag = 'output window, operand 0']
    %12 = vsyncpa [#allocation3], 0
    %s13 = scalar_lea.sflag [#allocation3], 1
    %14 = vsyncpa %s13, 0
    %15 = vsyncpa [#allocation6], 0
    %s16 = scalar_lea.sflag [#allocation6], 1
    %17 = vsyncpa %s16, 0
    %18 = vsyncpa [#allocation9], 0
    %19 = vsyncpa [#allocation4], 0
    %s20 = scalar_lea.sflag [#allocation4], 1
    %21 = vsyncpa %s20, 0
    loop: start=0, step=1, limit=4
    $region2: #{tpu_custom_call.1} parent=1 // loop_pre_header
      _
    $region3: #{tpu_custom_call.1} parent=1 // loop_header
      %s23 = sphi 0, %s27
      %p24 = scmp.ge.s32.totalorder %s23, 4
      %s30 = sphi 0, %s42
      %s31 = sphi 0, %s38
      %s32 = sphi 0, %s30
      %s33 = sphi 0, %s31
      %s34 = sphi 0, %s32
      %s35 = sphi 0, %s33
      %s47 = sphi 0, %s49
      %s50 = sphi 0, %s47
      %s51 = sphi 0, %s50
      %s67 = sphi 0, %s51
      %s75 = sphi 0, %s77
      %s78 = sphi 0, %s75
      %s79 = sphi 0, %s78
      %s95 = sphi 0, %s79
      %s103 = sphi 0, %s105
      %s106 = sphi 0, %s103
      %s107 = sphi 0, %s106
      %s123 = sphi 0, %s107
      %s127 = sphi 0, %s127
      %s129 = sphi 0, %s127
      %s130 = sphi 0, %s129
      %s144 = sphi 0, %s130
      %s148 = sphi 0, %s148
      %s150 = sphi 0, %s148
      %s151 = sphi 0, %s150
      %s165 = sphi 0, %s151
      %s169 = sphi 0, %s169
      %s171 = sphi 0, %s169
      %s172 = sphi 0, %s171
      %s186 = sphi 0, %s172
      %s190 = sphi 0, %s190
      %s192 = sphi 0, %s190
      %s193 = sphi 0, %s192
      %s207 = sphi 0, %s193
      %s215 = sphi 0, %s217
      %s218 = sphi 0, %s215
      %s219 = sphi 0, %s218
      %s235 = sphi 0, %s219
    $region4: #{tpu_custom_call.1} parent=1 // loop_header_branch
      %26 = sbr.rel (%p24) target = $region8
    $region5: #{tpu_custom_call.1} parent=1 // loop_body
      %s28 = ssub.s32 %s23, 1
      %s29 = ssub.s32 %s23, 2
      %s36 = sadd.s32 1, %s31
      %p37 = scmp.ge.s32.totalorder %s36, 1
      %s38 = scalar_select %p37, 0, %s36
      %s39 = sadd.s32 1, %s30
      %s40 = scalar_select %p37, %s39, %s30
      %p41 = scmp.ge.s32.totalorder %s40, 2
      %s42 = scalar_select %p41, 0, %s40
      %s43 = ssub.s32 %s30, %s42
      %s44 = ssub.s32 %s31, %s38
      %s45 = sor.u32 %s43, %s44
      %p46 = scmp.eq.s32.totalorder %s45, 0
      %s48 = sadd.s32 %s47, 1
      %s49 = scalar_select %p46, %s47, %s48
      %p52 = pneg %p46
      %p53 = scmp.eq.s32.totalorder %s23, 1
      %p54 = por %p52, %p53
      %p55 = scmp.ne.s32.totalorder %s47, %s50
      %p56 = scmp.eq.s32.totalorder %s23, 0
      %p57 = por %p55, %p56
      %p58 = scmp.ne.s32.totalorder %s47, %s50
      %p59 = scmp.eq.s32.totalorder %s28, 1
      %p60 = por %p58, %p59
      %p61 = scmp.ne.s32.totalorder %s50, %s51
      %p62 = scmp.eq.s32.totalorder %s28, 0
      %p63 = por %p61, %p62
      %p64 = scmp.ne.s32.totalorder %s50, %s51
      %p65 = scmp.eq.s32.totalorder %s29, 1
      %p66 = por %p64, %p65
      %p68 = scmp.ne.s32.totalorder %s51, %s67
      %p69 = scmp.eq.s32.totalorder %s29, 0
      %p70 = por %p68, %p69
      %s71 = ssub.s32 %s30, %s42
      %s72 = ssub.s32 %s31, %s38
      %s73 = sor.u32 %s71, %s72
      %p74 = scmp.eq.s32.totalorder %s73, 0
      %s76 = sadd.s32 %s75, 1
      %s77 = scalar_select %p74, %s75, %s76
      %p80 = pneg %p74
      %p81 = scmp.eq.s32.totalorder %s23, 1
      %p82 = por %p80, %p81
      %p83 = scmp.ne.s32.totalorder %s75, %s78
      %p84 = scmp.eq.s32.totalorder %s23, 0
      %p85 = por %p83, %p84
      %p86 = scmp.ne.s32.totalorder %s75, %s78
      %p87 = scmp.eq.s32.totalorder %s28, 1
      %p88 = por %p86, %p87
      %p89 = scmp.ne.s32.totalorder %s78, %s79
      %p90 = scmp.eq.s32.totalorder %s28, 0
      %p91 = por %p89, %p90
      %p92 = scmp.ne.s32.totalorder %s78, %s79
      %p93 = scmp.eq.s32.totalorder %s29, 1
      %p94 = por %p92, %p93
      %p96 = scmp.ne.s32.totalorder %s79, %s95
      %p97 = scmp.eq.s32.totalorder %s29, 0
      %p98 = por %p96, %p97
      %s99 = ssub.s32 %s30, %s42
      %s100 = ssub.s32 %s31, %s38
      %s101 = sor.u32 %s99, %s100
      %p102 = scmp.eq.s32.totalorder %s101, 0
      %s104 = sadd.s32 %s103, 1
      %s105 = scalar_select %p102, %s103, %s104
      %p108 = pneg %p102
      %p109 = scmp.eq.s32.totalorder %s23, 1
      %p110 = por %p108, %p109
      %p111 = scmp.ne.s32.totalorder %s103, %s106
      %p112 = scmp.eq.s32.totalorder %s23, 0
      %p113 = por %p111, %p112
      %p114 = scmp.ne.s32.totalorder %s103, %s106
      %p115 = scmp.eq.s32.totalorder %s28, 1
      %p116 = por %p114, %p115
      %p117 = scmp.ne.s32.totalorder %s106, %s107
      %p118 = scmp.eq.s32.totalorder %s28, 0
      %p119 = por %p117, %p118
      %p120 = scmp.ne.s32.totalorder %s106, %s107
      %p121 = scmp.eq.s32.totalorder %s29, 1
      %p122 = por %p120, %p121
      %p124 = scmp.ne.s32.totalorder %s107, %s123
      %p125 = scmp.eq.s32.totalorder %s29, 0
      %p126 = por %p124, %p125
      %s128 = sadd.s32 %s127, 1
      %p131 = scmp.eq.s32.totalorder %s23, 1
      %p132 = scmp.ne.s32.totalorder %s127, %s129
      %p133 = scmp.eq.s32.totalorder %s23, 0
      %p134 = por %p132, %p133
      %p135 = scmp.ne.s32.totalorder %s127, %s129
      %p136 = scmp.eq.s32.totalorder %s28, 1
      %p137 = por %p135, %p136
      %p138 = scmp.ne.s32.totalorder %s129, %s130
      %p139 = scmp.eq.s32.totalorder %s28, 0
      %p140 = por %p138, %p139
      %p141 = scmp.ne.s32.totalorder %s129, %s130
      %p142 = scmp.eq.s32.totalorder %s29, 1
      %p143 = por %p141, %p142
      %p145 = scmp.ne.s32.totalorder %s130, %s144
      %p146 = scmp.eq.s32.totalorder %s29, 0
      %p147 = por %p145, %p146
      %s149 = sadd.s32 %s148, 1
      %p152 = scmp.eq.s32.totalorder %s23, 1
      %p153 = scmp.ne.s32.totalorder %s148, %s150
      %p154 = scmp.eq.s32.totalorder %s23, 0
      %p155 = por %p153, %p154
      %p156 = scmp.ne.s32.totalorder %s148, %s150
      %p157 = scmp.eq.s32.totalorder %s28, 1
      %p158 = por %p156, %p157
      %p159 = scmp.ne.s32.totalorder %s150, %s151
      %p160 = scmp.eq.s32.totalorder %s28, 0
      %p161 = por %p159, %p160
      %p162 = scmp.ne.s32.totalorder %s150, %s151
      %p163 = scmp.eq.s32.totalorder %s29, 1
      %p164 = por %p162, %p163
      %p166 = scmp.ne.s32.totalorder %s151, %s165
      %p167 = scmp.eq.s32.totalorder %s29, 0
      %p168 = por %p166, %p167
      %s170 = sadd.s32 %s169, 1
      %p173 = scmp.eq.s32.totalorder %s23, 1
      %p174 = scmp.ne.s32.totalorder %s169, %s171
      %p175 = scmp.eq.s32.totalorder %s23, 0
      %p176 = por %p174, %p175
      %p177 = scmp.ne.s32.totalorder %s169, %s171
      %p178 = scmp.eq.s32.totalorder %s28, 1
      %p179 = por %p177, %p178
      %p180 = scmp.ne.s32.totalorder %s171, %s172
      %p181 = scmp.eq.s32.totalorder %s28, 0
      %p182 = por %p180, %p181
      %p183 = scmp.ne.s32.totalorder %s171, %s172
      %p184 = scmp.eq.s32.totalorder %s29, 1
      %p185 = por %p183, %p184
      %p187 = scmp.ne.s32.totalorder %s172, %s186
      %p188 = scmp.eq.s32.totalorder %s29, 0
      %p189 = por %p187, %p188
      %s191 = sadd.s32 %s190, 1
      %p194 = scmp.eq.s32.totalorder %s23, 1
      %p195 = scmp.ne.s32.totalorder %s190, %s192
      %p196 = scmp.eq.s32.totalorder %s23, 0
      %p197 = por %p195, %p196
      %p198 = scmp.ne.s32.totalorder %s190, %s192
      %p199 = scmp.eq.s32.totalorder %s28, 1
      %p200 = por %p198, %p199
      %p201 = scmp.ne.s32.totalorder %s192, %s193
      %p202 = scmp.eq.s32.totalorder %s28, 0
      %p203 = por %p201, %p202
      %p204 = scmp.ne.s32.totalorder %s192, %s193
      %p205 = scmp.eq.s32.totalorder %s29, 1
      %p206 = por %p204, %p205
      %p208 = scmp.ne.s32.totalorder %s193, %s207
      %p209 = scmp.eq.s32.totalorder %s29, 0
      %p210 = por %p208, %p209
      %s211 = ssub.s32 %s30, %s42
      %s212 = ssub.s32 %s31, %s38
      %s213 = sor.u32 %s211, %s212
      %p214 = scmp.eq.s32.totalorder %s213, 0
      %s216 = sadd.s32 %s215, 1
      %s217 = scalar_select %p214, %s215, %s216
      %p220 = pneg %p214
      %p221 = scmp.eq.s32.totalorder %s23, 1
      %p222 = por %p220, %p221
      %p223 = scmp.ne.s32.totalorder %s215, %s218
      %p224 = scmp.eq.s32.totalorder %s23, 0
      %p225 = por %p223, %p224
      %p226 = scmp.ne.s32.totalorder %s215, %s218
      %p227 = scmp.eq.s32.totalorder %s28, 1
      %p228 = por %p226, %p227
      %p229 = scmp.ne.s32.totalorder %s218, %s219
      %p230 = scmp.eq.s32.totalorder %s28, 0
      %p231 = por %p229, %p230
      %p232 = scmp.ne.s32.totalorder %s218, %s219
      %p233 = scmp.eq.s32.totalorder %s29, 1
      %p234 = por %p232, %p233
      %p236 = scmp.ne.s32.totalorder %s219, %s235
      %p237 = scmp.eq.s32.totalorder %s29, 0
      %p238 = por %p236, %p237
      %p239 = scmp.le.s32.totalorder 1, %s23
      %p240 = scmp.lt.s32.totalorder %s23, 3
      %p241 = pnand %p239, %p240
      %p242 = pneg %p241
      // Predicated region
      $region9: #{tpu_custom_call.1} parent=5 // pred_check
        _
      $region10: #{tpu_custom_call.1} parent=5 // pred_check_branch
        %244 = sbr.rel (%p241) target = $region12
      $region11: #{tpu_custom_call.1} parent=5 // pred_region
        %s245 = ssub.s32 %s23, 1
        // Predicated region
        $region13: #{tpu_custom_call.1} parent=11 // pred_check
          %p246 = pneg %p140
        $region14: #{tpu_custom_call.1} parent=11 // pred_check_branch
          %248 = sbr.rel (%p246) target = $region16
        $region15: #{tpu_custom_call.1} parent=11 // pred_region
          %250 = vsyncadd [#allocation6], 0
          %s251 = sshll.u32 %s3, 4
          %s252 = int_to_ptr.hbm [resolvable:$true] %s251
          %s253 = sshll.u32 [#allocation7], 4
          %s254 = int_to_ptr.vmem [resolvable:$true] %s253
          %259 = dma.hbm_to_vmem [thread:$0]  %s252, 1024, %s254, [#allocation6], 64, 64, 4
        $region16: #{tpu_custom_call.1} parent=11 // pred_fallthru
          _
        // Predicated region
        $region17: #{tpu_custom_call.1} parent=11 // pred_check
          %p260 = pneg %p161
        $region18: #{tpu_custom_call.1} parent=11 // pred_check_branch
          %262 = sbr.rel (%p260) target = $region20
        $region19: #{tpu_custom_call.1} parent=11 // pred_region
          %264 = vsyncadd [#allocation9], 0
          %s265 = sshll.u32 %s4, 4
          %s266 = int_to_ptr.hbm [resolvable:$true] %s265
          %s267 = sshll.u32 [#allocation8], 4
          %s268 = int_to_ptr.vmem [resolvable:$true] %s267
          %273 = dma.hbm_to_vmem [thread:$0]  %s266, 32832, %s268, [#allocation9], 64, 64, 4
        $region20: #{tpu_custom_call.1} parent=11 // pred_fallthru
          _
        // Predicated region
        $region21: #{tpu_custom_call.1} parent=11 // pred_check
          %p274 = pneg %p182
        $region22: #{tpu_custom_call.1} parent=11 // pred_check_branch
          %276 = sbr.rel (%p274) target = $region24
        $region23: #{tpu_custom_call.1} parent=11 // pred_region
          %278 = vsyncadd [#allocation9], 0
          %s279 = sshll.u32 %s5, 4
          %s280 = int_to_ptr.hbm [resolvable:$true] %s279
          %s281 = sshll.u32 [#allocation10], 4
          %s282 = int_to_ptr.vmem [resolvable:$true] %s281
          %287 = dma.hbm_to_vmem [thread:$0]  %s280, 11840, %s282, [#allocation9], 64, 64, 4
        $region24: #{tpu_custom_call.1} parent=11 // pred_fallthru
          _
        // Predicated region
        $region25: #{tpu_custom_call.1} parent=11 // pred_check
          %p288 = pneg %p203
        $region26: #{tpu_custom_call.1} parent=11 // pred_check_branch
          %290 = sbr.rel (%p288) target = $region28
        $region27: #{tpu_custom_call.1} parent=11 // pred_region
          _
        $region28: #{tpu_custom_call.1} parent=11 // pred_fallthru
          _
      $region12: #{tpu_custom_call.1} parent=5 // pred_fallthru
        _
      %p291 = scmp.lt.s32.totalorder %s23, 2
      // Predicated region
      $region29: #{tpu_custom_call.1} parent=5 // pred_check
        %p292 = pneg %p291
      $region30: #{tpu_custom_call.1} parent=5 // pred_check_branch
        %294 = sbr.rel (%p292) target = $region32
      $region31: #{tpu_custom_call.1} parent=5 // pred_region
        // Predicated region
        $region33: #{tpu_custom_call.1} parent=31 // pred_check
          %p295 = pneg %p57
        $region34: #{tpu_custom_call.1} parent=31 // pred_check_branch
          %297 = sbr.rel (%p295) target = $region36
        $region35: #{tpu_custom_call.1} parent=31 // pred_region
          %s298 = sand.u32 %s47, 1
          %s299 = scalar_lea.sflag [#allocation3], %s298
          %s300 = sand.u32 %s47, 1
          %s301 = smul.addr %s300, 8
          %s302 = scalar_lea.vmem [#allocation2], %s301
          %304 = vsyncadd %s299, 0
          %s305 = sadd.s32 %s31, %s30
          %s306 = smul.addr %s305, 8
          %s307 = scalar_lea.hbm %s0, %s306
          %s309 = sshll.u32 %s307, 4
          %s310 = int_to_ptr.hbm [resolvable:$true] %s309
          %s311 = sshll.u32 %s302, 4
          %s312 = int_to_ptr.vmem [resolvable:$true] %s311
          %314 = dma.hbm_to_vmem [thread:$0]  %s310, 128, %s312, %s299
        $region36: #{tpu_custom_call.1} parent=31 // pred_fallthru
          _
        // Predicated region
        $region37: #{tpu_custom_call.1} parent=31 // pred_check
          %p315 = pneg %p85
        $region38: #{tpu_custom_call.1} parent=31 // pred_check_branch
          %317 = sbr.rel (%p315) target = $region40
        $region39: #{tpu_custom_call.1} parent=31 // pred_region
          %s318 = sand.u32 %s23, 1
          %s319 = scalar_lea.sflag [#allocation6], %s318
          %s320 = sand.u32 %s75, 1
          %s321 = smul.addr %s320, 8
          %s322 = scalar_lea.vmem [#allocation5], %s321
          %324 = vsyncadd %s319, 0
          %s325 = sadd.s32 %s31, %s30
          %s326 = smul.addr %s325, 8
          %s327 = scalar_lea.hbm %s1, %s326
          %s329 = sshll.u32 %s327, 4
          %s330 = int_to_ptr.hbm [resolvable:$true] %s329
          %s331 = sshll.u32 %s322, 4
          %s332 = int_to_ptr.vmem [resolvable:$true] %s331
          %334 = dma.hbm_to_vmem [thread:$0]  %s330, 128, %s332, %s319
        $region40: #{tpu_custom_call.1} parent=31 // pred_fallthru
          _
        // Predicated region
        $region41: #{tpu_custom_call.1} parent=31 // pred_check
          %p335 = pneg %p113
        $region42: #{tpu_custom_call.1} parent=31 // pred_check_branch
          %337 = sbr.rel (%p335) target = $region44
        $region43: #{tpu_custom_call.1} parent=31 // pred_region
          %p338 = scmp.lt.s32.totalorder %s30, 1
          %s339 = scalar_select %p338, %s30, 1
          %p340 = scmp.lt.s32.totalorder %s31, 0
          %s341 = scalar_select %p340, %s31, 0
          %s342 = sadd.s32 %s341, %s339
          %s343 = smul.addr %s342, 8
          %s344 = scalar_lea.vmem %s2, %s343
        $region44: #{tpu_custom_call.1} parent=31 // pred_fallthru
          _
      $region32: #{tpu_custom_call.1} parent=5 // pred_fallthru
        _
      %p345 = scmp.le.s32.totalorder 1, %s23
      %p346 = scmp.lt.s32.totalorder %s23, 3
      %p347 = pnand %p345, %p346
      %p348 = pneg %p347
      // Predicated region
      $region45: #{tpu_custom_call.1} parent=5 // pred_check
        _
      $region46: #{tpu_custom_call.1} parent=5 // pred_check_branch
        %350 = sbr.rel (%p347) target = $region48
      $region47: #{tpu_custom_call.1} parent=5 // pred_region
        %s351 = ssub.s32 %s23, 1
        %s352 = sand.u32 %s50, 1
        %s353 = scalar_lea.sflag [#allocation3], %s352
        %s354 = sand.u32 %s50, 1
        %s355 = smul.addr %s354, 8
        %s356 = scalar_lea.vmem [#allocation2], %s355
        // Predicated region
        $region49: #{tpu_custom_call.1} parent=47 // pred_check
          %p357 = pneg %p63
        $region50: #{tpu_custom_call.1} parent=47 // pred_check_branch
          %359 = sbr.rel (%p357) target = $region52
        $region51: #{tpu_custom_call.1} parent=47 // pred_region
          %361 = dma.done %s353, 128
        $region52: #{tpu_custom_call.1} parent=47 // pred_fallthru
          _
        %s362 = sand.u32 %s28, 1
        %s363 = scalar_lea.sflag [#allocation6], %s362
        %s364 = sand.u32 %s78, 1
        %s365 = smul.addr %s364, 8
        %s366 = scalar_lea.vmem [#allocation5], %s365
        // Predicated region
        $region53: #{tpu_custom_call.1} parent=47 // pred_check
          %p367 = pneg %p91
        $region54: #{tpu_custom_call.1} parent=47 // pred_check_branch
          %369 = sbr.rel (%p367) target = $region56
        $region55: #{tpu_custom_call.1} parent=47 // pred_region
          %371 = dma.done %s363, 128
        $region56: #{tpu_custom_call.1} parent=47 // pred_fallthru
          _
        // Predicated region
        $region57: #{tpu_custom_call.1} parent=47 // pred_check
          %p372 = pneg %p140
        $region58: #{tpu_custom_call.1} parent=47 // pred_check_branch
          %374 = sbr.rel (%p372) target = $region60
        $region59: #{tpu_custom_call.1} parent=47 // pred_region
          %376 = dma.done [#allocation6], 1024
        $region60: #{tpu_custom_call.1} parent=47 // pred_fallthru
          _
        // Predicated region
        $region61: #{tpu_custom_call.1} parent=47 // pred_check
          %p377 = pneg %p161
        $region62: #{tpu_custom_call.1} parent=47 // pred_check_branch
          %379 = sbr.rel (%p377) target = $region64
        $region63: #{tpu_custom_call.1} parent=47 // pred_region
          %381 = dma.done [#allocation9], 32832
        $region64: #{tpu_custom_call.1} parent=47 // pred_fallthru
          _
        // Predicated region
        $region65: #{tpu_custom_call.1} parent=47 // pred_check
          %p382 = pneg %p182
        $region66: #{tpu_custom_call.1} parent=47 // pred_check_branch
          %384 = sbr.rel (%p382) target = $region68
        $region67: #{tpu_custom_call.1} parent=47 // pred_region
          %386 = dma.done [#allocation9], 11840
        $region68: #{tpu_custom_call.1} parent=47 // pred_fallthru
          _
        %s387 = sand.u32 %s50, 1
        %s388 = scalar_lea.sflag [#allocation3], %s387
        %s389 = sand.u32 %s50, 1
        %s390 = smul.addr %s389, 8
        %s391 = scalar_lea.vmem [#allocation2], %s390
        %p392 = pneg %p63
        %p393 = pneg %p60
        %s394 = sand.u32 %s28, 1
        %s395 = scalar_lea.sflag [#allocation6], %s394
        %s396 = sand.u32 %s78, 1
        %s397 = smul.addr %s396, 8
        %s398 = scalar_lea.vmem [#allocation5], %s397
        %p399 = pneg %p91
        %p400 = pneg %p88
        %p401 = scmp.lt.s32.totalorder %s32, 1
        %s402 = scalar_select %p401, %s32, 1
        %p403 = scmp.lt.s32.totalorder %s33, 0
        %s404 = scalar_select %p403, %s33, 0
        %s405 = sadd.s32 %s404, %s402
        %s406 = smul.addr %s405, 8
        %s407 = scalar_lea.vmem %s2, %s406
        %p408 = pneg %p119
        %p409 = pneg %p116
        %p410 = pneg %p140
        %p411 = pneg %p137
        %p412 = pneg %p161
        %p413 = pneg %p158
        %p414 = pneg %p182
        %p415 = pneg %p179
        %p416 = pneg %p203
        %p417 = pneg %p200
        %p418 = pneg %p231
        %p419 = pneg %p228
        %s420 = sand.u32 %s218, 1
        %s421 = scalar_lea.sflag [#allocation4], %s420
        %s422 = sand.u32 %s218, 1
        %s423 = smul.addr %s422, 8
        %s424 = scalar_lea.vmem [#allocation11], %s423
        %p425 = scmp.lt.s32.totalorder %s32, 1
        %s426 = scalar_select %p425, %s32, 1
        %p427 = scmp.lt.s32.totalorder %s33, 0
        %s428 = scalar_select %p427, %s33, 0
        %s429 = sadd.s32 %s428, %s426
        %s430 = smul.addr %s429, 8
        %s431 = scalar_lea.vmem %s2, %s430
        %v433 = vld [vmem:[%s356] sm:$0xff]
        %v434 = vcvt.f32.s32.to.zero.pseudo %v433
        %v435 = vlaneseq
        %v436 = vand.u32 %v435, 127
        %437 = vset.pattern.permute.xlu0 0
        %438 = vperm.xlu0 %437, %v434
        %v439 = vpop.permute.xlu0 %438
        %vm440 = vcmp.eq.s32.totalorder %v439, %v436
        %v441 = vadd.s32 %v434, 64
        %442 = vset.pattern.permute.xlu0 2
        %443 = vperm.xlu0 %442, %v441
        %v444 = vpop.permute.xlu0 %443
        %vm445 = vcmp.eq.s32.totalorder %v444, %v436
        %vm446 = vmor %vm440, %vm445
        %v447 = vadd.s32 %v434, 75
        %448 = vset.pattern.permute.xlu0 3
        %449 = vperm.xlu0 %448, %v447
        %v450 = vpop.permute.xlu0 %449
        %vm451 = vcmp.eq.s32.totalorder %v450, %v436
        %vm452 = vmor %vm446, %vm451
        %vm453 = vcmp.eq.s32.totalorder %v436, 126
        %vm454 = vmor %vm452, %vm453
        %v455 = vsub.s32 %v436, 94
        %v456 = vcvt.s32.f32 %v455
        %v457 = vmul.f32 %v456, 0.06666667
        %459 = vset.pattern.permute.xlu0 4
        %460 = vperm.xlu0 %459, %v433
        %v461 = vpop.permute.xlu0 %460
        %v463 = vsub.f32 %v461, %v457
        %v464 = vmul.f32 %v463, 16.0
        %vm465 = vcmp.ge.s32.totalorder %v436, 94
        %vm466 = vcmp.lt.s32.totalorder %v436, 110
        %vm467 = vmand %vm465, %vm466
        %v468 = vsub.f32 0.0, %v464
        %v469 = vmul.f32 %v468, %v464
        %v470 = vmul.f32 %v469, 1.442695
        %v471 = vpow.pop %v470
        %v472 = vsel %vm467, %v471, 0.0
        %v473 = vsub.s32 %v436, 110
        %v474 = vcvt.s32.f32 %v473
        %v475 = vmul.f32 %v474, 0.06666667
        %476 = vset.pattern.permute.xlu0 5
        %477 = vperm.xlu0 %476, %v433
        %v478 = vpop.permute.xlu0 %477
        %v480 = vsub.f32 %v478, %v475
        %v481 = vmul.f32 %v480, 16.0
        %vm482 = vcmp.ge.s32.totalorder %v436, 110
        %vm483 = vcmp.lt.s32.totalorder %v436, 126
        %vm484 = vmand %vm482, %vm483
        %v485 = vsub.f32 0.0, %v481
        %v486 = vmul.f32 %v485, %v481
        %v487 = vmul.f32 %v486, 1.442695
        %v488 = vpow.pop %v487
        %v489 = vsel %vm484, %v488, 0.0
        %v490 = vsel %vm454, 1, 0
        %v491 = vcvt.s32.f32 %v490
        %v492 = vadd.f32 %v491, %v472
        %v493 = vadd.f32 %v492, %v489
        %v494 = vpack.c.bf16 %v493, %v493
        %v495 = vld [vmem:[#allocation7] sm:$0xf]
        %v496 = vld [vmem:[#allocation7 + $0x4] sm:$0xf]
        %v497 = vld [vmem:[#allocation7 + $0x8] sm:$0xf]
        %v498 = vld [vmem:[#allocation7 + $0xc] sm:$0xf]
        %v499 = vld [vmem:[#allocation7 + $0x10] sm:$0xf]
        %v500 = vld [vmem:[#allocation7 + $0x14] sm:$0xf]
        %v501 = vld [vmem:[#allocation7 + $0x18] sm:$0xf]
        %v502 = vld [vmem:[#allocation7 + $0x1c] sm:$0xf]
        %v503 = vld [vmem:[#allocation7 + $0x20] sm:$0xf]
        %v504 = vld [vmem:[#allocation7 + $0x24] sm:$0xf]
        %v505 = vld [vmem:[#allocation7 + $0x28] sm:$0xf]
        %v506 = vld [vmem:[#allocation7 + $0x2c] sm:$0xf]
        %v507 = vld [vmem:[#allocation7 + $0x30] sm:$0xf]
        %v508 = vld [vmem:[#allocation7 + $0x34] sm:$0xf]
        %v509 = vld [vmem:[#allocation7 + $0x38] sm:$0xf]
        %v510 = vld [vmem:[#allocation7 + $0x3c] sm:$0xf]
        %v511 = vadd.s32 %v436, 128
        %v512 = vadd.s32 %v436, 256
        %v513 = vadd.s32 %v436, 384
        %v514 = vadd.s32 %v436, 512
        %v515 = vadd.s32 %v436, 640
        %v516 = vadd.s32 %v436, 768
        %v517 = vadd.s32 %v436, 896
        %v518 = vadd.s32 %v436, 1024
        %v519 = vadd.s32 %v436, 1152
        %v520 = vadd.s32 %v436, 1280
        %v521 = vadd.s32 %v436, 1408
        %v522 = vadd.s32 %v436, 1536
        %v523 = vadd.s32 %v436, 1664
        %v524 = vadd.s32 %v436, 1792
        %v525 = vadd.s32 %v436, 1920
        %v526 = vadd.s32 %v436, 2048
        %v527 = vadd.s32 %v436, 2176
        %v528 = vadd.s32 %v436, 2304
        %v529 = vadd.s32 %v436, 2432
        %v530 = vadd.s32 %v436, 2560
        %v531 = vadd.s32 %v436, 2688
        %v532 = vadd.s32 %v436, 2816
        %v533 = vadd.s32 %v436, 2944
        %v534 = vadd.s32 %v436, 3072
        %v535 = vadd.s32 %v436, 3200
        %v536 = vadd.s32 %v436, 3328
        %v537 = vadd.s32 %v436, 3456
        %v538 = vadd.s32 %v436, 3584
        %v539 = vadd.s32 %v436, 3712
        %v540 = vadd.s32 %v436, 3840
        %v541 = vadd.s32 %v436, 3968
        %v542 = vadd.s32 %v436, 4096
        %543 = vset.pattern.permute.xlu0 1
        %544 = vperm.xlu0 %543, %v434
        %v545 = vpop.permute.xlu0 %544
        %vm546 = vcmp.eq.s32.totalorder %v545, %v436
        %vm547 = vcmp.eq.s32.totalorder %v545, %v511
        %vm548 = vcmp.eq.s32.totalorder %v545, %v512
        %vm549 = vcmp.eq.s32.totalorder %v545, %v513
        %vm550 = vcmp.eq.s32.totalorder %v545, %v514
        %vm551 = vcmp.eq.s32.totalorder %v545, %v515
        %vm552 = vcmp.eq.s32.totalorder %v545, %v516
        %vm553 = vcmp.eq.s32.totalorder %v545, %v517
        %vm554 = vcmp.eq.s32.totalorder %v545, %v518
        %vm555 = vcmp.eq.s32.totalorder %v545, %v519
        %vm556 = vcmp.eq.s32.totalorder %v545, %v520
        %vm557 = vcmp.eq.s32.totalorder %v545, %v521
        %vm558 = vcmp.eq.s32.totalorder %v545, %v522
        %vm559 = vcmp.eq.s32.totalorder %v545, %v523
        %vm560 = vcmp.eq.s32.totalorder %v545, %v524
        %vm561 = vcmp.eq.s32.totalorder %v545, %v525
        %vm562 = vcmp.eq.s32.totalorder %v545, %v526
        %vm563 = vcmp.eq.s32.totalorder %v545, %v527
        %vm564 = vcmp.eq.s32.totalorder %v545, %v528
        %vm565 = vcmp.eq.s32.totalorder %v545, %v529
        %vm566 = vcmp.eq.s32.totalorder %v545, %v530
        %vm567 = vcmp.eq.s32.totalorder %v545, %v531
        %vm568 = vcmp.eq.s32.totalorder %v545, %v532
        %vm569 = vcmp.eq.s32.totalorder %v545, %v533
        %vm570 = vcmp.eq.s32.totalorder %v545, %v534
        %vm571 = vcmp.eq.s32.totalorder %v545, %v535
        %vm572 = vcmp.eq.s32.totalorder %v545, %v536
        %vm573 = vcmp.eq.s32.totalorder %v545, %v537
        %vm574 = vcmp.eq.s32.totalorder %v545, %v538
        %vm575 = vcmp.eq.s32.totalorder %v545, %v539
        %vm576 = vcmp.eq.s32.totalorder %v545, %v540
        %vm577 = vcmp.eq.s32.totalorder %v545, %v541
        %vm578 = vcmp.eq.s32.totalorder %v545, %v542
        %v579 = vsel %vm546, 1, 0
        %v580 = vsel %vm547, 1, 0
        %v581 = vsel %vm548, 1, 0
        %v582 = vsel %vm549, 1, 0
        %v583 = vsel %vm550, 1, 0
        %v584 = vsel %vm551, 1, 0
        %v585 = vsel %vm552, 1, 0
        %v586 = vsel %vm553, 1, 0
        %v587 = vsel %vm554, 1, 0
        %v588 = vsel %vm555, 1, 0
        %v589 = vsel %vm556, 1, 0
        %v590 = vsel %vm557, 1, 0
        %v591 = vsel %vm558, 1, 0
        %v592 = vsel %vm559, 1, 0
        %v593 = vsel %vm560, 1, 0
        %v594 = vsel %vm561, 1, 0
        %v595 = vsel %vm562, 1, 0
        %v596 = vsel %vm563, 1, 0
        %v597 = vsel %vm564, 1, 0
        %v598 = vsel %vm565, 1, 0
        %v599 = vsel %vm566, 1, 0
        %v600 = vsel %vm567, 1, 0
        %v601 = vsel %vm568, 1, 0
        %v602 = vsel %vm569, 1, 0
        %v603 = vsel %vm570, 1, 0
        %v604 = vsel %vm571, 1, 0
        %v605 = vsel %vm572, 1, 0
        %v606 = vsel %vm573, 1, 0
        %v607 = vsel %vm574, 1, 0
        %v608 = vsel %vm575, 1, 0
        %v609 = vsel %vm576, 1, 0
        %v610 = vsel %vm577, 1, 0
        %v611 = vsel %vm578, 1, 0
        %v612 = vcvt.s32.f32 %v579
        %v613 = vcvt.s32.f32 %v580
        %v614 = vcvt.s32.f32 %v581
        %v615 = vcvt.s32.f32 %v582
        %v616 = vcvt.s32.f32 %v583
        %v617 = vcvt.s32.f32 %v584
        %v618 = vcvt.s32.f32 %v585
        %v619 = vcvt.s32.f32 %v586
        %v620 = vcvt.s32.f32 %v587
        %v621 = vcvt.s32.f32 %v588
        %v622 = vcvt.s32.f32 %v589
        %v623 = vcvt.s32.f32 %v590
        %v624 = vcvt.s32.f32 %v591
        %v625 = vcvt.s32.f32 %v592
        %v626 = vcvt.s32.f32 %v593
        %v627 = vcvt.s32.f32 %v594
        %v628 = vcvt.s32.f32 %v595
        %v629 = vcvt.s32.f32 %v596
        %v630 = vcvt.s32.f32 %v597
        %v631 = vcvt.s32.f32 %v598
        %v632 = vcvt.s32.f32 %v599
        %v633 = vcvt.s32.f32 %v600
        %v634 = vcvt.s32.f32 %v601
        %v635 = vcvt.s32.f32 %v602
        %v636 = vcvt.s32.f32 %v603
        %v637 = vcvt.s32.f32 %v604
        %v638 = vcvt.s32.f32 %v605
        %v639 = vcvt.s32.f32 %v606
        %v640 = vcvt.s32.f32 %v607
        %v641 = vcvt.s32.f32 %v608
        %v642 = vcvt.s32.f32 %v609
        %v643 = vcvt.s32.f32 %v610
        %v644 = vcvt.s32.f32 %v611
        %v645 = vpack.c.bf16 %v612, %v612
        %v646 = vpack.c.bf16 %v613, %v613
        %v647 = vpack.c.bf16 %v614, %v614
        %v648 = vpack.c.bf16 %v615, %v615
        %v649 = vpack.c.bf16 %v616, %v616
        %v650 = vpack.c.bf16 %v617, %v617
        %v651 = vpack.c.bf16 %v618, %v618
        %v652 = vpack.c.bf16 %v619, %v619
        %v653 = vpack.c.bf16 %v620, %v620
        %v654 = vpack.c.bf16 %v621, %v621
        %v655 = vpack.c.bf16 %v622, %v622
        %v656 = vpack.c.bf16 %v623, %v623
        %v657 = vpack.c.bf16 %v624, %v624
        %v658 = vpack.c.bf16 %v625, %v625
        %v659 = vpack.c.bf16 %v626, %v626
        %v660 = vpack.c.bf16 %v627, %v627
        %v661 = vpack.c.bf16 %v628, %v628
        %v662 = vpack.c.bf16 %v629, %v629
        %v663 = vpack.c.bf16 %v630, %v630
        %v664 = vpack.c.bf16 %v631, %v631
        %v665 = vpack.c.bf16 %v632, %v632
        %v666 = vpack.c.bf16 %v633, %v633
        %v667 = vpack.c.bf16 %v634, %v634
        %v668 = vpack.c.bf16 %v635, %v635
        %v669 = vpack.c.bf16 %v636, %v636
        %v670 = vpack.c.bf16 %v637, %v637
        %v671 = vpack.c.bf16 %v638, %v638
        %v672 = vpack.c.bf16 %v639, %v639
        %v673 = vpack.c.bf16 %v640, %v640
        %v674 = vpack.c.bf16 %v641, %v641
        %v675 = vpack.c.bf16 %v642, %v642
        %v676 = vpack.c.bf16 %v643, %v643
        %v677 = vpack.c.bf16 %v644, %v644
        %v678 = vld [vmem:[#allocation8] sm:$0xf]
        %v679 = vld [vmem:[#allocation8 + $0x4] sm:$0xf]
        %v680 = vld [vmem:[#allocation8 + $0x8] sm:$0xf]
        %v681 = vld [vmem:[#allocation8 + $0xc] sm:$0xf]
        %v682 = vld [vmem:[#allocation8 + $0x10] sm:$0xf]
        %v683 = vld [vmem:[#allocation8 + $0x14] sm:$0xf]
        %v684 = vld [vmem:[#allocation8 + $0x18] sm:$0xf]
        %v685 = vld [vmem:[#allocation8 + $0x1c] sm:$0xf]
        %v686 = vld [vmem:[#allocation8 + $0x20] sm:$0xf]
        %v687 = vld [vmem:[#allocation8 + $0x24] sm:$0xf]
        %v688 = vld [vmem:[#allocation8 + $0x28] sm:$0xf]
        %v689 = vld [vmem:[#allocation8 + $0x2c] sm:$0xf]
        %v690 = vld [vmem:[#allocation8 + $0x30] sm:$0xf]
        %v691 = vld [vmem:[#allocation8 + $0x34] sm:$0xf]
        %v692 = vld [vmem:[#allocation8 + $0x38] sm:$0xf]
        %v693 = vld [vmem:[#allocation8 + $0x3c] sm:$0xf]
        %v694 = vld [vmem:[#allocation8 + $0x40] sm:$0xf]
        %v695 = vld [vmem:[#allocation8 + $0x44] sm:$0xf]
        %v696 = vld [vmem:[#allocation8 + $0x48] sm:$0xf]
        %v697 = vld [vmem:[#allocation8 + $0x4c] sm:$0xf]
        %v698 = vld [vmem:[#allocation8 + $0x50] sm:$0xf]
        %v699 = vld [vmem:[#allocation8 + $0x54] sm:$0xf]
        %v700 = vld [vmem:[#allocation8 + $0x58] sm:$0xf]
        %v701 = vld [vmem:[#allocation8 + $0x5c] sm:$0xf]
        %v702 = vld [vmem:[#allocation8 + $0x60] sm:$0xf]
        %v703 = vld [vmem:[#allocation8 + $0x64] sm:$0xf]
        %v704 = vld [vmem:[#allocation8 + $0x68] sm:$0xf]
        %v705 = vld [vmem:[#allocation8 + $0x6c] sm:$0xf]
        %v706 = vld [vmem:[#allocation8 + $0x70] sm:$0xf]
        %v707 = vld [vmem:[#allocation8 + $0x74] sm:$0xf]
        %v708 = vld [vmem:[#allocation8 + $0x78] sm:$0xf]
        %v709 = vld [vmem:[#allocation8 + $0x7c] sm:$0xf]
        %v710 = vld [vmem:[#allocation8 + $0x80] sm:$0xf]
        %v711 = vld [vmem:[#allocation8 + $0x84] sm:$0xf]
        %v712 = vld [vmem:[#allocation8 + $0x88] sm:$0xf]
        %v713 = vld [vmem:[#allocation8 + $0x8c] sm:$0xf]
        %v714 = vld [vmem:[#allocation8 + $0x90] sm:$0xf]
        %v715 = vld [vmem:[#allocation8 + $0x94] sm:$0xf]
        %v716 = vld [vmem:[#allocation8 + $0x98] sm:$0xf]
        %v717 = vld [vmem:[#allocation8 + $0x9c] sm:$0xf]
        %v718 = vld [vmem:[#allocation8 + $0xa0] sm:$0xf]
        %v719 = vld [vmem:[#allocation8 + $0xa4] sm:$0xf]
        %v720 = vld [vmem:[#allocation8 + $0xa8] sm:$0xf]
        %v721 = vld [vmem:[#allocation8 + $0xac] sm:$0xf]
        %v722 = vld [vmem:[#allocation8 + $0xb0] sm:$0xf]
        %v723 = vld [vmem:[#allocation8 + $0xb4] sm:$0xf]
        %v724 = vld [vmem:[#allocation8 + $0xb8] sm:$0xf]
        %v725 = vld [vmem:[#allocation8 + $0xbc] sm:$0xf]
        %v726 = vld [vmem:[#allocation8 + $0xc0] sm:$0xf]
        %v727 = vld [vmem:[#allocation8 + $0xc4] sm:$0xf]
        %v728 = vld [vmem:[#allocation8 + $0xc8] sm:$0xf]
        %v729 = vld [vmem:[#allocation8 + $0xcc] sm:$0xf]
        %v730 = vld [vmem:[#allocation8 + $0xd0] sm:$0xf]
        %v731 = vld [vmem:[#allocation8 + $0xd4] sm:$0xf]
        %v732 = vld [vmem:[#allocation8 + $0xd8] sm:$0xf]
        %v733 = vld [vmem:[#allocation8 + $0xdc] sm:$0xf]
        %v734 = vld [vmem:[#allocation8 + $0xe0] sm:$0xf]
        %v735 = vld [vmem:[#allocation8 + $0xe4] sm:$0xf]
        %v736 = vld [vmem:[#allocation8 + $0xe8] sm:$0xf]
        %v737 = vld [vmem:[#allocation8 + $0xec] sm:$0xf]
        %v738 = vld [vmem:[#allocation8 + $0xf0] sm:$0xf]
        %v739 = vld [vmem:[#allocation8 + $0xf4] sm:$0xf]
        %v740 = vld [vmem:[#allocation8 + $0xf8] sm:$0xf]
        %v741 = vld [vmem:[#allocation8 + $0xfc] sm:$0xf]
        %v742 = vld [vmem:[#allocation8 + $0x100] sm:$0xf]
        %v743 = vld [vmem:[#allocation8 + $0x104] sm:$0xf]
        %v744 = vld [vmem:[#allocation8 + $0x108] sm:$0xf]
        %v745 = vld [vmem:[#allocation8 + $0x10c] sm:$0xf]
        %v746 = vld [vmem:[#allocation8 + $0x110] sm:$0xf]
        %v747 = vld [vmem:[#allocation8 + $0x114] sm:$0xf]
        %v748 = vld [vmem:[#allocation8 + $0x118] sm:$0xf]
        %v749 = vld [vmem:[#allocation8 + $0x11c] sm:$0xf]
        %v750 = vld [vmem:[#allocation8 + $0x120] sm:$0xf]
        %v751 = vld [vmem:[#allocation8 + $0x124] sm:$0xf]
        %v752 = vld [vmem:[#allocation8 + $0x128] sm:$0xf]
        %v753 = vld [vmem:[#allocation8 + $0x12c] sm:$0xf]
        %v754 = vld [vmem:[#allocation8 + $0x130] sm:$0xf]
        %v755 = vld [vmem:[#allocation8 + $0x134] sm:$0xf]
        %v756 = vld [vmem:[#allocation8 + $0x138] sm:$0xf]
        %v757 = vld [vmem:[#allocation8 + $0x13c] sm:$0xf]
        %v758 = vld [vmem:[#allocation8 + $0x140] sm:$0xf]
        %v759 = vld [vmem:[#allocation8 + $0x144] sm:$0xf]
        %v760 = vld [vmem:[#allocation8 + $0x148] sm:$0xf]
        %v761 = vld [vmem:[#allocation8 + $0x14c] sm:$0xf]
        %v762 = vld [vmem:[#allocation8 + $0x150] sm:$0xf]
        %v763 = vld [vmem:[#allocation8 + $0x154] sm:$0xf]
        %v764 = vld [vmem:[#allocation8 + $0x158] sm:$0xf]
        %v765 = vld [vmem:[#allocation8 + $0x15c] sm:$0xf]
        %v766 = vld [vmem:[#allocation8 + $0x160] sm:$0xf]
        %v767 = vld [vmem:[#allocation8 + $0x164] sm:$0xf]
        %v768 = vld [vmem:[#allocation8 + $0x168] sm:$0xf]
        %v769 = vld [vmem:[#allocation8 + $0x16c] sm:$0xf]
        %v770 = vld [vmem:[#allocation8 + $0x170] sm:$0xf]
        %v771 = vld [vmem:[#allocation8 + $0x174] sm:$0xf]
        %v772 = vld [vmem:[#allocation8 + $0x178] sm:$0xf]
        %v773 = vld [vmem:[#allocation8 + $0x17c] sm:$0xf]
        %v774 = vld [vmem:[#allocation8 + $0x180] sm:$0xf]
        %v775 = vld [vmem:[#allocation8 + $0x184] sm:$0xf]
        %v776 = vld [vmem:[#allocation8 + $0x188] sm:$0xf]
        %v777 = vld [vmem:[#allocation8 + $0x18c] sm:$0xf]
        %v778 = vld [vmem:[#allocation8 + $0x190] sm:$0xf]
        %v779 = vld [vmem:[#allocation8 + $0x194] sm:$0xf]
        %v780 = vld [vmem:[#allocation8 + $0x198] sm:$0xf]
        %v781 = vld [vmem:[#allocation8 + $0x19c] sm:$0xf]
        %v782 = vld [vmem:[#allocation8 + $0x1a0] sm:$0xf]
        %v783 = vld [vmem:[#allocation8 + $0x1a4] sm:$0xf]
        %v784 = vld [vmem:[#allocation8 + $0x1a8] sm:$0xf]
        %v785 = vld [vmem:[#allocation8 + $0x1ac] sm:$0xf]
        %v786 = vld [vmem:[#allocation8 + $0x1b0] sm:$0xf]
        %v787 = vld [vmem:[#allocation8 + $0x1b4] sm:$0xf]
        %v788 = vld [vmem:[#allocation8 + $0x1b8] sm:$0xf]
        %v789 = vld [vmem:[#allocation8 + $0x1bc] sm:$0xf]
        %v790 = vld [vmem:[#allocation8 + $0x1c0] sm:$0xf]
        %v791 = vld [vmem:[#allocation8 + $0x1c4] sm:$0xf]
        %v792 = vld [vmem:[#allocation8 + $0x1c8] sm:$0xf]
        %v793 = vld [vmem:[#allocation8 + $0x1cc] sm:$0xf]
        %v794 = vld [vmem:[#allocation8 + $0x1d0] sm:$0xf]
        %v795 = vld [vmem:[#allocation8 + $0x1d4] sm:$0xf]
        %v796 = vld [vmem:[#allocation8 + $0x1d8] sm:$0xf]
        %v797 = vld [vmem:[#allocation8 + $0x1dc] sm:$0xf]
        %v798 = vld [vmem:[#allocation8 + $0x1e0] sm:$0xf]
        %v799 = vld [vmem:[#allocation8 + $0x1e4] sm:$0xf]
        %v800 = vld [vmem:[#allocation8 + $0x1e8] sm:$0xf]
        %v801 = vld [vmem:[#allocation8 + $0x1ec] sm:$0xf]
        %v802 = vld [vmem:[#allocation8 + $0x1f0] sm:$0xf]
        %v803 = vld [vmem:[#allocation8 + $0x1f4] sm:$0xf]
        %v804 = vld [vmem:[#allocation8 + $0x1f8] sm:$0xf]
        %v805 = vld [vmem:[#allocation8 + $0x1fc] sm:$0xf]
        %v806 = vld [vmem:[#allocation8 + $0x200] sm:$0xf]
        %v807 = vld [vmem:[#allocation8 + $0x204] sm:$0xf]
        %v808 = vld [vmem:[#allocation8 + $0x208] sm:$0xf]
        %v809 = vld [vmem:[#allocation8 + $0x20c] sm:$0xf]
        %v810 = vld [vmem:[#allocation8 + $0x210] sm:$0xf]
        %v811 = vld [vmem:[#allocation8 + $0x214] sm:$0xf]
        %v812 = vld [vmem:[#allocation8 + $0x218] sm:$0xf]
        %v813 = vld [vmem:[#allocation8 + $0x21c] sm:$0xf]
        %v814 = vld [vmem:[#allocation8 + $0x220] sm:$0xf]
        %v815 = vld [vmem:[#allocation8 + $0x224] sm:$0xf]
        %v816 = vld [vmem:[#allocation8 + $0x228] sm:$0xf]
        %v817 = vld [vmem:[#allocation8 + $0x22c] sm:$0xf]
        %v818 = vld [vmem:[#allocation8 + $0x230] sm:$0xf]
        %v819 = vld [vmem:[#allocation8 + $0x234] sm:$0xf]
        %v820 = vld [vmem:[#allocation8 + $0x238] sm:$0xf]
        %v821 = vld [vmem:[#allocation8 + $0x23c] sm:$0xf]
        %v822 = vld [vmem:[#allocation8 + $0x240] sm:$0xf]
        %v823 = vld [vmem:[#allocation8 + $0x244] sm:$0xf]
        %v824 = vld [vmem:[#allocation8 + $0x248] sm:$0xf]
        %v825 = vld [vmem:[#allocation8 + $0x24c] sm:$0xf]
        %v826 = vld [vmem:[#allocation8 + $0x250] sm:$0xf]
        %v827 = vld [vmem:[#allocation8 + $0x254] sm:$0xf]
        %v828 = vld [vmem:[#allocation8 + $0x258] sm:$0xf]
        %v829 = vld [vmem:[#allocation8 + $0x25c] sm:$0xf]
        %v830 = vld [vmem:[#allocation8 + $0x260] sm:$0xf]
        %v831 = vld [vmem:[#allocation8 + $0x264] sm:$0xf]
        %v832 = vld [vmem:[#allocation8 + $0x268] sm:$0xf]
        %v833 = vld [vmem:[#allocation8 + $0x26c] sm:$0xf]
        %v834 = vld [vmem:[#allocation8 + $0x270] sm:$0xf]
        %v835 = vld [vmem:[#allocation8 + $0x274] sm:$0xf]
        %v836 = vld [vmem:[#allocation8 + $0x278] sm:$0xf]
        %v837 = vld [vmem:[#allocation8 + $0x27c] sm:$0xf]
        %v838 = vld [vmem:[#allocation8 + $0x280] sm:$0xf]
        %v839 = vld [vmem:[#allocation8 + $0x284] sm:$0xf]
        %v840 = vld [vmem:[#allocation8 + $0x288] sm:$0xf]
        %v841 = vld [vmem:[#allocation8 + $0x28c] sm:$0xf]
        %v842 = vld [vmem:[#allocation8 + $0x290] sm:$0xf]
        %v843 = vld [vmem:[#allocation8 + $0x294] sm:$0xf]
        %v844 = vld [vmem:[#allocation8 + $0x298] sm:$0xf]
        %v845 = vld [vmem:[#allocation8 + $0x29c] sm:$0xf]
        %v846 = vld [vmem:[#allocation8 + $0x2a0] sm:$0xf]
        %v847 = vld [vmem:[#allocation8 + $0x2a4] sm:$0xf]
        %v848 = vld [vmem:[#allocation8 + $0x2a8] sm:$0xf]
        %v849 = vld [vmem:[#allocation8 + $0x2ac] sm:$0xf]
        %v850 = vld [vmem:[#allocation8 + $0x2b0] sm:$0xf]
        %v851 = vld [vmem:[#allocation8 + $0x2b4] sm:$0xf]
        %v852 = vld [vmem:[#allocation8 + $0x2b8] sm:$0xf]
        %v853 = vld [vmem:[#allocation8 + $0x2bc] sm:$0xf]
        %v854 = vld [vmem:[#allocation8 + $0x2c0] sm:$0xf]
        %v855 = vld [vmem:[#allocation8 + $0x2c4] sm:$0xf]
        %v856 = vld [vmem:[#allocation8 + $0x2c8] sm:$0xf]
        %v857 = vld [vmem:[#allocation8 + $0x2cc] sm:$0xf]
        %v858 = vld [vmem:[#allocation8 + $0x2d0] sm:$0xf]
        %v859 = vld [vmem:[#allocation8 + $0x2d4] sm:$0xf]
        %v860 = vld [vmem:[#allocation8 + $0x2d8] sm:$0xf]
        %v861 = vld [vmem:[#allocation8 + $0x2dc] sm:$0xf]
        %v862 = vld [vmem:[#allocation8 + $0x2e0] sm:$0xf]
        %v863 = vld [vmem:[#allocation8 + $0x2e4] sm:$0xf]
        %v864 = vld [vmem:[#allocation8 + $0x2e8] sm:$0xf]
        %v865 = vld [vmem:[#allocation8 + $0x2ec] sm:$0xf]
        %v866 = vld [vmem:[#allocation8 + $0x2f0] sm:$0xf]
        %v867 = vld [vmem:[#allocation8 + $0x2f4] sm:$0xf]
        %v868 = vld [vmem:[#allocation8 + $0x2f8] sm:$0xf]
        %v869 = vld [vmem:[#allocation8 + $0x2fc] sm:$0xf]
        %v870 = vld [vmem:[#allocation8 + $0x300] sm:$0xf]
        %v871 = vld [vmem:[#allocation8 + $0x304] sm:$0xf]
        %v872 = vld [vmem:[#allocation8 + $0x308] sm:$0xf]
        %v873 = vld [vmem:[#allocation8 + $0x30c] sm:$0xf]
        %v874 = vld [vmem:[#allocation8 + $0x310] sm:$0xf]
        %v875 = vld [vmem:[#allocation8 + $0x314] sm:$0xf]
        %v876 = vld [vmem:[#allocation8 + $0x318] sm:$0xf]
        %v877 = vld [vmem:[#allocation8 + $0x31c] sm:$0xf]
        %v878 = vld [vmem:[#allocation8 + $0x320] sm:$0xf]
        %v879 = vld [vmem:[#allocation8 + $0x324] sm:$0xf]
        %v880 = vld [vmem:[#allocation8 + $0x328] sm:$0xf]
        %v881 = vld [vmem:[#allocation8 + $0x32c] sm:$0xf]
        %v882 = vld [vmem:[#allocation8 + $0x330] sm:$0xf]
        %v883 = vld [vmem:[#allocation8 + $0x334] sm:$0xf]
        %v884 = vld [vmem:[#allocation8 + $0x338] sm:$0xf]
        %v885 = vld [vmem:[#allocation8 + $0x33c] sm:$0xf]
        %v886 = vld [vmem:[#allocation8 + $0x340] sm:$0xf]
        %v887 = vld [vmem:[#allocation8 + $0x344] sm:$0xf]
        %v888 = vld [vmem:[#allocation8 + $0x348] sm:$0xf]
        %v889 = vld [vmem:[#allocation8 + $0x34c] sm:$0xf]
        %v890 = vld [vmem:[#allocation8 + $0x350] sm:$0xf]
        %v891 = vld [vmem:[#allocation8 + $0x354] sm:$0xf]
        %v892 = vld [vmem:[#allocation8 + $0x358] sm:$0xf]
        %v893 = vld [vmem:[#allocation8 + $0x35c] sm:$0xf]
        %v894 = vld [vmem:[#allocation8 + $0x360] sm:$0xf]
        %v895 = vld [vmem:[#allocation8 + $0x364] sm:$0xf]
        %v896 = vld [vmem:[#allocation8 + $0x368] sm:$0xf]
        %v897 = vld [vmem:[#allocation8 + $0x36c] sm:$0xf]
        %v898 = vld [vmem:[#allocation8 + $0x370] sm:$0xf]
        %v899 = vld [vmem:[#allocation8 + $0x374] sm:$0xf]
        %v900 = vld [vmem:[#allocation8 + $0x378] sm:$0xf]
        %v901 = vld [vmem:[#allocation8 + $0x37c] sm:$0xf]
        %v902 = vld [vmem:[#allocation8 + $0x380] sm:$0xf]
        %v903 = vld [vmem:[#allocation8 + $0x384] sm:$0xf]
        %v904 = vld [vmem:[#allocation8 + $0x388] sm:$0xf]
        %v905 = vld [vmem:[#allocation8 + $0x38c] sm:$0xf]
        %v906 = vld [vmem:[#allocation8 + $0x390] sm:$0xf]
        %v907 = vld [vmem:[#allocation8 + $0x394] sm:$0xf]
        %v908 = vld [vmem:[#allocation8 + $0x398] sm:$0xf]
        %v909 = vld [vmem:[#allocation8 + $0x39c] sm:$0xf]
        %v910 = vld [vmem:[#allocation8 + $0x3a0] sm:$0xf]
        %v911 = vld [vmem:[#allocation8 + $0x3a4] sm:$0xf]
        %v912 = vld [vmem:[#allocation8 + $0x3a8] sm:$0xf]
        %v913 = vld [vmem:[#allocation8 + $0x3ac] sm:$0xf]
        %v914 = vld [vmem:[#allocation8 + $0x3b0] sm:$0xf]
        %v915 = vld [vmem:[#allocation8 + $0x3b4] sm:$0xf]
        %v916 = vld [vmem:[#allocation8 + $0x3b8] sm:$0xf]
        %v917 = vld [vmem:[#allocation8 + $0x3bc] sm:$0xf]
        %v918 = vld [vmem:[#allocation8 + $0x3c0] sm:$0xf]
        %v919 = vld [vmem:[#allocation8 + $0x3c4] sm:$0xf]
        %v920 = vld [vmem:[#allocation8 + $0x3c8] sm:$0xf]
        %v921 = vld [vmem:[#allocation8 + $0x3cc] sm:$0xf]
        %v922 = vld [vmem:[#allocation8 + $0x3d0] sm:$0xf]
        %v923 = vld [vmem:[#allocation8 + $0x3d4] sm:$0xf]
        %v924 = vld [vmem:[#allocation8 + $0x3d8] sm:$0xf]
        %v925 = vld [vmem:[#allocation8 + $0x3dc] sm:$0xf]
        %v926 = vld [vmem:[#allocation8 + $0x3e0] sm:$0xf]
        %v927 = vld [vmem:[#allocation8 + $0x3e4] sm:$0xf]
        %v928 = vld [vmem:[#allocation8 + $0x3e8] sm:$0xf]
        %v929 = vld [vmem:[#allocation8 + $0x3ec] sm:$0xf]
        %v930 = vld [vmem:[#allocation8 + $0x3f0] sm:$0xf]
        %v931 = vld [vmem:[#allocation8 + $0x3f4] sm:$0xf]
        %v932 = vld [vmem:[#allocation8 + $0x3f8] sm:$0xf]
        %v933 = vld [vmem:[#allocation8 + $0x3fc] sm:$0xf]
        %v934 = vld [vmem:[#allocation8 + $0x400] sm:$0xf]
        %v935 = vld [vmem:[#allocation8 + $0x404] sm:$0xf]
        %v936 = vld [vmem:[#allocation8 + $0x408] sm:$0xf]
        %v937 = vld [vmem:[#allocation8 + $0x40c] sm:$0xf]
        %v938 = vld [vmem:[#allocation8 + $0x410] sm:$0xf]
        %v939 = vld [vmem:[#allocation8 + $0x414] sm:$0xf]
        %v940 = vld [vmem:[#allocation8 + $0x418] sm:$0xf]
        %v941 = vld [vmem:[#allocation8 + $0x41c] sm:$0xf]
        %v942 = vld [vmem:[#allocation8 + $0x420] sm:$0xf]
        %v943 = vld [vmem:[#allocation8 + $0x424] sm:$0xf]
        %v944 = vld [vmem:[#allocation8 + $0x428] sm:$0xf]
        %v945 = vld [vmem:[#allocation8 + $0x42c] sm:$0xf]
        %v946 = vld [vmem:[#allocation8 + $0x430] sm:$0xf]
        %v947 = vld [vmem:[#allocation8 + $0x434] sm:$0xf]
        %v948 = vld [vmem:[#allocation8 + $0x438] sm:$0xf]
        %v949 = vld [vmem:[#allocation8 + $0x43c] sm:$0xf]
        %v950 = vld [vmem:[#allocation8 + $0x440] sm:$0xf]
        %v951 = vld [vmem:[#allocation8 + $0x444] sm:$0xf]
        %v952 = vld [vmem:[#allocation8 + $0x448] sm:$0xf]
        %v953 = vld [vmem:[#allocation8 + $0x44c] sm:$0xf]
        %v954 = vld [vmem:[#allocation8 + $0x450] sm:$0xf]
        %v955 = vld [vmem:[#allocation8 + $0x454] sm:$0xf]
        %v956 = vld [vmem:[#allocation8 + $0x458] sm:$0xf]
        %v957 = vld [vmem:[#allocation8 + $0x45c] sm:$0xf]
        %v958 = vld [vmem:[#allocation8 + $0x460] sm:$0xf]
        %v959 = vld [vmem:[#allocation8 + $0x464] sm:$0xf]
        %v960 = vld [vmem:[#allocation8 + $0x468] sm:$0xf]
        %v961 = vld [vmem:[#allocation8 + $0x46c] sm:$0xf]
        %v962 = vld [vmem:[#allocation8 + $0x470] sm:$0xf]
        %v963 = vld [vmem:[#allocation8 + $0x474] sm:$0xf]
        %v964 = vld [vmem:[#allocation8 + $0x478] sm:$0xf]
        %v965 = vld [vmem:[#allocation8 + $0x47c] sm:$0xf]
        %v966 = vld [vmem:[#allocation8 + $0x480] sm:$0xf]
        %v967 = vld [vmem:[#allocation8 + $0x484] sm:$0xf]
        %v968 = vld [vmem:[#allocation8 + $0x488] sm:$0xf]
        %v969 = vld [vmem:[#allocation8 + $0x48c] sm:$0xf]
        %v970 = vld [vmem:[#allocation8 + $0x490] sm:$0xf]
        %v971 = vld [vmem:[#allocation8 + $0x494] sm:$0xf]
        %v972 = vld [vmem:[#allocation8 + $0x498] sm:$0xf]
        %v973 = vld [vmem:[#allocation8 + $0x49c] sm:$0xf]
        %v974 = vld [vmem:[#allocation8 + $0x4a0] sm:$0xf]
        %v975 = vld [vmem:[#allocation8 + $0x4a4] sm:$0xf]
        %v976 = vld [vmem:[#allocation8 + $0x4a8] sm:$0xf]
        %v977 = vld [vmem:[#allocation8 + $0x4ac] sm:$0xf]
        %v978 = vld [vmem:[#allocation8 + $0x4b0] sm:$0xf]
        %v979 = vld [vmem:[#allocation8 + $0x4b4] sm:$0xf]
        %v980 = vld [vmem:[#allocation8 + $0x4b8] sm:$0xf]
        %v981 = vld [vmem:[#allocation8 + $0x4bc] sm:$0xf]
        %v982 = vld [vmem:[#allocation8 + $0x4c0] sm:$0xf]
        %v983 = vld [vmem:[#allocation8 + $0x4c4] sm:$0xf]
        %v984 = vld [vmem:[#allocation8 + $0x4c8] sm:$0xf]
        %v985 = vld [vmem:[#allocation8 + $0x4cc] sm:$0xf]
        %v986 = vld [vmem:[#allocation8 + $0x4d0] sm:$0xf]
        %v987 = vld [vmem:[#allocation8 + $0x4d4] sm:$0xf]
        %v988 = vld [vmem:[#allocation8 + $0x4d8] sm:$0xf]
        %v989 = vld [vmem:[#allocation8 + $0x4dc] sm:$0xf]
        %v990 = vld [vmem:[#allocation8 + $0x4e0] sm:$0xf]
        %v991 = vld [vmem:[#allocation8 + $0x4e4] sm:$0xf]
        %v992 = vld [vmem:[#allocation8 + $0x4e8] sm:$0xf]
        %v993 = vld [vmem:[#allocation8 + $0x4ec] sm:$0xf]
        %v994 = vld [vmem:[#allocation8 + $0x4f0] sm:$0xf]
        %v995 = vld [vmem:[#allocation8 + $0x4f4] sm:$0xf]
        %v996 = vld [vmem:[#allocation8 + $0x4f8] sm:$0xf]
        %v997 = vld [vmem:[#allocation8 + $0x4fc] sm:$0xf]
        %v998 = vld [vmem:[#allocation8 + $0x500] sm:$0xf]
        %v999 = vld [vmem:[#allocation8 + $0x504] sm:$0xf]
        %v1000 = vld [vmem:[#allocation8 + $0x508] sm:$0xf]
        %v1001 = vld [vmem:[#allocation8 + $0x50c] sm:$0xf]
        %v1002 = vld [vmem:[#allocation8 + $0x510] sm:$0xf]
        %v1003 = vld [vmem:[#allocation8 + $0x514] sm:$0xf]
        %v1004 = vld [vmem:[#allocation8 + $0x518] sm:$0xf]
        %v1005 = vld [vmem:[#allocation8 + $0x51c] sm:$0xf]
        %v1006 = vld [vmem:[#allocation8 + $0x520] sm:$0xf]
        %v1007 = vld [vmem:[#allocation8 + $0x524] sm:$0xf]
        %v1008 = vld [vmem:[#allocation8 + $0x528] sm:$0xf]
        %v1009 = vld [vmem:[#allocation8 + $0x52c] sm:$0xf]
        %v1010 = vld [vmem:[#allocation8 + $0x530] sm:$0xf]
        %v1011 = vld [vmem:[#allocation8 + $0x534] sm:$0xf]
        %v1012 = vld [vmem:[#allocation8 + $0x538] sm:$0xf]
        %v1013 = vld [vmem:[#allocation8 + $0x53c] sm:$0xf]
        %v1014 = vld [vmem:[#allocation8 + $0x540] sm:$0xf]
        %v1015 = vld [vmem:[#allocation8 + $0x544] sm:$0xf]
        %v1016 = vld [vmem:[#allocation8 + $0x548] sm:$0xf]
        %v1017 = vld [vmem:[#allocation8 + $0x54c] sm:$0xf]
        %v1018 = vld [vmem:[#allocation8 + $0x550] sm:$0xf]
        %v1019 = vld [vmem:[#allocation8 + $0x554] sm:$0xf]
        %v1020 = vld [vmem:[#allocation8 + $0x558] sm:$0xf]
        %v1021 = vld [vmem:[#allocation8 + $0x55c] sm:$0xf]
        %v1022 = vld [vmem:[#allocation8 + $0x560] sm:$0xf]
        %v1023 = vld [vmem:[#allocation8 + $0x564] sm:$0xf]
        %v1024 = vld [vmem:[#allocation8 + $0x568] sm:$0xf]
        %v1025 = vld [vmem:[#allocation8 + $0x56c] sm:$0xf]
        %v1026 = vld [vmem:[#allocation8 + $0x570] sm:$0xf]
        %v1027 = vld [vmem:[#allocation8 + $0x574] sm:$0xf]
        %v1028 = vld [vmem:[#allocation8 + $0x578] sm:$0xf]
        %v1029 = vld [vmem:[#allocation8 + $0x57c] sm:$0xf]
        %v1030 = vld [vmem:[#allocation8 + $0x580] sm:$0xf]
        %v1031 = vld [vmem:[#allocation8 + $0x584] sm:$0xf]
        %v1032 = vld [vmem:[#allocation8 + $0x588] sm:$0xf]
        %v1033 = vld [vmem:[#allocation8 + $0x58c] sm:$0xf]
        %v1034 = vld [vmem:[#allocation8 + $0x590] sm:$0xf]
        %v1035 = vld [vmem:[#allocation8 + $0x594] sm:$0xf]
        %v1036 = vld [vmem:[#allocation8 + $0x598] sm:$0xf]
        %v1037 = vld [vmem:[#allocation8 + $0x59c] sm:$0xf]
        %v1038 = vld [vmem:[#allocation8 + $0x5a0] sm:$0xf]
        %v1039 = vld [vmem:[#allocation8 + $0x5a4] sm:$0xf]
        %v1040 = vld [vmem:[#allocation8 + $0x5a8] sm:$0xf]
        %v1041 = vld [vmem:[#allocation8 + $0x5ac] sm:$0xf]
        %v1042 = vld [vmem:[#allocation8 + $0x5b0] sm:$0xf]
        %v1043 = vld [vmem:[#allocation8 + $0x5b4] sm:$0xf]
        %v1044 = vld [vmem:[#allocation8 + $0x5b8] sm:$0xf]
        %v1045 = vld [vmem:[#allocation8 + $0x5bc] sm:$0xf]
        %v1046 = vld [vmem:[#allocation8 + $0x5c0] sm:$0xf]
        %v1047 = vld [vmem:[#allocation8 + $0x5c4] sm:$0xf]
        %v1048 = vld [vmem:[#allocation8 + $0x5c8] sm:$0xf]
        %v1049 = vld [vmem:[#allocation8 + $0x5cc] sm:$0xf]
        %v1050 = vld [vmem:[#allocation8 + $0x5d0] sm:$0xf]
        %v1051 = vld [vmem:[#allocation8 + $0x5d4] sm:$0xf]
        %v1052 = vld [vmem:[#allocation8 + $0x5d8] sm:$0xf]
        %v1053 = vld [vmem:[#allocation8 + $0x5dc] sm:$0xf]
        %v1054 = vld [vmem:[#allocation8 + $0x5e0] sm:$0xf]
        %v1055 = vld [vmem:[#allocation8 + $0x5e4] sm:$0xf]
        %v1056 = vld [vmem:[#allocation8 + $0x5e8] sm:$0xf]
        %v1057 = vld [vmem:[#allocation8 + $0x5ec] sm:$0xf]
        %v1058 = vld [vmem:[#allocation8 + $0x5f0] sm:$0xf]
        %v1059 = vld [vmem:[#allocation8 + $0x5f4] sm:$0xf]
        %v1060 = vld [vmem:[#allocation8 + $0x5f8] sm:$0xf]
        %v1061 = vld [vmem:[#allocation8 + $0x5fc] sm:$0xf]
        %v1062 = vld [vmem:[#allocation8 + $0x600] sm:$0xf]
        %v1063 = vld [vmem:[#allocation8 + $0x604] sm:$0xf]
        %v1064 = vld [vmem:[#allocation8 + $0x608] sm:$0xf]
        %v1065 = vld [vmem:[#allocation8 + $0x60c] sm:$0xf]
        %v1066 = vld [vmem:[#allocation8 + $0x610] sm:$0xf]
        %v1067 = vld [vmem:[#allocation8 + $0x614] sm:$0xf]
        %v1068 = vld [vmem:[#allocation8 + $0x618] sm:$0xf]
        %v1069 = vld [vmem:[#allocation8 + $0x61c] sm:$0xf]
        %v1070 = vld [vmem:[#allocation8 + $0x620] sm:$0xf]
        %v1071 = vld [vmem:[#allocation8 + $0x624] sm:$0xf]
        %v1072 = vld [vmem:[#allocation8 + $0x628] sm:$0xf]
        %v1073 = vld [vmem:[#allocation8 + $0x62c] sm:$0xf]
        %v1074 = vld [vmem:[#allocation8 + $0x630] sm:$0xf]
        %v1075 = vld [vmem:[#allocation8 + $0x634] sm:$0xf]
        %v1076 = vld [vmem:[#allocation8 + $0x638] sm:$0xf]
        %v1077 = vld [vmem:[#allocation8 + $0x63c] sm:$0xf]
        %v1078 = vld [vmem:[#allocation8 + $0x640] sm:$0xf]
        %v1079 = vld [vmem:[#allocation8 + $0x644] sm:$0xf]
        %v1080 = vld [vmem:[#allocation8 + $0x648] sm:$0xf]
        %v1081 = vld [vmem:[#allocation8 + $0x64c] sm:$0xf]
        %v1082 = vld [vmem:[#allocation8 + $0x650] sm:$0xf]
        %v1083 = vld [vmem:[#allocation8 + $0x654] sm:$0xf]
        %v1084 = vld [vmem:[#allocation8 + $0x658] sm:$0xf]
        %v1085 = vld [vmem:[#allocation8 + $0x65c] sm:$0xf]
        %v1086 = vld [vmem:[#allocation8 + $0x660] sm:$0xf]
        %v1087 = vld [vmem:[#allocation8 + $0x664] sm:$0xf]
        %v1088 = vld [vmem:[#allocation8 + $0x668] sm:$0xf]
        %v1089 = vld [vmem:[#allocation8 + $0x66c] sm:$0xf]
        %v1090 = vld [vmem:[#allocation8 + $0x670] sm:$0xf]
        %v1091 = vld [vmem:[#allocation8 + $0x674] sm:$0xf]
        %v1092 = vld [vmem:[#allocation8 + $0x678] sm:$0xf]
        %v1093 = vld [vmem:[#allocation8 + $0x67c] sm:$0xf]
        %v1094 = vld [vmem:[#allocation8 + $0x680] sm:$0xf]
        %v1095 = vld [vmem:[#allocation8 + $0x684] sm:$0xf]
        %v1096 = vld [vmem:[#allocation8 + $0x688] sm:$0xf]
        %v1097 = vld [vmem:[#allocation8 + $0x68c] sm:$0xf]
        %v1098 = vld [vmem:[#allocation8 + $0x690] sm:$0xf]
        %v1099 = vld [vmem:[#allocation8 + $0x694] sm:$0xf]
        %v1100 = vld [vmem:[#allocation8 + $0x698] sm:$0xf]
        %v1101 = vld [vmem:[#allocation8 + $0x69c] sm:$0xf]
        %v1102 = vld [vmem:[#allocation8 + $0x6a0] sm:$0xf]
        %v1103 = vld [vmem:[#allocation8 + $0x6a4] sm:$0xf]
        %v1104 = vld [vmem:[#allocation8 + $0x6a8] sm:$0xf]
        %v1105 = vld [vmem:[#allocation8 + $0x6ac] sm:$0xf]
        %v1106 = vld [vmem:[#allocation8 + $0x6b0] sm:$0xf]
        %v1107 = vld [vmem:[#allocation8 + $0x6b4] sm:$0xf]
        %v1108 = vld [vmem:[#allocation8 + $0x6b8] sm:$0xf]
        %v1109 = vld [vmem:[#allocation8 + $0x6bc] sm:$0xf]
        %v1110 = vld [vmem:[#allocation8 + $0x6c0] sm:$0xf]
        %v1111 = vld [vmem:[#allocation8 + $0x6c4] sm:$0xf]
        %v1112 = vld [vmem:[#allocation8 + $0x6c8] sm:$0xf]
        %v1113 = vld [vmem:[#allocation8 + $0x6cc] sm:$0xf]
        %v1114 = vld [vmem:[#allocation8 + $0x6d0] sm:$0xf]
        %v1115 = vld [vmem:[#allocation8 + $0x6d4] sm:$0xf]
        %v1116 = vld [vmem:[#allocation8 + $0x6d8] sm:$0xf]
        %v1117 = vld [vmem:[#allocation8 + $0x6dc] sm:$0xf]
        %v1118 = vld [vmem:[#allocation8 + $0x6e0] sm:$0xf]
        %v1119 = vld [vmem:[#allocation8 + $0x6e4] sm:$0xf]
        %v1120 = vld [vmem:[#allocation8 + $0x6e8] sm:$0xf]
        %v1121 = vld [vmem:[#allocation8 + $0x6ec] sm:$0xf]
        %v1122 = vld [vmem:[#allocation8 + $0x6f0] sm:$0xf]
        %v1123 = vld [vmem:[#allocation8 + $0x6f4] sm:$0xf]
        %v1124 = vld [vmem:[#allocation8 + $0x6f8] sm:$0xf]
        %v1125 = vld [vmem:[#allocation8 + $0x6fc] sm:$0xf]
        %v1126 = vld [vmem:[#allocation8 + $0x700] sm:$0xf]
        %v1127 = vld [vmem:[#allocation8 + $0x704] sm:$0xf]
        %v1128 = vld [vmem:[#allocation8 + $0x708] sm:$0xf]
        %v1129 = vld [vmem:[#allocation8 + $0x70c] sm:$0xf]
        %v1130 = vld [vmem:[#allocation8 + $0x710] sm:$0xf]
        %v1131 = vld [vmem:[#allocation8 + $0x714] sm:$0xf]
        %v1132 = vld [vmem:[#allocation8 + $0x718] sm:$0xf]
        %v1133 = vld [vmem:[#allocation8 + $0x71c] sm:$0xf]
        %v1134 = vld [vmem:[#allocation8 + $0x720] sm:$0xf]
        %v1135 = vld [vmem:[#allocation8 + $0x724] sm:$0xf]
        %v1136 = vld [vmem:[#allocation8 + $0x728] sm:$0xf]
        %v1137 = vld [vmem:[#allocation8 + $0x72c] sm:$0xf]
        %v1138 = vld [vmem:[#allocation8 + $0x730] sm:$0xf]
        %v1139 = vld [vmem:[#allocation8 + $0x734] sm:$0xf]
        %v1140 = vld [vmem:[#allocation8 + $0x738] sm:$0xf]
        %v1141 = vld [vmem:[#allocation8 + $0x73c] sm:$0xf]
        %v1142 = vld [vmem:[#allocation8 + $0x740] sm:$0xf]
        %v1143 = vld [vmem:[#allocation8 + $0x744] sm:$0xf]
        %v1144 = vld [vmem:[#allocation8 + $0x748] sm:$0xf]
        %v1145 = vld [vmem:[#allocation8 + $0x74c] sm:$0xf]
        %v1146 = vld [vmem:[#allocation8 + $0x750] sm:$0xf]
        %v1147 = vld [vmem:[#allocation8 + $0x754] sm:$0xf]
        %v1148 = vld [vmem:[#allocation8 + $0x758] sm:$0xf]
        %v1149 = vld [vmem:[#allocation8 + $0x75c] sm:$0xf]
        %v1150 = vld [vmem:[#allocation8 + $0x760] sm:$0xf]
        %v1151 = vld [vmem:[#allocation8 + $0x764] sm:$0xf]
        %v1152 = vld [vmem:[#allocation8 + $0x768] sm:$0xf]
        %v1153 = vld [vmem:[#allocation8 + $0x76c] sm:$0xf]
        %v1154 = vld [vmem:[#allocation8 + $0x770] sm:$0xf]
        %v1155 = vld [vmem:[#allocation8 + $0x774] sm:$0xf]
        %v1156 = vld [vmem:[#allocation8 + $0x778] sm:$0xf]
        %v1157 = vld [vmem:[#allocation8 + $0x77c] sm:$0xf]
        %v1158 = vld [vmem:[#allocation8 + $0x780] sm:$0xf]
        %v1159 = vld [vmem:[#allocation8 + $0x784] sm:$0xf]
        %v1160 = vld [vmem:[#allocation8 + $0x788] sm:$0xf]
        %v1161 = vld [vmem:[#allocation8 + $0x78c] sm:$0xf]
        %v1162 = vld [vmem:[#allocation8 + $0x790] sm:$0xf]
        %v1163 = vld [vmem:[#allocation8 + $0x794] sm:$0xf]
        %v1164 = vld [vmem:[#allocation8 + $0x798] sm:$0xf]
        %v1165 = vld [vmem:[#allocation8 + $0x79c] sm:$0xf]
        %v1166 = vld [vmem:[#allocation8 + $0x7a0] sm:$0xf]
        %v1167 = vld [vmem:[#allocation8 + $0x7a4] sm:$0xf]
        %v1168 = vld [vmem:[#allocation8 + $0x7a8] sm:$0xf]
        %v1169 = vld [vmem:[#allocation8 + $0x7ac] sm:$0xf]
        %v1170 = vld [vmem:[#allocation8 + $0x7b0] sm:$0xf]
        %v1171 = vld [vmem:[#allocation8 + $0x7b4] sm:$0xf]
        %v1172 = vld [vmem:[#allocation8 + $0x7b8] sm:$0xf]
        %v1173 = vld [vmem:[#allocation8 + $0x7bc] sm:$0xf]
        %v1174 = vld [vmem:[#allocation8 + $0x7c0] sm:$0xf]
        %v1175 = vld [vmem:[#allocation8 + $0x7c4] sm:$0xf]
        %v1176 = vld [vmem:[#allocation8 + $0x7c8] sm:$0xf]
        %v1177 = vld [vmem:[#allocation8 + $0x7cc] sm:$0xf]
        %v1178 = vld [vmem:[#allocation8 + $0x7d0] sm:$0xf]
        %v1179 = vld [vmem:[#allocation8 + $0x7d4] sm:$0xf]
        %v1180 = vld [vmem:[#allocation8 + $0x7d8] sm:$0xf]
        %v1181 = vld [vmem:[#allocation8 + $0x7dc] sm:$0xf]
        %v1182 = vld [vmem:[#allocation8 + $0x7e0] sm:$0xf]
        %v1183 = vld [vmem:[#allocation8 + $0x7e4] sm:$0xf]
        %v1184 = vld [vmem:[#allocation8 + $0x7e8] sm:$0xf]
        %v1185 = vld [vmem:[#allocation8 + $0x7ec] sm:$0xf]
        %v1186 = vld [vmem:[#allocation8 + $0x7f0] sm:$0xf]
        %v1187 = vld [vmem:[#allocation8 + $0x7f4] sm:$0xf]
        %v1188 = vld [vmem:[#allocation8 + $0x7f8] sm:$0xf]
        %v1189 = vld [vmem:[#allocation8 + $0x7fc] sm:$0xf]
        %v1190 = vld [vmem:[#allocation8 + $0x800] sm:$0x7]
        %v1704 = vunpack.c.l.b16 %v678
        %v1705 = vunpack.c.l.b16 %v679
        %v1706 = vunpack.c.l.b16 %v680
        %v1707 = vunpack.c.l.b16 %v681
        %v1708 = vunpack.c.l.b16 %v682
        %v1709 = vunpack.c.l.b16 %v683
        %v1710 = vunpack.c.l.b16 %v684
        %v1711 = vunpack.c.l.b16 %v685
        %v1712 = vunpack.c.l.b16 %v686
        %v1713 = vunpack.c.l.b16 %v687
        %v1714 = vunpack.c.l.b16 %v688
        %v1715 = vunpack.c.l.b16 %v689
        %v1716 = vunpack.c.l.b16 %v690
        %v1717 = vunpack.c.l.b16 %v691
        %v1718 = vunpack.c.l.b16 %v692
        %v1719 = vunpack.c.l.b16 %v693
        %v1720 = vunpack.c.l.b16 %v694
        %v1721 = vunpack.c.l.b16 %v695
        %v1722 = vunpack.c.l.b16 %v696
        %v1723 = vunpack.c.l.b16 %v697
        %v1724 = vunpack.c.l.b16 %v698
        %v1725 = vunpack.c.l.b16 %v699
        %v1726 = vunpack.c.l.b16 %v700
        %v1727 = vunpack.c.l.b16 %v701
        %v1728 = vunpack.c.l.b16 %v702
        %v1729 = vunpack.c.l.b16 %v703
        %v1730 = vunpack.c.l.b16 %v704
        %v1731 = vunpack.c.l.b16 %v705
        %v1732 = vunpack.c.l.b16 %v706
        %v1733 = vunpack.c.l.b16 %v707
        %v1734 = vunpack.c.l.b16 %v708
        %v1735 = vunpack.c.l.b16 %v709
        %v1736 = vunpack.c.l.b16 %v710
        %v1737 = vunpack.c.l.b16 %v711
        %v1738 = vunpack.c.l.b16 %v712
        %v1739 = vunpack.c.l.b16 %v713
        %v1740 = vunpack.c.l.b16 %v714
        %v1741 = vunpack.c.l.b16 %v715
        %v1742 = vunpack.c.l.b16 %v716
        %v1743 = vunpack.c.l.b16 %v717
        %v1744 = vunpack.c.l.b16 %v718
        %v1745 = vunpack.c.l.b16 %v719
        %v1746 = vunpack.c.l.b16 %v720
        %v1747 = vunpack.c.l.b16 %v721
        %v1748 = vunpack.c.l.b16 %v722
        %v1749 = vunpack.c.l.b16 %v723
        %v1750 = vunpack.c.l.b16 %v724
        %v1751 = vunpack.c.l.b16 %v725
        %v1752 = vunpack.c.l.b16 %v726
        %v1753 = vunpack.c.l.b16 %v727
        %v1754 = vunpack.c.l.b16 %v728
        %v1755 = vunpack.c.l.b16 %v729
        %v1756 = vunpack.c.l.b16 %v730
        %v1757 = vunpack.c.l.b16 %v731
        %v1758 = vunpack.c.l.b16 %v732
        %v1759 = vunpack.c.l.b16 %v733
        %v1760 = vunpack.c.l.b16 %v734
        %v1761 = vunpack.c.l.b16 %v735
        %v1762 = vunpack.c.l.b16 %v736
        %v1763 = vunpack.c.l.b16 %v737
        %v1764 = vunpack.c.l.b16 %v738
        %v1765 = vunpack.c.l.b16 %v739
        %v1766 = vunpack.c.l.b16 %v740
        %v1767 = vunpack.c.l.b16 %v741
        %v1768 = vunpack.c.l.b16 %v742
        %v1769 = vunpack.c.l.b16 %v743
        %v1770 = vunpack.c.l.b16 %v744
        %v1771 = vunpack.c.l.b16 %v745
        %v1772 = vunpack.c.l.b16 %v746
        %v1773 = vunpack.c.l.b16 %v747
        %v1774 = vunpack.c.l.b16 %v748
        %v1775 = vunpack.c.l.b16 %v749
        %v1776 = vunpack.c.l.b16 %v750
        %v1777 = vunpack.c.l.b16 %v751
        %v1778 = vunpack.c.l.b16 %v752
        %v1779 = vunpack.c.l.b16 %v753
        %v1780 = vunpack.c.l.b16 %v754
        %v1781 = vunpack.c.l.b16 %v755
        %v1782 = vunpack.c.l.b16 %v756
        %v1783 = vunpack.c.l.b16 %v757
        %v1784 = vunpack.c.l.b16 %v758
        %v1785 = vunpack.c.l.b16 %v759
        %v1786 = vunpack.c.l.b16 %v760
        %v1787 = vunpack.c.l.b16 %v761
        %v1788 = vunpack.c.l.b16 %v762
        %v1789 = vunpack.c.l.b16 %v763
        %v1790 = vunpack.c.l.b16 %v764
        %v1791 = vunpack.c.l.b16 %v765
        %v1792 = vunpack.c.l.b16 %v766
        %v1793 = vunpack.c.l.b16 %v767
        %v1794 = vunpack.c.l.b16 %v768
        %v1795 = vunpack.c.l.b16 %v769
        %v1796 = vunpack.c.l.b16 %v770
        %v1797 = vunpack.c.l.b16 %v771
        %v1798 = vunpack.c.l.b16 %v772
        %v1799 = vunpack.c.l.b16 %v773
        %v1800 = vunpack.c.l.b16 %v774
        %v1801 = vunpack.c.l.b16 %v775
        %v1802 = vunpack.c.l.b16 %v776
        %v1803 = vunpack.c.l.b16 %v777
        %v1804 = vunpack.c.l.b16 %v778
        %v1805 = vunpack.c.l.b16 %v779
        %v1806 = vunpack.c.l.b16 %v780
        %v1807 = vunpack.c.l.b16 %v781
        %v1808 = vunpack.c.l.b16 %v782
        %v1809 = vunpack.c.l.b16 %v783
        %v1810 = vunpack.c.l.b16 %v784
        %v1811 = vunpack.c.l.b16 %v785
        %v1812 = vunpack.c.l.b16 %v786
        %v1813 = vunpack.c.l.b16 %v787
        %v1814 = vunpack.c.l.b16 %v788
        %v1815 = vunpack.c.l.b16 %v789
        %v1816 = vunpack.c.l.b16 %v790
        %v1817 = vunpack.c.l.b16 %v791
        %v1818 = vunpack.c.l.b16 %v792
        %v1819 = vunpack.c.l.b16 %v793
        %v1820 = vunpack.c.l.b16 %v794
        %v1821 = vunpack.c.l.b16 %v795
        %v1822 = vunpack.c.l.b16 %v796
        %v1823 = vunpack.c.l.b16 %v797
        %v1824 = vunpack.c.l.b16 %v798
        %v1825 = vunpack.c.l.b16 %v799
        %v1826 = vunpack.c.l.b16 %v800
        %v1827 = vunpack.c.l.b16 %v801
        %v1828 = vunpack.c.l.b16 %v802
        %v1829 = vunpack.c.l.b16 %v803
        %v1830 = vunpack.c.l.b16 %v804
        %v1831 = vunpack.c.l.b16 %v805
        %v1832 = vunpack.c.l.b16 %v806
        %v1833 = vunpack.c.l.b16 %v807
        %v1834 = vunpack.c.l.b16 %v808
        %v1835 = vunpack.c.l.b16 %v809
        %v1836 = vunpack.c.l.b16 %v810
        %v1837 = vunpack.c.l.b16 %v811
        %v1838 = vunpack.c.l.b16 %v812
        %v1839 = vunpack.c.l.b16 %v813
        %v1840 = vunpack.c.l.b16 %v814
        %v1841 = vunpack.c.l.b16 %v815
        %v1842 = vunpack.c.l.b16 %v816
        %v1843 = vunpack.c.l.b16 %v817
        %v1844 = vunpack.c.l.b16 %v818
        %v1845 = vunpack.c.l.b16 %v819
        %v1846 = vunpack.c.l.b16 %v820
        %v1847 = vunpack.c.l.b16 %v821
        %v1848 = vunpack.c.l.b16 %v822
        %v1849 = vunpack.c.l.b16 %v823
        %v1850 = vunpack.c.l.b16 %v824
        %v1851 = vunpack.c.l.b16 %v825
        %v1852 = vunpack.c.l.b16 %v826
        %v1853 = vunpack.c.l.b16 %v827
        %v1854 = vunpack.c.l.b16 %v828
        %v1855 = vunpack.c.l.b16 %v829
        %v1856 = vunpack.c.l.b16 %v830
        %v1857 = vunpack.c.l.b16 %v831
        %v1858 = vunpack.c.l.b16 %v832
        %v1859 = vunpack.c.l.b16 %v833
        %v1860 = vunpack.c.l.b16 %v834
        %v1861 = vunpack.c.l.b16 %v835
        %v1862 = vunpack.c.l.b16 %v836
        %v1863 = vunpack.c.l.b16 %v837
        %v1864 = vunpack.c.l.b16 %v838
        %v1865 = vunpack.c.l.b16 %v839
        %v1866 = vunpack.c.l.b16 %v840
        %v1867 = vunpack.c.l.b16 %v841
        %v1868 = vunpack.c.l.b16 %v842
        %v1869 = vunpack.c.l.b16 %v843
        %v1870 = vunpack.c.l.b16 %v844
        %v1871 = vunpack.c.l.b16 %v845
        %v1872 = vunpack.c.l.b16 %v846
        %v1873 = vunpack.c.l.b16 %v847
        %v1874 = vunpack.c.l.b16 %v848
        %v1875 = vunpack.c.l.b16 %v849
        %v1876 = vunpack.c.l.b16 %v850
        %v1877 = vunpack.c.l.b16 %v851
        %v1878 = vunpack.c.l.b16 %v852
        %v1879 = vunpack.c.l.b16 %v853
        %v1880 = vunpack.c.l.b16 %v854
        %v1881 = vunpack.c.l.b16 %v855
        %v1882 = vunpack.c.l.b16 %v856
        %v1883 = vunpack.c.l.b16 %v857
        %v1884 = vunpack.c.l.b16 %v858
        %v1885 = vunpack.c.l.b16 %v859
        %v1886 = vunpack.c.l.b16 %v860
        %v1887 = vunpack.c.l.b16 %v861
        %v1888 = vunpack.c.l.b16 %v862
        %v1889 = vunpack.c.l.b16 %v863
        %v1890 = vunpack.c.l.b16 %v864
        %v1891 = vunpack.c.l.b16 %v865
        %v1892 = vunpack.c.l.b16 %v866
        %v1893 = vunpack.c.l.b16 %v867
        %v1894 = vunpack.c.l.b16 %v868
        %v1895 = vunpack.c.l.b16 %v869
        %v1896 = vunpack.c.l.b16 %v870
        %v1897 = vunpack.c.l.b16 %v871
        %v1898 = vunpack.c.l.b16 %v872
        %v1899 = vunpack.c.l.b16 %v873
        %v1900 = vunpack.c.l.b16 %v874
        %v1901 = vunpack.c.l.b16 %v875
        %v1902 = vunpack.c.l.b16 %v876
        %v1903 = vunpack.c.l.b16 %v877
        %v1904 = vunpack.c.l.b16 %v878
        %v1905 = vunpack.c.l.b16 %v879
        %v1906 = vunpack.c.l.b16 %v880
        %v1907 = vunpack.c.l.b16 %v881
        %v1908 = vunpack.c.l.b16 %v882
        %v1909 = vunpack.c.l.b16 %v883
        %v1910 = vunpack.c.l.b16 %v884
        %v1911 = vunpack.c.l.b16 %v885
        %v1912 = vunpack.c.l.b16 %v886
        %v1913 = vunpack.c.l.b16 %v887
        %v1914 = vunpack.c.l.b16 %v888
        %v1915 = vunpack.c.l.b16 %v889
        %v1916 = vunpack.c.l.b16 %v890
        %v1917 = vunpack.c.l.b16 %v891
        %v1918 = vunpack.c.l.b16 %v892
        %v1919 = vunpack.c.l.b16 %v893
        %v1920 = vunpack.c.l.b16 %v894
        %v1921 = vunpack.c.l.b16 %v895
        %v1922 = vunpack.c.l.b16 %v896
        %v1923 = vunpack.c.l.b16 %v897
        %v1924 = vunpack.c.l.b16 %v898
        %v1925 = vunpack.c.l.b16 %v899
        %v1926 = vunpack.c.l.b16 %v900
        %v1927 = vunpack.c.l.b16 %v901
        %v1928 = vunpack.c.l.b16 %v902
        %v1929 = vunpack.c.l.b16 %v903
        %v1930 = vunpack.c.l.b16 %v904
        %v1931 = vunpack.c.l.b16 %v905
        %v1932 = vunpack.c.l.b16 %v906
        %v1933 = vunpack.c.l.b16 %v907
        %v1934 = vunpack.c.l.b16 %v908
        %v1935 = vunpack.c.l.b16 %v909
        %v1936 = vunpack.c.l.b16 %v910
        %v1937 = vunpack.c.l.b16 %v911
        %v1938 = vunpack.c.l.b16 %v912
        %v1939 = vunpack.c.l.b16 %v913
        %v1940 = vunpack.c.l.b16 %v914
        %v1941 = vunpack.c.l.b16 %v915
        %v1942 = vunpack.c.l.b16 %v916
        %v1943 = vunpack.c.l.b16 %v917
        %v1944 = vunpack.c.l.b16 %v918
        %v1945 = vunpack.c.l.b16 %v919
        %v1946 = vunpack.c.l.b16 %v920
        %v1947 = vunpack.c.l.b16 %v921
        %v1948 = vunpack.c.l.b16 %v922
        %v1949 = vunpack.c.l.b16 %v923
        %v1950 = vunpack.c.l.b16 %v924
        %v1951 = vunpack.c.l.b16 %v925
        %v1952 = vunpack.c.l.b16 %v926
        %v1953 = vunpack.c.l.b16 %v927
        %v1954 = vunpack.c.l.b16 %v928
        %v1955 = vunpack.c.l.b16 %v929
        %v1956 = vunpack.c.l.b16 %v930
        %v1957 = vunpack.c.l.b16 %v931
        %v1958 = vunpack.c.l.b16 %v932
        %v1959 = vunpack.c.l.b16 %v933
        %v1960 = vunpack.c.l.b16 %v934
        %v1961 = vunpack.c.l.b16 %v935
        %v1962 = vunpack.c.l.b16 %v936
        %v1963 = vunpack.c.l.b16 %v937
        %v1964 = vunpack.c.l.b16 %v938
        %v1965 = vunpack.c.l.b16 %v939
        %v1966 = vunpack.c.l.b16 %v940
        %v1967 = vunpack.c.l.b16 %v941
        %v1968 = vunpack.c.l.b16 %v942
        %v1969 = vunpack.c.l.b16 %v943
        %v1970 = vunpack.c.l.b16 %v944
        %v1971 = vunpack.c.l.b16 %v945
        %v1972 = vunpack.c.l.b16 %v946
        %v1973 = vunpack.c.l.b16 %v947
        %v1974 = vunpack.c.l.b16 %v948
        %v1975 = vunpack.c.l.b16 %v949
        %v1976 = vunpack.c.l.b16 %v950
        %v1977 = vunpack.c.l.b16 %v951
        %v1978 = vunpack.c.l.b16 %v952
        %v1979 = vunpack.c.l.b16 %v953
        %v1980 = vunpack.c.l.b16 %v954
        %v1981 = vunpack.c.l.b16 %v955
        %v1982 = vunpack.c.l.b16 %v956
        %v1983 = vunpack.c.l.b16 %v957
        %v1984 = vunpack.c.l.b16 %v958
        %v1985 = vunpack.c.l.b16 %v959
        %v1986 = vunpack.c.l.b16 %v960
        %v1987 = vunpack.c.l.b16 %v961
        %v1988 = vunpack.c.l.b16 %v962
        %v1989 = vunpack.c.l.b16 %v963
        %v1990 = vunpack.c.l.b16 %v964
        %v1991 = vunpack.c.l.b16 %v965
        %v1992 = vunpack.c.l.b16 %v966
        %v1993 = vunpack.c.l.b16 %v967
        %v1994 = vunpack.c.l.b16 %v968
        %v1995 = vunpack.c.l.b16 %v969
        %v1996 = vunpack.c.l.b16 %v970
        %v1997 = vunpack.c.l.b16 %v971
        %v1998 = vunpack.c.l.b16 %v972
        %v1999 = vunpack.c.l.b16 %v973
        %v2000 = vunpack.c.l.b16 %v974
        %v2001 = vunpack.c.l.b16 %v975
        %v2002 = vunpack.c.l.b16 %v976
        %v2003 = vunpack.c.l.b16 %v977
        %v2004 = vunpack.c.l.b16 %v978
        %v2005 = vunpack.c.l.b16 %v979
        %v2006 = vunpack.c.l.b16 %v980
        %v2007 = vunpack.c.l.b16 %v981
        %v2008 = vunpack.c.l.b16 %v982
        %v2009 = vunpack.c.l.b16 %v983
        %v2010 = vunpack.c.l.b16 %v984
        %v2011 = vunpack.c.l.b16 %v985
        %v2012 = vunpack.c.l.b16 %v986
        %v2013 = vunpack.c.l.b16 %v987
        %v2014 = vunpack.c.l.b16 %v988
        %v2015 = vunpack.c.l.b16 %v989
        %v2016 = vunpack.c.l.b16 %v990
        %v2017 = vunpack.c.l.b16 %v991
        %v2018 = vunpack.c.l.b16 %v992
        %v2019 = vunpack.c.l.b16 %v993
        %v2020 = vunpack.c.l.b16 %v994
        %v2021 = vunpack.c.l.b16 %v995
        %v2022 = vunpack.c.l.b16 %v996
        %v2023 = vunpack.c.l.b16 %v997
        %v2024 = vunpack.c.l.b16 %v998
        %v2025 = vunpack.c.l.b16 %v999
        %v2026 = vunpack.c.l.b16 %v1000
        %v2027 = vunpack.c.l.b16 %v1001
        %v2028 = vunpack.c.l.b16 %v1002
        %v2029 = vunpack.c.l.b16 %v1003
        %v2030 = vunpack.c.l.b16 %v1004
        %v2031 = vunpack.c.l.b16 %v1005
        %v2032 = vunpack.c.l.b16 %v1006
        %v2033 = vunpack.c.l.b16 %v1007
        %v2034 = vunpack.c.l.b16 %v1008
        %v2035 = vunpack.c.l.b16 %v1009
        %v2036 = vunpack.c.l.b16 %v1010
        %v2037 = vunpack.c.l.b16 %v1011
        %v2038 = vunpack.c.l.b16 %v1012
        %v2039 = vunpack.c.l.b16 %v1013
        %v2040 = vunpack.c.l.b16 %v1014
        %v2041 = vunpack.c.l.b16 %v1015
        %v2042 = vunpack.c.l.b16 %v1016
        %v2043 = vunpack.c.l.b16 %v1017
        %v2044 = vunpack.c.l.b16 %v1018
        %v2045 = vunpack.c.l.b16 %v1019
        %v2046 = vunpack.c.l.b16 %v1020
        %v2047 = vunpack.c.l.b16 %v1021
        %v2048 = vunpack.c.l.b16 %v1022
        %v2049 = vunpack.c.l.b16 %v1023
        %v2050 = vunpack.c.l.b16 %v1024
        %v2051 = vunpack.c.l.b16 %v1025
        %v2052 = vunpack.c.l.b16 %v1026
        %v2053 = vunpack.c.l.b16 %v1027
        %v2054 = vunpack.c.l.b16 %v1028
        %v2055 = vunpack.c.l.b16 %v1029
        %v2056 = vunpack.c.l.b16 %v1030
        %v2057 = vunpack.c.l.b16 %v1031
        %v2058 = vunpack.c.l.b16 %v1032
        %v2059 = vunpack.c.l.b16 %v1033
        %v2060 = vunpack.c.l.b16 %v1034
        %v2061 = vunpack.c.l.b16 %v1035
        %v2062 = vunpack.c.l.b16 %v1036
        %v2063 = vunpack.c.l.b16 %v1037
        %v2064 = vunpack.c.l.b16 %v1038
        %v2065 = vunpack.c.l.b16 %v1039
        %v2066 = vunpack.c.l.b16 %v1040
        %v2067 = vunpack.c.l.b16 %v1041
        %v2068 = vunpack.c.l.b16 %v1042
        %v2069 = vunpack.c.l.b16 %v1043
        %v2070 = vunpack.c.l.b16 %v1044
        %v2071 = vunpack.c.l.b16 %v1045
        %v2072 = vunpack.c.l.b16 %v1046
        %v2073 = vunpack.c.l.b16 %v1047
        %v2074 = vunpack.c.l.b16 %v1048
        %v2075 = vunpack.c.l.b16 %v1049
        %v2076 = vunpack.c.l.b16 %v1050
        %v2077 = vunpack.c.l.b16 %v1051
        %v2078 = vunpack.c.l.b16 %v1052
        %v2079 = vunpack.c.l.b16 %v1053
        %v2080 = vunpack.c.l.b16 %v1054
        %v2081 = vunpack.c.l.b16 %v1055
        %v2082 = vunpack.c.l.b16 %v1056
        %v2083 = vunpack.c.l.b16 %v1057
        %v2084 = vunpack.c.l.b16 %v1058
        %v2085 = vunpack.c.l.b16 %v1059
        %v2086 = vunpack.c.l.b16 %v1060
        %v2087 = vunpack.c.l.b16 %v1061
        %v2088 = vunpack.c.l.b16 %v1062
        %v2089 = vunpack.c.l.b16 %v1063
        %v2090 = vunpack.c.l.b16 %v1064
        %v2091 = vunpack.c.l.b16 %v1065
        %v2092 = vunpack.c.l.b16 %v1066
        %v2093 = vunpack.c.l.b16 %v1067
        %v2094 = vunpack.c.l.b16 %v1068
        %v2095 = vunpack.c.l.b16 %v1069
        %v2096 = vunpack.c.l.b16 %v1070
        %v2097 = vunpack.c.l.b16 %v1071
        %v2098 = vunpack.c.l.b16 %v1072
        %v2099 = vunpack.c.l.b16 %v1073
        %v2100 = vunpack.c.l.b16 %v1074
        %v2101 = vunpack.c.l.b16 %v1075
        %v2102 = vunpack.c.l.b16 %v1076
        %v2103 = vunpack.c.l.b16 %v1077
        %v2104 = vunpack.c.l.b16 %v1078
        %v2105 = vunpack.c.l.b16 %v1079
        %v2106 = vunpack.c.l.b16 %v1080
        %v2107 = vunpack.c.l.b16 %v1081
        %v2108 = vunpack.c.l.b16 %v1082
        %v2109 = vunpack.c.l.b16 %v1083
        %v2110 = vunpack.c.l.b16 %v1084
        %v2111 = vunpack.c.l.b16 %v1085
        %v2112 = vunpack.c.l.b16 %v1086
        %v2113 = vunpack.c.l.b16 %v1087
        %v2114 = vunpack.c.l.b16 %v1088
        %v2115 = vunpack.c.l.b16 %v1089
        %v2116 = vunpack.c.l.b16 %v1090
        %v2117 = vunpack.c.l.b16 %v1091
        %v2118 = vunpack.c.l.b16 %v1092
        %v2119 = vunpack.c.l.b16 %v1093
        %v2120 = vunpack.c.l.b16 %v1094
        %v2121 = vunpack.c.l.b16 %v1095
        %v2122 = vunpack.c.l.b16 %v1096
        %v2123 = vunpack.c.l.b16 %v1097
        %v2124 = vunpack.c.l.b16 %v1098
        %v2125 = vunpack.c.l.b16 %v1099
        %v2126 = vunpack.c.l.b16 %v1100
        %v2127 = vunpack.c.l.b16 %v1101
        %v2128 = vunpack.c.l.b16 %v1102
        %v2129 = vunpack.c.l.b16 %v1103
        %v2130 = vunpack.c.l.b16 %v1104
        %v2131 = vunpack.c.l.b16 %v1105
        %v2132 = vunpack.c.l.b16 %v1106
        %v2133 = vunpack.c.l.b16 %v1107
        %v2134 = vunpack.c.l.b16 %v1108
        %v2135 = vunpack.c.l.b16 %v1109
        %v2136 = vunpack.c.l.b16 %v1110
        %v2137 = vunpack.c.l.b16 %v1111
        %v2138 = vunpack.c.l.b16 %v1112
        %v2139 = vunpack.c.l.b16 %v1113
        %v2140 = vunpack.c.l.b16 %v1114
        %v2141 = vunpack.c.l.b16 %v1115
        %v2142 = vunpack.c.l.b16 %v1116
        %v2143 = vunpack.c.l.b16 %v1117
        %v2144 = vunpack.c.l.b16 %v1118
        %v2145 = vunpack.c.l.b16 %v1119
        %v2146 = vunpack.c.l.b16 %v1120
        %v2147 = vunpack.c.l.b16 %v1121
        %v2148 = vunpack.c.l.b16 %v1122
        %v2149 = vunpack.c.l.b16 %v1123
        %v2150 = vunpack.c.l.b16 %v1124
        %v2151 = vunpack.c.l.b16 %v1125
        %v2152 = vunpack.c.l.b16 %v1126
        %v2153 = vunpack.c.l.b16 %v1127
        %v2154 = vunpack.c.l.b16 %v1128
        %v2155 = vunpack.c.l.b16 %v1129
        %v2156 = vunpack.c.l.b16 %v1130
        %v2157 = vunpack.c.l.b16 %v1131
        %v2158 = vunpack.c.l.b16 %v1132
        %v2159 = vunpack.c.l.b16 %v1133
        %v2160 = vunpack.c.l.b16 %v1134
        %v2161 = vunpack.c.l.b16 %v1135
        %v2162 = vunpack.c.l.b16 %v1136
        %v2163 = vunpack.c.l.b16 %v1137
        %v2164 = vunpack.c.l.b16 %v1138
        %v2165 = vunpack.c.l.b16 %v1139
        %v2166 = vunpack.c.l.b16 %v1140
        %v2167 = vunpack.c.l.b16 %v1141
        %v2168 = vunpack.c.l.b16 %v1142
        %v2169 = vunpack.c.l.b16 %v1143
        %v2170 = vunpack.c.l.b16 %v1144
        %v2171 = vunpack.c.l.b16 %v1145
        %v2172 = vunpack.c.l.b16 %v1146
        %v2173 = vunpack.c.l.b16 %v1147
        %v2174 = vunpack.c.l.b16 %v1148
        %v2175 = vunpack.c.l.b16 %v1149
        %v2176 = vunpack.c.l.b16 %v1150
        %v2177 = vunpack.c.l.b16 %v1151
        %v2178 = vunpack.c.l.b16 %v1152
        %v2179 = vunpack.c.l.b16 %v1153
        %v2180 = vunpack.c.l.b16 %v1154
        %v2181 = vunpack.c.l.b16 %v1155
        %v2182 = vunpack.c.l.b16 %v1156
        %v2183 = vunpack.c.l.b16 %v1157
        %v2184 = vunpack.c.l.b16 %v1158
        %v2185 = vunpack.c.l.b16 %v1159
        %v2186 = vunpack.c.l.b16 %v1160
        %v2187 = vunpack.c.l.b16 %v1161
        %v2188 = vunpack.c.l.b16 %v1162
        %v2189 = vunpack.c.l.b16 %v1163
        %v2190 = vunpack.c.l.b16 %v1164
        %v2191 = vunpack.c.l.b16 %v1165
        %v2192 = vunpack.c.l.b16 %v1166
        %v2193 = vunpack.c.l.b16 %v1167
        %v2194 = vunpack.c.l.b16 %v1168
        %v2195 = vunpack.c.l.b16 %v1169
        %v2196 = vunpack.c.l.b16 %v1170
        %v2197 = vunpack.c.l.b16 %v1171
        %v2198 = vunpack.c.l.b16 %v1172
        %v2199 = vunpack.c.l.b16 %v1173
        %v2200 = vunpack.c.l.b16 %v1174
        %v2201 = vunpack.c.l.b16 %v1175
        %v2202 = vunpack.c.l.b16 %v1176
        %v2203 = vunpack.c.l.b16 %v1177
        %v2204 = vunpack.c.l.b16 %v1178
        %v2205 = vunpack.c.l.b16 %v1179
        %v2206 = vunpack.c.l.b16 %v1180
        %v2207 = vunpack.c.l.b16 %v1181
        %v2208 = vunpack.c.l.b16 %v1182
        %v2209 = vunpack.c.l.b16 %v1183
        %v2210 = vunpack.c.l.b16 %v1184
        %v2211 = vunpack.c.l.b16 %v1185
        %v2212 = vunpack.c.l.b16 %v1186
        %v2213 = vunpack.c.l.b16 %v1187
        %v2214 = vunpack.c.l.b16 %v1188
        %v2215 = vunpack.c.l.b16 %v1189
        %v2216 = vunpack.c.l.b16 %v1190
        %v2217 = vpack.c.b16 %v1705, %v1704
        %v2218 = vpack.c.b16 %v1707, %v1706
        %v2219 = vpack.c.b16 %v1709, %v1708
        %v2220 = vpack.c.b16 %v1711, %v1710
        %v2221 = vpack.c.b16 %v1713, %v1712
        %v2222 = vpack.c.b16 %v1715, %v1714
        %v2223 = vpack.c.b16 %v1717, %v1716
        %v2224 = vpack.c.b16 %v1719, %v1718
        %v2225 = vpack.c.b16 %v1721, %v1720
        %v2226 = vpack.c.b16 %v1723, %v1722
        %v2227 = vpack.c.b16 %v1725, %v1724
        %v2228 = vpack.c.b16 %v1727, %v1726
        %v2229 = vpack.c.b16 %v1729, %v1728
        %v2230 = vpack.c.b16 %v1731, %v1730
        %v2231 = vpack.c.b16 %v1733, %v1732
        %v2232 = vpack.c.b16 %v1735, %v1734
        %v2233 = vpack.c.b16 %v1737, %v1736
        %v2234 = vpack.c.b16 %v1739, %v1738
        %v2235 = vpack.c.b16 %v1741, %v1740
        %v2236 = vpack.c.b16 %v1743, %v1742
        %v2237 = vpack.c.b16 %v1745, %v1744
        %v2238 = vpack.c.b16 %v1747, %v1746
        %v2239 = vpack.c.b16 %v1749, %v1748
        %v2240 = vpack.c.b16 %v1751, %v1750
        %v2241 = vpack.c.b16 %v1753, %v1752
        %v2242 = vpack.c.b16 %v1755, %v1754
        %v2243 = vpack.c.b16 %v1757, %v1756
        %v2244 = vpack.c.b16 %v1759, %v1758
        %v2245 = vpack.c.b16 %v1761, %v1760
        %v2246 = vpack.c.b16 %v1763, %v1762
        %v2247 = vpack.c.b16 %v1765, %v1764
        %v2248 = vpack.c.b16 %v1767, %v1766
        %v2249 = vpack.c.b16 %v1769, %v1768
        %v2250 = vpack.c.b16 %v1771, %v1770
        %v2251 = vpack.c.b16 %v1773, %v1772
        %v2252 = vpack.c.b16 %v1775, %v1774
        %v2253 = vpack.c.b16 %v1777, %v1776
        %v2254 = vpack.c.b16 %v1779, %v1778
        %v2255 = vpack.c.b16 %v1781, %v1780
        %v2256 = vpack.c.b16 %v1783, %v1782
        %v2257 = vpack.c.b16 %v1785, %v1784
        %v2258 = vpack.c.b16 %v1787, %v1786
        %v2259 = vpack.c.b16 %v1789, %v1788
        %v2260 = vpack.c.b16 %v1791, %v1790
        %v2261 = vpack.c.b16 %v1793, %v1792
        %v2262 = vpack.c.b16 %v1795, %v1794
        %v2263 = vpack.c.b16 %v1797, %v1796
        %v2264 = vpack.c.b16 %v1799, %v1798
        %v2265 = vpack.c.b16 %v1801, %v1800
        %v2266 = vpack.c.b16 %v1803, %v1802
        %v2267 = vpack.c.b16 %v1805, %v1804
        %v2268 = vpack.c.b16 %v1807, %v1806
        %v2269 = vpack.c.b16 %v1809, %v1808
        %v2270 = vpack.c.b16 %v1811, %v1810
        %v2271 = vpack.c.b16 %v1813, %v1812
        %v2272 = vpack.c.b16 %v1815, %v1814
        %v2273 = vpack.c.b16 %v1817, %v1816
        %v2274 = vpack.c.b16 %v1819, %v1818
        %v2275 = vpack.c.b16 %v1821, %v1820
        %v2276 = vpack.c.b16 %v1823, %v1822
        %v2277 = vpack.c.b16 %v1825, %v1824
        %v2278 = vpack.c.b16 %v1827, %v1826
        %v2279 = vpack.c.b16 %v1829, %v1828
        %v2280 = vpack.c.b16 %v1831, %v1830
        %v2281 = vpack.c.b16 %v1833, %v1832
        %v2282 = vpack.c.b16 %v1835, %v1834
        %v2283 = vpack.c.b16 %v1837, %v1836
        %v2284 = vpack.c.b16 %v1839, %v1838
        %v2285 = vpack.c.b16 %v1841, %v1840
        %v2286 = vpack.c.b16 %v1843, %v1842
        %v2287 = vpack.c.b16 %v1845, %v1844
        %v2288 = vpack.c.b16 %v1847, %v1846
        %v2289 = vpack.c.b16 %v1849, %v1848
        %v2290 = vpack.c.b16 %v1851, %v1850
        %v2291 = vpack.c.b16 %v1853, %v1852
        %v2292 = vpack.c.b16 %v1855, %v1854
        %v2293 = vpack.c.b16 %v1857, %v1856
        %v2294 = vpack.c.b16 %v1859, %v1858
        %v2295 = vpack.c.b16 %v1861, %v1860
        %v2296 = vpack.c.b16 %v1863, %v1862
        %v2297 = vpack.c.b16 %v1865, %v1864
        %v2298 = vpack.c.b16 %v1867, %v1866
        %v2299 = vpack.c.b16 %v1869, %v1868
        %v2300 = vpack.c.b16 %v1871, %v1870
        %v2301 = vpack.c.b16 %v1873, %v1872
        %v2302 = vpack.c.b16 %v1875, %v1874
        %v2303 = vpack.c.b16 %v1877, %v1876
        %v2304 = vpack.c.b16 %v1879, %v1878
        %v2305 = vpack.c.b16 %v1881, %v1880
        %v2306 = vpack.c.b16 %v1883, %v1882
        %v2307 = vpack.c.b16 %v1885, %v1884
        %v2308 = vpack.c.b16 %v1887, %v1886
        %v2309 = vpack.c.b16 %v1889, %v1888
        %v2310 = vpack.c.b16 %v1891, %v1890
        %v2311 = vpack.c.b16 %v1893, %v1892
        %v2312 = vpack.c.b16 %v1895, %v1894
        %v2313 = vpack.c.b16 %v1897, %v1896
        %v2314 = vpack.c.b16 %v1899, %v1898
        %v2315 = vpack.c.b16 %v1901, %v1900
        %v2316 = vpack.c.b16 %v1903, %v1902
        %v2317 = vpack.c.b16 %v1905, %v1904
        %v2318 = vpack.c.b16 %v1907, %v1906
        %v2319 = vpack.c.b16 %v1909, %v1908
        %v2320 = vpack.c.b16 %v1911, %v1910
        %v2321 = vpack.c.b16 %v1913, %v1912
        %v2322 = vpack.c.b16 %v1915, %v1914
        %v2323 = vpack.c.b16 %v1917, %v1916
        %v2324 = vpack.c.b16 %v1919, %v1918
        %v2325 = vpack.c.b16 %v1921, %v1920
        %v2326 = vpack.c.b16 %v1923, %v1922
        %v2327 = vpack.c.b16 %v1925, %v1924
        %v2328 = vpack.c.b16 %v1927, %v1926
        %v2329 = vpack.c.b16 %v1929, %v1928
        %v2330 = vpack.c.b16 %v1931, %v1930
        %v2331 = vpack.c.b16 %v1933, %v1932
        %v2332 = vpack.c.b16 %v1935, %v1934
        %v2333 = vpack.c.b16 %v1937, %v1936
        %v2334 = vpack.c.b16 %v1939, %v1938
        %v2335 = vpack.c.b16 %v1941, %v1940
        %v2336 = vpack.c.b16 %v1943, %v1942
        %v2337 = vpack.c.b16 %v1945, %v1944
        %v2338 = vpack.c.b16 %v1947, %v1946
        %v2339 = vpack.c.b16 %v1949, %v1948
        %v2340 = vpack.c.b16 %v1951, %v1950
        %v2341 = vpack.c.b16 %v1953, %v1952
        %v2342 = vpack.c.b16 %v1955, %v1954
        %v2343 = vpack.c.b16 %v1957, %v1956
        %v2344 = vpack.c.b16 %v1959, %v1958
        %v2345 = vpack.c.b16 %v1961, %v1960
        %v2346 = vpack.c.b16 %v1963, %v1962
        %v2347 = vpack.c.b16 %v1965, %v1964
        %v2348 = vpack.c.b16 %v1967, %v1966
        %v2349 = vpack.c.b16 %v1969, %v1968
        %v2350 = vpack.c.b16 %v1971, %v1970
        %v2351 = vpack.c.b16 %v1973, %v1972
        %v2352 = vpack.c.b16 %v1975, %v1974
        %v2353 = vpack.c.b16 %v1977, %v1976
        %v2354 = vpack.c.b16 %v1979, %v1978
        %v2355 = vpack.c.b16 %v1981, %v1980
        %v2356 = vpack.c.b16 %v1983, %v1982
        %v2357 = vpack.c.b16 %v1985, %v1984
        %v2358 = vpack.c.b16 %v1987, %v1986
        %v2359 = vpack.c.b16 %v1989, %v1988
        %v2360 = vpack.c.b16 %v1991, %v1990
        %v2361 = vpack.c.b16 %v1993, %v1992
        %v2362 = vpack.c.b16 %v1995, %v1994
        %v2363 = vpack.c.b16 %v1997, %v1996
        %v2364 = vpack.c.b16 %v1999, %v1998
        %v2365 = vpack.c.b16 %v2001, %v2000
        %v2366 = vpack.c.b16 %v2003, %v2002
        %v2367 = vpack.c.b16 %v2005, %v2004
        %v2368 = vpack.c.b16 %v2007, %v2006
        %v2369 = vpack.c.b16 %v2009, %v2008
        %v2370 = vpack.c.b16 %v2011, %v2010
        %v2371 = vpack.c.b16 %v2013, %v2012
        %v2372 = vpack.c.b16 %v2015, %v2014
        %v2373 = vpack.c.b16 %v2017, %v2016
        %v2374 = vpack.c.b16 %v2019, %v2018
        %v2375 = vpack.c.b16 %v2021, %v2020
        %v2376 = vpack.c.b16 %v2023, %v2022
        %v2377 = vpack.c.b16 %v2025, %v2024
        %v2378 = vpack.c.b16 %v2027, %v2026
        %v2379 = vpack.c.b16 %v2029, %v2028
        %v2380 = vpack.c.b16 %v2031, %v2030
        %v2381 = vpack.c.b16 %v2033, %v2032
        %v2382 = vpack.c.b16 %v2035, %v2034
        %v2383 = vpack.c.b16 %v2037, %v2036
        %v2384 = vpack.c.b16 %v2039, %v2038
        %v2385 = vpack.c.b16 %v2041, %v2040
        %v2386 = vpack.c.b16 %v2043, %v2042
        %v2387 = vpack.c.b16 %v2045, %v2044
        %v2388 = vpack.c.b16 %v2047, %v2046
        %v2389 = vpack.c.b16 %v2049, %v2048
        %v2390 = vpack.c.b16 %v2051, %v2050
        %v2391 = vpack.c.b16 %v2053, %v2052
        %v2392 = vpack.c.b16 %v2055, %v2054
        %v2393 = vpack.c.b16 %v2057, %v2056
        %v2394 = vpack.c.b16 %v2059, %v2058
        %v2395 = vpack.c.b16 %v2061, %v2060
        %v2396 = vpack.c.b16 %v2063, %v2062
        %v2397 = vpack.c.b16 %v2065, %v2064
        %v2398 = vpack.c.b16 %v2067, %v2066
        %v2399 = vpack.c.b16 %v2069, %v2068
        %v2400 = vpack.c.b16 %v2071, %v2070
        %v2401 = vpack.c.b16 %v2073, %v2072
        %v2402 = vpack.c.b16 %v2075, %v2074
        %v2403 = vpack.c.b16 %v2077, %v2076
        %v2404 = vpack.c.b16 %v2079, %v2078
        %v2405 = vpack.c.b16 %v2081, %v2080
        %v2406 = vpack.c.b16 %v2083, %v2082
        %v2407 = vpack.c.b16 %v2085, %v2084
        %v2408 = vpack.c.b16 %v2087, %v2086
        %v2409 = vpack.c.b16 %v2089, %v2088
        %v2410 = vpack.c.b16 %v2091, %v2090
        %v2411 = vpack.c.b16 %v2093, %v2092
        %v2412 = vpack.c.b16 %v2095, %v2094
        %v2413 = vpack.c.b16 %v2097, %v2096
        %v2414 = vpack.c.b16 %v2099, %v2098
        %v2415 = vpack.c.b16 %v2101, %v2100
        %v2416 = vpack.c.b16 %v2103, %v2102
        %v2417 = vpack.c.b16 %v2105, %v2104
        %v2418 = vpack.c.b16 %v2107, %v2106
        %v2419 = vpack.c.b16 %v2109, %v2108
        %v2420 = vpack.c.b16 %v2111, %v2110
        %v2421 = vpack.c.b16 %v2113, %v2112
        %v2422 = vpack.c.b16 %v2115, %v2114
        %v2423 = vpack.c.b16 %v2117, %v2116
        %v2424 = vpack.c.b16 %v2119, %v2118
        %v2425 = vpack.c.b16 %v2121, %v2120
        %v2426 = vpack.c.b16 %v2123, %v2122
        %v2427 = vpack.c.b16 %v2125, %v2124
        %v2428 = vpack.c.b16 %v2127, %v2126
        %v2429 = vpack.c.b16 %v2129, %v2128
        %v2430 = vpack.c.b16 %v2131, %v2130
        %v2431 = vpack.c.b16 %v2133, %v2132
        %v2432 = vpack.c.b16 %v2135, %v2134
        %v2433 = vpack.c.b16 %v2137, %v2136
        %v2434 = vpack.c.b16 %v2139, %v2138
        %v2435 = vpack.c.b16 %v2141, %v2140
        %v2436 = vpack.c.b16 %v2143, %v2142
        %v2437 = vpack.c.b16 %v2145, %v2144
        %v2438 = vpack.c.b16 %v2147, %v2146
        %v2439 = vpack.c.b16 %v2149, %v2148
        %v2440 = vpack.c.b16 %v2151, %v2150
        %v2441 = vpack.c.b16 %v2153, %v2152
        %v2442 = vpack.c.b16 %v2155, %v2154
        %v2443 = vpack.c.b16 %v2157, %v2156
        %v2444 = vpack.c.b16 %v2159, %v2158
        %v2445 = vpack.c.b16 %v2161, %v2160
        %v2446 = vpack.c.b16 %v2163, %v2162
        %v2447 = vpack.c.b16 %v2165, %v2164
        %v2448 = vpack.c.b16 %v2167, %v2166
        %v2449 = vpack.c.b16 %v2169, %v2168
        %v2450 = vpack.c.b16 %v2171, %v2170
        %v2451 = vpack.c.b16 %v2173, %v2172
        %v2452 = vpack.c.b16 %v2175, %v2174
        %v2453 = vpack.c.b16 %v2177, %v2176
        %v2454 = vpack.c.b16 %v2179, %v2178
        %v2455 = vpack.c.b16 %v2181, %v2180
        %v2456 = vpack.c.b16 %v2183, %v2182
        %v2457 = vpack.c.b16 %v2185, %v2184
        %v2458 = vpack.c.b16 %v2187, %v2186
        %v2459 = vpack.c.b16 %v2189, %v2188
        %v2460 = vpack.c.b16 %v2191, %v2190
        %v2461 = vpack.c.b16 %v2193, %v2192
        %v2462 = vpack.c.b16 %v2195, %v2194
        %v2463 = vpack.c.b16 %v2197, %v2196
        %v2464 = vpack.c.b16 %v2199, %v2198
        %v2465 = vpack.c.b16 %v2201, %v2200
        %v2466 = vpack.c.b16 %v2203, %v2202
        %v2467 = vpack.c.b16 %v2205, %v2204
        %v2468 = vpack.c.b16 %v2207, %v2206
        %v2469 = vpack.c.b16 %v2209, %v2208
        %v2470 = vpack.c.b16 %v2211, %v2210
        %v2471 = vpack.c.b16 %v2213, %v2212
        %v2472 = vpack.c.b16 %v2215, %v2214
        %v2473 = vpack.c.b16 %v2216, %v2216
        %vm2730 = vcmask 39936
        %v2732 = vsel %vm2730, %v677, 0
        %vm2734 = vcmask 1041408
        %vm2735 = vcmask 1042432
        %v2736 = vsel %vm2734, 4294967295, 65535
        %v2737 = vsel %vm2735, %v2736, 0
        %v2739 = vand.u32 %v2473, %v2737
        %2741 = vmatpush.bf16.msra.mxu0 %v2224
        %2742 = vmatpush.bf16.msra.mxu0 %v2223
        %2743 = vmatpush.bf16.msra.mxu0 %v2222
        %2744 = vmatpush.bf16.msra.mxu0 %v2221
        %2745 = vmatpush.bf16.msra.mxu0 %v2220
        %2746 = vmatpush.bf16.msra.mxu0 %v2219
        %2747 = vmatpush.bf16.msra.mxu0 %v2218
        %2748 = vmatpush.bf16.msra.mxu0 %v2217
        %2749 = vmatmul.bf16.gmra.mxu0 %v645
        %v2750 = vpop.f32.mrf.mxu0
        %v2751 = vadd.f32 0.0, %v2750
        %v2752 = vpop.f32.mrf.mxu0
        %2753 = vdwg.mxu0
        %2754 = vmatpush.bf16.msra.mxu0 %v2232
        %2755 = vmatpush.bf16.msra.mxu0 %v2231
        %2756 = vmatpush.bf16.msra.mxu0 %v2230
        %2757 = vmatpush.bf16.msra.mxu0 %v2229
        %2758 = vmatpush.bf16.msra.mxu0 %v2228
        %2759 = vmatpush.bf16.msra.mxu0 %v2227
        %2760 = vmatpush.bf16.msra.mxu0 %v2226
        %2761 = vmatpush.bf16.msra.mxu0 %v2225
        %2762 = vmatmul.bf16.gmra.mxu0 %v646
        %v2763 = vpop.f32.mrf.mxu0
        %v2764 = vadd.f32 %v2751, %v2763
        %v2765 = vpop.f32.mrf.mxu0
        %2766 = vdwg.mxu0
        %2767 = vmatpush.bf16.msra.mxu0 %v2240
        %2768 = vmatpush.bf16.msra.mxu0 %v2239
        %2769 = vmatpush.bf16.msra.mxu0 %v2238
        %2770 = vmatpush.bf16.msra.mxu0 %v2237
        %2771 = vmatpush.bf16.msra.mxu0 %v2236
        %2772 = vmatpush.bf16.msra.mxu0 %v2235
        %2773 = vmatpush.bf16.msra.mxu0 %v2234
        %2774 = vmatpush.bf16.msra.mxu0 %v2233
        %2775 = vmatmul.bf16.gmra.mxu0 %v647
        %v2776 = vpop.f32.mrf.mxu0
        %v2777 = vadd.f32 %v2764, %v2776
        %v2778 = vpop.f32.mrf.mxu0
        %2779 = vdwg.mxu0
        %2780 = vmatpush.bf16.msra.mxu0 %v2248
        %2781 = vmatpush.bf16.msra.mxu0 %v2247
        %2782 = vmatpush.bf16.msra.mxu0 %v2246
        %2783 = vmatpush.bf16.msra.mxu0 %v2245
        %2784 = vmatpush.bf16.msra.mxu0 %v2244
        %2785 = vmatpush.bf16.msra.mxu0 %v2243
        %2786 = vmatpush.bf16.msra.mxu0 %v2242
        %2787 = vmatpush.bf16.msra.mxu0 %v2241
        %2788 = vmatmul.bf16.gmra.mxu0 %v648
        %v2789 = vpop.f32.mrf.mxu0
        %v2790 = vadd.f32 %v2777, %v2789
        %v2791 = vpop.f32.mrf.mxu0
        %2792 = vdwg.mxu0
        %2793 = vmatpush.bf16.msra.mxu0 %v2256
        %2794 = vmatpush.bf16.msra.mxu0 %v2255
        %2795 = vmatpush.bf16.msra.mxu0 %v2254
        %2796 = vmatpush.bf16.msra.mxu0 %v2253
        %2797 = vmatpush.bf16.msra.mxu0 %v2252
        %2798 = vmatpush.bf16.msra.mxu0 %v2251
        %2799 = vmatpush.bf16.msra.mxu0 %v2250
        %2800 = vmatpush.bf16.msra.mxu0 %v2249
        %2801 = vmatmul.bf16.gmra.mxu0 %v649
        %v2802 = vpop.f32.mrf.mxu0
        %v2803 = vadd.f32 %v2790, %v2802
        %v2804 = vpop.f32.mrf.mxu0
        %2805 = vdwg.mxu0
        %2806 = vmatpush.bf16.msra.mxu0 %v2264
        %2807 = vmatpush.bf16.msra.mxu0 %v2263
        %2808 = vmatpush.bf16.msra.mxu0 %v2262
        %2809 = vmatpush.bf16.msra.mxu0 %v2261
        %2810 = vmatpush.bf16.msra.mxu0 %v2260
        %2811 = vmatpush.bf16.msra.mxu0 %v2259
        %2812 = vmatpush.bf16.msra.mxu0 %v2258
        %2813 = vmatpush.bf16.msra.mxu0 %v2257
        %2814 = vmatmul.bf16.gmra.mxu0 %v650
        %v2815 = vpop.f32.mrf.mxu0
        %v2816 = vadd.f32 %v2803, %v2815
        %v2817 = vpop.f32.mrf.mxu0
        %2818 = vdwg.mxu0
        %2819 = vmatpush.bf16.msra.mxu0 %v2272
        %2820 = vmatpush.bf16.msra.mxu0 %v2271
        %2821 = vmatpush.bf16.msra.mxu0 %v2270
        %2822 = vmatpush.bf16.msra.mxu0 %v2269
        %2823 = vmatpush.bf16.msra.mxu0 %v2268
        %2824 = vmatpush.bf16.msra.mxu0 %v2267
        %2825 = vmatpush.bf16.msra.mxu0 %v2266
        %2826 = vmatpush.bf16.msra.mxu0 %v2265
        %2827 = vmatmul.bf16.gmra.mxu0 %v651
        %v2828 = vpop.f32.mrf.mxu0
        %v2829 = vadd.f32 %v2816, %v2828
        %v2830 = vpop.f32.mrf.mxu0
        %2831 = vdwg.mxu0
        %2832 = vmatpush.bf16.msra.mxu0 %v2280
        %2833 = vmatpush.bf16.msra.mxu0 %v2279
        %2834 = vmatpush.bf16.msra.mxu0 %v2278
        %2835 = vmatpush.bf16.msra.mxu0 %v2277
        %2836 = vmatpush.bf16.msra.mxu0 %v2276
        %2837 = vmatpush.bf16.msra.mxu0 %v2275
        %2838 = vmatpush.bf16.msra.mxu0 %v2274
        %2839 = vmatpush.bf16.msra.mxu0 %v2273
        %2840 = vmatmul.bf16.gmra.mxu0 %v652
        %v2841 = vpop.f32.mrf.mxu0
        %v2842 = vadd.f32 %v2829, %v2841
        %v2843 = vpop.f32.mrf.mxu0
        %2844 = vdwg.mxu0
        %2845 = vmatpush.bf16.msra.mxu0 %v2288
        %2846 = vmatpush.bf16.msra.mxu0 %v2287
        %2847 = vmatpush.bf16.msra.mxu0 %v2286
        %2848 = vmatpush.bf16.msra.mxu0 %v2285
        %2849 = vmatpush.bf16.msra.mxu0 %v2284
        %2850 = vmatpush.bf16.msra.mxu0 %v2283
        %2851 = vmatpush.bf16.msra.mxu0 %v2282
        %2852 = vmatpush.bf16.msra.mxu0 %v2281
        %2853 = vmatmul.bf16.gmra.mxu0 %v653
        %v2854 = vpop.f32.mrf.mxu0
        %v2855 = vadd.f32 %v2842, %v2854
        %v2856 = vpop.f32.mrf.mxu0
        %2857 = vdwg.mxu0
        %2858 = vmatpush.bf16.msra.mxu0 %v2296
        %2859 = vmatpush.bf16.msra.mxu0 %v2295
        %2860 = vmatpush.bf16.msra.mxu0 %v2294
        %2861 = vmatpush.bf16.msra.mxu0 %v2293
        %2862 = vmatpush.bf16.msra.mxu0 %v2292
        %2863 = vmatpush.bf16.msra.mxu0 %v2291
        %2864 = vmatpush.bf16.msra.mxu0 %v2290
        %2865 = vmatpush.bf16.msra.mxu0 %v2289
        %2866 = vmatmul.bf16.gmra.mxu0 %v654
        %v2867 = vpop.f32.mrf.mxu0
        %v2868 = vadd.f32 %v2855, %v2867
        %v2869 = vpop.f32.mrf.mxu0
        %2870 = vdwg.mxu0
        %2871 = vmatpush.bf16.msra.mxu0 %v2304
        %2872 = vmatpush.bf16.msra.mxu0 %v2303
        %2873 = vmatpush.bf16.msra.mxu0 %v2302
        %2874 = vmatpush.bf16.msra.mxu0 %v2301
        %2875 = vmatpush.bf16.msra.mxu0 %v2300
        %2876 = vmatpush.bf16.msra.mxu0 %v2299
        %2877 = vmatpush.bf16.msra.mxu0 %v2298
        %2878 = vmatpush.bf16.msra.mxu0 %v2297
        %2879 = vmatmul.bf16.gmra.mxu0 %v655
        %v2880 = vpop.f32.mrf.mxu0
        %v2881 = vadd.f32 %v2868, %v2880
        %v2882 = vpop.f32.mrf.mxu0
        %2883 = vdwg.mxu0
        %2884 = vmatpush.bf16.msra.mxu0 %v2312
        %2885 = vmatpush.bf16.msra.mxu0 %v2311
        %2886 = vmatpush.bf16.msra.mxu0 %v2310
        %2887 = vmatpush.bf16.msra.mxu0 %v2309
        %2888 = vmatpush.bf16.msra.mxu0 %v2308
        %2889 = vmatpush.bf16.msra.mxu0 %v2307
        %2890 = vmatpush.bf16.msra.mxu0 %v2306
        %2891 = vmatpush.bf16.msra.mxu0 %v2305
        %2892 = vmatmul.bf16.gmra.mxu0 %v656
        %v2893 = vpop.f32.mrf.mxu0
        %v2894 = vadd.f32 %v2881, %v2893
        %v2895 = vpop.f32.mrf.mxu0
        %2896 = vdwg.mxu0
        %2897 = vmatpush.bf16.msra.mxu0 %v2320
        %2898 = vmatpush.bf16.msra.mxu0 %v2319
        %2899 = vmatpush.bf16.msra.mxu0 %v2318
        %2900 = vmatpush.bf16.msra.mxu0 %v2317
        %2901 = vmatpush.bf16.msra.mxu0 %v2316
        %2902 = vmatpush.bf16.msra.mxu0 %v2315
        %2903 = vmatpush.bf16.msra.mxu0 %v2314
        %2904 = vmatpush.bf16.msra.mxu0 %v2313
        %2905 = vmatmul.bf16.gmra.mxu0 %v657
        %v2906 = vpop.f32.mrf.mxu0
        %v2907 = vadd.f32 %v2894, %v2906
        %v2908 = vpop.f32.mrf.mxu0
        %2909 = vdwg.mxu0
        %2910 = vmatpush.bf16.msra.mxu0 %v2328
        %2911 = vmatpush.bf16.msra.mxu0 %v2327
        %2912 = vmatpush.bf16.msra.mxu0 %v2326
        %2913 = vmatpush.bf16.msra.mxu0 %v2325
        %2914 = vmatpush.bf16.msra.mxu0 %v2324
        %2915 = vmatpush.bf16.msra.mxu0 %v2323
        %2916 = vmatpush.bf16.msra.mxu0 %v2322
        %2917 = vmatpush.bf16.msra.mxu0 %v2321
        %2918 = vmatmul.bf16.gmra.mxu0 %v658
        %v2919 = vpop.f32.mrf.mxu0
        %v2920 = vadd.f32 %v2907, %v2919
        %v2921 = vpop.f32.mrf.mxu0
        %2922 = vdwg.mxu0
        %2923 = vmatpush.bf16.msra.mxu0 %v2336
        %2924 = vmatpush.bf16.msra.mxu0 %v2335
        %2925 = vmatpush.bf16.msra.mxu0 %v2334
        %2926 = vmatpush.bf16.msra.mxu0 %v2333
        %2927 = vmatpush.bf16.msra.mxu0 %v2332
        %2928 = vmatpush.bf16.msra.mxu0 %v2331
        %2929 = vmatpush.bf16.msra.mxu0 %v2330
        %2930 = vmatpush.bf16.msra.mxu0 %v2329
        %2931 = vmatmul.bf16.gmra.mxu0 %v659
        %v2932 = vpop.f32.mrf.mxu0
        %v2933 = vadd.f32 %v2920, %v2932
        %v2934 = vpop.f32.mrf.mxu0
        %2935 = vdwg.mxu0
        %2936 = vmatpush.bf16.msra.mxu0 %v2344
        %2937 = vmatpush.bf16.msra.mxu0 %v2343
        %2938 = vmatpush.bf16.msra.mxu0 %v2342
        %2939 = vmatpush.bf16.msra.mxu0 %v2341
        %2940 = vmatpush.bf16.msra.mxu0 %v2340
        %2941 = vmatpush.bf16.msra.mxu0 %v2339
        %2942 = vmatpush.bf16.msra.mxu0 %v2338
        %2943 = vmatpush.bf16.msra.mxu0 %v2337
        %2944 = vmatmul.bf16.gmra.mxu0 %v660
        %v2945 = vpop.f32.mrf.mxu0
        %v2946 = vadd.f32 %v2933, %v2945
        %v2947 = vpop.f32.mrf.mxu0
        %2948 = vdwg.mxu0
        %2949 = vmatpush.bf16.msra.mxu0 %v2352
        %2950 = vmatpush.bf16.msra.mxu0 %v2351
        %2951 = vmatpush.bf16.msra.mxu0 %v2350
        %2952 = vmatpush.bf16.msra.mxu0 %v2349
        %2953 = vmatpush.bf16.msra.mxu0 %v2348
        %2954 = vmatpush.bf16.msra.mxu0 %v2347
        %2955 = vmatpush.bf16.msra.mxu0 %v2346
        %2956 = vmatpush.bf16.msra.mxu0 %v2345
        %2957 = vmatmul.bf16.gmra.mxu0 %v661
        %v2958 = vpop.f32.mrf.mxu0
        %v2959 = vadd.f32 %v2946, %v2958
        %v2960 = vpop.f32.mrf.mxu0
        %2961 = vdwg.mxu0
        %2962 = vmatpush.bf16.msra.mxu0 %v2360
        %2963 = vmatpush.bf16.msra.mxu0 %v2359
        %2964 = vmatpush.bf16.msra.mxu0 %v2358
        %2965 = vmatpush.bf16.msra.mxu0 %v2357
        %2966 = vmatpush.bf16.msra.mxu0 %v2356
        %2967 = vmatpush.bf16.msra.mxu0 %v2355
        %2968 = vmatpush.bf16.msra.mxu0 %v2354
        %2969 = vmatpush.bf16.msra.mxu0 %v2353
        %2970 = vmatmul.bf16.gmra.mxu0 %v662
        %v2971 = vpop.f32.mrf.mxu0
        %v2972 = vadd.f32 %v2959, %v2971
        %v2973 = vpop.f32.mrf.mxu0
        %2974 = vdwg.mxu0
        %2975 = vmatpush.bf16.msra.mxu0 %v2368
        %2976 = vmatpush.bf16.msra.mxu0 %v2367
        %2977 = vmatpush.bf16.msra.mxu0 %v2366
        %2978 = vmatpush.bf16.msra.mxu0 %v2365
        %2979 = vmatpush.bf16.msra.mxu0 %v2364
        %2980 = vmatpush.bf16.msra.mxu0 %v2363
        %2981 = vmatpush.bf16.msra.mxu0 %v2362
        %2982 = vmatpush.bf16.msra.mxu0 %v2361
        %2983 = vmatmul.bf16.gmra.mxu0 %v663
        %v2984 = vpop.f32.mrf.mxu0
        %v2985 = vadd.f32 %v2972, %v2984
        %v2986 = vpop.f32.mrf.mxu0
        %2987 = vdwg.mxu0
        %2988 = vmatpush.bf16.msra.mxu0 %v2376
        %2989 = vmatpush.bf16.msra.mxu0 %v2375
        %2990 = vmatpush.bf16.msra.mxu0 %v2374
        %2991 = vmatpush.bf16.msra.mxu0 %v2373
        %2992 = vmatpush.bf16.msra.mxu0 %v2372
        %2993 = vmatpush.bf16.msra.mxu0 %v2371
        %2994 = vmatpush.bf16.msra.mxu0 %v2370
        %2995 = vmatpush.bf16.msra.mxu0 %v2369
        %2996 = vmatmul.bf16.gmra.mxu0 %v664
        %v2997 = vpop.f32.mrf.mxu0
        %v2998 = vadd.f32 %v2985, %v2997
        %v2999 = vpop.f32.mrf.mxu0
        %3000 = vdwg.mxu0
        %3001 = vmatpush.bf16.msra.mxu0 %v2384
        %3002 = vmatpush.bf16.msra.mxu0 %v2383
        %3003 = vmatpush.bf16.msra.mxu0 %v2382
        %3004 = vmatpush.bf16.msra.mxu0 %v2381
        %3005 = vmatpush.bf16.msra.mxu0 %v2380
        %3006 = vmatpush.bf16.msra.mxu0 %v2379
        %3007 = vmatpush.bf16.msra.mxu0 %v2378
        %3008 = vmatpush.bf16.msra.mxu0 %v2377
        %3009 = vmatmul.bf16.gmra.mxu0 %v665
        %v3010 = vpop.f32.mrf.mxu0
        %v3011 = vadd.f32 %v2998, %v3010
        %v3012 = vpop.f32.mrf.mxu0
        %3013 = vdwg.mxu0
        %3014 = vmatpush.bf16.msra.mxu0 %v2392
        %3015 = vmatpush.bf16.msra.mxu0 %v2391
        %3016 = vmatpush.bf16.msra.mxu0 %v2390
        %3017 = vmatpush.bf16.msra.mxu0 %v2389
        %3018 = vmatpush.bf16.msra.mxu0 %v2388
        %3019 = vmatpush.bf16.msra.mxu0 %v2387
        %3020 = vmatpush.bf16.msra.mxu0 %v2386
        %3021 = vmatpush.bf16.msra.mxu0 %v2385
        %3022 = vmatmul.bf16.gmra.mxu0 %v666
        %v3023 = vpop.f32.mrf.mxu0
        %v3024 = vadd.f32 %v3011, %v3023
        %v3025 = vpop.f32.mrf.mxu0
        %3026 = vdwg.mxu0
        %3027 = vmatpush.bf16.msra.mxu0 %v2400
        %3028 = vmatpush.bf16.msra.mxu0 %v2399
        %3029 = vmatpush.bf16.msra.mxu0 %v2398
        %3030 = vmatpush.bf16.msra.mxu0 %v2397
        %3031 = vmatpush.bf16.msra.mxu0 %v2396
        %3032 = vmatpush.bf16.msra.mxu0 %v2395
        %3033 = vmatpush.bf16.msra.mxu0 %v2394
        %3034 = vmatpush.bf16.msra.mxu0 %v2393
        %3035 = vmatmul.bf16.gmra.mxu0 %v667
        %v3036 = vpop.f32.mrf.mxu0
        %v3037 = vadd.f32 %v3024, %v3036
        %v3038 = vpop.f32.mrf.mxu0
        %3039 = vdwg.mxu0
        %3040 = vmatpush.bf16.msra.mxu0 %v2408
        %3041 = vmatpush.bf16.msra.mxu0 %v2407
        %3042 = vmatpush.bf16.msra.mxu0 %v2406
        %3043 = vmatpush.bf16.msra.mxu0 %v2405
        %3044 = vmatpush.bf16.msra.mxu0 %v2404
        %3045 = vmatpush.bf16.msra.mxu0 %v2403
        %3046 = vmatpush.bf16.msra.mxu0 %v2402
        %3047 = vmatpush.bf16.msra.mxu0 %v2401
        %3048 = vmatmul.bf16.gmra.mxu0 %v668
        %v3049 = vpop.f32.mrf.mxu0
        %v3050 = vadd.f32 %v3037, %v3049
        %v3051 = vpop.f32.mrf.mxu0
        %3052 = vdwg.mxu0
        %3053 = vmatpush.bf16.msra.mxu0 %v2416
        %3054 = vmatpush.bf16.msra.mxu0 %v2415
        %3055 = vmatpush.bf16.msra.mxu0 %v2414
        %3056 = vmatpush.bf16.msra.mxu0 %v2413
        %3057 = vmatpush.bf16.msra.mxu0 %v2412
        %3058 = vmatpush.bf16.msra.mxu0 %v2411
        %3059 = vmatpush.bf16.msra.mxu0 %v2410
        %3060 = vmatpush.bf16.msra.mxu0 %v2409
        %3061 = vmatmul.bf16.gmra.mxu0 %v669
        %v3062 = vpop.f32.mrf.mxu0
        %v3063 = vadd.f32 %v3050, %v3062
        %v3064 = vpop.f32.mrf.mxu0
        %3065 = vdwg.mxu0
        %3066 = vmatpush.bf16.msra.mxu0 %v2424
        %3067 = vmatpush.bf16.msra.mxu0 %v2423
        %3068 = vmatpush.bf16.msra.mxu0 %v2422
        %3069 = vmatpush.bf16.msra.mxu0 %v2421
        %3070 = vmatpush.bf16.msra.mxu0 %v2420
        %3071 = vmatpush.bf16.msra.mxu0 %v2419
        %3072 = vmatpush.bf16.msra.mxu0 %v2418
        %3073 = vmatpush.bf16.msra.mxu0 %v2417
        %3074 = vmatmul.bf16.gmra.mxu0 %v670
        %v3075 = vpop.f32.mrf.mxu0
        %v3076 = vadd.f32 %v3063, %v3075
        %v3077 = vpop.f32.mrf.mxu0
        %3078 = vdwg.mxu0
        %3079 = vmatpush.bf16.msra.mxu0 %v2432
        %3080 = vmatpush.bf16.msra.mxu0 %v2431
        %3081 = vmatpush.bf16.msra.mxu0 %v2430
        %3082 = vmatpush.bf16.msra.mxu0 %v2429
        %3083 = vmatpush.bf16.msra.mxu0 %v2428
        %3084 = vmatpush.bf16.msra.mxu0 %v2427
        %3085 = vmatpush.bf16.msra.mxu0 %v2426
        %3086 = vmatpush.bf16.msra.mxu0 %v2425
        %3087 = vmatmul.bf16.gmra.mxu0 %v671
        %v3088 = vpop.f32.mrf.mxu0
        %v3089 = vadd.f32 %v3076, %v3088
        %v3090 = vpop.f32.mrf.mxu0
        %3091 = vdwg.mxu0
        %3092 = vmatpush.bf16.msra.mxu0 %v2440
        %3093 = vmatpush.bf16.msra.mxu0 %v2439
        %3094 = vmatpush.bf16.msra.mxu0 %v2438
        %3095 = vmatpush.bf16.msra.mxu0 %v2437
        %3096 = vmatpush.bf16.msra.mxu0 %v2436
        %3097 = vmatpush.bf16.msra.mxu0 %v2435
        %3098 = vmatpush.bf16.msra.mxu0 %v2434
        %3099 = vmatpush.bf16.msra.mxu0 %v2433
        %3100 = vmatmul.bf16.gmra.mxu0 %v672
        %v3101 = vpop.f32.mrf.mxu0
        %v3102 = vadd.f32 %v3089, %v3101
        %v3103 = vpop.f32.mrf.mxu0
        %3104 = vdwg.mxu0
        %3105 = vmatpush.bf16.msra.mxu0 %v2448
        %3106 = vmatpush.bf16.msra.mxu0 %v2447
        %3107 = vmatpush.bf16.msra.mxu0 %v2446
        %3108 = vmatpush.bf16.msra.mxu0 %v2445
        %3109 = vmatpush.bf16.msra.mxu0 %v2444
        %3110 = vmatpush.bf16.msra.mxu0 %v2443
        %3111 = vmatpush.bf16.msra.mxu0 %v2442
        %3112 = vmatpush.bf16.msra.mxu0 %v2441
        %3113 = vmatmul.bf16.gmra.mxu0 %v673
        %v3114 = vpop.f32.mrf.mxu0
        %v3115 = vadd.f32 %v3102, %v3114
        %v3116 = vpop.f32.mrf.mxu0
        %3117 = vdwg.mxu0
        %3118 = vmatpush.bf16.msra.mxu0 %v2456
        %3119 = vmatpush.bf16.msra.mxu0 %v2455
        %3120 = vmatpush.bf16.msra.mxu0 %v2454
        %3121 = vmatpush.bf16.msra.mxu0 %v2453
        %3122 = vmatpush.bf16.msra.mxu0 %v2452
        %3123 = vmatpush.bf16.msra.mxu0 %v2451
        %3124 = vmatpush.bf16.msra.mxu0 %v2450
        %3125 = vmatpush.bf16.msra.mxu0 %v2449
        %3126 = vmatmul.bf16.gmra.mxu0 %v674
        %v3127 = vpop.f32.mrf.mxu0
        %v3128 = vadd.f32 %v3115, %v3127
        %v3129 = vpop.f32.mrf.mxu0
        %3130 = vdwg.mxu0
        %3131 = vmatpush.bf16.msra.mxu0 %v2464
        %3132 = vmatpush.bf16.msra.mxu0 %v2463
        %3133 = vmatpush.bf16.msra.mxu0 %v2462
        %3134 = vmatpush.bf16.msra.mxu0 %v2461
        %3135 = vmatpush.bf16.msra.mxu0 %v2460
        %3136 = vmatpush.bf16.msra.mxu0 %v2459
        %3137 = vmatpush.bf16.msra.mxu0 %v2458
        %3138 = vmatpush.bf16.msra.mxu0 %v2457
        %3139 = vmatmul.bf16.gmra.mxu0 %v675
        %v3140 = vpop.f32.mrf.mxu0
        %v3141 = vadd.f32 %v3128, %v3140
        %v3142 = vpop.f32.mrf.mxu0
        %3143 = vdwg.mxu0
        %3144 = vmatpush.bf16.msra.mxu0 %v2472
        %3145 = vmatpush.bf16.msra.mxu0 %v2471
        %3146 = vmatpush.bf16.msra.mxu0 %v2470
        %3147 = vmatpush.bf16.msra.mxu0 %v2469
        %3148 = vmatpush.bf16.msra.mxu0 %v2468
        %3149 = vmatpush.bf16.msra.mxu0 %v2467
        %3150 = vmatpush.bf16.msra.mxu0 %v2466
        %3151 = vmatpush.bf16.msra.mxu0 %v2465
        %3152 = vmatmul.bf16.gmra.mxu0 %v676
        %v3153 = vpop.f32.mrf.mxu0
        %v3154 = vadd.f32 %v3141, %v3153
        %v3155 = vpop.f32.mrf.mxu0
        %3156 = vdwg.mxu0
        %3157 = vmatpush.bf16.msra.mxu0 0
        %3158 = vmatpush.bf16.msra.mxu0 0
        %3159 = vmatpush.bf16.msra.mxu0 0
        %3160 = vmatpush.bf16.msra.mxu0 0
        %3161 = vmatpush.bf16.msra.mxu0 0
        %3162 = vmatpush.bf16.msra.mxu0 0
        %3163 = vmatpush.bf16.msra.mxu0 0
        %3164 = vmatpush.bf16.msra.mxu0 %v2739
        %3165 = vmatmul.bf16.gmra.mxu0 %v2732
        %v3166 = vpop.f32.mrf.mxu0
        %v3167 = vadd.f32 %v3154, %v3166
        %v3168 = vpop.f32.mrf.mxu0
        %3169 = vdwg.mxu0
        %v3186 = vunpack.c.l.b16 %v495
        %v3187 = vunpack.c.l.b16 %v496
        %v3188 = vunpack.c.l.b16 %v497
        %v3189 = vunpack.c.l.b16 %v498
        %v3190 = vunpack.c.l.b16 %v499
        %v3191 = vunpack.c.l.b16 %v500
        %v3192 = vunpack.c.l.b16 %v501
        %v3193 = vunpack.c.l.b16 %v502
        %v3194 = vunpack.c.l.b16 %v503
        %v3195 = vunpack.c.l.b16 %v504
        %v3196 = vunpack.c.l.b16 %v505
        %v3197 = vunpack.c.l.b16 %v506
        %v3198 = vunpack.c.l.b16 %v507
        %v3199 = vunpack.c.l.b16 %v508
        %v3200 = vunpack.c.l.b16 %v509
        %v3201 = vunpack.c.l.b16 %v510
        %v3202 = vpack.c.b16 %v3187, %v3186
        %v3203 = vpack.c.b16 %v3189, %v3188
        %v3204 = vpack.c.b16 %v3191, %v3190
        %v3205 = vpack.c.b16 %v3193, %v3192
        %v3206 = vpack.c.b16 %v3195, %v3194
        %v3207 = vpack.c.b16 %v3197, %v3196
        %v3208 = vpack.c.b16 %v3199, %v3198
        %v3209 = vpack.c.b16 %v3201, %v3200
        %3218 = vmatpush.bf16.msra.mxu0 %v3209
        %3219 = vmatpush.bf16.msra.mxu0 %v3208
        %3220 = vmatpush.bf16.msra.mxu0 %v3207
        %3221 = vmatpush.bf16.msra.mxu0 %v3206
        %3222 = vmatpush.bf16.msra.mxu0 %v3205
        %3223 = vmatpush.bf16.msra.mxu0 %v3204
        %3224 = vmatpush.bf16.msra.mxu0 %v3203
        %3225 = vmatpush.bf16.msra.mxu0 %v3202
        %3226 = vmatmul.bf16.gmra.mxu0 %v494
        %v3227 = vpop.f32.mrf.mxu0
        %v3228 = vadd.f32 %v3167, %v3227
        %v3229 = vpop.f32.mrf.mxu0
        %3230 = vdwg.mxu0
        %v3231 = vld [vmem:[%s431] sm:$0xff]
        %3232 = vset.pattern.permute.xlu0 0
        %3233 = vperm.xlu0 %3232, %v3231
        %v3234 = vpop.permute.xlu0 %3233
        %vm3235 = vcmp.eq.s32.totalorder %v3234, %v436
        %vm3236 = vcmp.eq.s32.totalorder %v3234, %v511
        %vm3237 = vcmp.eq.s32.totalorder %v3234, %v512
        %vm3238 = vcmp.eq.s32.totalorder %v3234, %v513
        %vm3239 = vcmp.eq.s32.totalorder %v3234, %v514
        %vm3240 = vcmp.eq.s32.totalorder %v3234, %v515
        %vm3241 = vcmp.eq.s32.totalorder %v3234, %v516
        %vm3242 = vcmp.eq.s32.totalorder %v3234, %v517
        %vm3243 = vcmp.eq.s32.totalorder %v3234, %v518
        %vm3244 = vcmp.eq.s32.totalorder %v3234, %v519
        %vm3245 = vcmp.eq.s32.totalorder %v3234, %v520
        %vm3246 = vcmp.eq.s32.totalorder %v3234, %v521
        %v3247 = vsel %vm3235, 1, 0
        %v3248 = vsel %vm3236, 1, 0
        %v3249 = vsel %vm3237, 1, 0
        %v3250 = vsel %vm3238, 1, 0
        %v3251 = vsel %vm3239, 1, 0
        %v3252 = vsel %vm3240, 1, 0
        %v3253 = vsel %vm3241, 1, 0
        %v3254 = vsel %vm3242, 1, 0
        %v3255 = vsel %vm3243, 1, 0
        %v3256 = vsel %vm3244, 1, 0
        %v3257 = vsel %vm3245, 1, 0
        %v3258 = vsel %vm3246, 1, 0
        %v3259 = vcvt.s32.f32 %v3247
        %v3260 = vcvt.s32.f32 %v3248
        %v3261 = vcvt.s32.f32 %v3249
        %v3262 = vcvt.s32.f32 %v3250
        %v3263 = vcvt.s32.f32 %v3251
        %v3264 = vcvt.s32.f32 %v3252
        %v3265 = vcvt.s32.f32 %v3253
        %v3266 = vcvt.s32.f32 %v3254
        %v3267 = vcvt.s32.f32 %v3255
        %v3268 = vcvt.s32.f32 %v3256
        %v3269 = vcvt.s32.f32 %v3257
        %v3270 = vcvt.s32.f32 %v3258
        %3271 = vset.pattern.permute.xlu0 1
        %3272 = vperm.xlu0 %3271, %v3231
        %v3273 = vpop.permute.xlu0 %3272
        %vm3274 = vcmp.eq.s32.totalorder %v3273, %v436
        %vm3275 = vcmp.eq.s32.totalorder %v3273, %v511
        %vm3276 = vcmp.eq.s32.totalorder %v3273, %v512
        %vm3277 = vcmp.eq.s32.totalorder %v3273, %v513
        %vm3278 = vcmp.eq.s32.totalorder %v3273, %v514
        %vm3279 = vcmp.eq.s32.totalorder %v3273, %v515
        %vm3280 = vcmp.eq.s32.totalorder %v3273, %v516
        %vm3281 = vcmp.eq.s32.totalorder %v3273, %v517
        %vm3282 = vcmp.eq.s32.totalorder %v3273, %v518
        %vm3283 = vcmp.eq.s32.totalorder %v3273, %v519
        %vm3284 = vcmp.eq.s32.totalorder %v3273, %v520
        %vm3285 = vcmp.eq.s32.totalorder %v3273, %v521
        %v3286 = vsel %vm3274, 1, 0
        %v3287 = vsel %vm3275, 1, 0
        %v3288 = vsel %vm3276, 1, 0
        %v3289 = vsel %vm3277, 1, 0
        %v3290 = vsel %vm3278, 1, 0
        %v3291 = vsel %vm3279, 1, 0
        %v3292 = vsel %vm3280, 1, 0
        %v3293 = vsel %vm3281, 1, 0
        %v3294 = vsel %vm3282, 1, 0
        %v3295 = vsel %vm3283, 1, 0
        %v3296 = vsel %vm3284, 1, 0
        %v3297 = vsel %vm3285, 1, 0
        %v3298 = vcvt.s32.f32 %v3286
        %v3299 = vcvt.s32.f32 %v3287
        %v3300 = vcvt.s32.f32 %v3288
        %v3301 = vcvt.s32.f32 %v3289
        %v3302 = vcvt.s32.f32 %v3290
        %v3303 = vcvt.s32.f32 %v3291
        %v3304 = vcvt.s32.f32 %v3292
        %v3305 = vcvt.s32.f32 %v3293
        %v3306 = vcvt.s32.f32 %v3294
        %v3307 = vcvt.s32.f32 %v3295
        %v3308 = vcvt.s32.f32 %v3296
        %v3309 = vcvt.s32.f32 %v3297
        %v3310 = vadd.f32 %v3259, %v3298
        %v3311 = vadd.f32 %v3260, %v3299
        %v3312 = vadd.f32 %v3261, %v3300
        %v3313 = vadd.f32 %v3262, %v3301
        %v3314 = vadd.f32 %v3263, %v3302
        %v3315 = vadd.f32 %v3264, %v3303
        %v3316 = vadd.f32 %v3265, %v3304
        %v3317 = vadd.f32 %v3266, %v3305
        %v3318 = vadd.f32 %v3267, %v3306
        %v3319 = vadd.f32 %v3268, %v3307
        %v3320 = vadd.f32 %v3269, %v3308
        %v3321 = vadd.f32 %v3270, %v3309
        %3322 = vset.pattern.permute.xlu0 2
        %3323 = vperm.xlu0 %3322, %v3231
        %v3324 = vpop.permute.xlu0 %3323
        %vm3325 = vcmp.eq.s32.totalorder %v3324, %v436
        %vm3326 = vcmp.eq.s32.totalorder %v3324, %v511
        %vm3327 = vcmp.eq.s32.totalorder %v3324, %v512
        %vm3328 = vcmp.eq.s32.totalorder %v3324, %v513
        %vm3329 = vcmp.eq.s32.totalorder %v3324, %v514
        %vm3330 = vcmp.eq.s32.totalorder %v3324, %v515
        %vm3331 = vcmp.eq.s32.totalorder %v3324, %v516
        %vm3332 = vcmp.eq.s32.totalorder %v3324, %v517
        %vm3333 = vcmp.eq.s32.totalorder %v3324, %v518
        %vm3334 = vcmp.eq.s32.totalorder %v3324, %v519
        %vm3335 = vcmp.eq.s32.totalorder %v3324, %v520
        %vm3336 = vcmp.eq.s32.totalorder %v3324, %v521
        %v3337 = vsel %vm3325, 1, 0
        %v3338 = vsel %vm3326, 1, 0
        %v3339 = vsel %vm3327, 1, 0
        %v3340 = vsel %vm3328, 1, 0
        %v3341 = vsel %vm3329, 1, 0
        %v3342 = vsel %vm3330, 1, 0
        %v3343 = vsel %vm3331, 1, 0
        %v3344 = vsel %vm3332, 1, 0
        %v3345 = vsel %vm3333, 1, 0
        %v3346 = vsel %vm3334, 1, 0
        %v3347 = vsel %vm3335, 1, 0
        %v3348 = vsel %vm3336, 1, 0
        %v3349 = vcvt.s32.f32 %v3337
        %v3350 = vcvt.s32.f32 %v3338
        %v3351 = vcvt.s32.f32 %v3339
        %v3352 = vcvt.s32.f32 %v3340
        %v3353 = vcvt.s32.f32 %v3341
        %v3354 = vcvt.s32.f32 %v3342
        %v3355 = vcvt.s32.f32 %v3343
        %v3356 = vcvt.s32.f32 %v3344
        %v3357 = vcvt.s32.f32 %v3345
        %v3358 = vcvt.s32.f32 %v3346
        %v3359 = vcvt.s32.f32 %v3347
        %v3360 = vcvt.s32.f32 %v3348
        %v3361 = vadd.f32 %v3310, %v3349
        %v3362 = vadd.f32 %v3311, %v3350
        %v3363 = vadd.f32 %v3312, %v3351
        %v3364 = vadd.f32 %v3313, %v3352
        %v3365 = vadd.f32 %v3314, %v3353
        %v3366 = vadd.f32 %v3315, %v3354
        %v3367 = vadd.f32 %v3316, %v3355
        %v3368 = vadd.f32 %v3317, %v3356
        %v3369 = vadd.f32 %v3318, %v3357
        %v3370 = vadd.f32 %v3319, %v3358
        %v3371 = vadd.f32 %v3320, %v3359
        %v3372 = vadd.f32 %v3321, %v3360
        %3373 = vset.pattern.permute.xlu0 3
        %3374 = vperm.xlu0 %3373, %v3231
        %v3375 = vpop.permute.xlu0 %3374
        %vm3376 = vcmp.eq.s32.totalorder %v3375, %v436
        %vm3377 = vcmp.eq.s32.totalorder %v3375, %v511
        %vm3378 = vcmp.eq.s32.totalorder %v3375, %v512
        %vm3379 = vcmp.eq.s32.totalorder %v3375, %v513
        %vm3380 = vcmp.eq.s32.totalorder %v3375, %v514
        %vm3381 = vcmp.eq.s32.totalorder %v3375, %v515
        %vm3382 = vcmp.eq.s32.totalorder %v3375, %v516
        %vm3383 = vcmp.eq.s32.totalorder %v3375, %v517
        %vm3384 = vcmp.eq.s32.totalorder %v3375, %v518
        %vm3385 = vcmp.eq.s32.totalorder %v3375, %v519
        %vm3386 = vcmp.eq.s32.totalorder %v3375, %v520
        %vm3387 = vcmp.eq.s32.totalorder %v3375, %v521
        %v3388 = vsel %vm3376, 1, 0
        %v3389 = vsel %vm3377, 1, 0
        %v3390 = vsel %vm3378, 1, 0
        %v3391 = vsel %vm3379, 1, 0
        %v3392 = vsel %vm3380, 1, 0
        %v3393 = vsel %vm3381, 1, 0
        %v3394 = vsel %vm3382, 1, 0
        %v3395 = vsel %vm3383, 1, 0
        %v3396 = vsel %vm3384, 1, 0
        %v3397 = vsel %vm3385, 1, 0
        %v3398 = vsel %vm3386, 1, 0
        %v3399 = vsel %vm3387, 1, 0
        %v3400 = vcvt.s32.f32 %v3388
        %v3401 = vcvt.s32.f32 %v3389
        %v3402 = vcvt.s32.f32 %v3390
        %v3403 = vcvt.s32.f32 %v3391
        %v3404 = vcvt.s32.f32 %v3392
        %v3405 = vcvt.s32.f32 %v3393
        %v3406 = vcvt.s32.f32 %v3394
        %v3407 = vcvt.s32.f32 %v3395
        %v3408 = vcvt.s32.f32 %v3396
        %v3409 = vcvt.s32.f32 %v3397
        %v3410 = vcvt.s32.f32 %v3398
        %v3411 = vcvt.s32.f32 %v3399
        %v3412 = vadd.f32 %v3361, %v3400
        %v3413 = vadd.f32 %v3362, %v3401
        %v3414 = vadd.f32 %v3363, %v3402
        %v3415 = vadd.f32 %v3364, %v3403
        %v3416 = vadd.f32 %v3365, %v3404
        %v3417 = vadd.f32 %v3366, %v3405
        %v3418 = vadd.f32 %v3367, %v3406
        %v3419 = vadd.f32 %v3368, %v3407
        %v3420 = vadd.f32 %v3369, %v3408
        %v3421 = vadd.f32 %v3370, %v3409
        %v3422 = vadd.f32 %v3371, %v3410
        %v3423 = vadd.f32 %v3372, %v3411
        %v3424 = vpack.c.bf16 %v3412, %v3412
        %v3425 = vpack.c.bf16 %v3413, %v3413
        %v3426 = vpack.c.bf16 %v3414, %v3414
        %v3427 = vpack.c.bf16 %v3415, %v3415
        %v3428 = vpack.c.bf16 %v3416, %v3416
        %v3429 = vpack.c.bf16 %v3417, %v3417
        %v3430 = vpack.c.bf16 %v3418, %v3418
        %v3431 = vpack.c.bf16 %v3419, %v3419
        %v3432 = vpack.c.bf16 %v3420, %v3420
        %v3433 = vpack.c.bf16 %v3421, %v3421
        %v3434 = vpack.c.bf16 %v3422, %v3422
        %v3435 = vpack.c.bf16 %v3423, %v3423
        %v3436 = vld [vmem:[#allocation10] sm:$0xf]
        %v3437 = vld [vmem:[#allocation10 + $0x4] sm:$0xf]
        %v3438 = vld [vmem:[#allocation10 + $0x8] sm:$0xf]
        %v3439 = vld [vmem:[#allocation10 + $0xc] sm:$0xf]
        %v3440 = vld [vmem:[#allocation10 + $0x10] sm:$0xf]
        %v3441 = vld [vmem:[#allocation10 + $0x14] sm:$0xf]
        %v3442 = vld [vmem:[#allocation10 + $0x18] sm:$0xf]
        %v3443 = vld [vmem:[#allocation10 + $0x1c] sm:$0xf]
        %v3444 = vld [vmem:[#allocation10 + $0x20] sm:$0xf]
        %v3445 = vld [vmem:[#allocation10 + $0x24] sm:$0xf]
        %v3446 = vld [vmem:[#allocation10 + $0x28] sm:$0xf]
        %v3447 = vld [vmem:[#allocation10 + $0x2c] sm:$0xf]
        %v3448 = vld [vmem:[#allocation10 + $0x30] sm:$0xf]
        %v3449 = vld [vmem:[#allocation10 + $0x34] sm:$0xf]
        %v3450 = vld [vmem:[#allocation10 + $0x38] sm:$0xf]
        %v3451 = vld [vmem:[#allocation10 + $0x3c] sm:$0xf]
        %v3452 = vld [vmem:[#allocation10 + $0x40] sm:$0xf]
        %v3453 = vld [vmem:[#allocation10 + $0x44] sm:$0xf]
        %v3454 = vld [vmem:[#allocation10 + $0x48] sm:$0xf]
        %v3455 = vld [vmem:[#allocation10 + $0x4c] sm:$0xf]
        %v3456 = vld [vmem:[#allocation10 + $0x50] sm:$0xf]
        %v3457 = vld [vmem:[#allocation10 + $0x54] sm:$0xf]
        %v3458 = vld [vmem:[#allocation10 + $0x58] sm:$0xf]
        %v3459 = vld [vmem:[#allocation10 + $0x5c] sm:$0xf]
        %v3460 = vld [vmem:[#allocation10 + $0x60] sm:$0xf]
        %v3461 = vld [vmem:[#allocation10 + $0x64] sm:$0xf]
        %v3462 = vld [vmem:[#allocation10 + $0x68] sm:$0xf]
        %v3463 = vld [vmem:[#allocation10 + $0x6c] sm:$0xf]
        %v3464 = vld [vmem:[#allocation10 + $0x70] sm:$0xf]
        %v3465 = vld [vmem:[#allocation10 + $0x74] sm:$0xf]
        %v3466 = vld [vmem:[#allocation10 + $0x78] sm:$0xf]
        %v3467 = vld [vmem:[#allocation10 + $0x7c] sm:$0xf]
        %v3468 = vld [vmem:[#allocation10 + $0x80] sm:$0xf]
        %v3469 = vld [vmem:[#allocation10 + $0x84] sm:$0xf]
        %v3470 = vld [vmem:[#allocation10 + $0x88] sm:$0xf]
        %v3471 = vld [vmem:[#allocation10 + $0x8c] sm:$0xf]
        %v3472 = vld [vmem:[#allocation10 + $0x90] sm:$0xf]
        %v3473 = vld [vmem:[#allocation10 + $0x94] sm:$0xf]
        %v3474 = vld [vmem:[#allocation10 + $0x98] sm:$0xf]
        %v3475 = vld [vmem:[#allocation10 + $0x9c] sm:$0xf]
        %v3476 = vld [vmem:[#allocation10 + $0xa0] sm:$0xf]
        %v3477 = vld [vmem:[#allocation10 + $0xa4] sm:$0xf]
        %v3478 = vld [vmem:[#allocation10 + $0xa8] sm:$0xf]
        %v3479 = vld [vmem:[#allocation10 + $0xac] sm:$0xf]
        %v3480 = vld [vmem:[#allocation10 + $0xb0] sm:$0xf]
        %v3481 = vld [vmem:[#allocation10 + $0xb4] sm:$0xf]
        %v3482 = vld [vmem:[#allocation10 + $0xb8] sm:$0xf]
        %v3483 = vld [vmem:[#allocation10 + $0xbc] sm:$0xf]
        %v3484 = vld [vmem:[#allocation10 + $0xc0] sm:$0xf]
        %v3485 = vld [vmem:[#allocation10 + $0xc4] sm:$0xf]
        %v3486 = vld [vmem:[#allocation10 + $0xc8] sm:$0xf]
        %v3487 = vld [vmem:[#allocation10 + $0xcc] sm:$0xf]
        %v3488 = vld [vmem:[#allocation10 + $0xd0] sm:$0xf]
        %v3489 = vld [vmem:[#allocation10 + $0xd4] sm:$0xf]
        %v3490 = vld [vmem:[#allocation10 + $0xd8] sm:$0xf]
        %v3491 = vld [vmem:[#allocation10 + $0xdc] sm:$0xf]
        %v3492 = vld [vmem:[#allocation10 + $0xe0] sm:$0xf]
        %v3493 = vld [vmem:[#allocation10 + $0xe4] sm:$0xf]
        %v3494 = vld [vmem:[#allocation10 + $0xe8] sm:$0xf]
        %v3495 = vld [vmem:[#allocation10 + $0xec] sm:$0xf]
        %v3496 = vld [vmem:[#allocation10 + $0xf0] sm:$0xf]
        %v3497 = vld [vmem:[#allocation10 + $0xf4] sm:$0xf]
        %v3498 = vld [vmem:[#allocation10 + $0xf8] sm:$0xf]
        %v3499 = vld [vmem:[#allocation10 + $0xfc] sm:$0xf]
        %v3500 = vld [vmem:[#allocation10 + $0x100] sm:$0xf]
        %v3501 = vld [vmem:[#allocation10 + $0x104] sm:$0xf]
        %v3502 = vld [vmem:[#allocation10 + $0x108] sm:$0xf]
        %v3503 = vld [vmem:[#allocation10 + $0x10c] sm:$0xf]
        %v3504 = vld [vmem:[#allocation10 + $0x110] sm:$0xf]
        %v3505 = vld [vmem:[#allocation10 + $0x114] sm:$0xf]
        %v3506 = vld [vmem:[#allocation10 + $0x118] sm:$0xf]
        %v3507 = vld [vmem:[#allocation10 + $0x11c] sm:$0xf]
        %v3508 = vld [vmem:[#allocation10 + $0x120] sm:$0xf]
        %v3509 = vld [vmem:[#allocation10 + $0x124] sm:$0xf]
        %v3510 = vld [vmem:[#allocation10 + $0x128] sm:$0xf]
        %v3511 = vld [vmem:[#allocation10 + $0x12c] sm:$0xf]
        %v3512 = vld [vmem:[#allocation10 + $0x130] sm:$0xf]
        %v3513 = vld [vmem:[#allocation10 + $0x134] sm:$0xf]
        %v3514 = vld [vmem:[#allocation10 + $0x138] sm:$0xf]
        %v3515 = vld [vmem:[#allocation10 + $0x13c] sm:$0xf]
        %v3516 = vld [vmem:[#allocation10 + $0x140] sm:$0xf]
        %v3517 = vld [vmem:[#allocation10 + $0x144] sm:$0xf]
        %v3518 = vld [vmem:[#allocation10 + $0x148] sm:$0xf]
        %v3519 = vld [vmem:[#allocation10 + $0x14c] sm:$0xf]
        %v3520 = vld [vmem:[#allocation10 + $0x150] sm:$0xf]
        %v3521 = vld [vmem:[#allocation10 + $0x154] sm:$0xf]
        %v3522 = vld [vmem:[#allocation10 + $0x158] sm:$0xf]
        %v3523 = vld [vmem:[#allocation10 + $0x15c] sm:$0xf]
        %v3524 = vld [vmem:[#allocation10 + $0x160] sm:$0xf]
        %v3525 = vld [vmem:[#allocation10 + $0x164] sm:$0xf]
        %v3526 = vld [vmem:[#allocation10 + $0x168] sm:$0xf]
        %v3527 = vld [vmem:[#allocation10 + $0x16c] sm:$0xf]
        %v3528 = vld [vmem:[#allocation10 + $0x170] sm:$0xf]
        %v3529 = vld [vmem:[#allocation10 + $0x174] sm:$0xf]
        %v3530 = vld [vmem:[#allocation10 + $0x178] sm:$0xf]
        %v3531 = vld [vmem:[#allocation10 + $0x17c] sm:$0xf]
        %v3532 = vld [vmem:[#allocation10 + $0x180] sm:$0xf]
        %v3533 = vld [vmem:[#allocation10 + $0x184] sm:$0xf]
        %v3534 = vld [vmem:[#allocation10 + $0x188] sm:$0xf]
        %v3535 = vld [vmem:[#allocation10 + $0x18c] sm:$0xf]
        %v3536 = vld [vmem:[#allocation10 + $0x190] sm:$0xf]
        %v3537 = vld [vmem:[#allocation10 + $0x194] sm:$0xf]
        %v3538 = vld [vmem:[#allocation10 + $0x198] sm:$0xf]
        %v3539 = vld [vmem:[#allocation10 + $0x19c] sm:$0xf]
        %v3540 = vld [vmem:[#allocation10 + $0x1a0] sm:$0xf]
        %v3541 = vld [vmem:[#allocation10 + $0x1a4] sm:$0xf]
        %v3542 = vld [vmem:[#allocation10 + $0x1a8] sm:$0xf]
        %v3543 = vld [vmem:[#allocation10 + $0x1ac] sm:$0xf]
        %v3544 = vld [vmem:[#allocation10 + $0x1b0] sm:$0xf]
        %v3545 = vld [vmem:[#allocation10 + $0x1b4] sm:$0xf]
        %v3546 = vld [vmem:[#allocation10 + $0x1b8] sm:$0xf]
        %v3547 = vld [vmem:[#allocation10 + $0x1bc] sm:$0xf]
        %v3548 = vld [vmem:[#allocation10 + $0x1c0] sm:$0xf]
        %v3549 = vld [vmem:[#allocation10 + $0x1c4] sm:$0xf]
        %v3550 = vld [vmem:[#allocation10 + $0x1c8] sm:$0xf]
        %v3551 = vld [vmem:[#allocation10 + $0x1cc] sm:$0xf]
        %v3552 = vld [vmem:[#allocation10 + $0x1d0] sm:$0xf]
        %v3553 = vld [vmem:[#allocation10 + $0x1d4] sm:$0xf]
        %v3554 = vld [vmem:[#allocation10 + $0x1d8] sm:$0xf]
        %v3555 = vld [vmem:[#allocation10 + $0x1dc] sm:$0xf]
        %v3556 = vld [vmem:[#allocation10 + $0x1e0] sm:$0xf]
        %v3557 = vld [vmem:[#allocation10 + $0x1e4] sm:$0xf]
        %v3558 = vld [vmem:[#allocation10 + $0x1e8] sm:$0xf]
        %v3559 = vld [vmem:[#allocation10 + $0x1ec] sm:$0xf]
        %v3560 = vld [vmem:[#allocation10 + $0x1f0] sm:$0xf]
        %v3561 = vld [vmem:[#allocation10 + $0x1f4] sm:$0xf]
        %v3562 = vld [vmem:[#allocation10 + $0x1f8] sm:$0xf]
        %v3563 = vld [vmem:[#allocation10 + $0x1fc] sm:$0xf]
        %v3564 = vld [vmem:[#allocation10 + $0x200] sm:$0xf]
        %v3565 = vld [vmem:[#allocation10 + $0x204] sm:$0xf]
        %v3566 = vld [vmem:[#allocation10 + $0x208] sm:$0xf]
        %v3567 = vld [vmem:[#allocation10 + $0x20c] sm:$0xf]
        %v3568 = vld [vmem:[#allocation10 + $0x210] sm:$0xf]
        %v3569 = vld [vmem:[#allocation10 + $0x214] sm:$0xf]
        %v3570 = vld [vmem:[#allocation10 + $0x218] sm:$0xf]
        %v3571 = vld [vmem:[#allocation10 + $0x21c] sm:$0xf]
        %v3572 = vld [vmem:[#allocation10 + $0x220] sm:$0xf]
        %v3573 = vld [vmem:[#allocation10 + $0x224] sm:$0xf]
        %v3574 = vld [vmem:[#allocation10 + $0x228] sm:$0xf]
        %v3575 = vld [vmem:[#allocation10 + $0x22c] sm:$0xf]
        %v3576 = vld [vmem:[#allocation10 + $0x230] sm:$0xf]
        %v3577 = vld [vmem:[#allocation10 + $0x234] sm:$0xf]
        %v3578 = vld [vmem:[#allocation10 + $0x238] sm:$0xf]
        %v3579 = vld [vmem:[#allocation10 + $0x23c] sm:$0xf]
        %v3580 = vld [vmem:[#allocation10 + $0x240] sm:$0xf]
        %v3581 = vld [vmem:[#allocation10 + $0x244] sm:$0xf]
        %v3582 = vld [vmem:[#allocation10 + $0x248] sm:$0xf]
        %v3583 = vld [vmem:[#allocation10 + $0x24c] sm:$0xf]
        %v3584 = vld [vmem:[#allocation10 + $0x250] sm:$0xf]
        %v3585 = vld [vmem:[#allocation10 + $0x254] sm:$0xf]
        %v3586 = vld [vmem:[#allocation10 + $0x258] sm:$0xf]
        %v3587 = vld [vmem:[#allocation10 + $0x25c] sm:$0xf]
        %v3588 = vld [vmem:[#allocation10 + $0x260] sm:$0xf]
        %v3589 = vld [vmem:[#allocation10 + $0x264] sm:$0xf]
        %v3590 = vld [vmem:[#allocation10 + $0x268] sm:$0xf]
        %v3591 = vld [vmem:[#allocation10 + $0x26c] sm:$0xf]
        %v3592 = vld [vmem:[#allocation10 + $0x270] sm:$0xf]
        %v3593 = vld [vmem:[#allocation10 + $0x274] sm:$0xf]
        %v3594 = vld [vmem:[#allocation10 + $0x278] sm:$0xf]
        %v3595 = vld [vmem:[#allocation10 + $0x27c] sm:$0xf]
        %v3596 = vld [vmem:[#allocation10 + $0x280] sm:$0xf]
        %v3597 = vld [vmem:[#allocation10 + $0x284] sm:$0xf]
        %v3598 = vld [vmem:[#allocation10 + $0x288] sm:$0xf]
        %v3599 = vld [vmem:[#allocation10 + $0x28c] sm:$0xf]
        %v3600 = vld [vmem:[#allocation10 + $0x290] sm:$0xf]
        %v3601 = vld [vmem:[#allocation10 + $0x294] sm:$0xf]
        %v3602 = vld [vmem:[#allocation10 + $0x298] sm:$0xf]
        %v3603 = vld [vmem:[#allocation10 + $0x29c] sm:$0xf]
        %v3604 = vld [vmem:[#allocation10 + $0x2a0] sm:$0xf]
        %v3605 = vld [vmem:[#allocation10 + $0x2a4] sm:$0xf]
        %v3606 = vld [vmem:[#allocation10 + $0x2a8] sm:$0xf]
        %v3607 = vld [vmem:[#allocation10 + $0x2ac] sm:$0xf]
        %v3608 = vld [vmem:[#allocation10 + $0x2b0] sm:$0xf]
        %v3609 = vld [vmem:[#allocation10 + $0x2b4] sm:$0xf]
        %v3610 = vld [vmem:[#allocation10 + $0x2b8] sm:$0xf]
        %v3611 = vld [vmem:[#allocation10 + $0x2bc] sm:$0xf]
        %v3612 = vld [vmem:[#allocation10 + $0x2c0] sm:$0xf]
        %v3613 = vld [vmem:[#allocation10 + $0x2c4] sm:$0xf]
        %v3614 = vld [vmem:[#allocation10 + $0x2c8] sm:$0xf]
        %v3615 = vld [vmem:[#allocation10 + $0x2cc] sm:$0xf]
        %v3616 = vld [vmem:[#allocation10 + $0x2d0] sm:$0xf]
        %v3617 = vld [vmem:[#allocation10 + $0x2d4] sm:$0xf]
        %v3618 = vld [vmem:[#allocation10 + $0x2d8] sm:$0xf]
        %v3619 = vld [vmem:[#allocation10 + $0x2dc] sm:$0xf]
        %v3620 = vld [vmem:[#allocation10 + $0x2e0] sm:$0x7]
        %v3806 = vunpack.c.l.b16 %v3436
        %v3807 = vunpack.c.l.b16 %v3437
        %v3808 = vunpack.c.l.b16 %v3438
        %v3809 = vunpack.c.l.b16 %v3439
        %v3810 = vunpack.c.l.b16 %v3440
        %v3811 = vunpack.c.l.b16 %v3441
        %v3812 = vunpack.c.l.b16 %v3442
        %v3813 = vunpack.c.l.b16 %v3443
        %v3814 = vunpack.c.l.b16 %v3444
        %v3815 = vunpack.c.l.b16 %v3445
        %v3816 = vunpack.c.l.b16 %v3446
        %v3817 = vunpack.c.l.b16 %v3447
        %v3818 = vunpack.c.l.b16 %v3448
        %v3819 = vunpack.c.l.b16 %v3449
        %v3820 = vunpack.c.l.b16 %v3450
        %v3821 = vunpack.c.l.b16 %v3451
        %v3822 = vunpack.c.l.b16 %v3452
        %v3823 = vunpack.c.l.b16 %v3453
        %v3824 = vunpack.c.l.b16 %v3454
        %v3825 = vunpack.c.l.b16 %v3455
        %v3826 = vunpack.c.l.b16 %v3456
        %v3827 = vunpack.c.l.b16 %v3457
        %v3828 = vunpack.c.l.b16 %v3458
        %v3829 = vunpack.c.l.b16 %v3459
        %v3830 = vunpack.c.l.b16 %v3460
        %v3831 = vunpack.c.l.b16 %v3461
        %v3832 = vunpack.c.l.b16 %v3462
        %v3833 = vunpack.c.l.b16 %v3463
        %v3834 = vunpack.c.l.b16 %v3464
        %v3835 = vunpack.c.l.b16 %v3465
        %v3836 = vunpack.c.l.b16 %v3466
        %v3837 = vunpack.c.l.b16 %v3467
        %v3838 = vunpack.c.l.b16 %v3468
        %v3839 = vunpack.c.l.b16 %v3469
        %v3840 = vunpack.c.l.b16 %v3470
        %v3841 = vunpack.c.l.b16 %v3471
        %v3842 = vunpack.c.l.b16 %v3472
        %v3843 = vunpack.c.l.b16 %v3473
        %v3844 = vunpack.c.l.b16 %v3474
        %v3845 = vunpack.c.l.b16 %v3475
        %v3846 = vunpack.c.l.b16 %v3476
        %v3847 = vunpack.c.l.b16 %v3477
        %v3848 = vunpack.c.l.b16 %v3478
        %v3849 = vunpack.c.l.b16 %v3479
        %v3850 = vunpack.c.l.b16 %v3480
        %v3851 = vunpack.c.l.b16 %v3481
        %v3852 = vunpack.c.l.b16 %v3482
        %v3853 = vunpack.c.l.b16 %v3483
        %v3854 = vunpack.c.l.b16 %v3484
        %v3855 = vunpack.c.l.b16 %v3485
        %v3856 = vunpack.c.l.b16 %v3486
        %v3857 = vunpack.c.l.b16 %v3487
        %v3858 = vunpack.c.l.b16 %v3488
        %v3859 = vunpack.c.l.b16 %v3489
        %v3860 = vunpack.c.l.b16 %v3490
        %v3861 = vunpack.c.l.b16 %v3491
        %v3862 = vunpack.c.l.b16 %v3492
        %v3863 = vunpack.c.l.b16 %v3493
        %v3864 = vunpack.c.l.b16 %v3494
        %v3865 = vunpack.c.l.b16 %v3495
        %v3866 = vunpack.c.l.b16 %v3496
        %v3867 = vunpack.c.l.b16 %v3497
        %v3868 = vunpack.c.l.b16 %v3498
        %v3869 = vunpack.c.l.b16 %v3499
        %v3870 = vunpack.c.l.b16 %v3500
        %v3871 = vunpack.c.l.b16 %v3501
        %v3872 = vunpack.c.l.b16 %v3502
        %v3873 = vunpack.c.l.b16 %v3503
        %v3874 = vunpack.c.l.b16 %v3504
        %v3875 = vunpack.c.l.b16 %v3505
        %v3876 = vunpack.c.l.b16 %v3506
        %v3877 = vunpack.c.l.b16 %v3507
        %v3878 = vunpack.c.l.b16 %v3508
        %v3879 = vunpack.c.l.b16 %v3509
        %v3880 = vunpack.c.l.b16 %v3510
        %v3881 = vunpack.c.l.b16 %v3511
        %v3882 = vunpack.c.l.b16 %v3512
        %v3883 = vunpack.c.l.b16 %v3513
        %v3884 = vunpack.c.l.b16 %v3514
        %v3885 = vunpack.c.l.b16 %v3515
        %v3886 = vunpack.c.l.b16 %v3516
        %v3887 = vunpack.c.l.b16 %v3517
        %v3888 = vunpack.c.l.b16 %v3518
        %v3889 = vunpack.c.l.b16 %v3519
        %v3890 = vunpack.c.l.b16 %v3520
        %v3891 = vunpack.c.l.b16 %v3521
        %v3892 = vunpack.c.l.b16 %v3522
        %v3893 = vunpack.c.l.b16 %v3523
        %v3894 = vunpack.c.l.b16 %v3524
        %v3895 = vunpack.c.l.b16 %v3525
        %v3896 = vunpack.c.l.b16 %v3526
        %v3897 = vunpack.c.l.b16 %v3527
        %v3898 = vunpack.c.l.b16 %v3528
        %v3899 = vunpack.c.l.b16 %v3529
        %v3900 = vunpack.c.l.b16 %v3530
        %v3901 = vunpack.c.l.b16 %v3531
        %v3902 = vunpack.c.l.b16 %v3532
        %v3903 = vunpack.c.l.b16 %v3533
        %v3904 = vunpack.c.l.b16 %v3534
        %v3905 = vunpack.c.l.b16 %v3535
        %v3906 = vunpack.c.l.b16 %v3536
        %v3907 = vunpack.c.l.b16 %v3537
        %v3908 = vunpack.c.l.b16 %v3538
        %v3909 = vunpack.c.l.b16 %v3539
        %v3910 = vunpack.c.l.b16 %v3540
        %v3911 = vunpack.c.l.b16 %v3541
        %v3912 = vunpack.c.l.b16 %v3542
        %v3913 = vunpack.c.l.b16 %v3543
        %v3914 = vunpack.c.l.b16 %v3544
        %v3915 = vunpack.c.l.b16 %v3545
        %v3916 = vunpack.c.l.b16 %v3546
        %v3917 = vunpack.c.l.b16 %v3547
        %v3918 = vunpack.c.l.b16 %v3548
        %v3919 = vunpack.c.l.b16 %v3549
        %v3920 = vunpack.c.l.b16 %v3550
        %v3921 = vunpack.c.l.b16 %v3551
        %v3922 = vunpack.c.l.b16 %v3552
        %v3923 = vunpack.c.l.b16 %v3553
        %v3924 = vunpack.c.l.b16 %v3554
        %v3925 = vunpack.c.l.b16 %v3555
        %v3926 = vunpack.c.l.b16 %v3556
        %v3927 = vunpack.c.l.b16 %v3557
        %v3928 = vunpack.c.l.b16 %v3558
        %v3929 = vunpack.c.l.b16 %v3559
        %v3930 = vunpack.c.l.b16 %v3560
        %v3931 = vunpack.c.l.b16 %v3561
        %v3932 = vunpack.c.l.b16 %v3562
        %v3933 = vunpack.c.l.b16 %v3563
        %v3934 = vunpack.c.l.b16 %v3564
        %v3935 = vunpack.c.l.b16 %v3565
        %v3936 = vunpack.c.l.b16 %v3566
        %v3937 = vunpack.c.l.b16 %v3567
        %v3938 = vunpack.c.l.b16 %v3568
        %v3939 = vunpack.c.l.b16 %v3569
        %v3940 = vunpack.c.l.b16 %v3570
        %v3941 = vunpack.c.l.b16 %v3571
        %v3942 = vunpack.c.l.b16 %v3572
        %v3943 = vunpack.c.l.b16 %v3573
        %v3944 = vunpack.c.l.b16 %v3574
        %v3945 = vunpack.c.l.b16 %v3575
        %v3946 = vunpack.c.l.b16 %v3576
        %v3947 = vunpack.c.l.b16 %v3577
        %v3948 = vunpack.c.l.b16 %v3578
        %v3949 = vunpack.c.l.b16 %v3579
        %v3950 = vunpack.c.l.b16 %v3580
        %v3951 = vunpack.c.l.b16 %v3581
        %v3952 = vunpack.c.l.b16 %v3582
        %v3953 = vunpack.c.l.b16 %v3583
        %v3954 = vunpack.c.l.b16 %v3584
        %v3955 = vunpack.c.l.b16 %v3585
        %v3956 = vunpack.c.l.b16 %v3586
        %v3957 = vunpack.c.l.b16 %v3587
        %v3958 = vunpack.c.l.b16 %v3588
        %v3959 = vunpack.c.l.b16 %v3589
        %v3960 = vunpack.c.l.b16 %v3590
        %v3961 = vunpack.c.l.b16 %v3591
        %v3962 = vunpack.c.l.b16 %v3592
        %v3963 = vunpack.c.l.b16 %v3593
        %v3964 = vunpack.c.l.b16 %v3594
        %v3965 = vunpack.c.l.b16 %v3595
        %v3966 = vunpack.c.l.b16 %v3596
        %v3967 = vunpack.c.l.b16 %v3597
        %v3968 = vunpack.c.l.b16 %v3598
        %v3969 = vunpack.c.l.b16 %v3599
        %v3970 = vunpack.c.l.b16 %v3600
        %v3971 = vunpack.c.l.b16 %v3601
        %v3972 = vunpack.c.l.b16 %v3602
        %v3973 = vunpack.c.l.b16 %v3603
        %v3974 = vunpack.c.l.b16 %v3604
        %v3975 = vunpack.c.l.b16 %v3605
        %v3976 = vunpack.c.l.b16 %v3606
        %v3977 = vunpack.c.l.b16 %v3607
        %v3978 = vunpack.c.l.b16 %v3608
        %v3979 = vunpack.c.l.b16 %v3609
        %v3980 = vunpack.c.l.b16 %v3610
        %v3981 = vunpack.c.l.b16 %v3611
        %v3982 = vunpack.c.l.b16 %v3612
        %v3983 = vunpack.c.l.b16 %v3613
        %v3984 = vunpack.c.l.b16 %v3614
        %v3985 = vunpack.c.l.b16 %v3615
        %v3986 = vunpack.c.l.b16 %v3616
        %v3987 = vunpack.c.l.b16 %v3617
        %v3988 = vunpack.c.l.b16 %v3618
        %v3989 = vunpack.c.l.b16 %v3619
        %v3990 = vunpack.c.l.b16 %v3620
        %v3991 = vpack.c.b16 %v3807, %v3806
        %v3992 = vpack.c.b16 %v3809, %v3808
        %v3993 = vpack.c.b16 %v3811, %v3810
        %v3994 = vpack.c.b16 %v3813, %v3812
        %v3995 = vpack.c.b16 %v3815, %v3814
        %v3996 = vpack.c.b16 %v3817, %v3816
        %v3997 = vpack.c.b16 %v3819, %v3818
        %v3998 = vpack.c.b16 %v3821, %v3820
        %v3999 = vpack.c.b16 %v3823, %v3822
        %v4000 = vpack.c.b16 %v3825, %v3824
        %v4001 = vpack.c.b16 %v3827, %v3826
        %v4002 = vpack.c.b16 %v3829, %v3828
        %v4003 = vpack.c.b16 %v3831, %v3830
        %v4004 = vpack.c.b16 %v3833, %v3832
        %v4005 = vpack.c.b16 %v3835, %v3834
        %v4006 = vpack.c.b16 %v3837, %v3836
        %v4007 = vpack.c.b16 %v3839, %v3838
        %v4008 = vpack.c.b16 %v3841, %v3840
        %v4009 = vpack.c.b16 %v3843, %v3842
        %v4010 = vpack.c.b16 %v3845, %v3844
        %v4011 = vpack.c.b16 %v3847, %v3846
        %v4012 = vpack.c.b16 %v3849, %v3848
        %v4013 = vpack.c.b16 %v3851, %v3850
        %v4014 = vpack.c.b16 %v3853, %v3852
        %v4015 = vpack.c.b16 %v3855, %v3854
        %v4016 = vpack.c.b16 %v3857, %v3856
        %v4017 = vpack.c.b16 %v3859, %v3858
        %v4018 = vpack.c.b16 %v3861, %v3860
        %v4019 = vpack.c.b16 %v3863, %v3862
        %v4020 = vpack.c.b16 %v3865, %v3864
        %v4021 = vpack.c.b16 %v3867, %v3866
        %v4022 = vpack.c.b16 %v3869, %v3868
        %v4023 = vpack.c.b16 %v3871, %v3870
        %v4024 = vpack.c.b16 %v3873, %v3872
        %v4025 = vpack.c.b16 %v3875, %v3874
        %v4026 = vpack.c.b16 %v3877, %v3876
        %v4027 = vpack.c.b16 %v3879, %v3878
        %v4028 = vpack.c.b16 %v3881, %v3880
        %v4029 = vpack.c.b16 %v3883, %v3882
        %v4030 = vpack.c.b16 %v3885, %v3884
        %v4031 = vpack.c.b16 %v3887, %v3886
        %v4032 = vpack.c.b16 %v3889, %v3888
        %v4033 = vpack.c.b16 %v3891, %v3890
        %v4034 = vpack.c.b16 %v3893, %v3892
        %v4035 = vpack.c.b16 %v3895, %v3894
        %v4036 = vpack.c.b16 %v3897, %v3896
        %v4037 = vpack.c.b16 %v3899, %v3898
        %v4038 = vpack.c.b16 %v3901, %v3900
        %v4039 = vpack.c.b16 %v3903, %v3902
        %v4040 = vpack.c.b16 %v3905, %v3904
        %v4041 = vpack.c.b16 %v3907, %v3906
        %v4042 = vpack.c.b16 %v3909, %v3908
        %v4043 = vpack.c.b16 %v3911, %v3910
        %v4044 = vpack.c.b16 %v3913, %v3912
        %v4045 = vpack.c.b16 %v3915, %v3914
        %v4046 = vpack.c.b16 %v3917, %v3916
        %v4047 = vpack.c.b16 %v3919, %v3918
        %v4048 = vpack.c.b16 %v3921, %v3920
        %v4049 = vpack.c.b16 %v3923, %v3922
        %v4050 = vpack.c.b16 %v3925, %v3924
        %v4051 = vpack.c.b16 %v3927, %v3926
        %v4052 = vpack.c.b16 %v3929, %v3928
        %v4053 = vpack.c.b16 %v3931, %v3930
        %v4054 = vpack.c.b16 %v3933, %v3932
        %v4055 = vpack.c.b16 %v3935, %v3934
        %v4056 = vpack.c.b16 %v3937, %v3936
        %v4057 = vpack.c.b16 %v3939, %v3938
        %v4058 = vpack.c.b16 %v3941, %v3940
        %v4059 = vpack.c.b16 %v3943, %v3942
        %v4060 = vpack.c.b16 %v3945, %v3944
        %v4061 = vpack.c.b16 %v3947, %v3946
        %v4062 = vpack.c.b16 %v3949, %v3948
        %v4063 = vpack.c.b16 %v3951, %v3950
        %v4064 = vpack.c.b16 %v3953, %v3952
        %v4065 = vpack.c.b16 %v3955, %v3954
        %v4066 = vpack.c.b16 %v3957, %v3956
        %v4067 = vpack.c.b16 %v3959, %v3958
        %v4068 = vpack.c.b16 %v3961, %v3960
        %v4069 = vpack.c.b16 %v3963, %v3962
        %v4070 = vpack.c.b16 %v3965, %v3964
        %v4071 = vpack.c.b16 %v3967, %v3966
        %v4072 = vpack.c.b16 %v3969, %v3968
        %v4073 = vpack.c.b16 %v3971, %v3970
        %v4074 = vpack.c.b16 %v3973, %v3972
        %v4075 = vpack.c.b16 %v3975, %v3974
        %v4076 = vpack.c.b16 %v3977, %v3976
        %v4077 = vpack.c.b16 %v3979, %v3978
        %v4078 = vpack.c.b16 %v3981, %v3980
        %v4079 = vpack.c.b16 %v3983, %v3982
        %v4080 = vpack.c.b16 %v3985, %v3984
        %v4081 = vpack.c.b16 %v3987, %v3986
        %v4082 = vpack.c.b16 %v3989, %v3988
        %v4083 = vpack.c.b16 %v3990, %v3990
        %vm4176 = vcmask 572416
        %v4178 = vsel %vm4176, %v3435, 0
        %v4181 = vsel %vm2735, %v4083, 0
        %4183 = vmatpush.bf16.msra.mxu0 %v3998
        %4184 = vmatpush.bf16.msra.mxu0 %v3997
        %4185 = vmatpush.bf16.msra.mxu0 %v3996
        %4186 = vmatpush.bf16.msra.mxu0 %v3995
        %4187 = vmatpush.bf16.msra.mxu0 %v3994
        %4188 = vmatpush.bf16.msra.mxu0 %v3993
        %4189 = vmatpush.bf16.msra.mxu0 %v3992
        %4190 = vmatpush.bf16.msra.mxu0 %v3991
        %4191 = vmatmul.bf16.gmra.mxu0 %v3424
        %v4192 = vpop.f32.mrf.mxu0
        %v4193 = vadd.f32 0.0, %v4192
        %v4194 = vpop.f32.mrf.mxu0
        %4195 = vdwg.mxu0
        %4196 = vmatpush.bf16.msra.mxu0 %v4006
        %4197 = vmatpush.bf16.msra.mxu0 %v4005
        %4198 = vmatpush.bf16.msra.mxu0 %v4004
        %4199 = vmatpush.bf16.msra.mxu0 %v4003
        %4200 = vmatpush.bf16.msra.mxu0 %v4002
        %4201 = vmatpush.bf16.msra.mxu0 %v4001
        %4202 = vmatpush.bf16.msra.mxu0 %v4000
        %4203 = vmatpush.bf16.msra.mxu0 %v3999
        %4204 = vmatmul.bf16.gmra.mxu0 %v3425
        %v4205 = vpop.f32.mrf.mxu0
        %v4206 = vadd.f32 %v4193, %v4205
        %v4207 = vpop.f32.mrf.mxu0
        %4208 = vdwg.mxu0
        %4209 = vmatpush.bf16.msra.mxu0 %v4014
        %4210 = vmatpush.bf16.msra.mxu0 %v4013
        %4211 = vmatpush.bf16.msra.mxu0 %v4012
        %4212 = vmatpush.bf16.msra.mxu0 %v4011
        %4213 = vmatpush.bf16.msra.mxu0 %v4010
        %4214 = vmatpush.bf16.msra.mxu0 %v4009
        %4215 = vmatpush.bf16.msra.mxu0 %v4008
        %4216 = vmatpush.bf16.msra.mxu0 %v4007
        %4217 = vmatmul.bf16.gmra.mxu0 %v3426
        %v4218 = vpop.f32.mrf.mxu0
        %v4219 = vadd.f32 %v4206, %v4218
        %v4220 = vpop.f32.mrf.mxu0
        %4221 = vdwg.mxu0
        %4222 = vmatpush.bf16.msra.mxu0 %v4022
        %4223 = vmatpush.bf16.msra.mxu0 %v4021
        %4224 = vmatpush.bf16.msra.mxu0 %v4020
        %4225 = vmatpush.bf16.msra.mxu0 %v4019
        %4226 = vmatpush.bf16.msra.mxu0 %v4018
        %4227 = vmatpush.bf16.msra.mxu0 %v4017
        %4228 = vmatpush.bf16.msra.mxu0 %v4016
        %4229 = vmatpush.bf16.msra.mxu0 %v4015
        %4230 = vmatmul.bf16.gmra.mxu0 %v3427
        %v4231 = vpop.f32.mrf.mxu0
        %v4232 = vadd.f32 %v4219, %v4231
        %v4233 = vpop.f32.mrf.mxu0
        %4234 = vdwg.mxu0
        %4235 = vmatpush.bf16.msra.mxu0 %v4030
        %4236 = vmatpush.bf16.msra.mxu0 %v4029
        %4237 = vmatpush.bf16.msra.mxu0 %v4028
        %4238 = vmatpush.bf16.msra.mxu0 %v4027
        %4239 = vmatpush.bf16.msra.mxu0 %v4026
        %4240 = vmatpush.bf16.msra.mxu0 %v4025
        %4241 = vmatpush.bf16.msra.mxu0 %v4024
        %4242 = vmatpush.bf16.msra.mxu0 %v4023
        %4243 = vmatmul.bf16.gmra.mxu0 %v3428
        %v4244 = vpop.f32.mrf.mxu0
        %v4245 = vadd.f32 %v4232, %v4244
        %v4246 = vpop.f32.mrf.mxu0
        %4247 = vdwg.mxu0
        %4248 = vmatpush.bf16.msra.mxu0 %v4038
        %4249 = vmatpush.bf16.msra.mxu0 %v4037
        %4250 = vmatpush.bf16.msra.mxu0 %v4036
        %4251 = vmatpush.bf16.msra.mxu0 %v4035
        %4252 = vmatpush.bf16.msra.mxu0 %v4034
        %4253 = vmatpush.bf16.msra.mxu0 %v4033
        %4254 = vmatpush.bf16.msra.mxu0 %v4032
        %4255 = vmatpush.bf16.msra.mxu0 %v4031
        %4256 = vmatmul.bf16.gmra.mxu0 %v3429
        %v4257 = vpop.f32.mrf.mxu0
        %v4258 = vadd.f32 %v4245, %v4257
        %v4259 = vpop.f32.mrf.mxu0
        %4260 = vdwg.mxu0
        %4261 = vmatpush.bf16.msra.mxu0 %v4046
        %4262 = vmatpush.bf16.msra.mxu0 %v4045
        %4263 = vmatpush.bf16.msra.mxu0 %v4044
        %4264 = vmatpush.bf16.msra.mxu0 %v4043
        %4265 = vmatpush.bf16.msra.mxu0 %v4042
        %4266 = vmatpush.bf16.msra.mxu0 %v4041
        %4267 = vmatpush.bf16.msra.mxu0 %v4040
        %4268 = vmatpush.bf16.msra.mxu0 %v4039
        %4269 = vmatmul.bf16.gmra.mxu0 %v3430
        %v4270 = vpop.f32.mrf.mxu0
        %v4271 = vadd.f32 %v4258, %v4270
        %v4272 = vpop.f32.mrf.mxu0
        %4273 = vdwg.mxu0
        %4274 = vmatpush.bf16.msra.mxu0 %v4054
        %4275 = vmatpush.bf16.msra.mxu0 %v4053
        %4276 = vmatpush.bf16.msra.mxu0 %v4052
        %4277 = vmatpush.bf16.msra.mxu0 %v4051
        %4278 = vmatpush.bf16.msra.mxu0 %v4050
        %4279 = vmatpush.bf16.msra.mxu0 %v4049
        %4280 = vmatpush.bf16.msra.mxu0 %v4048
        %4281 = vmatpush.bf16.msra.mxu0 %v4047
        %4282 = vmatmul.bf16.gmra.mxu0 %v3431
        %v4283 = vpop.f32.mrf.mxu0
        %v4284 = vadd.f32 %v4271, %v4283
        %v4285 = vpop.f32.mrf.mxu0
        %4286 = vdwg.mxu0
        %4287 = vmatpush.bf16.msra.mxu0 %v4062
        %4288 = vmatpush.bf16.msra.mxu0 %v4061
        %4289 = vmatpush.bf16.msra.mxu0 %v4060
        %4290 = vmatpush.bf16.msra.mxu0 %v4059
        %4291 = vmatpush.bf16.msra.mxu0 %v4058
        %4292 = vmatpush.bf16.msra.mxu0 %v4057
        %4293 = vmatpush.bf16.msra.mxu0 %v4056
        %4294 = vmatpush.bf16.msra.mxu0 %v4055
        %4295 = vmatmul.bf16.gmra.mxu0 %v3432
        %v4296 = vpop.f32.mrf.mxu0
        %v4297 = vadd.f32 %v4284, %v4296
        %v4298 = vpop.f32.mrf.mxu0
        %4299 = vdwg.mxu0
        %4300 = vmatpush.bf16.msra.mxu0 %v4070
        %4301 = vmatpush.bf16.msra.mxu0 %v4069
        %4302 = vmatpush.bf16.msra.mxu0 %v4068
        %4303 = vmatpush.bf16.msra.mxu0 %v4067
        %4304 = vmatpush.bf16.msra.mxu0 %v4066
        %4305 = vmatpush.bf16.msra.mxu0 %v4065
        %4306 = vmatpush.bf16.msra.mxu0 %v4064
        %4307 = vmatpush.bf16.msra.mxu0 %v4063
        %4308 = vmatmul.bf16.gmra.mxu0 %v3433
        %v4309 = vpop.f32.mrf.mxu0
        %v4310 = vadd.f32 %v4297, %v4309
        %v4311 = vpop.f32.mrf.mxu0
        %4312 = vdwg.mxu0
        %4313 = vmatpush.bf16.msra.mxu0 %v4078
        %4314 = vmatpush.bf16.msra.mxu0 %v4077
        %4315 = vmatpush.bf16.msra.mxu0 %v4076
        %4316 = vmatpush.bf16.msra.mxu0 %v4075
        %4317 = vmatpush.bf16.msra.mxu0 %v4074
        %4318 = vmatpush.bf16.msra.mxu0 %v4073
        %4319 = vmatpush.bf16.msra.mxu0 %v4072
        %4320 = vmatpush.bf16.msra.mxu0 %v4071
        %4321 = vmatmul.bf16.gmra.mxu0 %v3434
        %v4322 = vpop.f32.mrf.mxu0
        %v4323 = vadd.f32 %v4310, %v4322
        %v4324 = vpop.f32.mrf.mxu0
        %4325 = vdwg.mxu0
        %4326 = vmatpush.bf16.msra.mxu0 0
        %4327 = vmatpush.bf16.msra.mxu0 0
        %4328 = vmatpush.bf16.msra.mxu0 0
        %4329 = vmatpush.bf16.msra.mxu0 %v4181
        %4330 = vmatpush.bf16.msra.mxu0 %v4082
        %4331 = vmatpush.bf16.msra.mxu0 %v4081
        %4332 = vmatpush.bf16.msra.mxu0 %v4080
        %4333 = vmatpush.bf16.msra.mxu0 %v4079
        %4334 = vmatmul.bf16.gmra.mxu0 %v4178
        %v4335 = vpop.f32.mrf.mxu0
        %v4336 = vadd.f32 %v4323, %v4335
        %v4337 = vpop.f32.mrf.mxu0
        %4338 = vdwg.mxu0
        %v4339 = vadd.f32 %v3228, %v4336
        %v4340 = vld [vmem:[%s366] sm:$0xff]
        %4341 = vset.pattern.permute.xlu0 0
        %4342 = vperm.xlu0 %4341, %v4340
        %v4343 = vpop.permute.xlu0 %4342
        %vm4344 = vcmp.eq.s32.totalorder %v4343, %v436
        %vm4345 = vcmp.eq.s32.totalorder %v4343, %v511
        %vm4346 = vcmp.eq.s32.totalorder %v4343, %v512
        %v4347 = vsel %vm4344, 1, 0
        %v4348 = vsel %vm4345, 1, 0
        %v4349 = vsel %vm4346, 1, 0
        %v4350 = vcvt.s32.f32 %v4347
        %v4351 = vcvt.s32.f32 %v4348
        %v4352 = vcvt.s32.f32 %v4349
        %v4353 = vpack.c.bf16 %v4350, %v4350
        %v4354 = vpack.c.bf16 %v4351, %v4351
        %v4355 = vpack.c.bf16 %v4352, %v4352
        %v4356 = vld [vmem:[%s6] sm:$0xf]
        %v4357 = vld [vmem:[%s6 + $0x4] sm:$0xf]
        %v4358 = vld [vmem:[%s6 + $0x8] sm:$0xf]
        %v4359 = vld [vmem:[%s6 + $0xc] sm:$0xf]
        %v4360 = vld [vmem:[%s6 + $0x10] sm:$0xf]
        %v4361 = vld [vmem:[%s6 + $0x14] sm:$0xf]
        %v4362 = vld [vmem:[%s6 + $0x18] sm:$0xf]
        %v4363 = vld [vmem:[%s6 + $0x1c] sm:$0xf]
        %v4364 = vld [vmem:[%s6 + $0x20] sm:$0xf]
        %v4365 = vld [vmem:[%s6 + $0x24] sm:$0xf]
        %v4366 = vld [vmem:[%s6 + $0x28] sm:$0xf]
        %v4367 = vld [vmem:[%s6 + $0x2c] sm:$0xf]
        %v4368 = vld [vmem:[%s6 + $0x30] sm:$0xf]
        %v4369 = vld [vmem:[%s6 + $0x34] sm:$0xf]
        %v4370 = vld [vmem:[%s6 + $0x38] sm:$0xf]
        %v4371 = vld [vmem:[%s6 + $0x3c] sm:$0xf]
        %v4372 = vld [vmem:[%s6 + $0x40] sm:$0xf]
        %v4373 = vld [vmem:[%s6 + $0x44] sm:$0xf]
        %v4374 = vld [vmem:[%s6 + $0x48] sm:$0xf]
        %v4375 = vld [vmem:[%s6 + $0x4c] sm:$0xf]
        %v4376 = vld [vmem:[%s6 + $0x50] sm:$0xf]
        %v4377 = vld [vmem:[%s6 + $0x54] sm:$0xf]
        %v4378 = vld [vmem:[%s6 + $0x58] sm:$0xf]
        %v4379 = vld [vmem:[%s6 + $0x5c] sm:$0xf]
        %v4380 = vld [vmem:[%s6 + $0x60] sm:$0xf]
        %v4381 = vld [vmem:[%s6 + $0x64] sm:$0xf]
        %v4382 = vld [vmem:[%s6 + $0x68] sm:$0xf]
        %v4383 = vld [vmem:[%s6 + $0x6c] sm:$0xf]
        %v4384 = vld [vmem:[%s6 + $0x70] sm:$0xf]
        %v4385 = vld [vmem:[%s6 + $0x74] sm:$0xf]
        %v4386 = vld [vmem:[%s6 + $0x78] sm:$0xf]
        %v4387 = vld [vmem:[%s6 + $0x7c] sm:$0xf]
        %v4388 = vld [vmem:[%s6 + $0x80] sm:$0x3]
        %v4422 = vunpack.c.l.b16 %v4356
        %v4423 = vunpack.c.l.b16 %v4357
        %v4424 = vunpack.c.l.b16 %v4358
        %v4425 = vunpack.c.l.b16 %v4359
        %v4426 = vunpack.c.l.b16 %v4360
        %v4427 = vunpack.c.l.b16 %v4361
        %v4428 = vunpack.c.l.b16 %v4362
        %v4429 = vunpack.c.l.b16 %v4363
        %v4430 = vunpack.c.l.b16 %v4364
        %v4431 = vunpack.c.l.b16 %v4365
        %v4432 = vunpack.c.l.b16 %v4366
        %v4433 = vunpack.c.l.b16 %v4367
        %v4434 = vunpack.c.l.b16 %v4368
        %v4435 = vunpack.c.l.b16 %v4369
        %v4436 = vunpack.c.l.b16 %v4370
        %v4437 = vunpack.c.l.b16 %v4371
        %v4438 = vunpack.c.l.b16 %v4372
        %v4439 = vunpack.c.l.b16 %v4373
        %v4440 = vunpack.c.l.b16 %v4374
        %v4441 = vunpack.c.l.b16 %v4375
        %v4442 = vunpack.c.l.b16 %v4376
        %v4443 = vunpack.c.l.b16 %v4377
        %v4444 = vunpack.c.l.b16 %v4378
        %v4445 = vunpack.c.l.b16 %v4379
        %v4446 = vunpack.c.l.b16 %v4380
        %v4447 = vunpack.c.l.b16 %v4381
        %v4448 = vunpack.c.l.b16 %v4382
        %v4449 = vunpack.c.l.b16 %v4383
        %v4450 = vunpack.c.l.b16 %v4384
        %v4451 = vunpack.c.l.b16 %v4385
        %v4452 = vunpack.c.l.b16 %v4386
        %v4453 = vunpack.c.l.b16 %v4387
        %v4454 = vunpack.c.l.b16 %v4388
        %v4455 = vpack.c.b16 %v4423, %v4422
        %v4456 = vpack.c.b16 %v4425, %v4424
        %v4457 = vpack.c.b16 %v4427, %v4426
        %v4458 = vpack.c.b16 %v4429, %v4428
        %v4459 = vpack.c.b16 %v4431, %v4430
        %v4460 = vpack.c.b16 %v4433, %v4432
        %v4461 = vpack.c.b16 %v4435, %v4434
        %v4462 = vpack.c.b16 %v4437, %v4436
        %v4463 = vpack.c.b16 %v4439, %v4438
        %v4464 = vpack.c.b16 %v4441, %v4440
        %v4465 = vpack.c.b16 %v4443, %v4442
        %v4466 = vpack.c.b16 %v4445, %v4444
        %v4467 = vpack.c.b16 %v4447, %v4446
        %v4468 = vpack.c.b16 %v4449, %v4448
        %v4469 = vpack.c.b16 %v4451, %v4450
        %v4470 = vpack.c.b16 %v4453, %v4452
        %v4471 = vpack.c.b16 %v4454, %v4454
        %vm4488 = vcmask 31744
        %v4490 = vsel %vm4488, %v4355, 0
        %v4493 = vsel %vm2734, %v4471, 0
        %4495 = vmatpush.bf16.msra.mxu0 %v4462
        %4496 = vmatpush.bf16.msra.mxu0 %v4461
        %4497 = vmatpush.bf16.msra.mxu0 %v4460
        %4498 = vmatpush.bf16.msra.mxu0 %v4459
        %4499 = vmatpush.bf16.msra.mxu0 %v4458
        %4500 = vmatpush.bf16.msra.mxu0 %v4457
        %4501 = vmatpush.bf16.msra.mxu0 %v4456
        %4502 = vmatpush.bf16.msra.mxu0 %v4455
        %4503 = vmatmul.bf16.gmra.mxu0 %v4353
        %v4504 = vpop.f32.mrf.mxu0
        %v4505 = vadd.f32 0.0, %v4504
        %v4506 = vpop.f32.mrf.mxu0
        %4507 = vdwg.mxu0
        %4508 = vmatpush.bf16.msra.mxu0 %v4470
        %4509 = vmatpush.bf16.msra.mxu0 %v4469
        %4510 = vmatpush.bf16.msra.mxu0 %v4468
        %4511 = vmatpush.bf16.msra.mxu0 %v4467
        %4512 = vmatpush.bf16.msra.mxu0 %v4466
        %4513 = vmatpush.bf16.msra.mxu0 %v4465
        %4514 = vmatpush.bf16.msra.mxu0 %v4464
        %4515 = vmatpush.bf16.msra.mxu0 %v4463
        %4516 = vmatmul.bf16.gmra.mxu0 %v4354
        %v4517 = vpop.f32.mrf.mxu0
        %v4518 = vadd.f32 %v4505, %v4517
        %v4519 = vpop.f32.mrf.mxu0
        %4520 = vdwg.mxu0
        %4521 = vmatpush.bf16.msra.mxu0 0
        %4522 = vmatpush.bf16.msra.mxu0 0
        %4523 = vmatpush.bf16.msra.mxu0 0
        %4524 = vmatpush.bf16.msra.mxu0 0
        %4525 = vmatpush.bf16.msra.mxu0 0
        %4526 = vmatpush.bf16.msra.mxu0 0
        %4527 = vmatpush.bf16.msra.mxu0 0
        %4528 = vmatpush.bf16.msra.mxu0 %v4493
        %4529 = vmatmul.bf16.gmra.mxu0 %v4490
        %v4530 = vpop.f32.mrf.mxu0
        %v4531 = vadd.f32 %v4518, %v4530
        %v4532 = vpop.f32.mrf.mxu0
        %4533 = vdwg.mxu0
        %4534 = vset.pattern.permute.xlu0 1
        %4535 = vperm.xlu0 %4534, %v4340
        %v4536 = vpop.permute.xlu0 %4535
        %vm4537 = vcmp.eq.s32.totalorder %v4536, %v436
        %vm4538 = vcmp.eq.s32.totalorder %v4536, %v511
        %vm4539 = vcmp.eq.s32.totalorder %v4536, %v512
        %v4540 = vsel %vm4537, 1, 0
        %v4541 = vsel %vm4538, 1, 0
        %v4542 = vsel %vm4539, 1, 0
        %v4543 = vcvt.s32.f32 %v4540
        %v4544 = vcvt.s32.f32 %v4541
        %v4545 = vcvt.s32.f32 %v4542
        %v4546 = vpack.c.bf16 %v4543, %v4543
        %v4547 = vpack.c.bf16 %v4544, %v4544
        %v4548 = vpack.c.bf16 %v4545, %v4545
        %s4549 = scalar_lea.vmem %s6, 132
        %v4550 = vld [vmem:[%s4549] sm:$0xf]
        %v4551 = vld [vmem:[%s4549 + $0x4] sm:$0xf]
        %v4552 = vld [vmem:[%s4549 + $0x8] sm:$0xf]
        %v4553 = vld [vmem:[%s4549 + $0xc] sm:$0xf]
        %v4554 = vld [vmem:[%s4549 + $0x10] sm:$0xf]
        %v4555 = vld [vmem:[%s4549 + $0x14] sm:$0xf]
        %v4556 = vld [vmem:[%s4549 + $0x18] sm:$0xf]
        %v4557 = vld [vmem:[%s4549 + $0x1c] sm:$0xf]
        %v4558 = vld [vmem:[%s4549 + $0x20] sm:$0xf]
        %v4559 = vld [vmem:[%s4549 + $0x24] sm:$0xf]
        %v4560 = vld [vmem:[%s4549 + $0x28] sm:$0xf]
        %v4561 = vld [vmem:[%s4549 + $0x2c] sm:$0xf]
        %v4562 = vld [vmem:[%s4549 + $0x30] sm:$0xf]
        %v4563 = vld [vmem:[%s4549 + $0x34] sm:$0xf]
        %v4564 = vld [vmem:[%s4549 + $0x38] sm:$0xf]
        %v4565 = vld [vmem:[%s4549 + $0x3c] sm:$0xf]
        %v4566 = vld [vmem:[%s4549 + $0x40] sm:$0xf]
        %v4567 = vld [vmem:[%s4549 + $0x44] sm:$0xf]
        %v4568 = vld [vmem:[%s4549 + $0x48] sm:$0xf]
        %v4569 = vld [vmem:[%s4549 + $0x4c] sm:$0xf]
        %v4570 = vld [vmem:[%s4549 + $0x50] sm:$0xf]
        %v4571 = vld [vmem:[%s4549 + $0x54] sm:$0xf]
        %v4572 = vld [vmem:[%s4549 + $0x58] sm:$0xf]
        %v4573 = vld [vmem:[%s4549 + $0x5c] sm:$0xf]
        %v4574 = vld [vmem:[%s4549 + $0x60] sm:$0xf]
        %v4575 = vld [vmem:[%s4549 + $0x64] sm:$0xf]
        %v4576 = vld [vmem:[%s4549 + $0x68] sm:$0xf]
        %v4577 = vld [vmem:[%s4549 + $0x6c] sm:$0xf]
        %v4578 = vld [vmem:[%s4549 + $0x70] sm:$0xf]
        %v4579 = vld [vmem:[%s4549 + $0x74] sm:$0xf]
        %v4580 = vld [vmem:[%s4549 + $0x78] sm:$0xf]
        %v4581 = vld [vmem:[%s4549 + $0x7c] sm:$0xf]
        %v4582 = vld [vmem:[%s4549 + $0x80] sm:$0x3]
        %v4616 = vunpack.c.l.b16 %v4550
        %v4617 = vunpack.c.l.b16 %v4551
        %v4618 = vunpack.c.l.b16 %v4552
        %v4619 = vunpack.c.l.b16 %v4553
        %v4620 = vunpack.c.l.b16 %v4554
        %v4621 = vunpack.c.l.b16 %v4555
        %v4622 = vunpack.c.l.b16 %v4556
        %v4623 = vunpack.c.l.b16 %v4557
        %v4624 = vunpack.c.l.b16 %v4558
        %v4625 = vunpack.c.l.b16 %v4559
        %v4626 = vunpack.c.l.b16 %v4560
        %v4627 = vunpack.c.l.b16 %v4561
        %v4628 = vunpack.c.l.b16 %v4562
        %v4629 = vunpack.c.l.b16 %v4563
        %v4630 = vunpack.c.l.b16 %v4564
        %v4631 = vunpack.c.l.b16 %v4565
        %v4632 = vunpack.c.l.b16 %v4566
        %v4633 = vunpack.c.l.b16 %v4567
        %v4634 = vunpack.c.l.b16 %v4568
        %v4635 = vunpack.c.l.b16 %v4569
        %v4636 = vunpack.c.l.b16 %v4570
        %v4637 = vunpack.c.l.b16 %v4571
        %v4638 = vunpack.c.l.b16 %v4572
        %v4639 = vunpack.c.l.b16 %v4573
        %v4640 = vunpack.c.l.b16 %v4574
        %v4641 = vunpack.c.l.b16 %v4575
        %v4642 = vunpack.c.l.b16 %v4576
        %v4643 = vunpack.c.l.b16 %v4577
        %v4644 = vunpack.c.l.b16 %v4578
        %v4645 = vunpack.c.l.b16 %v4579
        %v4646 = vunpack.c.l.b16 %v4580
        %v4647 = vunpack.c.l.b16 %v4581
        %v4648 = vunpack.c.l.b16 %v4582
        %v4649 = vpack.c.b16 %v4617, %v4616
        %v4650 = vpack.c.b16 %v4619, %v4618
        %v4651 = vpack.c.b16 %v4621, %v4620
        %v4652 = vpack.c.b16 %v4623, %v4622
        %v4653 = vpack.c.b16 %v4625, %v4624
        %v4654 = vpack.c.b16 %v4627, %v4626
        %v4655 = vpack.c.b16 %v4629, %v4628
        %v4656 = vpack.c.b16 %v4631, %v4630
        %v4657 = vpack.c.b16 %v4633, %v4632
        %v4658 = vpack.c.b16 %v4635, %v4634
        %v4659 = vpack.c.b16 %v4637, %v4636
        %v4660 = vpack.c.b16 %v4639, %v4638
        %v4661 = vpack.c.b16 %v4641, %v4640
        %v4662 = vpack.c.b16 %v4643, %v4642
        %v4663 = vpack.c.b16 %v4645, %v4644
        %v4664 = vpack.c.b16 %v4647, %v4646
        %v4665 = vpack.c.b16 %v4648, %v4648
        %v4683 = vsel %vm4488, %v4548, 0
        %v4686 = vsel %vm2734, %v4665, 0
        %4688 = vmatpush.bf16.msra.mxu0 %v4656
        %4689 = vmatpush.bf16.msra.mxu0 %v4655
        %4690 = vmatpush.bf16.msra.mxu0 %v4654
        %4691 = vmatpush.bf16.msra.mxu0 %v4653
        %4692 = vmatpush.bf16.msra.mxu0 %v4652
        %4693 = vmatpush.bf16.msra.mxu0 %v4651
        %4694 = vmatpush.bf16.msra.mxu0 %v4650
        %4695 = vmatpush.bf16.msra.mxu0 %v4649
        %4696 = vmatmul.bf16.gmra.mxu0 %v4546
        %v4697 = vpop.f32.mrf.mxu0
        %v4698 = vadd.f32 0.0, %v4697
        %v4699 = vpop.f32.mrf.mxu0
        %4700 = vdwg.mxu0
        %4701 = vmatpush.bf16.msra.mxu0 %v4664
        %4702 = vmatpush.bf16.msra.mxu0 %v4663
        %4703 = vmatpush.bf16.msra.mxu0 %v4662
        %4704 = vmatpush.bf16.msra.mxu0 %v4661
        %4705 = vmatpush.bf16.msra.mxu0 %v4660
        %4706 = vmatpush.bf16.msra.mxu0 %v4659
        %4707 = vmatpush.bf16.msra.mxu0 %v4658
        %4708 = vmatpush.bf16.msra.mxu0 %v4657
        %4709 = vmatmul.bf16.gmra.mxu0 %v4547
        %v4710 = vpop.f32.mrf.mxu0
        %v4711 = vadd.f32 %v4698, %v4710
        %v4712 = vpop.f32.mrf.mxu0
        %4713 = vdwg.mxu0
        %4714 = vmatpush.bf16.msra.mxu0 0
        %4715 = vmatpush.bf16.msra.mxu0 0
        %4716 = vmatpush.bf16.msra.mxu0 0
        %4717 = vmatpush.bf16.msra.mxu0 0
        %4718 = vmatpush.bf16.msra.mxu0 0
        %4719 = vmatpush.bf16.msra.mxu0 0
        %4720 = vmatpush.bf16.msra.mxu0 0
        %4721 = vmatpush.bf16.msra.mxu0 %v4686
        %4722 = vmatmul.bf16.gmra.mxu0 %v4683
        %v4723 = vpop.f32.mrf.mxu0
        %v4724 = vadd.f32 %v4711, %v4723
        %v4725 = vpop.f32.mrf.mxu0
        %4726 = vdwg.mxu0
        %4727 = vset.pattern.permute.xlu0 2
        %4728 = vperm.xlu0 %4727, %v4340
        %v4729 = vpop.permute.xlu0 %4728
        %vm4730 = vcmp.eq.s32.totalorder %v4729, %v436
        %vm4731 = vcmp.eq.s32.totalorder %v4729, %v511
        %vm4732 = vcmp.eq.s32.totalorder %v4729, %v512
        %v4733 = vsel %vm4730, 1, 0
        %v4734 = vsel %vm4731, 1, 0
        %v4735 = vsel %vm4732, 1, 0
        %v4736 = vcvt.s32.f32 %v4733
        %v4737 = vcvt.s32.f32 %v4734
        %v4738 = vcvt.s32.f32 %v4735
        %v4739 = vpack.c.bf16 %v4736, %v4736
        %v4740 = vpack.c.bf16 %v4737, %v4737
        %v4741 = vpack.c.bf16 %v4738, %v4738
        %s4742 = scalar_lea.vmem %s6, 264
        %v4743 = vld [vmem:[%s4742] sm:$0xf]
        %v4744 = vld [vmem:[%s4742 + $0x4] sm:$0xf]
        %v4745 = vld [vmem:[%s4742 + $0x8] sm:$0xf]
        %v4746 = vld [vmem:[%s4742 + $0xc] sm:$0xf]
        %v4747 = vld [vmem:[%s4742 + $0x10] sm:$0xf]
        %v4748 = vld [vmem:[%s4742 + $0x14] sm:$0xf]
        %v4749 = vld [vmem:[%s4742 + $0x18] sm:$0xf]
        %v4750 = vld [vmem:[%s4742 + $0x1c] sm:$0xf]
        %v4751 = vld [vmem:[%s4742 + $0x20] sm:$0xf]
        %v4752 = vld [vmem:[%s4742 + $0x24] sm:$0xf]
        %v4753 = vld [vmem:[%s4742 + $0x28] sm:$0xf]
        %v4754 = vld [vmem:[%s4742 + $0x2c] sm:$0xf]
        %v4755 = vld [vmem:[%s4742 + $0x30] sm:$0xf]
        %v4756 = vld [vmem:[%s4742 + $0x34] sm:$0xf]
        %v4757 = vld [vmem:[%s4742 + $0x38] sm:$0xf]
        %v4758 = vld [vmem:[%s4742 + $0x3c] sm:$0xf]
        %v4759 = vld [vmem:[%s4742 + $0x40] sm:$0xf]
        %v4760 = vld [vmem:[%s4742 + $0x44] sm:$0xf]
        %v4761 = vld [vmem:[%s4742 + $0x48] sm:$0xf]
        %v4762 = vld [vmem:[%s4742 + $0x4c] sm:$0xf]
        %v4763 = vld [vmem:[%s4742 + $0x50] sm:$0xf]
        %v4764 = vld [vmem:[%s4742 + $0x54] sm:$0xf]
        %v4765 = vld [vmem:[%s4742 + $0x58] sm:$0xf]
        %v4766 = vld [vmem:[%s4742 + $0x5c] sm:$0xf]
        %v4767 = vld [vmem:[%s4742 + $0x60] sm:$0xf]
        %v4768 = vld [vmem:[%s4742 + $0x64] sm:$0xf]
        %v4769 = vld [vmem:[%s4742 + $0x68] sm:$0xf]
        %v4770 = vld [vmem:[%s4742 + $0x6c] sm:$0xf]
        %v4771 = vld [vmem:[%s4742 + $0x70] sm:$0xf]
        %v4772 = vld [vmem:[%s4742 + $0x74] sm:$0xf]
        %v4773 = vld [vmem:[%s4742 + $0x78] sm:$0xf]
        %v4774 = vld [vmem:[%s4742 + $0x7c] sm:$0xf]
        %v4775 = vld [vmem:[%s4742 + $0x80] sm:$0x3]
        %v4809 = vunpack.c.l.b16 %v4743
        %v4810 = vunpack.c.l.b16 %v4744
        %v4811 = vunpack.c.l.b16 %v4745
        %v4812 = vunpack.c.l.b16 %v4746
        %v4813 = vunpack.c.l.b16 %v4747
        %v4814 = vunpack.c.l.b16 %v4748
        %v4815 = vunpack.c.l.b16 %v4749
        %v4816 = vunpack.c.l.b16 %v4750
        %v4817 = vunpack.c.l.b16 %v4751
        %v4818 = vunpack.c.l.b16 %v4752
        %v4819 = vunpack.c.l.b16 %v4753
        %v4820 = vunpack.c.l.b16 %v4754
        %v4821 = vunpack.c.l.b16 %v4755
        %v4822 = vunpack.c.l.b16 %v4756
        %v4823 = vunpack.c.l.b16 %v4757
        %v4824 = vunpack.c.l.b16 %v4758
        %v4825 = vunpack.c.l.b16 %v4759
        %v4826 = vunpack.c.l.b16 %v4760
        %v4827 = vunpack.c.l.b16 %v4761
        %v4828 = vunpack.c.l.b16 %v4762
        %v4829 = vunpack.c.l.b16 %v4763
        %v4830 = vunpack.c.l.b16 %v4764
        %v4831 = vunpack.c.l.b16 %v4765
        %v4832 = vunpack.c.l.b16 %v4766
        %v4833 = vunpack.c.l.b16 %v4767
        %v4834 = vunpack.c.l.b16 %v4768
        %v4835 = vunpack.c.l.b16 %v4769
        %v4836 = vunpack.c.l.b16 %v4770
        %v4837 = vunpack.c.l.b16 %v4771
        %v4838 = vunpack.c.l.b16 %v4772
        %v4839 = vunpack.c.l.b16 %v4773
        %v4840 = vunpack.c.l.b16 %v4774
        %v4841 = vunpack.c.l.b16 %v4775
        %v4842 = vpack.c.b16 %v4810, %v4809
        %v4843 = vpack.c.b16 %v4812, %v4811
        %v4844 = vpack.c.b16 %v4814, %v4813
        %v4845 = vpack.c.b16 %v4816, %v4815
        %v4846 = vpack.c.b16 %v4818, %v4817
        %v4847 = vpack.c.b16 %v4820, %v4819
        %v4848 = vpack.c.b16 %v4822, %v4821
        %v4849 = vpack.c.b16 %v4824, %v4823
        %v4850 = vpack.c.b16 %v4826, %v4825
        %v4851 = vpack.c.b16 %v4828, %v4827
        %v4852 = vpack.c.b16 %v4830, %v4829
        %v4853 = vpack.c.b16 %v4832, %v4831
        %v4854 = vpack.c.b16 %v4834, %v4833
        %v4855 = vpack.c.b16 %v4836, %v4835
        %v4856 = vpack.c.b16 %v4838, %v4837
        %v4857 = vpack.c.b16 %v4840, %v4839
        %v4858 = vpack.c.b16 %v4841, %v4841
        %v4876 = vsel %vm4488, %v4741, 0
        %v4879 = vsel %vm2734, %v4858, 0
        %4881 = vmatpush.bf16.msra.mxu0 %v4849
        %4882 = vmatpush.bf16.msra.mxu0 %v4848
        %4883 = vmatpush.bf16.msra.mxu0 %v4847
        %4884 = vmatpush.bf16.msra.mxu0 %v4846
        %4885 = vmatpush.bf16.msra.mxu0 %v4845
        %4886 = vmatpush.bf16.msra.mxu0 %v4844
        %4887 = vmatpush.bf16.msra.mxu0 %v4843
        %4888 = vmatpush.bf16.msra.mxu0 %v4842
        %4889 = vmatmul.bf16.gmra.mxu0 %v4739
        %v4890 = vpop.f32.mrf.mxu0
        %v4891 = vadd.f32 0.0, %v4890
        %v4892 = vpop.f32.mrf.mxu0
        %4893 = vdwg.mxu0
        %4894 = vmatpush.bf16.msra.mxu0 %v4857
        %4895 = vmatpush.bf16.msra.mxu0 %v4856
        %4896 = vmatpush.bf16.msra.mxu0 %v4855
        %4897 = vmatpush.bf16.msra.mxu0 %v4854
        %4898 = vmatpush.bf16.msra.mxu0 %v4853
        %4899 = vmatpush.bf16.msra.mxu0 %v4852
        %4900 = vmatpush.bf16.msra.mxu0 %v4851
        %4901 = vmatpush.bf16.msra.mxu0 %v4850
        %4902 = vmatmul.bf16.gmra.mxu0 %v4740
        %v4903 = vpop.f32.mrf.mxu0
        %v4904 = vadd.f32 %v4891, %v4903
        %v4905 = vpop.f32.mrf.mxu0
        %4906 = vdwg.mxu0
        %4907 = vmatpush.bf16.msra.mxu0 0
        %4908 = vmatpush.bf16.msra.mxu0 0
        %4909 = vmatpush.bf16.msra.mxu0 0
        %4910 = vmatpush.bf16.msra.mxu0 0
        %4911 = vmatpush.bf16.msra.mxu0 0
        %4912 = vmatpush.bf16.msra.mxu0 0
        %4913 = vmatpush.bf16.msra.mxu0 0
        %4914 = vmatpush.bf16.msra.mxu0 %v4879
        %4915 = vmatmul.bf16.gmra.mxu0 %v4876
        %v4916 = vpop.f32.mrf.mxu0
        %v4917 = vadd.f32 %v4904, %v4916
        %v4918 = vpop.f32.mrf.mxu0
        %4919 = vdwg.mxu0
        %4920 = vset.pattern.permute.xlu0 3
        %4921 = vperm.xlu0 %4920, %v4340
        %v4922 = vpop.permute.xlu0 %4921
        %vm4923 = vcmp.eq.s32.totalorder %v4922, %v436
        %vm4924 = vcmp.eq.s32.totalorder %v4922, %v511
        %vm4925 = vcmp.eq.s32.totalorder %v4922, %v512
        %v4926 = vsel %vm4923, 1, 0
        %v4927 = vsel %vm4924, 1, 0
        %v4928 = vsel %vm4925, 1, 0
        %v4929 = vcvt.s32.f32 %v4926
        %v4930 = vcvt.s32.f32 %v4927
        %v4931 = vcvt.s32.f32 %v4928
        %v4932 = vpack.c.bf16 %v4929, %v4929
        %v4933 = vpack.c.bf16 %v4930, %v4930
        %v4934 = vpack.c.bf16 %v4931, %v4931
        %s4935 = scalar_lea.vmem %s6, 396
        %v4936 = vld [vmem:[%s4935] sm:$0xf]
        %v4937 = vld [vmem:[%s4935 + $0x4] sm:$0xf]
        %v4938 = vld [vmem:[%s4935 + $0x8] sm:$0xf]
        %v4939 = vld [vmem:[%s4935 + $0xc] sm:$0xf]
        %v4940 = vld [vmem:[%s4935 + $0x10] sm:$0xf]
        %v4941 = vld [vmem:[%s4935 + $0x14] sm:$0xf]
        %v4942 = vld [vmem:[%s4935 + $0x18] sm:$0xf]
        %v4943 = vld [vmem:[%s4935 + $0x1c] sm:$0xf]
        %v4944 = vld [vmem:[%s4935 + $0x20] sm:$0xf]
        %v4945 = vld [vmem:[%s4935 + $0x24] sm:$0xf]
        %v4946 = vld [vmem:[%s4935 + $0x28] sm:$0xf]
        %v4947 = vld [vmem:[%s4935 + $0x2c] sm:$0xf]
        %v4948 = vld [vmem:[%s4935 + $0x30] sm:$0xf]
        %v4949 = vld [vmem:[%s4935 + $0x34] sm:$0xf]
        %v4950 = vld [vmem:[%s4935 + $0x38] sm:$0xf]
        %v4951 = vld [vmem:[%s4935 + $0x3c] sm:$0xf]
        %v4952 = vld [vmem:[%s4935 + $0x40] sm:$0xf]
        %v4953 = vld [vmem:[%s4935 + $0x44] sm:$0xf]
        %v4954 = vld [vmem:[%s4935 + $0x48] sm:$0xf]
        %v4955 = vld [vmem:[%s4935 + $0x4c] sm:$0xf]
        %v4956 = vld [vmem:[%s4935 + $0x50] sm:$0xf]
        %v4957 = vld [vmem:[%s4935 + $0x54] sm:$0xf]
        %v4958 = vld [vmem:[%s4935 + $0x58] sm:$0xf]
        %v4959 = vld [vmem:[%s4935 + $0x5c] sm:$0xf]
        %v4960 = vld [vmem:[%s4935 + $0x60] sm:$0xf]
        %v4961 = vld [vmem:[%s4935 + $0x64] sm:$0xf]
        %v4962 = vld [vmem:[%s4935 + $0x68] sm:$0xf]
        %v4963 = vld [vmem:[%s4935 + $0x6c] sm:$0xf]
        %v4964 = vld [vmem:[%s4935 + $0x70] sm:$0xf]
        %v4965 = vld [vmem:[%s4935 + $0x74] sm:$0xf]
        %v4966 = vld [vmem:[%s4935 + $0x78] sm:$0xf]
        %v4967 = vld [vmem:[%s4935 + $0x7c] sm:$0xf]
        %v4968 = vld [vmem:[%s4935 + $0x80] sm:$0x3]
        %v5002 = vunpack.c.l.b16 %v4936
        %v5003 = vunpack.c.l.b16 %v4937
        %v5004 = vunpack.c.l.b16 %v4938
        %v5005 = vunpack.c.l.b16 %v4939
        %v5006 = vunpack.c.l.b16 %v4940
        %v5007 = vunpack.c.l.b16 %v4941
        %v5008 = vunpack.c.l.b16 %v4942
        %v5009 = vunpack.c.l.b16 %v4943
        %v5010 = vunpack.c.l.b16 %v4944
        %v5011 = vunpack.c.l.b16 %v4945
        %v5012 = vunpack.c.l.b16 %v4946
        %v5013 = vunpack.c.l.b16 %v4947
        %v5014 = vunpack.c.l.b16 %v4948
        %v5015 = vunpack.c.l.b16 %v4949
        %v5016 = vunpack.c.l.b16 %v4950
        %v5017 = vunpack.c.l.b16 %v4951
        %v5018 = vunpack.c.l.b16 %v4952
        %v5019 = vunpack.c.l.b16 %v4953
        %v5020 = vunpack.c.l.b16 %v4954
        %v5021 = vunpack.c.l.b16 %v4955
        %v5022 = vunpack.c.l.b16 %v4956
        %v5023 = vunpack.c.l.b16 %v4957
        %v5024 = vunpack.c.l.b16 %v4958
        %v5025 = vunpack.c.l.b16 %v4959
        %v5026 = vunpack.c.l.b16 %v4960
        %v5027 = vunpack.c.l.b16 %v4961
        %v5028 = vunpack.c.l.b16 %v4962
        %v5029 = vunpack.c.l.b16 %v4963
        %v5030 = vunpack.c.l.b16 %v4964
        %v5031 = vunpack.c.l.b16 %v4965
        %v5032 = vunpack.c.l.b16 %v4966
        %v5033 = vunpack.c.l.b16 %v4967
        %v5034 = vunpack.c.l.b16 %v4968
        %v5035 = vpack.c.b16 %v5003, %v5002
        %v5036 = vpack.c.b16 %v5005, %v5004
        %v5037 = vpack.c.b16 %v5007, %v5006
        %v5038 = vpack.c.b16 %v5009, %v5008
        %v5039 = vpack.c.b16 %v5011, %v5010
        %v5040 = vpack.c.b16 %v5013, %v5012
        %v5041 = vpack.c.b16 %v5015, %v5014
        %v5042 = vpack.c.b16 %v5017, %v5016
        %v5043 = vpack.c.b16 %v5019, %v5018
        %v5044 = vpack.c.b16 %v5021, %v5020
        %v5045 = vpack.c.b16 %v5023, %v5022
        %v5046 = vpack.c.b16 %v5025, %v5024
        %v5047 = vpack.c.b16 %v5027, %v5026
        %v5048 = vpack.c.b16 %v5029, %v5028
        %v5049 = vpack.c.b16 %v5031, %v5030
        %v5050 = vpack.c.b16 %v5033, %v5032
        %v5051 = vpack.c.b16 %v5034, %v5034
        %v5069 = vsel %vm4488, %v4934, 0
        %v5072 = vsel %vm2734, %v5051, 0
        %5074 = vmatpush.bf16.msra.mxu0 %v5042
        %5075 = vmatpush.bf16.msra.mxu0 %v5041
        %5076 = vmatpush.bf16.msra.mxu0 %v5040
        %5077 = vmatpush.bf16.msra.mxu0 %v5039
        %5078 = vmatpush.bf16.msra.mxu0 %v5038
        %5079 = vmatpush.bf16.msra.mxu0 %v5037
        %5080 = vmatpush.bf16.msra.mxu0 %v5036
        %5081 = vmatpush.bf16.msra.mxu0 %v5035
        %5082 = vmatmul.bf16.gmra.mxu0 %v4932
        %v5083 = vpop.f32.mrf.mxu0
        %v5084 = vadd.f32 0.0, %v5083
        %v5085 = vpop.f32.mrf.mxu0
        %5086 = vdwg.mxu0
        %5087 = vmatpush.bf16.msra.mxu0 %v5050
        %5088 = vmatpush.bf16.msra.mxu0 %v5049
        %5089 = vmatpush.bf16.msra.mxu0 %v5048
        %5090 = vmatpush.bf16.msra.mxu0 %v5047
        %5091 = vmatpush.bf16.msra.mxu0 %v5046
        %5092 = vmatpush.bf16.msra.mxu0 %v5045
        %5093 = vmatpush.bf16.msra.mxu0 %v5044
        %5094 = vmatpush.bf16.msra.mxu0 %v5043
        %5095 = vmatmul.bf16.gmra.mxu0 %v4933
        %v5096 = vpop.f32.mrf.mxu0
        %v5097 = vadd.f32 %v5084, %v5096
        %v5098 = vpop.f32.mrf.mxu0
        %5099 = vdwg.mxu0
        %5100 = vmatpush.bf16.msra.mxu0 0
        %5101 = vmatpush.bf16.msra.mxu0 0
        %5102 = vmatpush.bf16.msra.mxu0 0
        %5103 = vmatpush.bf16.msra.mxu0 0
        %5104 = vmatpush.bf16.msra.mxu0 0
        %5105 = vmatpush.bf16.msra.mxu0 0
        %5106 = vmatpush.bf16.msra.mxu0 0
        %5107 = vmatpush.bf16.msra.mxu0 %v5072
        %5108 = vmatmul.bf16.gmra.mxu0 %v5069
        %v5109 = vpop.f32.mrf.mxu0
        %v5110 = vadd.f32 %v5097, %v5109
        %v5111 = vpop.f32.mrf.mxu0
        %5112 = vdwg.mxu0
        %5113 = vset.pattern.permute.xlu0 4
        %5114 = vperm.xlu0 %5113, %v4340
        %v5115 = vpop.permute.xlu0 %5114
        %vm5116 = vcmp.eq.s32.totalorder %v5115, %v436
        %vm5117 = vcmp.eq.s32.totalorder %v5115, %v511
        %vm5118 = vcmp.eq.s32.totalorder %v5115, %v512
        %v5119 = vsel %vm5116, 1, 0
        %v5120 = vsel %vm5117, 1, 0
        %v5121 = vsel %vm5118, 1, 0
        %v5122 = vcvt.s32.f32 %v5119
        %v5123 = vcvt.s32.f32 %v5120
        %v5124 = vcvt.s32.f32 %v5121
        %v5125 = vpack.c.bf16 %v5122, %v5122
        %v5126 = vpack.c.bf16 %v5123, %v5123
        %v5127 = vpack.c.bf16 %v5124, %v5124
        %s5128 = scalar_lea.vmem %s6, 528
        %v5129 = vld [vmem:[%s5128] sm:$0xf]
        %v5130 = vld [vmem:[%s5128 + $0x4] sm:$0xf]
        %v5131 = vld [vmem:[%s5128 + $0x8] sm:$0xf]
        %v5132 = vld [vmem:[%s5128 + $0xc] sm:$0xf]
        %v5133 = vld [vmem:[%s5128 + $0x10] sm:$0xf]
        %v5134 = vld [vmem:[%s5128 + $0x14] sm:$0xf]
        %v5135 = vld [vmem:[%s5128 + $0x18] sm:$0xf]
        %v5136 = vld [vmem:[%s5128 + $0x1c] sm:$0xf]
        %v5137 = vld [vmem:[%s5128 + $0x20] sm:$0xf]
        %v5138 = vld [vmem:[%s5128 + $0x24] sm:$0xf]
        %v5139 = vld [vmem:[%s5128 + $0x28] sm:$0xf]
        %v5140 = vld [vmem:[%s5128 + $0x2c] sm:$0xf]
        %v5141 = vld [vmem:[%s5128 + $0x30] sm:$0xf]
        %v5142 = vld [vmem:[%s5128 + $0x34] sm:$0xf]
        %v5143 = vld [vmem:[%s5128 + $0x38] sm:$0xf]
        %v5144 = vld [vmem:[%s5128 + $0x3c] sm:$0xf]
        %v5145 = vld [vmem:[%s5128 + $0x40] sm:$0xf]
        %v5146 = vld [vmem:[%s5128 + $0x44] sm:$0xf]
        %v5147 = vld [vmem:[%s5128 + $0x48] sm:$0xf]
        %v5148 = vld [vmem:[%s5128 + $0x4c] sm:$0xf]
        %v5149 = vld [vmem:[%s5128 + $0x50] sm:$0xf]
        %v5150 = vld [vmem:[%s5128 + $0x54] sm:$0xf]
        %v5151 = vld [vmem:[%s5128 + $0x58] sm:$0xf]
        %v5152 = vld [vmem:[%s5128 + $0x5c] sm:$0xf]
        %v5153 = vld [vmem:[%s5128 + $0x60] sm:$0xf]
        %v5154 = vld [vmem:[%s5128 + $0x64] sm:$0xf]
        %v5155 = vld [vmem:[%s5128 + $0x68] sm:$0xf]
        %v5156 = vld [vmem:[%s5128 + $0x6c] sm:$0xf]
        %v5157 = vld [vmem:[%s5128 + $0x70] sm:$0xf]
        %v5158 = vld [vmem:[%s5128 + $0x74] sm:$0xf]
        %v5159 = vld [vmem:[%s5128 + $0x78] sm:$0xf]
        %v5160 = vld [vmem:[%s5128 + $0x7c] sm:$0xf]
        %v5161 = vld [vmem:[%s5128 + $0x80] sm:$0x3]
        %v5195 = vunpack.c.l.b16 %v5129
        %v5196 = vunpack.c.l.b16 %v5130
        %v5197 = vunpack.c.l.b16 %v5131
        %v5198 = vunpack.c.l.b16 %v5132
        %v5199 = vunpack.c.l.b16 %v5133
        %v5200 = vunpack.c.l.b16 %v5134
        %v5201 = vunpack.c.l.b16 %v5135
        %v5202 = vunpack.c.l.b16 %v5136
        %v5203 = vunpack.c.l.b16 %v5137
        %v5204 = vunpack.c.l.b16 %v5138
        %v5205 = vunpack.c.l.b16 %v5139
        %v5206 = vunpack.c.l.b16 %v5140
        %v5207 = vunpack.c.l.b16 %v5141
        %v5208 = vunpack.c.l.b16 %v5142
        %v5209 = vunpack.c.l.b16 %v5143
        %v5210 = vunpack.c.l.b16 %v5144
        %v5211 = vunpack.c.l.b16 %v5145
        %v5212 = vunpack.c.l.b16 %v5146
        %v5213 = vunpack.c.l.b16 %v5147
        %v5214 = vunpack.c.l.b16 %v5148
        %v5215 = vunpack.c.l.b16 %v5149
        %v5216 = vunpack.c.l.b16 %v5150
        %v5217 = vunpack.c.l.b16 %v5151
        %v5218 = vunpack.c.l.b16 %v5152
        %v5219 = vunpack.c.l.b16 %v5153
        %v5220 = vunpack.c.l.b16 %v5154
        %v5221 = vunpack.c.l.b16 %v5155
        %v5222 = vunpack.c.l.b16 %v5156
        %v5223 = vunpack.c.l.b16 %v5157
        %v5224 = vunpack.c.l.b16 %v5158
        %v5225 = vunpack.c.l.b16 %v5159
        %v5226 = vunpack.c.l.b16 %v5160
        %v5227 = vunpack.c.l.b16 %v5161
        %v5228 = vpack.c.b16 %v5196, %v5195
        %v5229 = vpack.c.b16 %v5198, %v5197
        %v5230 = vpack.c.b16 %v5200, %v5199
        %v5231 = vpack.c.b16 %v5202, %v5201
        %v5232 = vpack.c.b16 %v5204, %v5203
        %v5233 = vpack.c.b16 %v5206, %v5205
        %v5234 = vpack.c.b16 %v5208, %v5207
        %v5235 = vpack.c.b16 %v5210, %v5209
        %v5236 = vpack.c.b16 %v5212, %v5211
        %v5237 = vpack.c.b16 %v5214, %v5213
        %v5238 = vpack.c.b16 %v5216, %v5215
        %v5239 = vpack.c.b16 %v5218, %v5217
        %v5240 = vpack.c.b16 %v5220, %v5219
        %v5241 = vpack.c.b16 %v5222, %v5221
        %v5242 = vpack.c.b16 %v5224, %v5223
        %v5243 = vpack.c.b16 %v5226, %v5225
        %v5244 = vpack.c.b16 %v5227, %v5227
        %v5262 = vsel %vm4488, %v5127, 0
        %v5265 = vsel %vm2734, %v5244, 0
        %5267 = vmatpush.bf16.msra.mxu0 %v5235
        %5268 = vmatpush.bf16.msra.mxu0 %v5234
        %5269 = vmatpush.bf16.msra.mxu0 %v5233
        %5270 = vmatpush.bf16.msra.mxu0 %v5232
        %5271 = vmatpush.bf16.msra.mxu0 %v5231
        %5272 = vmatpush.bf16.msra.mxu0 %v5230
        %5273 = vmatpush.bf16.msra.mxu0 %v5229
        %5274 = vmatpush.bf16.msra.mxu0 %v5228
        %5275 = vmatmul.bf16.gmra.mxu0 %v5125
        %v5276 = vpop.f32.mrf.mxu0
        %v5277 = vadd.f32 0.0, %v5276
        %v5278 = vpop.f32.mrf.mxu0
        %5279 = vdwg.mxu0
        %5280 = vmatpush.bf16.msra.mxu0 %v5243
        %5281 = vmatpush.bf16.msra.mxu0 %v5242
        %5282 = vmatpush.bf16.msra.mxu0 %v5241
        %5283 = vmatpush.bf16.msra.mxu0 %v5240
        %5284 = vmatpush.bf16.msra.mxu0 %v5239
        %5285 = vmatpush.bf16.msra.mxu0 %v5238
        %5286 = vmatpush.bf16.msra.mxu0 %v5237
        %5287 = vmatpush.bf16.msra.mxu0 %v5236
        %5288 = vmatmul.bf16.gmra.mxu0 %v5126
        %v5289 = vpop.f32.mrf.mxu0
        %v5290 = vadd.f32 %v5277, %v5289
        %v5291 = vpop.f32.mrf.mxu0
        %5292 = vdwg.mxu0
        %5293 = vmatpush.bf16.msra.mxu0 0
        %5294 = vmatpush.bf16.msra.mxu0 0
        %5295 = vmatpush.bf16.msra.mxu0 0
        %5296 = vmatpush.bf16.msra.mxu0 0
        %5297 = vmatpush.bf16.msra.mxu0 0
        %5298 = vmatpush.bf16.msra.mxu0 0
        %5299 = vmatpush.bf16.msra.mxu0 0
        %5300 = vmatpush.bf16.msra.mxu0 %v5265
        %5301 = vmatmul.bf16.gmra.mxu0 %v5262
        %v5302 = vpop.f32.mrf.mxu0
        %v5303 = vadd.f32 %v5290, %v5302
        %v5304 = vpop.f32.mrf.mxu0
        %5305 = vdwg.mxu0
        %5306 = vset.pattern.permute.xlu0 5
        %5307 = vperm.xlu0 %5306, %v4340
        %v5308 = vpop.permute.xlu0 %5307
        %vm5309 = vcmp.eq.s32.totalorder %v5308, %v436
        %vm5310 = vcmp.eq.s32.totalorder %v5308, %v511
        %vm5311 = vcmp.eq.s32.totalorder %v5308, %v512
        %v5312 = vsel %vm5309, 1, 0
        %v5313 = vsel %vm5310, 1, 0
        %v5314 = vsel %vm5311, 1, 0
        %v5315 = vcvt.s32.f32 %v5312
        %v5316 = vcvt.s32.f32 %v5313
        %v5317 = vcvt.s32.f32 %v5314
        %v5318 = vpack.c.bf16 %v5315, %v5315
        %v5319 = vpack.c.bf16 %v5316, %v5316
        %v5320 = vpack.c.bf16 %v5317, %v5317
        %s5321 = scalar_lea.vmem %s6, 660
        %v5322 = vld [vmem:[%s5321] sm:$0xf]
        %v5323 = vld [vmem:[%s5321 + $0x4] sm:$0xf]
        %v5324 = vld [vmem:[%s5321 + $0x8] sm:$0xf]
        %v5325 = vld [vmem:[%s5321 + $0xc] sm:$0xf]
        %v5326 = vld [vmem:[%s5321 + $0x10] sm:$0xf]
        %v5327 = vld [vmem:[%s5321 + $0x14] sm:$0xf]
        %v5328 = vld [vmem:[%s5321 + $0x18] sm:$0xf]
        %v5329 = vld [vmem:[%s5321 + $0x1c] sm:$0xf]
        %v5330 = vld [vmem:[%s5321 + $0x20] sm:$0xf]
        %v5331 = vld [vmem:[%s5321 + $0x24] sm:$0xf]
        %v5332 = vld [vmem:[%s5321 + $0x28] sm:$0xf]
        %v5333 = vld [vmem:[%s5321 + $0x2c] sm:$0xf]
        %v5334 = vld [vmem:[%s5321 + $0x30] sm:$0xf]
        %v5335 = vld [vmem:[%s5321 + $0x34] sm:$0xf]
        %v5336 = vld [vmem:[%s5321 + $0x38] sm:$0xf]
        %v5337 = vld [vmem:[%s5321 + $0x3c] sm:$0xf]
        %v5338 = vld [vmem:[%s5321 + $0x40] sm:$0xf]
        %v5339 = vld [vmem:[%s5321 + $0x44] sm:$0xf]
        %v5340 = vld [vmem:[%s5321 + $0x48] sm:$0xf]
        %v5341 = vld [vmem:[%s5321 + $0x4c] sm:$0xf]
        %v5342 = vld [vmem:[%s5321 + $0x50] sm:$0xf]
        %v5343 = vld [vmem:[%s5321 + $0x54] sm:$0xf]
        %v5344 = vld [vmem:[%s5321 + $0x58] sm:$0xf]
        %v5345 = vld [vmem:[%s5321 + $0x5c] sm:$0xf]
        %v5346 = vld [vmem:[%s5321 + $0x60] sm:$0xf]
        %v5347 = vld [vmem:[%s5321 + $0x64] sm:$0xf]
        %v5348 = vld [vmem:[%s5321 + $0x68] sm:$0xf]
        %v5349 = vld [vmem:[%s5321 + $0x6c] sm:$0xf]
        %v5350 = vld [vmem:[%s5321 + $0x70] sm:$0xf]
        %v5351 = vld [vmem:[%s5321 + $0x74] sm:$0xf]
        %v5352 = vld [vmem:[%s5321 + $0x78] sm:$0xf]
        %v5353 = vld [vmem:[%s5321 + $0x7c] sm:$0xf]
        %v5354 = vld [vmem:[%s5321 + $0x80] sm:$0x3]
        %v5388 = vunpack.c.l.b16 %v5322
        %v5389 = vunpack.c.l.b16 %v5323
        %v5390 = vunpack.c.l.b16 %v5324
        %v5391 = vunpack.c.l.b16 %v5325
        %v5392 = vunpack.c.l.b16 %v5326
        %v5393 = vunpack.c.l.b16 %v5327
        %v5394 = vunpack.c.l.b16 %v5328
        %v5395 = vunpack.c.l.b16 %v5329
        %v5396 = vunpack.c.l.b16 %v5330
        %v5397 = vunpack.c.l.b16 %v5331
        %v5398 = vunpack.c.l.b16 %v5332
        %v5399 = vunpack.c.l.b16 %v5333
        %v5400 = vunpack.c.l.b16 %v5334
        %v5401 = vunpack.c.l.b16 %v5335
        %v5402 = vunpack.c.l.b16 %v5336
        %v5403 = vunpack.c.l.b16 %v5337
        %v5404 = vunpack.c.l.b16 %v5338
        %v5405 = vunpack.c.l.b16 %v5339
        %v5406 = vunpack.c.l.b16 %v5340
        %v5407 = vunpack.c.l.b16 %v5341
        %v5408 = vunpack.c.l.b16 %v5342
        %v5409 = vunpack.c.l.b16 %v5343
        %v5410 = vunpack.c.l.b16 %v5344
        %v5411 = vunpack.c.l.b16 %v5345
        %v5412 = vunpack.c.l.b16 %v5346
        %v5413 = vunpack.c.l.b16 %v5347
        %v5414 = vunpack.c.l.b16 %v5348
        %v5415 = vunpack.c.l.b16 %v5349
        %v5416 = vunpack.c.l.b16 %v5350
        %v5417 = vunpack.c.l.b16 %v5351
        %v5418 = vunpack.c.l.b16 %v5352
        %v5419 = vunpack.c.l.b16 %v5353
        %v5420 = vunpack.c.l.b16 %v5354
        %v5421 = vpack.c.b16 %v5389, %v5388
        %v5422 = vpack.c.b16 %v5391, %v5390
        %v5423 = vpack.c.b16 %v5393, %v5392
        %v5424 = vpack.c.b16 %v5395, %v5394
        %v5425 = vpack.c.b16 %v5397, %v5396
        %v5426 = vpack.c.b16 %v5399, %v5398
        %v5427 = vpack.c.b16 %v5401, %v5400
        %v5428 = vpack.c.b16 %v5403, %v5402
        %v5429 = vpack.c.b16 %v5405, %v5404
        %v5430 = vpack.c.b16 %v5407, %v5406
        %v5431 = vpack.c.b16 %v5409, %v5408
        %v5432 = vpack.c.b16 %v5411, %v5410
        %v5433 = vpack.c.b16 %v5413, %v5412
        %v5434 = vpack.c.b16 %v5415, %v5414
        %v5435 = vpack.c.b16 %v5417, %v5416
        %v5436 = vpack.c.b16 %v5419, %v5418
        %v5437 = vpack.c.b16 %v5420, %v5420
        %v5455 = vsel %vm4488, %v5320, 0
        %v5458 = vsel %vm2734, %v5437, 0
        %5460 = vmatpush.bf16.msra.mxu0 %v5428
        %5461 = vmatpush.bf16.msra.mxu0 %v5427
        %5462 = vmatpush.bf16.msra.mxu0 %v5426
        %5463 = vmatpush.bf16.msra.mxu0 %v5425
        %5464 = vmatpush.bf16.msra.mxu0 %v5424
        %5465 = vmatpush.bf16.msra.mxu0 %v5423
        %5466 = vmatpush.bf16.msra.mxu0 %v5422
        %5467 = vmatpush.bf16.msra.mxu0 %v5421
        %5468 = vmatmul.bf16.gmra.mxu0 %v5318
        %v5469 = vpop.f32.mrf.mxu0
        %v5470 = vadd.f32 0.0, %v5469
        %v5471 = vpop.f32.mrf.mxu0
        %5472 = vdwg.mxu0
        %5473 = vmatpush.bf16.msra.mxu0 %v5436
        %5474 = vmatpush.bf16.msra.mxu0 %v5435
        %5475 = vmatpush.bf16.msra.mxu0 %v5434
        %5476 = vmatpush.bf16.msra.mxu0 %v5433
        %5477 = vmatpush.bf16.msra.mxu0 %v5432
        %5478 = vmatpush.bf16.msra.mxu0 %v5431
        %5479 = vmatpush.bf16.msra.mxu0 %v5430
        %5480 = vmatpush.bf16.msra.mxu0 %v5429
        %5481 = vmatmul.bf16.gmra.mxu0 %v5319
        %v5482 = vpop.f32.mrf.mxu0
        %v5483 = vadd.f32 %v5470, %v5482
        %v5484 = vpop.f32.mrf.mxu0
        %5485 = vdwg.mxu0
        %5486 = vmatpush.bf16.msra.mxu0 0
        %5487 = vmatpush.bf16.msra.mxu0 0
        %5488 = vmatpush.bf16.msra.mxu0 0
        %5489 = vmatpush.bf16.msra.mxu0 0
        %5490 = vmatpush.bf16.msra.mxu0 0
        %5491 = vmatpush.bf16.msra.mxu0 0
        %5492 = vmatpush.bf16.msra.mxu0 0
        %5493 = vmatpush.bf16.msra.mxu0 %v5458
        %5494 = vmatmul.bf16.gmra.mxu0 %v5455
        %v5495 = vpop.f32.mrf.mxu0
        %v5496 = vadd.f32 %v5483, %v5495
        %v5497 = vpop.f32.mrf.mxu0
        %5498 = vdwg.mxu0
        %5499 = vset.pattern.permute.xlu0 6
        %5500 = vperm.xlu0 %5499, %v4340
        %v5501 = vpop.permute.xlu0 %5500
        %vm5502 = vcmp.eq.s32.totalorder %v5501, %v436
        %vm5503 = vcmp.eq.s32.totalorder %v5501, %v511
        %vm5504 = vcmp.eq.s32.totalorder %v5501, %v512
        %v5505 = vsel %vm5502, 1, 0
        %v5506 = vsel %vm5503, 1, 0
        %v5507 = vsel %vm5504, 1, 0
        %v5508 = vcvt.s32.f32 %v5505
        %v5509 = vcvt.s32.f32 %v5506
        %v5510 = vcvt.s32.f32 %v5507
        %v5511 = vpack.c.bf16 %v5508, %v5508
        %v5512 = vpack.c.bf16 %v5509, %v5509
        %v5513 = vpack.c.bf16 %v5510, %v5510
        %s5514 = scalar_lea.vmem %s6, 792
        %v5515 = vld [vmem:[%s5514] sm:$0xf]
        %v5516 = vld [vmem:[%s5514 + $0x4] sm:$0xf]
        %v5517 = vld [vmem:[%s5514 + $0x8] sm:$0xf]
        %v5518 = vld [vmem:[%s5514 + $0xc] sm:$0xf]
        %v5519 = vld [vmem:[%s5514 + $0x10] sm:$0xf]
        %v5520 = vld [vmem:[%s5514 + $0x14] sm:$0xf]
        %v5521 = vld [vmem:[%s5514 + $0x18] sm:$0xf]
        %v5522 = vld [vmem:[%s5514 + $0x1c] sm:$0xf]
        %v5523 = vld [vmem:[%s5514 + $0x20] sm:$0xf]
        %v5524 = vld [vmem:[%s5514 + $0x24] sm:$0xf]
        %v5525 = vld [vmem:[%s5514 + $0x28] sm:$0xf]
        %v5526 = vld [vmem:[%s5514 + $0x2c] sm:$0xf]
        %v5527 = vld [vmem:[%s5514 + $0x30] sm:$0xf]
        %v5528 = vld [vmem:[%s5514 + $0x34] sm:$0xf]
        %v5529 = vld [vmem:[%s5514 + $0x38] sm:$0xf]
        %v5530 = vld [vmem:[%s5514 + $0x3c] sm:$0xf]
        %v5531 = vld [vmem:[%s5514 + $0x40] sm:$0xf]
        %v5532 = vld [vmem:[%s5514 + $0x44] sm:$0xf]
        %v5533 = vld [vmem:[%s5514 + $0x48] sm:$0xf]
        %v5534 = vld [vmem:[%s5514 + $0x4c] sm:$0xf]
        %v5535 = vld [vmem:[%s5514 + $0x50] sm:$0xf]
        %v5536 = vld [vmem:[%s5514 + $0x54] sm:$0xf]
        %v5537 = vld [vmem:[%s5514 + $0x58] sm:$0xf]
        %v5538 = vld [vmem:[%s5514 + $0x5c] sm:$0xf]
        %v5539 = vld [vmem:[%s5514 + $0x60] sm:$0xf]
        %v5540 = vld [vmem:[%s5514 + $0x64] sm:$0xf]
        %v5541 = vld [vmem:[%s5514 + $0x68] sm:$0xf]
        %v5542 = vld [vmem:[%s5514 + $0x6c] sm:$0xf]
        %v5543 = vld [vmem:[%s5514 + $0x70] sm:$0xf]
        %v5544 = vld [vmem:[%s5514 + $0x74] sm:$0xf]
        %v5545 = vld [vmem:[%s5514 + $0x78] sm:$0xf]
        %v5546 = vld [vmem:[%s5514 + $0x7c] sm:$0xf]
        %v5547 = vld [vmem:[%s5514 + $0x80] sm:$0x3]
        %v5581 = vunpack.c.l.b16 %v5515
        %v5582 = vunpack.c.l.b16 %v5516
        %v5583 = vunpack.c.l.b16 %v5517
        %v5584 = vunpack.c.l.b16 %v5518
        %v5585 = vunpack.c.l.b16 %v5519
        %v5586 = vunpack.c.l.b16 %v5520
        %v5587 = vunpack.c.l.b16 %v5521
        %v5588 = vunpack.c.l.b16 %v5522
        %v5589 = vunpack.c.l.b16 %v5523
        %v5590 = vunpack.c.l.b16 %v5524
        %v5591 = vunpack.c.l.b16 %v5525
        %v5592 = vunpack.c.l.b16 %v5526
        %v5593 = vunpack.c.l.b16 %v5527
        %v5594 = vunpack.c.l.b16 %v5528
        %v5595 = vunpack.c.l.b16 %v5529
        %v5596 = vunpack.c.l.b16 %v5530
        %v5597 = vunpack.c.l.b16 %v5531
        %v5598 = vunpack.c.l.b16 %v5532
        %v5599 = vunpack.c.l.b16 %v5533
        %v5600 = vunpack.c.l.b16 %v5534
        %v5601 = vunpack.c.l.b16 %v5535
        %v5602 = vunpack.c.l.b16 %v5536
        %v5603 = vunpack.c.l.b16 %v5537
        %v5604 = vunpack.c.l.b16 %v5538
        %v5605 = vunpack.c.l.b16 %v5539
        %v5606 = vunpack.c.l.b16 %v5540
        %v5607 = vunpack.c.l.b16 %v5541
        %v5608 = vunpack.c.l.b16 %v5542
        %v5609 = vunpack.c.l.b16 %v5543
        %v5610 = vunpack.c.l.b16 %v5544
        %v5611 = vunpack.c.l.b16 %v5545
        %v5612 = vunpack.c.l.b16 %v5546
        %v5613 = vunpack.c.l.b16 %v5547
        %v5614 = vpack.c.b16 %v5582, %v5581
        %v5615 = vpack.c.b16 %v5584, %v5583
        %v5616 = vpack.c.b16 %v5586, %v5585
        %v5617 = vpack.c.b16 %v5588, %v5587
        %v5618 = vpack.c.b16 %v5590, %v5589
        %v5619 = vpack.c.b16 %v5592, %v5591
        %v5620 = vpack.c.b16 %v5594, %v5593
        %v5621 = vpack.c.b16 %v5596, %v5595
        %v5622 = vpack.c.b16 %v5598, %v5597
        %v5623 = vpack.c.b16 %v5600, %v5599
        %v5624 = vpack.c.b16 %v5602, %v5601
        %v5625 = vpack.c.b16 %v5604, %v5603
        %v5626 = vpack.c.b16 %v5606, %v5605
        %v5627 = vpack.c.b16 %v5608, %v5607
        %v5628 = vpack.c.b16 %v5610, %v5609
        %v5629 = vpack.c.b16 %v5612, %v5611
        %v5630 = vpack.c.b16 %v5613, %v5613
        %v5648 = vsel %vm4488, %v5513, 0
        %v5651 = vsel %vm2734, %v5630, 0
        %5653 = vmatpush.bf16.msra.mxu0 %v5621
        %5654 = vmatpush.bf16.msra.mxu0 %v5620
        %5655 = vmatpush.bf16.msra.mxu0 %v5619
        %5656 = vmatpush.bf16.msra.mxu0 %v5618
        %5657 = vmatpush.bf16.msra.mxu0 %v5617
        %5658 = vmatpush.bf16.msra.mxu0 %v5616
        %5659 = vmatpush.bf16.msra.mxu0 %v5615
        %5660 = vmatpush.bf16.msra.mxu0 %v5614
        %5661 = vmatmul.bf16.gmra.mxu0 %v5511
        %v5662 = vpop.f32.mrf.mxu0
        %v5663 = vadd.f32 0.0, %v5662
        %v5664 = vpop.f32.mrf.mxu0
        %5665 = vdwg.mxu0
        %5666 = vmatpush.bf16.msra.mxu0 %v5629
        %5667 = vmatpush.bf16.msra.mxu0 %v5628
        %5668 = vmatpush.bf16.msra.mxu0 %v5627
        %5669 = vmatpush.bf16.msra.mxu0 %v5626
        %5670 = vmatpush.bf16.msra.mxu0 %v5625
        %5671 = vmatpush.bf16.msra.mxu0 %v5624
        %5672 = vmatpush.bf16.msra.mxu0 %v5623
        %5673 = vmatpush.bf16.msra.mxu0 %v5622
        %5674 = vmatmul.bf16.gmra.mxu0 %v5512
        %v5675 = vpop.f32.mrf.mxu0
        %v5676 = vadd.f32 %v5663, %v5675
        %v5677 = vpop.f32.mrf.mxu0
        %5678 = vdwg.mxu0
        %5679 = vmatpush.bf16.msra.mxu0 0
        %5680 = vmatpush.bf16.msra.mxu0 0
        %5681 = vmatpush.bf16.msra.mxu0 0
        %5682 = vmatpush.bf16.msra.mxu0 0
        %5683 = vmatpush.bf16.msra.mxu0 0
        %5684 = vmatpush.bf16.msra.mxu0 0
        %5685 = vmatpush.bf16.msra.mxu0 0
        %5686 = vmatpush.bf16.msra.mxu0 %v5651
        %5687 = vmatmul.bf16.gmra.mxu0 %v5648
        %v5688 = vpop.f32.mrf.mxu0
        %v5689 = vadd.f32 %v5676, %v5688
        %v5690 = vpop.f32.mrf.mxu0
        %5691 = vdwg.mxu0
        %5692 = vset.pattern.permute.xlu0 7
        %5693 = vperm.xlu0 %5692, %v4340
        %v5694 = vpop.permute.xlu0 %5693
        %vm5695 = vcmp.eq.s32.totalorder %v5694, %v436
        %vm5696 = vcmp.eq.s32.totalorder %v5694, %v511
        %vm5697 = vcmp.eq.s32.totalorder %v5694, %v512
        %v5698 = vsel %vm5695, 1, 0
        %v5699 = vsel %vm5696, 1, 0
        %v5700 = vsel %vm5697, 1, 0
        %v5701 = vcvt.s32.f32 %v5698
        %v5702 = vcvt.s32.f32 %v5699
        %v5703 = vcvt.s32.f32 %v5700
        %v5704 = vpack.c.bf16 %v5701, %v5701
        %v5705 = vpack.c.bf16 %v5702, %v5702
        %v5706 = vpack.c.bf16 %v5703, %v5703
        %s5707 = scalar_lea.vmem %s6, 924
        %v5708 = vld [vmem:[%s5707] sm:$0xf]
        %v5709 = vld [vmem:[%s5707 + $0x4] sm:$0xf]
        %v5710 = vld [vmem:[%s5707 + $0x8] sm:$0xf]
        %v5711 = vld [vmem:[%s5707 + $0xc] sm:$0xf]
        %v5712 = vld [vmem:[%s5707 + $0x10] sm:$0xf]
        %v5713 = vld [vmem:[%s5707 + $0x14] sm:$0xf]
        %v5714 = vld [vmem:[%s5707 + $0x18] sm:$0xf]
        %v5715 = vld [vmem:[%s5707 + $0x1c] sm:$0xf]
        %v5716 = vld [vmem:[%s5707 + $0x20] sm:$0xf]
        %v5717 = vld [vmem:[%s5707 + $0x24] sm:$0xf]
        %v5718 = vld [vmem:[%s5707 + $0x28] sm:$0xf]
        %v5719 = vld [vmem:[%s5707 + $0x2c] sm:$0xf]
        %v5720 = vld [vmem:[%s5707 + $0x30] sm:$0xf]
        %v5721 = vld [vmem:[%s5707 + $0x34] sm:$0xf]
        %v5722 = vld [vmem:[%s5707 + $0x38] sm:$0xf]
        %v5723 = vld [vmem:[%s5707 + $0x3c] sm:$0xf]
        %v5724 = vld [vmem:[%s5707 + $0x40] sm:$0xf]
        %v5725 = vld [vmem:[%s5707 + $0x44] sm:$0xf]
        %v5726 = vld [vmem:[%s5707 + $0x48] sm:$0xf]
        %v5727 = vld [vmem:[%s5707 + $0x4c] sm:$0xf]
        %v5728 = vld [vmem:[%s5707 + $0x50] sm:$0xf]
        %v5729 = vld [vmem:[%s5707 + $0x54] sm:$0xf]
        %v5730 = vld [vmem:[%s5707 + $0x58] sm:$0xf]
        %v5731 = vld [vmem:[%s5707 + $0x5c] sm:$0xf]
        %v5732 = vld [vmem:[%s5707 + $0x60] sm:$0xf]
        %v5733 = vld [vmem:[%s5707 + $0x64] sm:$0xf]
        %v5734 = vld [vmem:[%s5707 + $0x68] sm:$0xf]
        %v5735 = vld [vmem:[%s5707 + $0x6c] sm:$0xf]
        %v5736 = vld [vmem:[%s5707 + $0x70] sm:$0xf]
        %v5737 = vld [vmem:[%s5707 + $0x74] sm:$0xf]
        %v5738 = vld [vmem:[%s5707 + $0x78] sm:$0xf]
        %v5739 = vld [vmem:[%s5707 + $0x7c] sm:$0xf]
        %v5740 = vld [vmem:[%s5707 + $0x80] sm:$0x3]
        %v5774 = vunpack.c.l.b16 %v5708
        %v5775 = vunpack.c.l.b16 %v5709
        %v5776 = vunpack.c.l.b16 %v5710
        %v5777 = vunpack.c.l.b16 %v5711
        %v5778 = vunpack.c.l.b16 %v5712
        %v5779 = vunpack.c.l.b16 %v5713
        %v5780 = vunpack.c.l.b16 %v5714
        %v5781 = vunpack.c.l.b16 %v5715
        %v5782 = vunpack.c.l.b16 %v5716
        %v5783 = vunpack.c.l.b16 %v5717
        %v5784 = vunpack.c.l.b16 %v5718
        %v5785 = vunpack.c.l.b16 %v5719
        %v5786 = vunpack.c.l.b16 %v5720
        %v5787 = vunpack.c.l.b16 %v5721
        %v5788 = vunpack.c.l.b16 %v5722
        %v5789 = vunpack.c.l.b16 %v5723
        %v5790 = vunpack.c.l.b16 %v5724
        %v5791 = vunpack.c.l.b16 %v5725
        %v5792 = vunpack.c.l.b16 %v5726
        %v5793 = vunpack.c.l.b16 %v5727
        %v5794 = vunpack.c.l.b16 %v5728
        %v5795 = vunpack.c.l.b16 %v5729
        %v5796 = vunpack.c.l.b16 %v5730
        %v5797 = vunpack.c.l.b16 %v5731
        %v5798 = vunpack.c.l.b16 %v5732
        %v5799 = vunpack.c.l.b16 %v5733
        %v5800 = vunpack.c.l.b16 %v5734
        %v5801 = vunpack.c.l.b16 %v5735
        %v5802 = vunpack.c.l.b16 %v5736
        %v5803 = vunpack.c.l.b16 %v5737
        %v5804 = vunpack.c.l.b16 %v5738
        %v5805 = vunpack.c.l.b16 %v5739
        %v5806 = vunpack.c.l.b16 %v5740
        %v5807 = vpack.c.b16 %v5775, %v5774
        %v5808 = vpack.c.b16 %v5777, %v5776
        %v5809 = vpack.c.b16 %v5779, %v5778
        %v5810 = vpack.c.b16 %v5781, %v5780
        %v5811 = vpack.c.b16 %v5783, %v5782
        %v5812 = vpack.c.b16 %v5785, %v5784
        %v5813 = vpack.c.b16 %v5787, %v5786
        %v5814 = vpack.c.b16 %v5789, %v5788
        %v5815 = vpack.c.b16 %v5791, %v5790
        %v5816 = vpack.c.b16 %v5793, %v5792
        %v5817 = vpack.c.b16 %v5795, %v5794
        %v5818 = vpack.c.b16 %v5797, %v5796
        %v5819 = vpack.c.b16 %v5799, %v5798
        %v5820 = vpack.c.b16 %v5801, %v5800
        %v5821 = vpack.c.b16 %v5803, %v5802
        %v5822 = vpack.c.b16 %v5805, %v5804
        %v5823 = vpack.c.b16 %v5806, %v5806
        %v5841 = vsel %vm4488, %v5706, 0
        %v5844 = vsel %vm2734, %v5823, 0
        %5846 = vmatpush.bf16.msra.mxu0 %v5814
        %5847 = vmatpush.bf16.msra.mxu0 %v5813
        %5848 = vmatpush.bf16.msra.mxu0 %v5812
        %5849 = vmatpush.bf16.msra.mxu0 %v5811
        %5850 = vmatpush.bf16.msra.mxu0 %v5810
        %5851 = vmatpush.bf16.msra.mxu0 %v5809
        %5852 = vmatpush.bf16.msra.mxu0 %v5808
        %5853 = vmatpush.bf16.msra.mxu0 %v5807
        %5854 = vmatmul.bf16.gmra.mxu0 %v5704
        %v5855 = vpop.f32.mrf.mxu0
        %v5856 = vadd.f32 0.0, %v5855
        %v5857 = vpop.f32.mrf.mxu0
        %5858 = vdwg.mxu0
        %5859 = vmatpush.bf16.msra.mxu0 %v5822
        %5860 = vmatpush.bf16.msra.mxu0 %v5821
        %5861 = vmatpush.bf16.msra.mxu0 %v5820
        %5862 = vmatpush.bf16.msra.mxu0 %v5819
        %5863 = vmatpush.bf16.msra.mxu0 %v5818
        %5864 = vmatpush.bf16.msra.mxu0 %v5817
        %5865 = vmatpush.bf16.msra.mxu0 %v5816
        %5866 = vmatpush.bf16.msra.mxu0 %v5815
        %5867 = vmatmul.bf16.gmra.mxu0 %v5705
        %v5868 = vpop.f32.mrf.mxu0
        %v5869 = vadd.f32 %v5856, %v5868
        %v5870 = vpop.f32.mrf.mxu0
        %5871 = vdwg.mxu0
        %5872 = vmatpush.bf16.msra.mxu0 0
        %5873 = vmatpush.bf16.msra.mxu0 0
        %5874 = vmatpush.bf16.msra.mxu0 0
        %5875 = vmatpush.bf16.msra.mxu0 0
        %5876 = vmatpush.bf16.msra.mxu0 0
        %5877 = vmatpush.bf16.msra.mxu0 0
        %5878 = vmatpush.bf16.msra.mxu0 0
        %5879 = vmatpush.bf16.msra.mxu0 %v5844
        %5880 = vmatmul.bf16.gmra.mxu0 %v5841
        %v5881 = vpop.f32.mrf.mxu0
        %v5882 = vadd.f32 %v5869, %v5881
        %v5883 = vpop.f32.mrf.mxu0
        %5884 = vdwg.mxu0
        %5886 = vrot.lane.b32.xlu0 %v4724, 4
        %v5887 = vpop.permute.xlu0 %5886
        %5890 = vrot.lane.b32.xlu0 %v4917, 8
        %v5891 = vpop.permute.xlu0 %5890
        %5894 = vrot.lane.b32.xlu0 %v5110, 12
        %v5895 = vpop.permute.xlu0 %5894
        %5898 = vrot.lane.b32.xlu0 %v5303, 16
        %v5899 = vpop.permute.xlu0 %5898
        %5902 = vrot.lane.b32.xlu0 %v5496, 20
        %v5903 = vpop.permute.xlu0 %5902
        %5906 = vrot.lane.b32.xlu0 %v5689, 24
        %v5907 = vpop.permute.xlu0 %5906
        %5910 = vrot.lane.b32.xlu0 %v5882, 28
        %v5911 = vpop.permute.xlu0 %5910
        %v5913 = vsel %vm4488, %v4531, %v5887
        %vm5914 = vcmask 64512
        %v5915 = vsel %vm5914, %v5913, %v5891
        %vm5916 = vcmask 97280
        %v5917 = vsel %vm5916, %v5915, %v5895
        %vm5918 = vcmask 130048
        %v5919 = vsel %vm5918, %v5917, %v5899
        %vm5920 = vcmask 162816
        %v5921 = vsel %vm5920, %v5919, %v5903
        %vm5922 = vcmask 195584
        %v5923 = vsel %vm5922, %v5921, %v5907
        %vm5924 = vcmask 228352
        %v5925 = vsel %vm5924, %v5923, %v5911
        %vm5926 = vcmask 261120
        %v5927 = vsel %vm5926, %v5925, 0.0
        %v5928 = vadd.f32 %v4339, %v5927
        %5929 = vst [vmem:[%s424] sm:$0xff] %v5928
        %s5930 = sand.u32 %s218, 1
        %s5931 = scalar_lea.sflag [#allocation4], %s5930
        %s5932 = sand.u32 %s218, 1
        %s5933 = smul.addr %s5932, 8
        %s5934 = scalar_lea.vmem [#allocation11], %s5933
        // Predicated region
        $region69: #{tpu_custom_call.1} parent=47 // pred_check
          %p5935 = pneg %p228
        $region70: #{tpu_custom_call.1} parent=47 // pred_check_branch
          %5937 = sbr.rel (%p5935) target = $region72
        $region71: #{tpu_custom_call.1} parent=47 // pred_region
          %5939 = vsyncadd %s5931, 0
          %s5940 = sadd.s32 %s33, %s32
          %s5941 = smul.addr %s5940, 8
          %s5942 = scalar_lea.hbm %s7, %s5941
          %s5944 = sshll.u32 %s5934, 4
          %s5945 = int_to_ptr.vmem [resolvable:$true] %s5944
          %s5946 = sshll.u32 %s5942, 4
          %s5947 = int_to_ptr.hbm [resolvable:$true] %s5946
          %5949 = dma.vmem_to_hbm [thread:$0]  %s5945, 128, %s5947, %s5931
        $region72: #{tpu_custom_call.1} parent=47 // pred_fallthru
          _
      $region48: #{tpu_custom_call.1} parent=5 // pred_fallthru
        _
      %p5950 = scmp.le.s32.totalorder 2, %s23
      // Predicated region
      $region73: #{tpu_custom_call.1} parent=5 // pred_check
        %p5951 = pneg %p5950
      $region74: #{tpu_custom_call.1} parent=5 // pred_check_branch
        %5953 = sbr.rel (%p5951) target = $region76
      $region75: #{tpu_custom_call.1} parent=5 // pred_region
        %s5954 = ssub.s32 %s23, 2
        // Predicated region
        $region77: #{tpu_custom_call.1} parent=75 // pred_check
          %p5955 = pneg %p234
        $region78: #{tpu_custom_call.1} parent=75 // pred_check_branch
          %5957 = sbr.rel (%p5955) target = $region80
        $region79: #{tpu_custom_call.1} parent=75 // pred_region
          %s5958 = sand.u32 %s219, 1
          %s5959 = scalar_lea.sflag [#allocation4], %s5958
          %s5960 = sand.u32 %s219, 1
          %s5961 = smul.addr %s5960, 8
          %s5962 = scalar_lea.vmem [#allocation11], %s5961
          %5964 = dma.done %s5959, 128
        $region80: #{tpu_custom_call.1} parent=75 // pred_fallthru
          _
      $region76: #{tpu_custom_call.1} parent=5 // pred_fallthru
        _
    $region6: #{tpu_custom_call.1} parent=1 // loop_footer
      %s27 = sadd.s32 1, %s23
    $region7: #{tpu_custom_call.1} parent=1 // loop_footer_branch
      %22 = sbr.rel target = $region3
    $region8: #{tpu_custom_call.1} parent=1 // loop_exit
      _
    %5965 = vsyncpa [#allocation3], 1
    %s5966 = scalar_lea.sflag [#allocation3], 1
    %5967 = vsyncpa %s5966, 1
    %5968 = vsyncpa [#allocation6], 1
    %s5969 = scalar_lea.sflag [#allocation6], 1
    %5970 = vsyncpa %s5969, 1
    %5971 = vsyncpa [#allocation9], 1
    %5972 = vsyncpa [#allocation4], 1
    %s5973 = scalar_lea.sflag [#allocation4], 1
    %5974 = vsyncpa %s5973, 1

// kernel: tpu_custom_call.1
$region0: #{tpu_custom_call.1}
  #allocation0 [shape = 'u32[]', space=smem, size = 0x4, offset = 0x4, fixed_abs, tag = 'smem constant byte address 0x4 - core index']
  #allocation1 [shape = 'u32[72,128]{1,0:T(1,128)}', space=vmem, size = 0x9000, scoped, tag = 'internal scratch']
  %s0 = inlined_call_operand.hbm [shape: f32[2,8,8], index: 0, kind: input, shape index: {}]
  %s1 = inlined_call_operand.hbm [shape: s32[2,8,8], index: 1, kind: input, shape index: {}]
  %s2 = inlined_call_operand.vmem [shape: s32[2,8,4], index: 2, kind: input, shape index: {}]
  %s3 = inlined_call_operand.hbm [shape: bf16[128,128], index: 3, kind: input, shape index: {}]
  %s4 = inlined_call_operand.hbm [shape: bf16[4101,128], index: 4, kind: input, shape index: {}]
  %s5 = inlined_call_operand.hbm [shape: bf16[1478,128], index: 5, kind: input, shape index: {}]
  %s6 = inlined_call_operand.vmem [shape: bf16[8,260,4], index: 6, kind: input, shape index: {}]
  %s7 = inlined_call_operand.hbm [shape: f32[2,8,128], index: 7, kind: output, shape index: {}]
  %s8 = sld [smem:[#allocation0]]
  $region81: #{tpu_custom_call.1} parent=0
    _
  %s10 = ssub.s32 1, %s8
  %s11 = scalar_select 0, %s10, %s8
  $region1: #{tpu_custom_call.1} parent=0
    #allocation2 [shape = 'u8[8192]{0}', space=vmem, size = 0x2000, scoped, tag = 'input window, operand 0']
    #allocation3 [shape = 's32[2]{0}', space=sflag, size = 0x8, scoped, tag = 'scoped memory for tpu_custom_call.1']
    #allocation4 [shape = 's32[2]{0}', space=sflag, size = 0x8, scoped, tag = 'scoped memory for tpu_custom_call.1']
    #allocation5 [shape = 'u8[8192]{0}', space=vmem, size = 0x2000, scoped, tag = 'input window, operand 1']
    #allocation6 [shape = 's32[2]{0}', space=sflag, size = 0x8, scoped, tag = 'scoped memory for tpu_custom_call.1']
    #allocation7 [shape = 'u8[32768]{0}', space=vmem, size = 0x8000, scoped, tag = 'input window, operand 3, single buffered']
    #allocation8 [shape = 'u8[1050624]{0}', space=vmem, size = 0x100800, scoped, tag = 'input window, operand 4, single buffered']
    #allocation9 [shape = 's32[1]{0}', space=sflag, size = 0x4, scoped, tag = 'scoped memory for tpu_custom_call.1']
    #allocation10 [shape = 'u8[378880]{0}', space=vmem, size = 0x5c800, scoped, tag = 'input window, operand 5, single buffered']
    #allocation11 [shape = 'u8[8192]{0}', space=vmem, size = 0x2000, scoped, tag = 'output window, operand 0']
    %12 = vsyncpa [#allocation3], 0
    %s13 = scalar_lea.sflag [#allocation3], 1
    %14 = vsyncpa %s13, 0
    %15 = vsyncpa [#allocation6], 0
    %s16 = scalar_lea.sflag [#allocation6], 1
    %17 = vsyncpa %s16, 0
    %18 = vsyncpa [#allocation9], 0
    %19 = vsyncpa [#allocation4], 0
    %s20 = scalar_lea.sflag [#allocation4], 1
    %21 = vsyncpa %s20, 0
    loop: start=0, step=1, limit=4
    $region2: #{tpu_custom_call.1} parent=1 // loop_pre_header
      _
    $region3: #{tpu_custom_call.1} parent=1 // loop_header
      %s23 = sphi 0, %s27
      %p24 = scmp.ge.s32.totalorder %s23, 4
      %s30 = sphi 0, %s42
      %s31 = sphi 0, %s38
      %s32 = sphi 0, %s30
      %s33 = sphi 0, %s31
      %s34 = sphi 0, %s32
      %s35 = sphi 0, %s33
      %s47 = sphi 0, %s49
      %s50 = sphi 0, %s47
      %s51 = sphi 0, %s50
      %s67 = sphi 0, %s51
      %s75 = sphi 0, %s77
      %s78 = sphi 0, %s75
      %s79 = sphi 0, %s78
      %s95 = sphi 0, %s79
      %s103 = sphi 0, %s105
      %s106 = sphi 0, %s103
      %s107 = sphi 0, %s106
      %s123 = sphi 0, %s107
      %s127 = sphi 0, %s127
      %s129 = sphi 0, %s127
      %s130 = sphi 0, %s129
      %s144 = sphi 0, %s130
      %s148 = sphi 0, %s148
      %s150 = sphi 0, %s148
      %s151 = sphi 0, %s150
      %s165 = sphi 0, %s151
      %s169 = sphi 0, %s169
      %s171 = sphi 0, %s169
      %s172 = sphi 0, %s171
      %s186 = sphi 0, %s172
      %s190 = sphi 0, %s190
      %s192 = sphi 0, %s190
      %s193 = sphi 0, %s192
      %s207 = sphi 0, %s193
      %s215 = sphi 0, %s217
      %s218 = sphi 0, %s215
      %s219 = sphi 0, %s218
      %s235 = sphi 0, %s219
    $region4: #{tpu_custom_call.1} parent=1 // loop_header_branch
      %26 = sbr.rel (%p24) target = $region8
    $region5: #{tpu_custom_call.1} parent=1 // loop_body
      %s28 = ssub.s32 %s23, 1
      %s29 = ssub.s32 %s23, 2
      %s36 = sadd.s32 1, %s31
      %p37 = scmp.ge.s32.totalorder %s36, 1
      %s38 = scalar_select %p37, 0, %s36
      %s39 = sadd.s32 1, %s30
      %s40 = scalar_select %p37, %s39, %s30
      %p41 = scmp.ge.s32.totalorder %s40, 2
      %s42 = scalar_select %p41, 0, %s40
      %s43 = ssub.s32 %s30, %s42
      %s44 = ssub.s32 %s31, %s38
      %s45 = sor.u32 %s43, %s44
      %p46 = scmp.eq.s32.totalorder %s45, 0
      %s48 = sadd.s32 %s47, 1
      %s49 = scalar_select %p46, %s47, %s48
      %p52 = pneg %p46
      %p53 = scmp.eq.s32.totalorder %s23, 1
      %p54 = por %p52, %p53
      %p55 = scmp.ne.s32.totalorder %s47, %s50
      %p56 = scmp.eq.s32.totalorder %s23, 0
      %p57 = por %p55, %p56
      %p58 = scmp.ne.s32.totalorder %s47, %s50
      %p59 = scmp.eq.s32.totalorder %s28, 1
      %p60 = por %p58, %p59
      %p61 = scmp.ne.s32.totalorder %s50, %s51
      %p62 = scmp.eq.s32.totalorder %s28, 0
      %p63 = por %p61, %p62
      %p64 = scmp.ne.s32.totalorder %s50, %s51
      %p65 = scmp.eq.s32.totalorder %s29, 1
      %p66 = por %p64, %p65
      %p68 = scmp.ne.s32.totalorder %s51, %s67
      %p69 = scmp.eq.s32.totalorder %s29, 0
      %p70 = por %p68, %p69
      %s71 = ssub.s32 %s30, %s42
      %s72 = ssub.s32 %s31, %s38
      %s73 = sor.u32 %s71, %s72
      %p74 = scmp.eq.s32.totalorder %s73, 0
      %s76 = sadd.s32 %s75, 1
      %s77 = scalar_select %p74, %s75, %s76
      %p80 = pneg %p74
      %p81 = scmp.eq.s32.totalorder %s23, 1
      %p82 = por %p80, %p81
      %p83 = scmp.ne.s32.totalorder %s75, %s78
      %p84 = scmp.eq.s32.totalorder %s23, 0
      %p85 = por %p83, %p84
      %p86 = scmp.ne.s32.totalorder %s75, %s78
      %p87 = scmp.eq.s32.totalorder %s28, 1
      %p88 = por %p86, %p87
      %p89 = scmp.ne.s32.totalorder %s78, %s79
      %p90 = scmp.eq.s32.totalorder %s28, 0
      %p91 = por %p89, %p90
      %p92 = scmp.ne.s32.totalorder %s78, %s79
      %p93 = scmp.eq.s32.totalorder %s29, 1
      %p94 = por %p92, %p93
      %p96 = scmp.ne.s32.totalorder %s79, %s95
      %p97 = scmp.eq.s32.totalorder %s29, 0
      %p98 = por %p96, %p97
      %s99 = ssub.s32 %s30, %s42
      %s100 = ssub.s32 %s31, %s38
      %s101 = sor.u32 %s99, %s100
      %p102 = scmp.eq.s32.totalorder %s101, 0
      %s104 = sadd.s32 %s103, 1
      %s105 = scalar_select %p102, %s103, %s104
      %p108 = pneg %p102
      %p109 = scmp.eq.s32.totalorder %s23, 1
      %p110 = por %p108, %p109
      %p111 = scmp.ne.s32.totalorder %s103, %s106
      %p112 = scmp.eq.s32.totalorder %s23, 0
      %p113 = por %p111, %p112
      %p114 = scmp.ne.s32.totalorder %s103, %s106
      %p115 = scmp.eq.s32.totalorder %s28, 1
      %p116 = por %p114, %p115
      %p117 = scmp.ne.s32.totalorder %s106, %s107
      %p118 = scmp.eq.s32.totalorder %s28, 0
      %p119 = por %p117, %p118
      %p120 = scmp.ne.s32.totalorder %s106, %s107
      %p121 = scmp.eq.s32.totalorder %s29, 1
      %p122 = por %p120, %p121
      %p124 = scmp.ne.s32.totalorder %s107, %s123
      %p125 = scmp.eq.s32.totalorder %s29, 0
      %p126 = por %p124, %p125
      %s128 = sadd.s32 %s127, 1
      %p131 = scmp.eq.s32.totalorder %s23, 1
      %p132 = scmp.ne.s32.totalorder %s127, %s129
      %p133 = scmp.eq.s32.totalorder %s23, 0
      %p134 = por %p132, %p133
      %p135 = scmp.ne.s32.totalorder %s127, %s129
      %p136 = scmp.eq.s32.totalorder %s28, 1
      %p137 = por %p135, %p136
      %p138 = scmp.ne.s32.totalorder %s129, %s130
      %p139 = scmp.eq.s32.totalorder %s28, 0
      %p140 = por %p138, %p139
      %p141 = scmp.ne.s32.totalorder %s129, %s130
      %p142 = scmp.eq.s32.totalorder %s29, 1
      %p143 = por %p141, %p142
      %p145 = scmp.ne.s32.totalorder %s130, %s144
      %p146 = scmp.eq.s32.totalorder %s29, 0
      %p147 = por %p145, %p146
      %s149 = sadd.s32 %s148, 1
      %p152 = scmp.eq.s32.totalorder %s23, 1
      %p153 = scmp.ne.s32.totalorder %s148, %s150
      %p154 = scmp.eq.s32.totalorder %s23, 0
      %p155 = por %p153, %p154
      %p156 = scmp.ne.s32.totalorder %s148, %s150
      %p157 = scmp.eq.s32.totalorder %s28, 1
      %p158 = por %p156, %p157
      %p159 = scmp.ne.s32.totalorder %s150, %s151
      %p160 = scmp.eq.s32.totalorder %s28, 0
      %p161 = por %p159, %p160
      %p162 = scmp.ne.s32.totalorder %s150, %s151
      %p163 = scmp.eq.s32.totalorder %s29, 1
      %p164 = por %p162, %p163
      %p166 = scmp.ne.s32.totalorder %s151, %s165
      %p167 = scmp.eq.s32.totalorder %s29, 0
      %p168 = por %p166, %p167
      %s170 = sadd.s32 %s169, 1
      %p173 = scmp.eq.s32.totalorder %s23, 1
      %p174 = scmp.ne.s32.totalorder %s169, %s171
      %p175 = scmp.eq.s32.totalorder %s23, 0
      %p176 = por %p174, %p175
      %p177 = scmp.ne.s32.totalorder %s169, %s171
      %p178 = scmp.eq.s32.totalorder %s28, 1
      %p179 = por %p177, %p178
      %p180 = scmp.ne.s32.totalorder %s171, %s172
      %p181 = scmp.eq.s32.totalorder %s28, 0
      %p182 = por %p180, %p181
      %p183 = scmp.ne.s32.totalorder %s171, %s172
      %p184 = scmp.eq.s32.totalorder %s29, 1
      %p185 = por %p183, %p184
      %p187 = scmp.ne.s32.totalorder %s172, %s186
      %p188 = scmp.eq.s32.totalorder %s29, 0
      %p189 = por %p187, %p188
      %s191 = sadd.s32 %s190, 1
      %p194 = scmp.eq.s32.totalorder %s23, 1
      %p195 = scmp.ne.s32.totalorder %s190, %s192
      %p196 = scmp.eq.s32.totalorder %s23, 0
      %p197 = por %p195, %p196
      %p198 = scmp.ne.s32.totalorder %s190, %s192
      %p199 = scmp.eq.s32.totalorder %s28, 1
      %p200 = por %p198, %p199
      %p201 = scmp.ne.s32.totalorder %s192, %s193
      %p202 = scmp.eq.s32.totalorder %s28, 0
      %p203 = por %p201, %p202
      %p204 = scmp.ne.s32.totalorder %s192, %s193
      %p205 = scmp.eq.s32.totalorder %s29, 1
      %p206 = por %p204, %p205
      %p208 = scmp.ne.s32.totalorder %s193, %s207
      %p209 = scmp.eq.s32.totalorder %s29, 0
      %p210 = por %p208, %p209
      %s211 = ssub.s32 %s30, %s42
      %s212 = ssub.s32 %s31, %s38
      %s213 = sor.u32 %s211, %s212
      %p214 = scmp.eq.s32.totalorder %s213, 0
      %s216 = sadd.s32 %s215, 1
      %s217 = scalar_select %p214, %s215, %s216
      %p220 = pneg %p214
      %p221 = scmp.eq.s32.totalorder %s23, 1
      %p222 = por %p220, %p221
      %p223 = scmp.ne.s32.totalorder %s215, %s218
      %p224 = scmp.eq.s32.totalorder %s23, 0
      %p225 = por %p223, %p224
      %p226 = scmp.ne.s32.totalorder %s215, %s218
      %p227 = scmp.eq.s32.totalorder %s28, 1
      %p228 = por %p226, %p227
      %p229 = scmp.ne.s32.totalorder %s218, %s219
      %p230 = scmp.eq.s32.totalorder %s28, 0
      %p231 = por %p229, %p230
      %p232 = scmp.ne.s32.totalorder %s218, %s219
      %p233 = scmp.eq.s32.totalorder %s29, 1
      %p234 = por %p232, %p233
      %p236 = scmp.ne.s32.totalorder %s219, %s235
      %p237 = scmp.eq.s32.totalorder %s29, 0
      %p238 = por %p236, %p237
      %p239 = scmp.le.s32.totalorder 1, %s23
      %p240 = scmp.lt.s32.totalorder %s23, 3
      %p241 = pnand %p239, %p240
      %p242 = pneg %p241
      // Predicated region
      $region9: #{tpu_custom_call.1} parent=5 // pred_check
        _
      $region10: #{tpu_custom_call.1} parent=5 // pred_check_branch
        %244 = sbr.rel (%p241) target = $region12
      $region11: #{tpu_custom_call.1} parent=5 // pred_region
        %s245 = ssub.s32 %s23, 1
        // Predicated region
        $region13: #{tpu_custom_call.1} parent=11 // pred_check
          %p246 = pneg %p140
        $region14: #{tpu_custom_call.1} parent=11 // pred_check_branch
          %248 = sbr.rel (%p246) target = $region16
        $region15: #{tpu_custom_call.1} parent=11 // pred_region
          %250 = vsyncadd [#allocation6], 0
          %s251 = sshll.u32 %s3, 4
          %s252 = int_to_ptr.hbm [resolvable:$true] %s251
          %s253 = sshll.u32 [#allocation7], 4
          %s254 = int_to_ptr.vmem [resolvable:$true] %s253
          %259 = dma.hbm_to_vmem [thread:$0]  %s252, 1024, %s254, [#allocation6], 64, 64, 4
        $region16: #{tpu_custom_call.1} parent=11 // pred_fallthru
          _
        // Predicated region
        $region17: #{tpu_custom_call.1} parent=11 // pred_check
          %p260 = pneg %p161
        $region18: #{tpu_custom_call.1} parent=11 // pred_check_branch
          %262 = sbr.rel (%p260) target = $region20
        $region19: #{tpu_custom_call.1} parent=11 // pred_region
          %264 = vsyncadd [#allocation9], 0
          %s265 = sshll.u32 %s4, 4
          %s266 = int_to_ptr.hbm [resolvable:$true] %s265
          %s267 = sshll.u32 [#allocation8], 4
          %s268 = int_to_ptr.vmem [resolvable:$true] %s267
          %273 = dma.hbm_to_vmem [thread:$0]  %s266, 32832, %s268, [#allocation9], 64, 64, 4
        $region20: #{tpu_custom_call.1} parent=11 // pred_fallthru
          _
        // Predicated region
        $region21: #{tpu_custom_call.1} parent=11 // pred_check
          %p274 = pneg %p182
        $region22: #{tpu_custom_call.1} parent=11 // pred_check_branch
          %276 = sbr.rel (%p274) target = $region24
        $region23: #{tpu_custom_call.1} parent=11 // pred_region
          %278 = vsyncadd [#allocation9], 0
          %s279 = sshll.u32 %s5, 4
          %s280 = int_to_ptr.hbm [resolvable:$true] %s279
          %s281 = sshll.u32 [#allocation10], 4
          %s282 = int_to_ptr.vmem [resolvable:$true] %s281
          %287 = dma.hbm_to_vmem [thread:$0]  %s280, 11840, %s282, [#allocation9], 64, 64, 4
        $region24: #{tpu_custom_call.1} parent=11 // pred_fallthru
          _
        // Predicated region
        $region25: #{tpu_custom_call.1} parent=11 // pred_check
          %p288 = pneg %p203
        $region26: #{tpu_custom_call.1} parent=11 // pred_check_branch
          %290 = sbr.rel (%p288) target = $region28
        $region27: #{tpu_custom_call.1} parent=11 // pred_region
          _
        $region28: #{tpu_custom_call.1} parent=11 // pred_fallthru
          _
      $region12: #{tpu_custom_call.1} parent=5 // pred_fallthru
        _
      %p291 = scmp.lt.s32.totalorder %s23, 2
      // Predicated region
      $region29: #{tpu_custom_call.1} parent=5 // pred_check
        %p292 = pneg %p291
      $region30: #{tpu_custom_call.1} parent=5 // pred_check_branch
        %294 = sbr.rel (%p292) target = $region32
      $region31: #{tpu_custom_call.1} parent=5 // pred_region
        // Predicated region
        $region33: #{tpu_custom_call.1} parent=31 // pred_check
          %p295 = pneg %p57
        $region34: #{tpu_custom_call.1} parent=31 // pred_check_branch
          %297 = sbr.rel (%p295) target = $region36
        $region35: #{tpu_custom_call.1} parent=31 // pred_region
          %s298 = sand.u32 %s47, 1
          %s299 = scalar_lea.sflag [#allocation3], %s298
          %s300 = sand.u32 %s47, 1
          %s301 = smul.addr %s300, 8
          %s302 = scalar_lea.vmem [#allocation2], %s301
          %304 = vsyncadd %s299, 0
          %s305 = sadd.s32 %s31, %s30
          %s306 = smul.addr %s305, 8
          %s307 = scalar_lea.hbm %s0, %s306
          %s309 = sshll.u32 %s307, 4
          %s310 = int_to_ptr.hbm [resolvable:$true] %s309
          %s311 = sshll.u32 %s302, 4
          %s312 = int_to_ptr.vmem [resolvable:$true] %s311
          %314 = dma.hbm_to_vmem [thread:$0]  %s310, 128, %s312, %s299
        $region36: #{tpu_custom_call.1} parent=31 // pred_fallthru
          _
        // Predicated region
        $region37: #{tpu_custom_call.1} parent=31 // pred_check
          %p315 = pneg %p85
        $region38: #{tpu_custom_call.1} parent=31 // pred_check_branch
          %317 = sbr.rel (%p315) target = $region40
        $region39: #{tpu_custom_call.1} parent=31 // pred_region
          %s318 = sand.u32 %s23, 1
          %s319 = scalar_lea.sflag [#allocation6], %s318
          %s320 = sand.u32 %s75, 1
          %s321 = smul.addr %s320, 8
          %s322 = scalar_lea.vmem [#allocation5], %s321
          %324 = vsyncadd %s319, 0
          %s325 = sadd.s32 %s31, %s30
          %s326 = smul.addr %s325, 8
          %s327 = scalar_lea.hbm %s1, %s326
          %s329 = sshll.u32 %s327, 4
          %s330 = int_to_ptr.hbm [resolvable:$true] %s329
          %s331 = sshll.u32 %s322, 4
          %s332 = int_to_ptr.vmem [resolvable:$true] %s331
          %334 = dma.hbm_to_vmem [thread:$0]  %s330, 128, %s332, %s319
        $region40: #{tpu_custom_call.1} parent=31 // pred_fallthru
          _
        // Predicated region
        $region41: #{tpu_custom_call.1} parent=31 // pred_check
          %p335 = pneg %p113
        $region42: #{tpu_custom_call.1} parent=31 // pred_check_branch
          %337 = sbr.rel (%p335) target = $region44
        $region43: #{tpu_custom_call.1} parent=31 // pred_region
          %p338 = scmp.lt.s32.totalorder %s30, 1
          %s339 = scalar_select %p338, %s30, 1
          %p340 = scmp.lt.s32.totalorder %s31, 0
          %s341 = scalar_select %p340, %s31, 0
          %s342 = sadd.s32 %s341, %s339
          %s343 = smul.addr %s342, 8
          %s344 = scalar_lea.vmem %s2, %s343
        $region44: #{tpu_custom_call.1} parent=31 // pred_fallthru
          _
      $region32: #{tpu_custom_call.1} parent=5 // pred_fallthru
        _
      %p345 = scmp.le.s32.totalorder 1, %s23
      %p346 = scmp.lt.s32.totalorder %s23, 3
      %p347 = pnand %p345, %p346
      %p348 = pneg %p347
      // Predicated region
      $region45: #{tpu_custom_call.1} parent=5 // pred_check
        _
      $region46: #{tpu_custom_call.1} parent=5 // pred_check_branch
        %350 = sbr.rel (%p347) target = $region48
      $region47: #{tpu_custom_call.1} parent=5 // pred_region
        %s351 = ssub.s32 %s23, 1
        %s352 = sand.u32 %s50, 1
        %s353 = scalar_lea.sflag [#allocation3], %s352
        %s354 = sand.u32 %s50, 1
        %s355 = smul.addr %s354, 8
        %s356 = scalar_lea.vmem [#allocation2], %s355
        // Predicated region
        $region49: #{tpu_custom_call.1} parent=47 // pred_check
          %p357 = pneg %p63
        $region50: #{tpu_custom_call.1} parent=47 // pred_check_branch
          %359 = sbr.rel (%p357) target = $region52
        $region51: #{tpu_custom_call.1} parent=47 // pred_region
          %361 = dma.done %s353, 128
        $region52: #{tpu_custom_call.1} parent=47 // pred_fallthru
          _
        %s362 = sand.u32 %s28, 1
        %s363 = scalar_lea.sflag [#allocation6], %s362
        %s364 = sand.u32 %s78, 1
        %s365 = smul.addr %s364, 8
        %s366 = scalar_lea.vmem [#allocation5], %s365
        // Predicated region
        $region53: #{tpu_custom_call.1} parent=47 // pred_check
          %p367 = pneg %p91
        $region54: #{tpu_custom_call.1} parent=47 // pred_check_branch
          %369 = sbr.rel (%p367) target = $region56
        $region55: #{tpu_custom_call.1} parent=47 // pred_region
          %371 = dma.done %s363, 128
        $region56: #{tpu_custom_call.1} parent=47 // pred_fallthru
          _
        // Predicated region
        $region57: #{tpu_custom_call.1} parent=47 // pred_check
          %p372 = pneg %p140
        $region58: #{tpu_custom_call.1} parent=47 // pred_check_branch
          %374 = sbr.rel (%p372) target = $region60
        $region59: #{tpu_custom_call.1} parent=47 // pred_region
          %376 = dma.done [#allocation6], 1024
        $region60: #{tpu_custom_call.1} parent=47 // pred_fallthru
          _
        // Predicated region
        $region61: #{tpu_custom_call.1} parent=47 // pred_check
          %p377 = pneg %p161
        $region62: #{tpu_custom_call.1} parent=47 // pred_check_branch
          %379 = sbr.rel (%p377) target = $region64
        $region63: #{tpu_custom_call.1} parent=47 // pred_region
          %381 = dma.done [#allocation9], 32832
        $region64: #{tpu_custom_call.1} parent=47 // pred_fallthru
          _
        // Predicated region
        $region65: #{tpu_custom_call.1} parent=47 // pred_check
          %p382 = pneg %p182
        $region66: #{tpu_custom_call.1} parent=47 // pred_check_branch
          %384 = sbr.rel (%p382) target = $region68
        $region67: #{tpu_custom_call.1} parent=47 // pred_region
          %386 = dma.done [#allocation9], 11840
        $region68: #{tpu_custom_call.1} parent=47 // pred_fallthru
          _
        %s387 = sand.u32 %s50, 1
        %s388 = scalar_lea.sflag [#allocation3], %s387
        %s389 = sand.u32 %s50, 1
        %s390 = smul.addr %s389, 8
        %s391 = scalar_lea.vmem [#allocation2], %s390
        %p392 = pneg %p63
        %p393 = pneg %p60
        %s394 = sand.u32 %s28, 1
        %s395 = scalar_lea.sflag [#allocation6], %s394
        %s396 = sand.u32 %s78, 1
        %s397 = smul.addr %s396, 8
        %s398 = scalar_lea.vmem [#allocation5], %s397
        %p399 = pneg %p91
        %p400 = pneg %p88
        %p401 = scmp.lt.s32.totalorder %s32, 1
        %s402 = scalar_select %p401, %s32, 1
        %p403 = scmp.lt.s32.totalorder %s33, 0
        %s404 = scalar_select %p403, %s33, 0
        %s405 = sadd.s32 %s404, %s402
        %s406 = smul.addr %s405, 8
        %s407 = scalar_lea.vmem %s2, %s406
        %p408 = pneg %p119
        %p409 = pneg %p116
        %p410 = pneg %p140
        %p411 = pneg %p137
        %p412 = pneg %p161
        %p413 = pneg %p158
        %p414 = pneg %p182
        %p415 = pneg %p179
        %p416 = pneg %p203
        %p417 = pneg %p200
        %p418 = pneg %p231
        %p419 = pneg %p228
        %s420 = sand.u32 %s218, 1
        %s421 = scalar_lea.sflag [#allocation4], %s420
        %s422 = sand.u32 %s218, 1
        %s423 = smul.addr %s422, 8
        %s424 = scalar_lea.vmem [#allocation11], %s423
        %p425 = scmp.lt.s32.totalorder %s32, 1
        %s426 = scalar_select %p425, %s32, 1
        %p427 = scmp.lt.s32.totalorder %s33, 0
        %s428 = scalar_select %p427, %s33, 0
        %s429 = sadd.s32 %s428, %s426
        %s430 = smul.addr %s429, 8
        %s431 = scalar_lea.vmem %s2, %s430
        %v433 = vld [vmem:[%s356] sm:$0xff]
        %v434 = vcvt.f32.s32.to.zero.pseudo %v433
        %v435 = vlaneseq
        %v436 = vand.u32 %v435, 127
        %437 = vset.pattern.permute.xlu0 0
        %438 = vperm.xlu0 %437, %v434
        %v439 = vpop.permute.xlu0 %438
        %vm440 = vcmp.eq.s32.totalorder %v439, %v436
        %v441 = vadd.s32 %v434, 64
        %442 = vset.pattern.permute.xlu0 2
        %443 = vperm.xlu0 %442, %v441
        %v444 = vpop.permute.xlu0 %443
        %vm445 = vcmp.eq.s32.totalorder %v444, %v436
        %vm446 = vmor %vm440, %vm445
        %v447 = vadd.s32 %v434, 75
        %448 = vset.pattern.permute.xlu0 3
        %449 = vperm.xlu0 %448, %v447
        %v450 = vpop.permute.xlu0 %449
        %vm451 = vcmp.eq.s32.totalorder %v450, %v436
        %vm452 = vmor %vm446, %vm451
        %vm453 = vcmp.eq.s32.totalorder %v436, 126
        %vm454 = vmor %vm452, %vm453
        %v455 = vsub.s32 %v436, 94
        %v456 = vcvt.s32.f32 %v455
        %v457 = vmul.f32 %v456, 0.06666667
        %459 = vset.pattern.permute.xlu0 4
        %460 = vperm.xlu0 %459, %v433
        %v461 = vpop.permute.xlu0 %460
        %v463 = vsub.f32 %v461, %v457
        %v464 = vmul.f32 %v463, 16.0
        %vm465 = vcmp.ge.s32.totalorder %v436, 94
        %vm466 = vcmp.lt.s32.totalorder %v436, 110
        %vm467 = vmand %vm465, %vm466
        %v468 = vsub.f32 0.0, %v464
        %v469 = vmul.f32 %v468, %v464
        %v470 = vmul.f32 %v469, 1.442695
        %v471 = vpow.pop %v470
        %v472 = vsel %vm467, %v471, 0.0
        %v473 = vsub.s32 %v436, 110
        %v474 = vcvt.s32.f32 %v473
        %v475 = vmul.f32 %v474, 0.06666667
        %476 = vset.pattern.permute.xlu0 5
        %477 = vperm.xlu0 %476, %v433
        %v478 = vpop.permute.xlu0 %477
        %v480 = vsub.f32 %v478, %v475
        %v481 = vmul.f32 %v480, 16.0
        %vm482 = vcmp.ge.s32.totalorder %v436, 110
        %vm483 = vcmp.lt.s32.totalorder %v436, 126
        %vm484 = vmand %vm482, %vm483
        %v485 = vsub.f32 0.0, %v481
        %v486 = vmul.f32 %v485, %v481
        %v487 = vmul.f32 %v486, 1.442695
        %v488 = vpow.pop %v487
        %v489 = vsel %vm484, %v488, 0.0
        %v490 = vsel %vm454, 1, 0
        %v491 = vcvt.s32.f32 %v490
        %v492 = vadd.f32 %v491, %v472
        %v493 = vadd.f32 %v492, %v489
        %v494 = vpack.c.bf16 %v493, %v493
        %v495 = vld [vmem:[#allocation7] sm:$0xf]
        %v496 = vld [vmem:[#allocation7 + $0x4] sm:$0xf]
        %v497 = vld [vmem:[#allocation7 + $0x8] sm:$0xf]
        %v498 = vld [vmem:[#allocation7 + $0xc] sm:$0xf]
        %v499 = vld [vmem:[#allocation7 + $0x10] sm:$0xf]
        %v500 = vld [vmem:[#allocation7 + $0x14] sm:$0xf]
        %v501 = vld [vmem:[#allocation7 + $0x18] sm:$0xf]
        %v502 = vld [vmem:[#allocation7 + $0x1c] sm:$0xf]
        %v503 = vld [vmem:[#allocation7 + $0x20] sm:$0xf]
        %v504 = vld [vmem:[#allocation7 + $0x24] sm:$0xf]
        %v505 = vld [vmem:[#allocation7 + $0x28] sm:$0xf]
        %v506 = vld [vmem:[#allocation7 + $0x2c] sm:$0xf]
        %v507 = vld [vmem:[#allocation7 + $0x30] sm:$0xf]
        %v508 = vld [vmem:[#allocation7 + $0x34] sm:$0xf]
        %v509 = vld [vmem:[#allocation7 + $0x38] sm:$0xf]
        %v510 = vld [vmem:[#allocation7 + $0x3c] sm:$0xf]
        %v511 = vadd.s32 %v436, 128
        %v512 = vadd.s32 %v436, 256
        %v513 = vadd.s32 %v436, 384
        %v514 = vadd.s32 %v436, 512
        %v515 = vadd.s32 %v436, 640
        %v516 = vadd.s32 %v436, 768
        %v517 = vadd.s32 %v436, 896
        %v518 = vadd.s32 %v436, 1024
        %v519 = vadd.s32 %v436, 1152
        %v520 = vadd.s32 %v436, 1280
        %v521 = vadd.s32 %v436, 1408
        %v522 = vadd.s32 %v436, 1536
        %v523 = vadd.s32 %v436, 1664
        %v524 = vadd.s32 %v436, 1792
        %v525 = vadd.s32 %v436, 1920
        %v526 = vadd.s32 %v436, 2048
        %v527 = vadd.s32 %v436, 2176
        %v528 = vadd.s32 %v436, 2304
        %v529 = vadd.s32 %v436, 2432
        %v530 = vadd.s32 %v436, 2560
        %v531 = vadd.s32 %v436, 2688
        %v532 = vadd.s32 %v436, 2816
        %v533 = vadd.s32 %v436, 2944
        %v534 = vadd.s32 %v436, 3072
        %v535 = vadd.s32 %v436, 3200
        %v536 = vadd.s32 %v436, 3328
        %v537 = vadd.s32 %v436, 3456
        %v538 = vadd.s32 %v436, 3584
        %v539 = vadd.s32 %v436, 3712
        %v540 = vadd.s32 %v436, 3840
        %v541 = vadd.s32 %v436, 3968
        %v542 = vadd.s32 %v436, 4096
        %543 = vset.pattern.permute.xlu0 1
        %544 = vperm.xlu0 %543, %v434
        %v545 = vpop.permute.xlu0 %544
        %vm546 = vcmp.eq.s32.totalorder %v545, %v436
        %vm547 = vcmp.eq.s32.totalorder %v545, %v511
        %vm548 = vcmp.eq.s32.totalorder %v545, %v512
        %vm549 = vcmp.eq.s32.totalorder %v545, %v513
        %vm550 = vcmp.eq.s32.totalorder %v545, %v514
        %vm551 = vcmp.eq.s32.totalorder %v545, %v515
        %vm552 = vcmp.eq.s32.totalorder %v545, %v516
        %vm553 = vcmp.eq.s32.totalorder %v545, %v517
        %vm554 = vcmp.eq.s32.totalorder %v545, %v518
        %vm555 = vcmp.eq.s32.totalorder %v545, %v519
        %vm556 = vcmp.eq.s32.totalorder %v545, %v520
        %vm557 = vcmp.eq.s32.totalorder %v545, %v521
        %vm558 = vcmp.eq.s32.totalorder %v545, %v522
        %vm559 = vcmp.eq.s32.totalorder %v545, %v523
        %vm560 = vcmp.eq.s32.totalorder %v545, %v524
        %vm561 = vcmp.eq.s32.totalorder %v545, %v525
        %vm562 = vcmp.eq.s32.totalorder %v545, %v526
        %vm563 = vcmp.eq.s32.totalorder %v545, %v527
        %vm564 = vcmp.eq.s32.totalorder %v545, %v528
        %vm565 = vcmp.eq.s32.totalorder %v545, %v529
        %vm566 = vcmp.eq.s32.totalorder %v545, %v530
        %vm567 = vcmp.eq.s32.totalorder %v545, %v531
        %vm568 = vcmp.eq.s32.totalorder %v545, %v532
        %vm569 = vcmp.eq.s32.totalorder %v545, %v533
        %vm570 = vcmp.eq.s32.totalorder %v545, %v534
        %vm571 = vcmp.eq.s32.totalorder %v545, %v535
        %vm572 = vcmp.eq.s32.totalorder %v545, %v536
        %vm573 = vcmp.eq.s32.totalorder %v545, %v537
        %vm574 = vcmp.eq.s32.totalorder %v545, %v538
        %vm575 = vcmp.eq.s32.totalorder %v545, %v539
        %vm576 = vcmp.eq.s32.totalorder %v545, %v540
        %vm577 = vcmp.eq.s32.totalorder %v545, %v541
        %vm578 = vcmp.eq.s32.totalorder %v545, %v542
        %v579 = vsel %vm546, 1, 0
        %v580 = vsel %vm547, 1, 0
        %v581 = vsel %vm548, 1, 0
        %v582 = vsel %vm549, 1, 0
        %v583 = vsel %vm550, 1, 0
        %v584 = vsel %vm551, 1, 0
        %v585 = vsel %vm552, 1, 0
        %v586 = vsel %vm553, 1, 0
        %v587 = vsel %vm554, 1, 0
        %v588 = vsel %vm555, 1, 0
        %v589 = vsel %vm556, 1, 0
        %v590 = vsel %vm557, 1, 0
        %v591 = vsel %vm558, 1, 0
        %v592 = vsel %vm559, 1, 0
        %v593 = vsel %vm560, 1, 0
        %v594 = vsel %vm561, 1, 0
        %v595 = vsel %vm562, 1, 0
        %v596 = vsel %vm563, 1, 0
        %v597 = vsel %vm564, 1, 0
        %v598 = vsel %vm565, 1, 0
        %v599 = vsel %vm566, 1, 0
        %v600 = vsel %vm567, 1, 0
        %v601 = vsel %vm568, 1, 0
        %v602 = vsel %vm569, 1, 0
        %v603 = vsel %vm570, 1, 0
        %v604 = vsel %vm571, 1, 0
        %v605 = vsel %vm572, 1, 0
        %v606 = vsel %vm573, 1, 0
        %v607 = vsel %vm574, 1, 0
        %v608 = vsel %vm575, 1, 0
        %v609 = vsel %vm576, 1, 0
        %v610 = vsel %vm577, 1, 0
        %v611 = vsel %vm578, 1, 0
        %v612 = vcvt.s32.f32 %v579
        %v613 = vcvt.s32.f32 %v580
        %v614 = vcvt.s32.f32 %v581
        %v615 = vcvt.s32.f32 %v582
        %v616 = vcvt.s32.f32 %v583
        %v617 = vcvt.s32.f32 %v584
        %v618 = vcvt.s32.f32 %v585
        %v619 = vcvt.s32.f32 %v586
        %v620 = vcvt.s32.f32 %v587
        %v621 = vcvt.s32.f32 %v588
        %v622 = vcvt.s32.f32 %v589
        %v623 = vcvt.s32.f32 %v590
        %v624 = vcvt.s32.f32 %v591
        %v625 = vcvt.s32.f32 %v592
        %v626 = vcvt.s32.f32 %v593
        %v627 = vcvt.s32.f32 %v594
        %v628 = vcvt.s32.f32 %v595
        %v629 = vcvt.s32.f32 %v596
        %v630 = vcvt.s32.f32 %v597
        %v631 = vcvt.s32.f32 %v598
        %v632 = vcvt.s32.f32 %v599
        %v633 = vcvt.s32.f32 %v600
        %v634 = vcvt.s32.f32 %v601
        %v635 = vcvt.s32.f32 %v602
        %v636 = vcvt.s32.f32 %v603
        %v637 = vcvt.s32.f32 %v604
        %v638 = vcvt.s32.f32 %v605
        %v639 = vcvt.s32.f32 %v606
        %v640 = vcvt.s32.f32 %v607
        %v641 = vcvt.s32.f32 %v608
        %v642 = vcvt.s32.f32 %v609
        %v643 = vcvt.s32.f32 %v610
        %v644 = vcvt.s32.f32 %v611
        %v645 = vpack.c.bf16 %v612, %v612
        %v646 = vpack.c.bf16 %v613, %v613
        %v647 = vpack.c.bf16 %v614, %v614
        %v648 = vpack.c.bf16 %v615, %v615
        %v649 = vpack.c.bf16 %v616, %v616
        %v650 = vpack.c.bf16 %v617, %v617
        %v651 = vpack.c.bf16 %v618, %v618
        %v652 = vpack.c.bf16 %v619, %v619
        %v653 = vpack.c.bf16 %v620, %v620
        %v654 = vpack.c.bf16 %v621, %v621
        %v655 = vpack.c.bf16 %v622, %v622
        %v656 = vpack.c.bf16 %v623, %v623
        %v657 = vpack.c.bf16 %v624, %v624
        %v658 = vpack.c.bf16 %v625, %v625
        %v659 = vpack.c.bf16 %v626, %v626
        %v660 = vpack.c.bf16 %v627, %v627
        %v661 = vpack.c.bf16 %v628, %v628
        %v662 = vpack.c.bf16 %v629, %v629
        %v663 = vpack.c.bf16 %v630, %v630
        %v664 = vpack.c.bf16 %v631, %v631
        %v665 = vpack.c.bf16 %v632, %v632
        %v666 = vpack.c.bf16 %v633, %v633
        %v667 = vpack.c.bf16 %v634, %v634
        %v668 = vpack.c.bf16 %v635, %v635
        %v669 = vpack.c.bf16 %v636, %v636
        %v670 = vpack.c.bf16 %v637, %v637
        %v671 = vpack.c.bf16 %v638, %v638
        %v672 = vpack.c.bf16 %v639, %v639
        %v673 = vpack.c.bf16 %v640, %v640
        %v674 = vpack.c.bf16 %v641, %v641
        %v675 = vpack.c.bf16 %v642, %v642
        %v676 = vpack.c.bf16 %v643, %v643
        %v677 = vpack.c.bf16 %v644, %v644
        %v678 = vld [vmem:[#allocation8] sm:$0xf]
        %v679 = vld [vmem:[#allocation8 + $0x4] sm:$0xf]
        %v680 = vld [vmem:[#allocation8 + $0x8] sm:$0xf]
        %v681 = vld [vmem:[#allocation8 + $0xc] sm:$0xf]
        %v682 = vld [vmem:[#allocation8 + $0x10] sm:$0xf]
        %v683 = vld [vmem:[#allocation8 + $0x14] sm:$0xf]
        %v684 = vld [vmem:[#allocation8 + $0x18] sm:$0xf]
        %v685 = vld [vmem:[#allocation8 + $0x1c] sm:$0xf]
        %v686 = vld [vmem:[#allocation8 + $0x20] sm:$0xf]
        %v687 = vld [vmem:[#allocation8 + $0x24] sm:$0xf]
        %v688 = vld [vmem:[#allocation8 + $0x28] sm:$0xf]
        %v689 = vld [vmem:[#allocation8 + $0x2c] sm:$0xf]
        %v690 = vld [vmem:[#allocation8 + $0x30] sm:$0xf]
        %v691 = vld [vmem:[#allocation8 + $0x34] sm:$0xf]
        %v692 = vld [vmem:[#allocation8 + $0x38] sm:$0xf]
        %v693 = vld [vmem:[#allocation8 + $0x3c] sm:$0xf]
        %v694 = vld [vmem:[#allocation8 + $0x40] sm:$0xf]
        %v695 = vld [vmem:[#allocation8 + $0x44] sm:$0xf]
        %v696 = vld [vmem:[#allocation8 + $0x48] sm:$0xf]
        %v697 = vld [vmem:[#allocation8 + $0x4c] sm:$0xf]
        %v698 = vld [vmem:[#allocation8 + $0x50] sm:$0xf]
        %v699 = vld [vmem:[#allocation8 + $0x54] sm:$0xf]
        %v700 = vld [vmem:[#allocation8 + $0x58] sm:$0xf]
        %v701 = vld [vmem:[#allocation8 + $0x5c] sm:$0xf]
        %v702 = vld [vmem:[#allocation8 + $0x60] sm:$0xf]
        %v703 = vld [vmem:[#allocation8 + $0x64] sm:$0xf]
        %v704 = vld [vmem:[#allocation8 + $0x68] sm:$0xf]
        %v705 = vld [vmem:[#allocation8 + $0x6c] sm:$0xf]
        %v706 = vld [vmem:[#allocation8 + $0x70] sm:$0xf]
        %v707 = vld [vmem:[#allocation8 + $0x74] sm:$0xf]
        %v708 = vld [vmem:[#allocation8 + $0x78] sm:$0xf]
        %v709 = vld [vmem:[#allocation8 + $0x7c] sm:$0xf]
        %v710 = vld [vmem:[#allocation8 + $0x80] sm:$0xf]
        %v711 = vld [vmem:[#allocation8 + $0x84] sm:$0xf]
        %v712 = vld [vmem:[#allocation8 + $0x88] sm:$0xf]
        %v713 = vld [vmem:[#allocation8 + $0x8c] sm:$0xf]
        %v714 = vld [vmem:[#allocation8 + $0x90] sm:$0xf]
        %v715 = vld [vmem:[#allocation8 + $0x94] sm:$0xf]
        %v716 = vld [vmem:[#allocation8 + $0x98] sm:$0xf]
        %v717 = vld [vmem:[#allocation8 + $0x9c] sm:$0xf]
        %v718 = vld [vmem:[#allocation8 + $0xa0] sm:$0xf]
        %v719 = vld [vmem:[#allocation8 + $0xa4] sm:$0xf]
        %v720 = vld [vmem:[#allocation8 + $0xa8] sm:$0xf]
        %v721 = vld [vmem:[#allocation8 + $0xac] sm:$0xf]
        %v722 = vld [vmem:[#allocation8 + $0xb0] sm:$0xf]
        %v723 = vld [vmem:[#allocation8 + $0xb4] sm:$0xf]
        %v724 = vld [vmem:[#allocation8 + $0xb8] sm:$0xf]
        %v725 = vld [vmem:[#allocation8 + $0xbc] sm:$0xf]
        %v726 = vld [vmem:[#allocation8 + $0xc0] sm:$0xf]
        %v727 = vld [vmem:[#allocation8 + $0xc4] sm:$0xf]
        %v728 = vld [vmem:[#allocation8 + $0xc8] sm:$0xf]
        %v729 = vld [vmem:[#allocation8 + $0xcc] sm:$0xf]
        %v730 = vld [vmem:[#allocation8 + $0xd0] sm:$0xf]
        %v731 = vld [vmem:[#allocation8 + $0xd4] sm:$0xf]
        %v732 = vld [vmem:[#allocation8 + $0xd8] sm:$0xf]
        %v733 = vld [vmem:[#allocation8 + $0xdc] sm:$0xf]
        %v734 = vld [vmem:[#allocation8 + $0xe0] sm:$0xf]
        %v735 = vld [vmem:[#allocation8 + $0xe4] sm:$0xf]
        %v736 = vld [vmem:[#allocation8 + $0xe8] sm:$0xf]
        %v737 = vld [vmem:[#allocation8 + $0xec] sm:$0xf]
        %v738 = vld [vmem:[#allocation8 + $0xf0] sm:$0xf]
        %v739 = vld [vmem:[#allocation8 + $0xf4] sm:$0xf]
        %v740 = vld [vmem:[#allocation8 + $0xf8] sm:$0xf]
        %v741 = vld [vmem:[#allocation8 + $0xfc] sm:$0xf]
        %v742 = vld [vmem:[#allocation8 + $0x100] sm:$0xf]
        %v743 = vld [vmem:[#allocation8 + $0x104] sm:$0xf]
        %v744 = vld [vmem:[#allocation8 + $0x108] sm:$0xf]
        %v745 = vld [vmem:[#allocation8 + $0x10c] sm:$0xf]
        %v746 = vld [vmem:[#allocation8 + $0x110] sm:$0xf]
        %v747 = vld [vmem:[#allocation8 + $0x114] sm:$0xf]
        %v748 = vld [vmem:[#allocation8 + $0x118] sm:$0xf]
        %v749 = vld [vmem:[#allocation8 + $0x11c] sm:$0xf]
        %v750 = vld [vmem:[#allocation8 + $0x120] sm:$0xf]
        %v751 = vld [vmem:[#allocation8 + $0x124] sm:$0xf]
        %v752 = vld [vmem:[#allocation8 + $0x128] sm:$0xf]
        %v753 = vld [vmem:[#allocation8 + $0x12c] sm:$0xf]
        %v754 = vld [vmem:[#allocation8 + $0x130] sm:$0xf]
        %v755 = vld [vmem:[#allocation8 + $0x134] sm:$0xf]
        %v756 = vld [vmem:[#allocation8 + $0x138] sm:$0xf]
        %v757 = vld [vmem:[#allocation8 + $0x13c] sm:$0xf]
        %v758 = vld [vmem:[#allocation8 + $0x140] sm:$0xf]
        %v759 = vld [vmem:[#allocation8 + $0x144] sm:$0xf]
        %v760 = vld [vmem:[#allocation8 + $0x148] sm:$0xf]
        %v761 = vld [vmem:[#allocation8 + $0x14c] sm:$0xf]
        %v762 = vld [vmem:[#allocation8 + $0x150] sm:$0xf]
        %v763 = vld [vmem:[#allocation8 + $0x154] sm:$0xf]
        %v764 = vld [vmem:[#allocation8 + $0x158] sm:$0xf]
        %v765 = vld [vmem:[#allocation8 + $0x15c] sm:$0xf]
        %v766 = vld [vmem:[#allocation8 + $0x160] sm:$0xf]
        %v767 = vld [vmem:[#allocation8 + $0x164] sm:$0xf]
        %v768 = vld [vmem:[#allocation8 + $0x168] sm:$0xf]
        %v769 = vld [vmem:[#allocation8 + $0x16c] sm:$0xf]
        %v770 = vld [vmem:[#allocation8 + $0x170] sm:$0xf]
        %v771 = vld [vmem:[#allocation8 + $0x174] sm:$0xf]
        %v772 = vld [vmem:[#allocation8 + $0x178] sm:$0xf]
        %v773 = vld [vmem:[#allocation8 + $0x17c] sm:$0xf]
        %v774 = vld [vmem:[#allocation8 + $0x180] sm:$0xf]
        %v775 = vld [vmem:[#allocation8 + $0x184] sm:$0xf]
        %v776 = vld [vmem:[#allocation8 + $0x188] sm:$0xf]
        %v777 = vld [vmem:[#allocation8 + $0x18c] sm:$0xf]
        %v778 = vld [vmem:[#allocation8 + $0x190] sm:$0xf]
        %v779 = vld [vmem:[#allocation8 + $0x194] sm:$0xf]
        %v780 = vld [vmem:[#allocation8 + $0x198] sm:$0xf]
        %v781 = vld [vmem:[#allocation8 + $0x19c] sm:$0xf]
        %v782 = vld [vmem:[#allocation8 + $0x1a0] sm:$0xf]
        %v783 = vld [vmem:[#allocation8 + $0x1a4] sm:$0xf]
        %v784 = vld [vmem:[#allocation8 + $0x1a8] sm:$0xf]
        %v785 = vld [vmem:[#allocation8 + $0x1ac] sm:$0xf]
        %v786 = vld [vmem:[#allocation8 + $0x1b0] sm:$0xf]
        %v787 = vld [vmem:[#allocation8 + $0x1b4] sm:$0xf]
        %v788 = vld [vmem:[#allocation8 + $0x1b8] sm:$0xf]
        %v789 = vld [vmem:[#allocation8 + $0x1bc] sm:$0xf]
        %v790 = vld [vmem:[#allocation8 + $0x1c0] sm:$0xf]
        %v791 = vld [vmem:[#allocation8 + $0x1c4] sm:$0xf]
        %v792 = vld [vmem:[#allocation8 + $0x1c8] sm:$0xf]
        %v793 = vld [vmem:[#allocation8 + $0x1cc] sm:$0xf]
        %v794 = vld [vmem:[#allocation8 + $0x1d0] sm:$0xf]
        %v795 = vld [vmem:[#allocation8 + $0x1d4] sm:$0xf]
        %v796 = vld [vmem:[#allocation8 + $0x1d8] sm:$0xf]
        %v797 = vld [vmem:[#allocation8 + $0x1dc] sm:$0xf]
        %v798 = vld [vmem:[#allocation8 + $0x1e0] sm:$0xf]
        %v799 = vld [vmem:[#allocation8 + $0x1e4] sm:$0xf]
        %v800 = vld [vmem:[#allocation8 + $0x1e8] sm:$0xf]
        %v801 = vld [vmem:[#allocation8 + $0x1ec] sm:$0xf]
        %v802 = vld [vmem:[#allocation8 + $0x1f0] sm:$0xf]
        %v803 = vld [vmem:[#allocation8 + $0x1f4] sm:$0xf]
        %v804 = vld [vmem:[#allocation8 + $0x1f8] sm:$0xf]
        %v805 = vld [vmem:[#allocation8 + $0x1fc] sm:$0xf]
        %v806 = vld [vmem:[#allocation8 + $0x200] sm:$0xf]
        %v807 = vld [vmem:[#allocation8 + $0x204] sm:$0xf]
        %v808 = vld [vmem:[#allocation8 + $0x208] sm:$0xf]
        %v809 = vld [vmem:[#allocation8 + $0x20c] sm:$0xf]
        %v810 = vld [vmem:[#allocation8 + $0x210] sm:$0xf]
        %v811 = vld [vmem:[#allocation8 + $0x214] sm:$0xf]
        %v812 = vld [vmem:[#allocation8 + $0x218] sm:$0xf]
        %v813 = vld [vmem:[#allocation8 + $0x21c] sm:$0xf]
        %v814 = vld [vmem:[#allocation8 + $0x220] sm:$0xf]
        %v815 = vld [vmem:[#allocation8 + $0x224] sm:$0xf]
        %v816 = vld [vmem:[#allocation8 + $0x228] sm:$0xf]
        %v817 = vld [vmem:[#allocation8 + $0x22c] sm:$0xf]
        %v818 = vld [vmem:[#allocation8 + $0x230] sm:$0xf]
        %v819 = vld [vmem:[#allocation8 + $0x234] sm:$0xf]
        %v820 = vld [vmem:[#allocation8 + $0x238] sm:$0xf]
        %v821 = vld [vmem:[#allocation8 + $0x23c] sm:$0xf]
        %v822 = vld [vmem:[#allocation8 + $0x240] sm:$0xf]
        %v823 = vld [vmem:[#allocation8 + $0x244] sm:$0xf]
        %v824 = vld [vmem:[#allocation8 + $0x248] sm:$0xf]
        %v825 = vld [vmem:[#allocation8 + $0x24c] sm:$0xf]
        %v826 = vld [vmem:[#allocation8 + $0x250] sm:$0xf]
        %v827 = vld [vmem:[#allocation8 + $0x254] sm:$0xf]
        %v828 = vld [vmem:[#allocation8 + $0x258] sm:$0xf]
        %v829 = vld [vmem:[#allocation8 + $0x25c] sm:$0xf]
        %v830 = vld [vmem:[#allocation8 + $0x260] sm:$0xf]
        %v831 = vld [vmem:[#allocation8 + $0x264] sm:$0xf]
        %v832 = vld [vmem:[#allocation8 + $0x268] sm:$0xf]
        %v833 = vld [vmem:[#allocation8 + $0x26c] sm:$0xf]
        %v834 = vld [vmem:[#allocation8 + $0x270] sm:$0xf]
        %v835 = vld [vmem:[#allocation8 + $0x274] sm:$0xf]
        %v836 = vld [vmem:[#allocation8 + $0x278] sm:$0xf]
        %v837 = vld [vmem:[#allocation8 + $0x27c] sm:$0xf]
        %v838 = vld [vmem:[#allocation8 + $0x280] sm:$0xf]
        %v839 = vld [vmem:[#allocation8 + $0x284] sm:$0xf]
        %v840 = vld [vmem:[#allocation8 + $0x288] sm:$0xf]
        %v841 = vld [vmem:[#allocation8 + $0x28c] sm:$0xf]
        %v842 = vld [vmem:[#allocation8 + $0x290] sm:$0xf]
        %v843 = vld [vmem:[#allocation8 + $0x294] sm:$0xf]
        %v844 = vld [vmem:[#allocation8 + $0x298] sm:$0xf]
        %v845 = vld [vmem:[#allocation8 + $0x29c] sm:$0xf]
        %v846 = vld [vmem:[#allocation8 + $0x2a0] sm:$0xf]
        %v847 = vld [vmem:[#allocation8 + $0x2a4] sm:$0xf]
        %v848 = vld [vmem:[#allocation8 + $0x2a8] sm:$0xf]
        %v849 = vld [vmem:[#allocation8 + $0x2ac] sm:$0xf]
        %v850 = vld [vmem:[#allocation8 + $0x2b0] sm:$0xf]
        %v851 = vld [vmem:[#allocation8 + $0x2b4] sm:$0xf]
        %v852 = vld [vmem:[#allocation8 + $0x2b8] sm:$0xf]
        %v853 = vld [vmem:[#allocation8 + $0x2bc] sm:$0xf]
        %v854 = vld [vmem:[#allocation8 + $0x2c0] sm:$0xf]
        %v855 = vld [vmem:[#allocation8 + $0x2c4] sm:$0xf]
        %v856 = vld [vmem:[#allocation8 + $0x2c8] sm:$0xf]
        %v857 = vld [vmem:[#allocation8 + $0x2cc] sm:$0xf]
        %v858 = vld [vmem:[#allocation8 + $0x2d0] sm:$0xf]
        %v859 = vld [vmem:[#allocation8 + $0x2d4] sm:$0xf]
        %v860 = vld [vmem:[#allocation8 + $0x2d8] sm:$0xf]
        %v861 = vld [vmem:[#allocation8 + $0x2dc] sm:$0xf]
        %v862 = vld [vmem:[#allocation8 + $0x2e0] sm:$0xf]
        %v863 = vld [vmem:[#allocation8 + $0x2e4] sm:$0xf]
        %v864 = vld [vmem:[#allocation8 + $0x2e8] sm:$0xf]
        %v865 = vld [vmem:[#allocation8 + $0x2ec] sm:$0xf]
        %v866 = vld [vmem:[#allocation8 + $0x2f0] sm:$0xf]
        %v867 = vld [vmem:[#allocation8 + $0x2f4] sm:$0xf]
        %v868 = vld [vmem:[#allocation8 + $0x2f8] sm:$0xf]
        %v869 = vld [vmem:[#allocation8 + $0x2fc] sm:$0xf]
        %v870 = vld [vmem:[#allocation8 + $0x300] sm:$0xf]
        %v871 = vld [vmem:[#allocation8 + $0x304] sm:$0xf]
        %v872 = vld [vmem:[#allocation8 + $0x308] sm:$0xf]
        %v873 = vld [vmem:[#allocation8 + $0x30c] sm:$0xf]
        %v874 = vld [vmem:[#allocation8 + $0x310] sm:$0xf]
        %v875 = vld [vmem:[#allocation8 + $0x314] sm:$0xf]
        %v876 = vld [vmem:[#allocation8 + $0x318] sm:$0xf]
        %v877 = vld [vmem:[#allocation8 + $0x31c] sm:$0xf]
        %v878 = vld [vmem:[#allocation8 + $0x320] sm:$0xf]
        %v879 = vld [vmem:[#allocation8 + $0x324] sm:$0xf]
        %v880 = vld [vmem:[#allocation8 + $0x328] sm:$0xf]
        %v881 = vld [vmem:[#allocation8 + $0x32c] sm:$0xf]
        %v882 = vld [vmem:[#allocation8 + $0x330] sm:$0xf]
        %v883 = vld [vmem:[#allocation8 + $0x334] sm:$0xf]
        %v884 = vld [vmem:[#allocation8 + $0x338] sm:$0xf]
        %v885 = vld [vmem:[#allocation8 + $0x33c] sm:$0xf]
        %v886 = vld [vmem:[#allocation8 + $0x340] sm:$0xf]
        %v887 = vld [vmem:[#allocation8 + $0x344] sm:$0xf]
        %v888 = vld [vmem:[#allocation8 + $0x348] sm:$0xf]
        %v889 = vld [vmem:[#allocation8 + $0x34c] sm:$0xf]
        %v890 = vld [vmem:[#allocation8 + $0x350] sm:$0xf]
        %v891 = vld [vmem:[#allocation8 + $0x354] sm:$0xf]
        %v892 = vld [vmem:[#allocation8 + $0x358] sm:$0xf]
        %v893 = vld [vmem:[#allocation8 + $0x35c] sm:$0xf]
        %v894 = vld [vmem:[#allocation8 + $0x360] sm:$0xf]
        %v895 = vld [vmem:[#allocation8 + $0x364] sm:$0xf]
        %v896 = vld [vmem:[#allocation8 + $0x368] sm:$0xf]
        %v897 = vld [vmem:[#allocation8 + $0x36c] sm:$0xf]
        %v898 = vld [vmem:[#allocation8 + $0x370] sm:$0xf]
        %v899 = vld [vmem:[#allocation8 + $0x374] sm:$0xf]
        %v900 = vld [vmem:[#allocation8 + $0x378] sm:$0xf]
        %v901 = vld [vmem:[#allocation8 + $0x37c] sm:$0xf]
        %v902 = vld [vmem:[#allocation8 + $0x380] sm:$0xf]
        %v903 = vld [vmem:[#allocation8 + $0x384] sm:$0xf]
        %v904 = vld [vmem:[#allocation8 + $0x388] sm:$0xf]
        %v905 = vld [vmem:[#allocation8 + $0x38c] sm:$0xf]
        %v906 = vld [vmem:[#allocation8 + $0x390] sm:$0xf]
        %v907 = vld [vmem:[#allocation8 + $0x394] sm:$0xf]
        %v908 = vld [vmem:[#allocation8 + $0x398] sm:$0xf]
        %v909 = vld [vmem:[#allocation8 + $0x39c] sm:$0xf]
        %v910 = vld [vmem:[#allocation8 + $0x3a0] sm:$0xf]
        %v911 = vld [vmem:[#allocation8 + $0x3a4] sm:$0xf]
        %v912 = vld [vmem:[#allocation8 + $0x3a8] sm:$0xf]
        %v913 = vld [vmem:[#allocation8 + $0x3ac] sm:$0xf]
        %v914 = vld [vmem:[#allocation8 + $0x3b0] sm:$0xf]
        %v915 = vld [vmem:[#allocation8 + $0x3b4] sm:$0xf]
        %v916 = vld [vmem:[#allocation8 + $0x3b8] sm:$0xf]
        %v917 = vld [vmem:[#allocation8 + $0x3bc] sm:$0xf]
        %v918 = vld [vmem:[#allocation8 + $0x3c0] sm:$0xf]
        %v919 = vld [vmem:[#allocation8 + $0x3c4] sm:$0xf]
        %v920 = vld [vmem:[#allocation8 + $0x3c8] sm:$0xf]
        %v921 = vld [vmem:[#allocation8 + $0x3cc] sm:$0xf]
        %v922 = vld [vmem:[#allocation8 + $0x3d0] sm:$0xf]
        %v923 = vld [vmem:[#allocation8 + $0x3d4] sm:$0xf]
        %v924 = vld [vmem:[#allocation8 + $0x3d8] sm:$0xf]
        %v925 = vld [vmem:[#allocation8 + $0x3dc] sm:$0xf]
        %v926 = vld [vmem:[#allocation8 + $0x3e0] sm:$0xf]
        %v927 = vld [vmem:[#allocation8 + $0x3e4] sm:$0xf]
        %v928 = vld [vmem:[#allocation8 + $0x3e8] sm:$0xf]
        %v929 = vld [vmem:[#allocation8 + $0x3ec] sm:$0xf]
        %v930 = vld [vmem:[#allocation8 + $0x3f0] sm:$0xf]
        %v931 = vld [vmem:[#allocation8 + $0x3f4] sm:$0xf]
        %v932 = vld [vmem:[#allocation8 + $0x3f8] sm:$0xf]
        %v933 = vld [vmem:[#allocation8 + $0x3fc] sm:$0xf]
        %v934 = vld [vmem:[#allocation8 + $0x400] sm:$0xf]
        %v935 = vld [vmem:[#allocation8 + $0x404] sm:$0xf]
        %v936 = vld [vmem:[#allocation8 + $0x408] sm:$0xf]
        %v937 = vld [vmem:[#allocation8 + $0x40c] sm:$0xf]
        %v938 = vld [vmem:[#allocation8 + $0x410] sm:$0xf]
        %v939 = vld [vmem:[#allocation8 + $0x414] sm:$0xf]
        %v940 = vld [vmem:[#allocation8 + $0x418] sm:$0xf]
        %v941 = vld [vmem:[#allocation8 + $0x41c] sm:$0xf]
        %v942 = vld [vmem:[#allocation8 + $0x420] sm:$0xf]
        %v943 = vld [vmem:[#allocation8 + $0x424] sm:$0xf]
        %v944 = vld [vmem:[#allocation8 + $0x428] sm:$0xf]
        %v945 = vld [vmem:[#allocation8 + $0x42c] sm:$0xf]
        %v946 = vld [vmem:[#allocation8 + $0x430] sm:$0xf]
        %v947 = vld [vmem:[#allocation8 + $0x434] sm:$0xf]
        %v948 = vld [vmem:[#allocation8 + $0x438] sm:$0xf]
        %v949 = vld [vmem:[#allocation8 + $0x43c] sm:$0xf]
        %v950 = vld [vmem:[#allocation8 + $0x440] sm:$0xf]
        %v951 = vld [vmem:[#allocation8 + $0x444] sm:$0xf]
        %v952 = vld [vmem:[#allocation8 + $0x448] sm:$0xf]
        %v953 = vld [vmem:[#allocation8 + $0x44c] sm:$0xf]
        %v954 = vld [vmem:[#allocation8 + $0x450] sm:$0xf]
        %v955 = vld [vmem:[#allocation8 + $0x454] sm:$0xf]
        %v956 = vld [vmem:[#allocation8 + $0x458] sm:$0xf]
        %v957 = vld [vmem:[#allocation8 + $0x45c] sm:$0xf]
        %v958 = vld [vmem:[#allocation8 + $0x460] sm:$0xf]
        %v959 = vld [vmem:[#allocation8 + $0x464] sm:$0xf]
        %v960 = vld [vmem:[#allocation8 + $0x468] sm:$0xf]
        %v961 = vld [vmem:[#allocation8 + $0x46c] sm:$0xf]
        %v962 = vld [vmem:[#allocation8 + $0x470] sm:$0xf]
        %v963 = vld [vmem:[#allocation8 + $0x474] sm:$0xf]
        %v964 = vld [vmem:[#allocation8 + $0x478] sm:$0xf]
        %v965 = vld [vmem:[#allocation8 + $0x47c] sm:$0xf]
        %v966 = vld [vmem:[#allocation8 + $0x480] sm:$0xf]
        %v967 = vld [vmem:[#allocation8 + $0x484] sm:$0xf]
        %v968 = vld [vmem:[#allocation8 + $0x488] sm:$0xf]
        %v969 = vld [vmem:[#allocation8 + $0x48c] sm:$0xf]
        %v970 = vld [vmem:[#allocation8 + $0x490] sm:$0xf]
        %v971 = vld [vmem:[#allocation8 + $0x494] sm:$0xf]
        %v972 = vld [vmem:[#allocation8 + $0x498] sm:$0xf]
        %v973 = vld [vmem:[#allocation8 + $0x49c] sm:$0xf]
        %v974 = vld [vmem:[#allocation8 + $0x4a0] sm:$0xf]
        %v975 = vld [vmem:[#allocation8 + $0x4a4] sm:$0xf]
        %v976 = vld [vmem:[#allocation8 + $0x4a8] sm:$0xf]
        %v977 = vld [vmem:[#allocation8 + $0x4ac] sm:$0xf]
        %v978 = vld [vmem:[#allocation8 + $0x4b0] sm:$0xf]
        %v979 = vld [vmem:[#allocation8 + $0x4b4] sm:$0xf]
        %v980 = vld [vmem:[#allocation8 + $0x4b8] sm:$0xf]
        %v981 = vld [vmem:[#allocation8 + $0x4bc] sm:$0xf]
        %v982 = vld [vmem:[#allocation8 + $0x4c0] sm:$0xf]
        %v983 = vld [vmem:[#allocation8 + $0x4c4] sm:$0xf]
        %v984 = vld [vmem:[#allocation8 + $0x4c8] sm:$0xf]
        %v985 = vld [vmem:[#allocation8 + $0x4cc] sm:$0xf]
        %v986 = vld [vmem:[#allocation8 + $0x4d0] sm:$0xf]
        %v987 = vld [vmem:[#allocation8 + $0x4d4] sm:$0xf]
        %v988 = vld [vmem:[#allocation8 + $0x4d8] sm:$0xf]
        %v989 = vld [vmem:[#allocation8 + $0x4dc] sm:$0xf]
        %v990 = vld [vmem:[#allocation8 + $0x4e0] sm:$0xf]
        %v991 = vld [vmem:[#allocation8 + $0x4e4] sm:$0xf]
        %v992 = vld [vmem:[#allocation8 + $0x4e8] sm:$0xf]
        %v993 = vld [vmem:[#allocation8 + $0x4ec] sm:$0xf]
        %v994 = vld [vmem:[#allocation8 + $0x4f0] sm:$0xf]
        %v995 = vld [vmem:[#allocation8 + $0x4f4] sm:$0xf]
        %v996 = vld [vmem:[#allocation8 + $0x4f8] sm:$0xf]
        %v997 = vld [vmem:[#allocation8 + $0x4fc] sm:$0xf]
        %v998 = vld [vmem:[#allocation8 + $0x500] sm:$0xf]
        %v999 = vld [vmem:[#allocation8 + $0x504] sm:$0xf]
        %v1000 = vld [vmem:[#allocation8 + $0x508] sm:$0xf]
        %v1001 = vld [vmem:[#allocation8 + $0x50c] sm:$0xf]
        %v1002 = vld [vmem:[#allocation8 + $0x510] sm:$0xf]
        %v1003 = vld [vmem:[#allocation8 + $0x514] sm:$0xf]
        %v1004 = vld [vmem:[#allocation8 + $0x518] sm:$0xf]
        %v1005 = vld [vmem:[#allocation8 + $0x51c] sm:$0xf]
        %v1006 = vld [vmem:[#allocation8 + $0x520] sm:$0xf]
        %v1007 = vld [vmem:[#allocation8 + $0x524] sm:$0xf]
        %v1008 = vld [vmem:[#allocation8 + $0x528] sm:$0xf]
        %v1009 = vld [vmem:[#allocation8 + $0x52c] sm:$0xf]
        %v1010 = vld [vmem:[#allocation8 + $0x530] sm:$0xf]
        %v1011 = vld [vmem:[#allocation8 + $0x534] sm:$0xf]
        %v1012 = vld [vmem:[#allocation8 + $0x538] sm:$0xf]
        %v1013 = vld [vmem:[#allocation8 + $0x53c] sm:$0xf]
        %v1014 = vld [vmem:[#allocation8 + $0x540] sm:$0xf]
        %v1015 = vld [vmem:[#allocation8 + $0x544] sm:$0xf]
        %v1016 = vld [vmem:[#allocation8 + $0x548] sm:$0xf]
        %v1017 = vld [vmem:[#allocation8 + $0x54c] sm:$0xf]
        %v1018 = vld [vmem:[#allocation8 + $0x550] sm:$0xf]
        %v1019 = vld [vmem:[#allocation8 + $0x554] sm:$0xf]
        %v1020 = vld [vmem:[#allocation8 + $0x558] sm:$0xf]
        %v1021 = vld [vmem:[#allocation8 + $0x55c] sm:$0xf]
        %v1022 = vld [vmem:[#allocation8 + $0x560] sm:$0xf]
        %v1023 = vld [vmem:[#allocation8 + $0x564] sm:$0xf]
        %v1024 = vld [vmem:[#allocation8 + $0x568] sm:$0xf]
        %v1025 = vld [vmem:[#allocation8 + $0x56c] sm:$0xf]
        %v1026 = vld [vmem:[#allocation8 + $0x570] sm:$0xf]
        %v1027 = vld [vmem:[#allocation8 + $0x574] sm:$0xf]
        %v1028 = vld [vmem:[#allocation8 + $0x578] sm:$0xf]
        %v1029 = vld [vmem:[#allocation8 + $0x57c] sm:$0xf]
        %v1030 = vld [vmem:[#allocation8 + $0x580] sm:$0xf]
        %v1031 = vld [vmem:[#allocation8 + $0x584] sm:$0xf]
        %v1032 = vld [vmem:[#allocation8 + $0x588] sm:$0xf]
        %v1033 = vld [vmem:[#allocation8 + $0x58c] sm:$0xf]
        %v1034 = vld [vmem:[#allocation8 + $0x590] sm:$0xf]
        %v1035 = vld [vmem:[#allocation8 + $0x594] sm:$0xf]
        %v1036 = vld [vmem:[#allocation8 + $0x598] sm:$0xf]
        %v1037 = vld [vmem:[#allocation8 + $0x59c] sm:$0xf]
        %v1038 = vld [vmem:[#allocation8 + $0x5a0] sm:$0xf]
        %v1039 = vld [vmem:[#allocation8 + $0x5a4] sm:$0xf]
        %v1040 = vld [vmem:[#allocation8 + $0x5a8] sm:$0xf]
        %v1041 = vld [vmem:[#allocation8 + $0x5ac] sm:$0xf]
        %v1042 = vld [vmem:[#allocation8 + $0x5b0] sm:$0xf]
        %v1043 = vld [vmem:[#allocation8 + $0x5b4] sm:$0xf]
        %v1044 = vld [vmem:[#allocation8 + $0x5b8] sm:$0xf]
        %v1045 = vld [vmem:[#allocation8 + $0x5bc] sm:$0xf]
        %v1046 = vld [vmem:[#allocation8 + $0x5c0] sm:$0xf]
        %v1047 = vld [vmem:[#allocation8 + $0x5c4] sm:$0xf]
        %v1048 = vld [vmem:[#allocation8 + $0x5c8] sm:$0xf]
        %v1049 = vld [vmem:[#allocation8 + $0x5cc] sm:$0xf]
        %v1050 = vld [vmem:[#allocation8 + $0x5d0] sm:$0xf]
        %v1051 = vld [vmem:[#allocation8 + $0x5d4] sm:$0xf]
        %v1052 = vld [vmem:[#allocation8 + $0x5d8] sm:$0xf]
        %v1053 = vld [vmem:[#allocation8 + $0x5dc] sm:$0xf]
        %v1054 = vld [vmem:[#allocation8 + $0x5e0] sm:$0xf]
        %v1055 = vld [vmem:[#allocation8 + $0x5e4] sm:$0xf]
        %v1056 = vld [vmem:[#allocation8 + $0x5e8] sm:$0xf]
        %v1057 = vld [vmem:[#allocation8 + $0x5ec] sm:$0xf]
        %v1058 = vld [vmem:[#allocation8 + $0x5f0] sm:$0xf]
        %v1059 = vld [vmem:[#allocation8 + $0x5f4] sm:$0xf]
        %v1060 = vld [vmem:[#allocation8 + $0x5f8] sm:$0xf]
        %v1061 = vld [vmem:[#allocation8 + $0x5fc] sm:$0xf]
        %v1062 = vld [vmem:[#allocation8 + $0x600] sm:$0xf]
        %v1063 = vld [vmem:[#allocation8 + $0x604] sm:$0xf]
        %v1064 = vld [vmem:[#allocation8 + $0x608] sm:$0xf]
        %v1065 = vld [vmem:[#allocation8 + $0x60c] sm:$0xf]
        %v1066 = vld [vmem:[#allocation8 + $0x610] sm:$0xf]
        %v1067 = vld [vmem:[#allocation8 + $0x614] sm:$0xf]
        %v1068 = vld [vmem:[#allocation8 + $0x618] sm:$0xf]
        %v1069 = vld [vmem:[#allocation8 + $0x61c] sm:$0xf]
        %v1070 = vld [vmem:[#allocation8 + $0x620] sm:$0xf]
        %v1071 = vld [vmem:[#allocation8 + $0x624] sm:$0xf]
        %v1072 = vld [vmem:[#allocation8 + $0x628] sm:$0xf]
        %v1073 = vld [vmem:[#allocation8 + $0x62c] sm:$0xf]
        %v1074 = vld [vmem:[#allocation8 + $0x630] sm:$0xf]
        %v1075 = vld [vmem:[#allocation8 + $0x634] sm:$0xf]
        %v1076 = vld [vmem:[#allocation8 + $0x638] sm:$0xf]
        %v1077 = vld [vmem:[#allocation8 + $0x63c] sm:$0xf]
        %v1078 = vld [vmem:[#allocation8 + $0x640] sm:$0xf]
        %v1079 = vld [vmem:[#allocation8 + $0x644] sm:$0xf]
        %v1080 = vld [vmem:[#allocation8 + $0x648] sm:$0xf]
        %v1081 = vld [vmem:[#allocation8 + $0x64c] sm:$0xf]
        %v1082 = vld [vmem:[#allocation8 + $0x650] sm:$0xf]
        %v1083 = vld [vmem:[#allocation8 + $0x654] sm:$0xf]
        %v1084 = vld [vmem:[#allocation8 + $0x658] sm:$0xf]
        %v1085 = vld [vmem:[#allocation8 + $0x65c] sm:$0xf]
        %v1086 = vld [vmem:[#allocation8 + $0x660] sm:$0xf]
        %v1087 = vld [vmem:[#allocation8 + $0x664] sm:$0xf]
        %v1088 = vld [vmem:[#allocation8 + $0x668] sm:$0xf]
        %v1089 = vld [vmem:[#allocation8 + $0x66c] sm:$0xf]
        %v1090 = vld [vmem:[#allocation8 + $0x670] sm:$0xf]
        %v1091 = vld [vmem:[#allocation8 + $0x674] sm:$0xf]
        %v1092 = vld [vmem:[#allocation8 + $0x678] sm:$0xf]
        %v1093 = vld [vmem:[#allocation8 + $0x67c] sm:$0xf]
        %v1094 = vld [vmem:[#allocation8 + $0x680] sm:$0xf]
        %v1095 = vld [vmem:[#allocation8 + $0x684] sm:$0xf]
        %v1096 = vld [vmem:[#allocation8 + $0x688] sm:$0xf]
        %v1097 = vld [vmem:[#allocation8 + $0x68c] sm:$0xf]
        %v1098 = vld [vmem:[#allocation8 + $0x690] sm:$0xf]
        %v1099 = vld [vmem:[#allocation8 + $0x694] sm:$0xf]
        %v1100 = vld [vmem:[#allocation8 + $0x698] sm:$0xf]
        %v1101 = vld [vmem:[#allocation8 + $0x69c] sm:$0xf]
        %v1102 = vld [vmem:[#allocation8 + $0x6a0] sm:$0xf]
        %v1103 = vld [vmem:[#allocation8 + $0x6a4] sm:$0xf]
        %v1104 = vld [vmem:[#allocation8 + $0x6a8] sm:$0xf]
        %v1105 = vld [vmem:[#allocation8 + $0x6ac] sm:$0xf]
        %v1106 = vld [vmem:[#allocation8 + $0x6b0] sm:$0xf]
        %v1107 = vld [vmem:[#allocation8 + $0x6b4] sm:$0xf]
        %v1108 = vld [vmem:[#allocation8 + $0x6b8] sm:$0xf]
        %v1109 = vld [vmem:[#allocation8 + $0x6bc] sm:$0xf]
        %v1110 = vld [vmem:[#allocation8 + $0x6c0] sm:$0xf]
        %v1111 = vld [vmem:[#allocation8 + $0x6c4] sm:$0xf]
        %v1112 = vld [vmem:[#allocation8 + $0x6c8] sm:$0xf]
        %v1113 = vld [vmem:[#allocation8 + $0x6cc] sm:$0xf]
        %v1114 = vld [vmem:[#allocation8 + $0x6d0] sm:$0xf]
        %v1115 = vld [vmem:[#allocation8 + $0x6d4] sm:$0xf]
        %v1116 = vld [vmem:[#allocation8 + $0x6d8] sm:$0xf]
        %v1117 = vld [vmem:[#allocation8 + $0x6dc] sm:$0xf]
        %v1118 = vld [vmem:[#allocation8 + $0x6e0] sm:$0xf]
        %v1119 = vld [vmem:[#allocation8 + $0x6e4] sm:$0xf]
        %v1120 = vld [vmem:[#allocation8 + $0x6e8] sm:$0xf]
        %v1121 = vld [vmem:[#allocation8 + $0x6ec] sm:$0xf]
        %v1122 = vld [vmem:[#allocation8 + $0x6f0] sm:$0xf]
        %v1123 = vld [vmem:[#allocation8 + $0x6f4] sm:$0xf]
        %v1124 = vld [vmem:[#allocation8 + $0x6f8] sm:$0xf]
        %v1125 = vld [vmem:[#allocation8 + $0x6fc] sm:$0xf]
        %v1126 = vld [vmem:[#allocation8 + $0x700] sm:$0xf]
        %v1127 = vld [vmem:[#allocation8 + $0x704] sm:$0xf]
        %v1128 = vld [vmem:[#allocation8 + $0x708] sm:$0xf]
        %v1129 = vld [vmem:[#allocation8 + $0x70c] sm:$0xf]
        %v1130 = vld [vmem:[#allocation8 + $0x710] sm:$0xf]
        %v1131 = vld [vmem:[#allocation8 + $0x714] sm:$0xf]
        %v1132 = vld [vmem:[#allocation8 + $0x718] sm:$0xf]
        %v1133 = vld [vmem:[#allocation8 + $0x71c] sm:$0xf]
        %v1134 = vld [vmem:[#allocation8 + $0x720] sm:$0xf]
        %v1135 = vld [vmem:[#allocation8 + $0x724] sm:$0xf]
        %v1136 = vld [vmem:[#allocation8 + $0x728] sm:$0xf]
        %v1137 = vld [vmem:[#allocation8 + $0x72c] sm:$0xf]
        %v1138 = vld [vmem:[#allocation8 + $0x730] sm:$0xf]
        %v1139 = vld [vmem:[#allocation8 + $0x734] sm:$0xf]
        %v1140 = vld [vmem:[#allocation8 + $0x738] sm:$0xf]
        %v1141 = vld [vmem:[#allocation8 + $0x73c] sm:$0xf]
        %v1142 = vld [vmem:[#allocation8 + $0x740] sm:$0xf]
        %v1143 = vld [vmem:[#allocation8 + $0x744] sm:$0xf]
        %v1144 = vld [vmem:[#allocation8 + $0x748] sm:$0xf]
        %v1145 = vld [vmem:[#allocation8 + $0x74c] sm:$0xf]
        %v1146 = vld [vmem:[#allocation8 + $0x750] sm:$0xf]
        %v1147 = vld [vmem:[#allocation8 + $0x754] sm:$0xf]
        %v1148 = vld [vmem:[#allocation8 + $0x758] sm:$0xf]
        %v1149 = vld [vmem:[#allocation8 + $0x75c] sm:$0xf]
        %v1150 = vld [vmem:[#allocation8 + $0x760] sm:$0xf]
        %v1151 = vld [vmem:[#allocation8 + $0x764] sm:$0xf]
        %v1152 = vld [vmem:[#allocation8 + $0x768] sm:$0xf]
        %v1153 = vld [vmem:[#allocation8 + $0x76c] sm:$0xf]
        %v1154 = vld [vmem:[#allocation8 + $0x770] sm:$0xf]
        %v1155 = vld [vmem:[#allocation8 + $0x774] sm:$0xf]
        %v1156 = vld [vmem:[#allocation8 + $0x778] sm:$0xf]
        %v1157 = vld [vmem:[#allocation8 + $0x77c] sm:$0xf]
        %v1158 = vld [vmem:[#allocation8 + $0x780] sm:$0xf]
        %v1159 = vld [vmem:[#allocation8 + $0x784] sm:$0xf]
        %v1160 = vld [vmem:[#allocation8 + $0x788] sm:$0xf]
        %v1161 = vld [vmem:[#allocation8 + $0x78c] sm:$0xf]
        %v1162 = vld [vmem:[#allocation8 + $0x790] sm:$0xf]
        %v1163 = vld [vmem:[#allocation8 + $0x794] sm:$0xf]
        %v1164 = vld [vmem:[#allocation8 + $0x798] sm:$0xf]
        %v1165 = vld [vmem:[#allocation8 + $0x79c] sm:$0xf]
        %v1166 = vld [vmem:[#allocation8 + $0x7a0] sm:$0xf]
        %v1167 = vld [vmem:[#allocation8 + $0x7a4] sm:$0xf]
        %v1168 = vld [vmem:[#allocation8 + $0x7a8] sm:$0xf]
        %v1169 = vld [vmem:[#allocation8 + $0x7ac] sm:$0xf]
        %v1170 = vld [vmem:[#allocation8 + $0x7b0] sm:$0xf]
        %v1171 = vld [vmem:[#allocation8 + $0x7b4] sm:$0xf]
        %v1172 = vld [vmem:[#allocation8 + $0x7b8] sm:$0xf]
        %v1173 = vld [vmem:[#allocation8 + $0x7bc] sm:$0xf]
        %v1174 = vld [vmem:[#allocation8 + $0x7c0] sm:$0xf]
        %v1175 = vld [vmem:[#allocation8 + $0x7c4] sm:$0xf]
        %v1176 = vld [vmem:[#allocation8 + $0x7c8] sm:$0xf]
        %v1177 = vld [vmem:[#allocation8 + $0x7cc] sm:$0xf]
        %v1178 = vld [vmem:[#allocation8 + $0x7d0] sm:$0xf]
        %v1179 = vld [vmem:[#allocation8 + $0x7d4] sm:$0xf]
        %v1180 = vld [vmem:[#allocation8 + $0x7d8] sm:$0xf]
        %v1181 = vld [vmem:[#allocation8 + $0x7dc] sm:$0xf]
        %v1182 = vld [vmem:[#allocation8 + $0x7e0] sm:$0xf]
        %v1183 = vld [vmem:[#allocation8 + $0x7e4] sm:$0xf]
        %v1184 = vld [vmem:[#allocation8 + $0x7e8] sm:$0xf]
        %v1185 = vld [vmem:[#allocation8 + $0x7ec] sm:$0xf]
        %v1186 = vld [vmem:[#allocation8 + $0x7f0] sm:$0xf]
        %v1187 = vld [vmem:[#allocation8 + $0x7f4] sm:$0xf]
        %v1188 = vld [vmem:[#allocation8 + $0x7f8] sm:$0xf]
        %v1189 = vld [vmem:[#allocation8 + $0x7fc] sm:$0xf]
        %v1190 = vld [vmem:[#allocation8 + $0x800] sm:$0x7]
        %v1704 = vunpack.c.l.b16 %v678
        %v1705 = vunpack.c.l.b16 %v679
        %v1706 = vunpack.c.l.b16 %v680
        %v1707 = vunpack.c.l.b16 %v681
        %v1708 = vunpack.c.l.b16 %v682
        %v1709 = vunpack.c.l.b16 %v683
        %v1710 = vunpack.c.l.b16 %v684
        %v1711 = vunpack.c.l.b16 %v685
        %v1712 = vunpack.c.l.b16 %v686
        %v1713 = vunpack.c.l.b16 %v687
        %v1714 = vunpack.c.l.b16 %v688
        %v1715 = vunpack.c.l.b16 %v689
        %v1716 = vunpack.c.l.b16 %v690
        %v1717 = vunpack.c.l.b16 %v691
        %v1718 = vunpack.c.l.b16 %v692
        %v1719 = vunpack.c.l.b16 %v693
        %v1720 = vunpack.c.l.b16 %v694
        %v1721 = vunpack.c.l.b16 %v695
        %v1722 = vunpack.c.l.b16 %v696
        %v1723 = vunpack.c.l.b16 %v697
        %v1724 = vunpack.c.l.b16 %v698
        %v1725 = vunpack.c.l.b16 %v699
        %v1726 = vunpack.c.l.b16 %v700
        %v1727 = vunpack.c.l.b16 %v701
        %v1728 = vunpack.c.l.b16 %v702
        %v1729 = vunpack.c.l.b16 %v703
        %v1730 = vunpack.c.l.b16 %v704
        %v1731 = vunpack.c.l.b16 %v705
        %v1732 = vunpack.c.l.b16 %v706
        %v1733 = vunpack.c.l.b16 %v707
        %v1734 = vunpack.c.l.b16 %v708
        %v1735 = vunpack.c.l.b16 %v709
        %v1736 = vunpack.c.l.b16 %v710
        %v1737 = vunpack.c.l.b16 %v711
        %v1738 = vunpack.c.l.b16 %v712
        %v1739 = vunpack.c.l.b16 %v713
        %v1740 = vunpack.c.l.b16 %v714
        %v1741 = vunpack.c.l.b16 %v715
        %v1742 = vunpack.c.l.b16 %v716
        %v1743 = vunpack.c.l.b16 %v717
        %v1744 = vunpack.c.l.b16 %v718
        %v1745 = vunpack.c.l.b16 %v719
        %v1746 = vunpack.c.l.b16 %v720
        %v1747 = vunpack.c.l.b16 %v721
        %v1748 = vunpack.c.l.b16 %v722
        %v1749 = vunpack.c.l.b16 %v723
        %v1750 = vunpack.c.l.b16 %v724
        %v1751 = vunpack.c.l.b16 %v725
        %v1752 = vunpack.c.l.b16 %v726
        %v1753 = vunpack.c.l.b16 %v727
        %v1754 = vunpack.c.l.b16 %v728
        %v1755 = vunpack.c.l.b16 %v729
        %v1756 = vunpack.c.l.b16 %v730
        %v1757 = vunpack.c.l.b16 %v731
        %v1758 = vunpack.c.l.b16 %v732
        %v1759 = vunpack.c.l.b16 %v733
        %v1760 = vunpack.c.l.b16 %v734
        %v1761 = vunpack.c.l.b16 %v735
        %v1762 = vunpack.c.l.b16 %v736
        %v1763 = vunpack.c.l.b16 %v737
        %v1764 = vunpack.c.l.b16 %v738
        %v1765 = vunpack.c.l.b16 %v739
        %v1766 = vunpack.c.l.b16 %v740
        %v1767 = vunpack.c.l.b16 %v741
        %v1768 = vunpack.c.l.b16 %v742
        %v1769 = vunpack.c.l.b16 %v743
        %v1770 = vunpack.c.l.b16 %v744
        %v1771 = vunpack.c.l.b16 %v745
        %v1772 = vunpack.c.l.b16 %v746
        %v1773 = vunpack.c.l.b16 %v747
        %v1774 = vunpack.c.l.b16 %v748
        %v1775 = vunpack.c.l.b16 %v749
        %v1776 = vunpack.c.l.b16 %v750
        %v1777 = vunpack.c.l.b16 %v751
        %v1778 = vunpack.c.l.b16 %v752
        %v1779 = vunpack.c.l.b16 %v753
        %v1780 = vunpack.c.l.b16 %v754
        %v1781 = vunpack.c.l.b16 %v755
        %v1782 = vunpack.c.l.b16 %v756
        %v1783 = vunpack.c.l.b16 %v757
        %v1784 = vunpack.c.l.b16 %v758
        %v1785 = vunpack.c.l.b16 %v759
        %v1786 = vunpack.c.l.b16 %v760
        %v1787 = vunpack.c.l.b16 %v761
        %v1788 = vunpack.c.l.b16 %v762
        %v1789 = vunpack.c.l.b16 %v763
        %v1790 = vunpack.c.l.b16 %v764
        %v1791 = vunpack.c.l.b16 %v765
        %v1792 = vunpack.c.l.b16 %v766
        %v1793 = vunpack.c.l.b16 %v767
        %v1794 = vunpack.c.l.b16 %v768
        %v1795 = vunpack.c.l.b16 %v769
        %v1796 = vunpack.c.l.b16 %v770
        %v1797 = vunpack.c.l.b16 %v771
        %v1798 = vunpack.c.l.b16 %v772
        %v1799 = vunpack.c.l.b16 %v773
        %v1800 = vunpack.c.l.b16 %v774
        %v1801 = vunpack.c.l.b16 %v775
        %v1802 = vunpack.c.l.b16 %v776
        %v1803 = vunpack.c.l.b16 %v777
        %v1804 = vunpack.c.l.b16 %v778
        %v1805 = vunpack.c.l.b16 %v779
        %v1806 = vunpack.c.l.b16 %v780
        %v1807 = vunpack.c.l.b16 %v781
        %v1808 = vunpack.c.l.b16 %v782
        %v1809 = vunpack.c.l.b16 %v783
        %v1810 = vunpack.c.l.b16 %v784
        %v1811 = vunpack.c.l.b16 %v785
        %v1812 = vunpack.c.l.b16 %v786
        %v1813 = vunpack.c.l.b16 %v787
        %v1814 = vunpack.c.l.b16 %v788
        %v1815 = vunpack.c.l.b16 %v789
        %v1816 = vunpack.c.l.b16 %v790
        %v1817 = vunpack.c.l.b16 %v791
        %v1818 = vunpack.c.l.b16 %v792
        %v1819 = vunpack.c.l.b16 %v793
        %v1820 = vunpack.c.l.b16 %v794
        %v1821 = vunpack.c.l.b16 %v795
        %v1822 = vunpack.c.l.b16 %v796
        %v1823 = vunpack.c.l.b16 %v797
        %v1824 = vunpack.c.l.b16 %v798
        %v1825 = vunpack.c.l.b16 %v799
        %v1826 = vunpack.c.l.b16 %v800
        %v1827 = vunpack.c.l.b16 %v801
        %v1828 = vunpack.c.l.b16 %v802
        %v1829 = vunpack.c.l.b16 %v803
        %v1830 = vunpack.c.l.b16 %v804
        %v1831 = vunpack.c.l.b16 %v805
        %v1832 = vunpack.c.l.b16 %v806
        %v1833 = vunpack.c.l.b16 %v807
        %v1834 = vunpack.c.l.b16 %v808
        %v1835 = vunpack.c.l.b16 %v809
        %v1836 = vunpack.c.l.b16 %v810
        %v1837 = vunpack.c.l.b16 %v811
        %v1838 = vunpack.c.l.b16 %v812
        %v1839 = vunpack.c.l.b16 %v813
        %v1840 = vunpack.c.l.b16 %v814
        %v1841 = vunpack.c.l.b16 %v815
        %v1842 = vunpack.c.l.b16 %v816
        %v1843 = vunpack.c.l.b16 %v817
        %v1844 = vunpack.c.l.b16 %v818
        %v1845 = vunpack.c.l.b16 %v819
        %v1846 = vunpack.c.l.b16 %v820
        %v1847 = vunpack.c.l.b16 %v821
        %v1848 = vunpack.c.l.b16 %v822
        %v1849 = vunpack.c.l.b16 %v823
        %v1850 = vunpack.c.l.b16 %v824
        %v1851 = vunpack.c.l.b16 %v825
        %v1852 = vunpack.c.l.b16 %v826
        %v1853 = vunpack.c.l.b16 %v827
        %v1854 = vunpack.c.l.b16 %v828
        %v1855 = vunpack.c.l.b16 %v829
        %v1856 = vunpack.c.l.b16 %v830
        %v1857 = vunpack.c.l.b16 %v831
        %v1858 = vunpack.c.l.b16 %v832
        %v1859 = vunpack.c.l.b16 %v833
        %v1860 = vunpack.c.l.b16 %v834
        %v1861 = vunpack.c.l.b16 %v835
        %v1862 = vunpack.c.l.b16 %v836
        %v1863 = vunpack.c.l.b16 %v837
        %v1864 = vunpack.c.l.b16 %v838
        %v1865 = vunpack.c.l.b16 %v839
        %v1866 = vunpack.c.l.b16 %v840
        %v1867 = vunpack.c.l.b16 %v841
        %v1868 = vunpack.c.l.b16 %v842
        %v1869 = vunpack.c.l.b16 %v843
        %v1870 = vunpack.c.l.b16 %v844
        %v1871 = vunpack.c.l.b16 %v845
        %v1872 = vunpack.c.l.b16 %v846
        %v1873 = vunpack.c.l.b16 %v847
        %v1874 = vunpack.c.l.b16 %v848
        %v1875 = vunpack.c.l.b16 %v849
        %v1876 = vunpack.c.l.b16 %v850
        %v1877 = vunpack.c.l.b16 %v851
        %v1878 = vunpack.c.l.b16 %v852
        %v1879 = vunpack.c.l.b16 %v853
        %v1880 = vunpack.c.l.b16 %v854
        %v1881 = vunpack.c.l.b16 %v855
        %v1882 = vunpack.c.l.b16 %v856
        %v1883 = vunpack.c.l.b16 %v857
        %v1884 = vunpack.c.l.b16 %v858
        %v1885 = vunpack.c.l.b16 %v859
        %v1886 = vunpack.c.l.b16 %v860
        %v1887 = vunpack.c.l.b16 %v861
        %v1888 = vunpack.c.l.b16 %v862
        %v1889 = vunpack.c.l.b16 %v863
        %v1890 = vunpack.c.l.b16 %v864
        %v1891 = vunpack.c.l.b16 %v865
        %v1892 = vunpack.c.l.b16 %v866
        %v1893 = vunpack.c.l.b16 %v867
        %v1894 = vunpack.c.l.b16 %v868
        %v1895 = vunpack.c.l.b16 %v869
        %v1896 = vunpack.c.l.b16 %v870
        %v1897 = vunpack.c.l.b16 %v871
        %v1898 = vunpack.c.l.b16 %v872
        %v1899 = vunpack.c.l.b16 %v873
        %v1900 = vunpack.c.l.b16 %v874
        %v1901 = vunpack.c.l.b16 %v875
        %v1902 = vunpack.c.l.b16 %v876
        %v1903 = vunpack.c.l.b16 %v877
        %v1904 = vunpack.c.l.b16 %v878
        %v1905 = vunpack.c.l.b16 %v879
        %v1906 = vunpack.c.l.b16 %v880
        %v1907 = vunpack.c.l.b16 %v881
        %v1908 = vunpack.c.l.b16 %v882
        %v1909 = vunpack.c.l.b16 %v883
        %v1910 = vunpack.c.l.b16 %v884
        %v1911 = vunpack.c.l.b16 %v885
        %v1912 = vunpack.c.l.b16 %v886
        %v1913 = vunpack.c.l.b16 %v887
        %v1914 = vunpack.c.l.b16 %v888
        %v1915 = vunpack.c.l.b16 %v889
        %v1916 = vunpack.c.l.b16 %v890
        %v1917 = vunpack.c.l.b16 %v891
        %v1918 = vunpack.c.l.b16 %v892
        %v1919 = vunpack.c.l.b16 %v893
        %v1920 = vunpack.c.l.b16 %v894
        %v1921 = vunpack.c.l.b16 %v895
        %v1922 = vunpack.c.l.b16 %v896
        %v1923 = vunpack.c.l.b16 %v897
        %v1924 = vunpack.c.l.b16 %v898
        %v1925 = vunpack.c.l.b16 %v899
        %v1926 = vunpack.c.l.b16 %v900
        %v1927 = vunpack.c.l.b16 %v901
        %v1928 = vunpack.c.l.b16 %v902
        %v1929 = vunpack.c.l.b16 %v903
        %v1930 = vunpack.c.l.b16 %v904
        %v1931 = vunpack.c.l.b16 %v905
        %v1932 = vunpack.c.l.b16 %v906
        %v1933 = vunpack.c.l.b16 %v907
        %v1934 = vunpack.c.l.b16 %v908
        %v1935 = vunpack.c.l.b16 %v909
        %v1936 = vunpack.c.l.b16 %v910
        %v1937 = vunpack.c.l.b16 %v911
        %v1938 = vunpack.c.l.b16 %v912
        %v1939 = vunpack.c.l.b16 %v913
        %v1940 = vunpack.c.l.b16 %v914
        %v1941 = vunpack.c.l.b16 %v915
        %v1942 = vunpack.c.l.b16 %v916
        %v1943 = vunpack.c.l.b16 %v917
        %v1944 = vunpack.c.l.b16 %v918
        %v1945 = vunpack.c.l.b16 %v919
        %v1946 = vunpack.c.l.b16 %v920
        %v1947 = vunpack.c.l.b16 %v921
        %v1948 = vunpack.c.l.b16 %v922
        %v1949 = vunpack.c.l.b16 %v923
        %v1950 = vunpack.c.l.b16 %v924
        %v1951 = vunpack.c.l.b16 %v925
        %v1952 = vunpack.c.l.b16 %v926
        %v1953 = vunpack.c.l.b16 %v927
        %v1954 = vunpack.c.l.b16 %v928
        %v1955 = vunpack.c.l.b16 %v929
        %v1956 = vunpack.c.l.b16 %v930
        %v1957 = vunpack.c.l.b16 %v931
        %v1958 = vunpack.c.l.b16 %v932
        %v1959 = vunpack.c.l.b16 %v933
        %v1960 = vunpack.c.l.b16 %v934
        %v1961 = vunpack.c.l.b16 %v935
        %v1962 = vunpack.c.l.b16 %v936
        %v1963 = vunpack.c.l.b16 %v937
        %v1964 = vunpack.c.l.b16 %v938
        %v1965 = vunpack.c.l.b16 %v939
        %v1966 = vunpack.c.l.b16 %v940
        %v1967 = vunpack.c.l.b16 %v941
        %v1968 = vunpack.c.l.b16 %v942
        %v1969 = vunpack.c.l.b16 %v943
        %v1970 = vunpack.c.l.b16 %v944
        %v1971 = vunpack.c.l.b16 %v945
        %v1972 = vunpack.c.l.b16 %v946
        %v1973 = vunpack.c.l.b16 %v947
        %v1974 = vunpack.c.l.b16 %v948
        %v1975 = vunpack.c.l.b16 %v949
        %v1976 = vunpack.c.l.b16 %v950
        %v1977 = vunpack.c.l.b16 %v951
        %v1978 = vunpack.c.l.b16 %v952
        %v1979 = vunpack.c.l.b16 %v953
        %v1980 = vunpack.c.l.b16 %v954
        %v1981 = vunpack.c.l.b16 %v955
        %v1982 = vunpack.c.l.b16 %v956
        %v1983 = vunpack.c.l.b16 %v957
        %v1984 = vunpack.c.l.b16 %v958
        %v1985 = vunpack.c.l.b16 %v959
        %v1986 = vunpack.c.l.b16 %v960
        %v1987 = vunpack.c.l.b16 %v961
        %v1988 = vunpack.c.l.b16 %v962
        %v1989 = vunpack.c.l.b16 %v963
        %v1990 = vunpack.c.l.b16 %v964
        %v1991 = vunpack.c.l.b16 %v965
        %v1992 = vunpack.c.l.b16 %v966
        %v1993 = vunpack.c.l.b16 %v967
        %v1994 = vunpack.c.l.b16 %v968
        %v1995 = vunpack.c.l.b16 %v969
        %v1996 = vunpack.c.l.b16 %v970
        %v1997 = vunpack.c.l.b16 %v971
        %v1998 = vunpack.c.l.b16 %v972
        %v1999 = vunpack.c.l.b16 %v973
        %v2000 = vunpack.c.l.b16 %v974
        %v2001 = vunpack.c.l.b16 %v975
        %v2002 = vunpack.c.l.b16 %v976
        %v2003 = vunpack.c.l.b16 %v977
        %v2004 = vunpack.c.l.b16 %v978
        %v2005 = vunpack.c.l.b16 %v979
        %v2006 = vunpack.c.l.b16 %v980
        %v2007 = vunpack.c.l.b16 %v981
        %v2008 = vunpack.c.l.b16 %v982
        %v2009 = vunpack.c.l.b16 %v983
        %v2010 = vunpack.c.l.b16 %v984
        %v2011 = vunpack.c.l.b16 %v985
        %v2012 = vunpack.c.l.b16 %v986
        %v2013 = vunpack.c.l.b16 %v987
        %v2014 = vunpack.c.l.b16 %v988
        %v2015 = vunpack.c.l.b16 %v989
        %v2016 = vunpack.c.l.b16 %v990
        %v2017 = vunpack.c.l.b16 %v991
        %v2018 = vunpack.c.l.b16 %v992
        %v2019 = vunpack.c.l.b16 %v993
        %v2020 = vunpack.c.l.b16 %v994
        %v2021 = vunpack.c.l.b16 %v995
        %v2022 = vunpack.c.l.b16 %v996
        %v2023 = vunpack.c.l.b16 %v997
        %v2024 = vunpack.c.l.b16 %v998
        %v2025 = vunpack.c.l.b16 %v999
        %v2026 = vunpack.c.l.b16 %v1000
        %v2027 = vunpack.c.l.b16 %v1001
        %v2028 = vunpack.c.l.b16 %v1002
        %v2029 = vunpack.c.l.b16 %v1003
        %v2030 = vunpack.c.l.b16 %v1004
        %v2031 = vunpack.c.l.b16 %v1005
        %v2032 = vunpack.c.l.b16 %v1006
        %v2033 = vunpack.c.l.b16 %v1007
        %v2034 = vunpack.c.l.b16 %v1008
        %v2035 = vunpack.c.l.b16 %v1009
        %v2036 = vunpack.c.l.b16 %v1010
        %v2037 = vunpack.c.l.b16 %v1011
        %v2038 = vunpack.c.l.b16 %v1012
        %v2039 = vunpack.c.l.b16 %v1013
        %v2040 = vunpack.c.l.b16 %v1014
        %v2041 = vunpack.c.l.b16 %v1015
        %v2042 = vunpack.c.l.b16 %v1016
        %v2043 = vunpack.c.l.b16 %v1017
        %v2044 = vunpack.c.l.b16 %v1018
        %v2045 = vunpack.c.l.b16 %v1019
        %v2046 = vunpack.c.l.b16 %v1020
        %v2047 = vunpack.c.l.b16 %v1021
        %v2048 = vunpack.c.l.b16 %v1022
        %v2049 = vunpack.c.l.b16 %v1023
        %v2050 = vunpack.c.l.b16 %v1024
        %v2051 = vunpack.c.l.b16 %v1025
        %v2052 = vunpack.c.l.b16 %v1026
        %v2053 = vunpack.c.l.b16 %v1027
        %v2054 = vunpack.c.l.b16 %v1028
        %v2055 = vunpack.c.l.b16 %v1029
        %v2056 = vunpack.c.l.b16 %v1030
        %v2057 = vunpack.c.l.b16 %v1031
        %v2058 = vunpack.c.l.b16 %v1032
        %v2059 = vunpack.c.l.b16 %v1033
        %v2060 = vunpack.c.l.b16 %v1034
        %v2061 = vunpack.c.l.b16 %v1035
        %v2062 = vunpack.c.l.b16 %v1036
        %v2063 = vunpack.c.l.b16 %v1037
        %v2064 = vunpack.c.l.b16 %v1038
        %v2065 = vunpack.c.l.b16 %v1039
        %v2066 = vunpack.c.l.b16 %v1040
        %v2067 = vunpack.c.l.b16 %v1041
        %v2068 = vunpack.c.l.b16 %v1042
        %v2069 = vunpack.c.l.b16 %v1043
        %v2070 = vunpack.c.l.b16 %v1044
        %v2071 = vunpack.c.l.b16 %v1045
        %v2072 = vunpack.c.l.b16 %v1046
        %v2073 = vunpack.c.l.b16 %v1047
        %v2074 = vunpack.c.l.b16 %v1048
        %v2075 = vunpack.c.l.b16 %v1049
        %v2076 = vunpack.c.l.b16 %v1050
        %v2077 = vunpack.c.l.b16 %v1051
        %v2078 = vunpack.c.l.b16 %v1052
        %v2079 = vunpack.c.l.b16 %v1053
        %v2080 = vunpack.c.l.b16 %v1054
        %v2081 = vunpack.c.l.b16 %v1055
        %v2082 = vunpack.c.l.b16 %v1056
        %v2083 = vunpack.c.l.b16 %v1057
        %v2084 = vunpack.c.l.b16 %v1058
        %v2085 = vunpack.c.l.b16 %v1059
        %v2086 = vunpack.c.l.b16 %v1060
        %v2087 = vunpack.c.l.b16 %v1061
        %v2088 = vunpack.c.l.b16 %v1062
        %v2089 = vunpack.c.l.b16 %v1063
        %v2090 = vunpack.c.l.b16 %v1064
        %v2091 = vunpack.c.l.b16 %v1065
        %v2092 = vunpack.c.l.b16 %v1066
        %v2093 = vunpack.c.l.b16 %v1067
        %v2094 = vunpack.c.l.b16 %v1068
        %v2095 = vunpack.c.l.b16 %v1069
        %v2096 = vunpack.c.l.b16 %v1070
        %v2097 = vunpack.c.l.b16 %v1071
        %v2098 = vunpack.c.l.b16 %v1072
        %v2099 = vunpack.c.l.b16 %v1073
        %v2100 = vunpack.c.l.b16 %v1074
        %v2101 = vunpack.c.l.b16 %v1075
        %v2102 = vunpack.c.l.b16 %v1076
        %v2103 = vunpack.c.l.b16 %v1077
        %v2104 = vunpack.c.l.b16 %v1078
        %v2105 = vunpack.c.l.b16 %v1079
        %v2106 = vunpack.c.l.b16 %v1080
        %v2107 = vunpack.c.l.b16 %v1081
        %v2108 = vunpack.c.l.b16 %v1082
        %v2109 = vunpack.c.l.b16 %v1083
        %v2110 = vunpack.c.l.b16 %v1084
        %v2111 = vunpack.c.l.b16 %v1085
        %v2112 = vunpack.c.l.b16 %v1086
        %v2113 = vunpack.c.l.b16 %v1087
        %v2114 = vunpack.c.l.b16 %v1088
        %v2115 = vunpack.c.l.b16 %v1089
        %v2116 = vunpack.c.l.b16 %v1090
        %v2117 = vunpack.c.l.b16 %v1091
        %v2118 = vunpack.c.l.b16 %v1092
        %v2119 = vunpack.c.l.b16 %v1093
        %v2120 = vunpack.c.l.b16 %v1094
        %v2121 = vunpack.c.l.b16 %v1095
        %v2122 = vunpack.c.l.b16 %v1096
        %v2123 = vunpack.c.l.b16 %v1097
        %v2124 = vunpack.c.l.b16 %v1098
        %v2125 = vunpack.c.l.b16 %v1099
        %v2126 = vunpack.c.l.b16 %v1100
        %v2127 = vunpack.c.l.b16 %v1101
        %v2128 = vunpack.c.l.b16 %v1102
        %v2129 = vunpack.c.l.b16 %v1103
        %v2130 = vunpack.c.l.b16 %v1104
        %v2131 = vunpack.c.l.b16 %v1105
        %v2132 = vunpack.c.l.b16 %v1106
        %v2133 = vunpack.c.l.b16 %v1107
        %v2134 = vunpack.c.l.b16 %v1108
        %v2135 = vunpack.c.l.b16 %v1109
        %v2136 = vunpack.c.l.b16 %v1110
        %v2137 = vunpack.c.l.b16 %v1111
        %v2138 = vunpack.c.l.b16 %v1112
        %v2139 = vunpack.c.l.b16 %v1113
        %v2140 = vunpack.c.l.b16 %v1114
        %v2141 = vunpack.c.l.b16 %v1115
        %v2142 = vunpack.c.l.b16 %v1116
        %v2143 = vunpack.c.l.b16 %v1117
        %v2144 = vunpack.c.l.b16 %v1118
        %v2145 = vunpack.c.l.b16 %v1119
        %v2146 = vunpack.c.l.b16 %v1120
        %v2147 = vunpack.c.l.b16 %v1121
        %v2148 = vunpack.c.l.b16 %v1122
        %v2149 = vunpack.c.l.b16 %v1123
        %v2150 = vunpack.c.l.b16 %v1124
        %v2151 = vunpack.c.l.b16 %v1125
        %v2152 = vunpack.c.l.b16 %v1126
        %v2153 = vunpack.c.l.b16 %v1127
        %v2154 = vunpack.c.l.b16 %v1128
        %v2155 = vunpack.c.l.b16 %v1129
        %v2156 = vunpack.c.l.b16 %v1130
        %v2157 = vunpack.c.l.b16 %v1131
        %v2158 = vunpack.c.l.b16 %v1132
        %v2159 = vunpack.c.l.b16 %v1133
        %v2160 = vunpack.c.l.b16 %v1134
        %v2161 = vunpack.c.l.b16 %v1135
        %v2162 = vunpack.c.l.b16 %v1136
        %v2163 = vunpack.c.l.b16 %v1137
        %v2164 = vunpack.c.l.b16 %v1138
        %v2165 = vunpack.c.l.b16 %v1139
        %v2166 = vunpack.c.l.b16 %v1140
        %v2167 = vunpack.c.l.b16 %v1141
        %v2168 = vunpack.c.l.b16 %v1142
        %v2169 = vunpack.c.l.b16 %v1143
        %v2170 = vunpack.c.l.b16 %v1144
        %v2171 = vunpack.c.l.b16 %v1145
        %v2172 = vunpack.c.l.b16 %v1146
        %v2173 = vunpack.c.l.b16 %v1147
        %v2174 = vunpack.c.l.b16 %v1148
        %v2175 = vunpack.c.l.b16 %v1149
        %v2176 = vunpack.c.l.b16 %v1150
        %v2177 = vunpack.c.l.b16 %v1151
        %v2178 = vunpack.c.l.b16 %v1152
        %v2179 = vunpack.c.l.b16 %v1153
        %v2180 = vunpack.c.l.b16 %v1154
        %v2181 = vunpack.c.l.b16 %v1155
        %v2182 = vunpack.c.l.b16 %v1156
        %v2183 = vunpack.c.l.b16 %v1157
        %v2184 = vunpack.c.l.b16 %v1158
        %v2185 = vunpack.c.l.b16 %v1159
        %v2186 = vunpack.c.l.b16 %v1160
        %v2187 = vunpack.c.l.b16 %v1161
        %v2188 = vunpack.c.l.b16 %v1162
        %v2189 = vunpack.c.l.b16 %v1163
        %v2190 = vunpack.c.l.b16 %v1164
        %v2191 = vunpack.c.l.b16 %v1165
        %v2192 = vunpack.c.l.b16 %v1166
        %v2193 = vunpack.c.l.b16 %v1167
        %v2194 = vunpack.c.l.b16 %v1168
        %v2195 = vunpack.c.l.b16 %v1169
        %v2196 = vunpack.c.l.b16 %v1170
        %v2197 = vunpack.c.l.b16 %v1171
        %v2198 = vunpack.c.l.b16 %v1172
        %v2199 = vunpack.c.l.b16 %v1173
        %v2200 = vunpack.c.l.b16 %v1174
        %v2201 = vunpack.c.l.b16 %v1175
        %v2202 = vunpack.c.l.b16 %v1176
        %v2203 = vunpack.c.l.b16 %v1177
        %v2204 = vunpack.c.l.b16 %v1178
        %v2205 = vunpack.c.l.b16 %v1179
        %v2206 = vunpack.c.l.b16 %v1180
        %v2207 = vunpack.c.l.b16 %v1181
        %v2208 = vunpack.c.l.b16 %v1182
        %v2209 = vunpack.c.l.b16 %v1183
        %v2210 = vunpack.c.l.b16 %v1184
        %v2211 = vunpack.c.l.b16 %v1185
        %v2212 = vunpack.c.l.b16 %v1186
        %v2213 = vunpack.c.l.b16 %v1187
        %v2214 = vunpack.c.l.b16 %v1188
        %v2215 = vunpack.c.l.b16 %v1189
        %v2216 = vunpack.c.l.b16 %v1190
        %v2217 = vpack.c.b16 %v1705, %v1704
        %v2218 = vpack.c.b16 %v1707, %v1706
        %v2219 = vpack.c.b16 %v1709, %v1708
        %v2220 = vpack.c.b16 %v1711, %v1710
        %v2221 = vpack.c.b16 %v1713, %v1712
        %v2222 = vpack.c.b16 %v1715, %v1714
        %v2223 = vpack.c.b16 %v1717, %v1716
        %v2224 = vpack.c.b16 %v1719, %v1718
        %v2225 = vpack.c.b16 %v1721, %v1720
        %v2226 = vpack.c.b16 %v1723, %v1722
        %v2227 = vpack.c.b16 %v1725, %v1724
        %v2228 = vpack.c.b16 %v1727, %v1726
        %v2229 = vpack.c.b16 %v1729, %v1728
        %v2230 = vpack.c.b16 %v1731, %v1730
        %v2231 = vpack.c.b16 %v1733, %v1732
        %v2232 = vpack.c.b16 %v1735, %v1734
        %v2233 = vpack.c.b16 %v1737, %v1736
        %v2234 = vpack.c.b16 %v1739, %v1738
        %v2235 = vpack.c.b16 %v1741, %v1740
        %v2236 = vpack.c.b16 %v1743, %v1742
        %v2237 = vpack.c.b16 %v1745, %v1744
        %v2238 = vpack.c.b16 %v1747, %v1746
        %v2239 = vpack.c.b16 %v1749, %v1748
        %v2240 = vpack.c.b16 %v1751, %v1750
        %v2241 = vpack.c.b16 %v1753, %v1752
        %v2242 = vpack.c.b16 %v1755, %v1754
        %v2243 = vpack.c.b16 %v1757, %v1756
        %v2244 = vpack.c.b16 %v1759, %v1758
        %v2245 = vpack.c.b16 %v1761, %v1760
        %v2246 = vpack.c.b16 %v1763, %v1762
        %v2247 = vpack.c.b16 %v1765, %v1764
        %v2248 = vpack.c.b16 %v1767, %v1766
        %v2249 = vpack.c.b16 %v1769, %v1768
        %v2250 = vpack.c.b16 %v1771, %v1770
        %v2251 = vpack.c.b16 %v1773, %v1772
        %v2252 = vpack.c.b16 %v1775, %v1774
        %v2253 = vpack.c.b16 %v1777, %v1776
        %v2254 = vpack.c.b16 %v1779, %v1778
        %v2255 = vpack.c.b16 %v1781, %v1780
        %v2256 = vpack.c.b16 %v1783, %v1782
        %v2257 = vpack.c.b16 %v1785, %v1784
        %v2258 = vpack.c.b16 %v1787, %v1786
        %v2259 = vpack.c.b16 %v1789, %v1788
        %v2260 = vpack.c.b16 %v1791, %v1790
        %v2261 = vpack.c.b16 %v1793, %v1792
        %v2262 = vpack.c.b16 %v1795, %v1794
        %v2263 = vpack.c.b16 %v1797, %v1796
        %v2264 = vpack.c.b16 %v1799, %v1798
        %v2265 = vpack.c.b16 %v1801, %v1800
        %v2266 = vpack.c.b16 %v1803, %v1802
        %v2267 = vpack.c.b16 %v1805, %v1804
        %v2268 = vpack.c.b16 %v1807, %v1806
        %v2269 = vpack.c.b16 %v1809, %v1808
        %v2270 = vpack.c.b16 %v1811, %v1810
        %v2271 = vpack.c.b16 %v1813, %v1812
        %v2272 = vpack.c.b16 %v1815, %v1814
        %v2273 = vpack.c.b16 %v1817, %v1816
        %v2274 = vpack.c.b16 %v1819, %v1818
        %v2275 = vpack.c.b16 %v1821, %v1820
        %v2276 = vpack.c.b16 %v1823, %v1822
        %v2277 = vpack.c.b16 %v1825, %v1824
        %v2278 = vpack.c.b16 %v1827, %v1826
        %v2279 = vpack.c.b16 %v1829, %v1828
        %v2280 = vpack.c.b16 %v1831, %v1830
        %v2281 = vpack.c.b16 %v1833, %v1832
        %v2282 = vpack.c.b16 %v1835, %v1834
        %v2283 = vpack.c.b16 %v1837, %v1836
        %v2284 = vpack.c.b16 %v1839, %v1838
        %v2285 = vpack.c.b16 %v1841, %v1840
        %v2286 = vpack.c.b16 %v1843, %v1842
        %v2287 = vpack.c.b16 %v1845, %v1844
        %v2288 = vpack.c.b16 %v1847, %v1846
        %v2289 = vpack.c.b16 %v1849, %v1848
        %v2290 = vpack.c.b16 %v1851, %v1850
        %v2291 = vpack.c.b16 %v1853, %v1852
        %v2292 = vpack.c.b16 %v1855, %v1854
        %v2293 = vpack.c.b16 %v1857, %v1856
        %v2294 = vpack.c.b16 %v1859, %v1858
        %v2295 = vpack.c.b16 %v1861, %v1860
        %v2296 = vpack.c.b16 %v1863, %v1862
        %v2297 = vpack.c.b16 %v1865, %v1864
        %v2298 = vpack.c.b16 %v1867, %v1866
        %v2299 = vpack.c.b16 %v1869, %v1868
        %v2300 = vpack.c.b16 %v1871, %v1870
        %v2301 = vpack.c.b16 %v1873, %v1872
        %v2302 = vpack.c.b16 %v1875, %v1874
        %v2303 = vpack.c.b16 %v1877, %v1876
        %v2304 = vpack.c.b16 %v1879, %v1878
        %v2305 = vpack.c.b16 %v1881, %v1880
        %v2306 = vpack.c.b16 %v1883, %v1882
        %v2307 = vpack.c.b16 %v1885, %v1884
        %v2308 = vpack.c.b16 %v1887, %v1886
        %v2309 = vpack.c.b16 %v1889, %v1888
        %v2310 = vpack.c.b16 %v1891, %v1890
        %v2311 = vpack.c.b16 %v1893, %v1892
        %v2312 = vpack.c.b16 %v1895, %v1894
        %v2313 = vpack.c.b16 %v1897, %v1896
        %v2314 = vpack.c.b16 %v1899, %v1898
        %v2315 = vpack.c.b16 %v1901, %v1900
        %v2316 = vpack.c.b16 %v1903, %v1902
        %v2317 = vpack.c.b16 %v1905, %v1904
        %v2318 = vpack.c.b16 %v1907, %v1906
        %v2319 = vpack.c.b16 %v1909, %v1908
        %v2320 = vpack.c.b16 %v1911, %v1910
        %v2321 = vpack.c.b16 %v1913, %v1912
        %v2322 = vpack.c.b16 %v1915, %v1914
        %v2323 = vpack.c.b16 %v1917, %v1916
        %v2324 = vpack.c.b16 %v1919, %v1918
        %v2325 = vpack.c.b16 %v1921, %v1920
        %v2326 = vpack.c.b16 %v1923, %v1922
        %v2327 = vpack.c.b16 %v1925, %v1924
        %v2328 = vpack.c.b16 %v1927, %v1926
        %v2329 = vpack.c.b16 %v1929, %v1928
        %v2330 = vpack.c.b16 %v1931, %v1930
        %v2331 = vpack.c.b16 %v1933, %v1932
        %v2332 = vpack.c.b16 %v1935, %v1934
        %v2333 = vpack.c.b16 %v1937, %v1936
        %v2334 = vpack.c.b16 %v1939, %v1938
        %v2335 = vpack.c.b16 %v1941, %v1940
        %v2336 = vpack.c.b16 %v1943, %v1942
        %v2337 = vpack.c.b16 %v1945, %v1944
        %v2338 = vpack.c.b16 %v1947, %v1946
        %v2339 = vpack.c.b16 %v1949, %v1948
        %v2340 = vpack.c.b16 %v1951, %v1950
        %v2341 = vpack.c.b16 %v1953, %v1952
        %v2342 = vpack.c.b16 %v1955, %v1954
        %v2343 = vpack.c.b16 %v1957, %v1956
        %v2344 = vpack.c.b16 %v1959, %v1958
        %v2345 = vpack.c.b16 %v1961, %v1960
        %v2346 = vpack.c.b16 %v1963, %v1962
        %v2347 = vpack.c.b16 %v1965, %v1964
        %v2348 = vpack.c.b16 %v1967, %v1966
        %v2349 = vpack.c.b16 %v1969, %v1968
        %v2350 = vpack.c.b16 %v1971, %v1970
        %v2351 = vpack.c.b16 %v1973, %v1972
        %v2352 = vpack.c.b16 %v1975, %v1974
        %v2353 = vpack.c.b16 %v1977, %v1976
        %v2354 = vpack.c.b16 %v1979, %v1978
        %v2355 = vpack.c.b16 %v1981, %v1980
        %v2356 = vpack.c.b16 %v1983, %v1982
        %v2357 = vpack.c.b16 %v1985, %v1984
        %v2358 = vpack.c.b16 %v1987, %v1986
        %v2359 = vpack.c.b16 %v1989, %v1988
        %v2360 = vpack.c.b16 %v1991, %v1990
        %v2361 = vpack.c.b16 %v1993, %v1992
        %v2362 = vpack.c.b16 %v1995, %v1994
        %v2363 = vpack.c.b16 %v1997, %v1996
        %v2364 = vpack.c.b16 %v1999, %v1998
        %v2365 = vpack.c.b16 %v2001, %v2000
        %v2366 = vpack.c.b16 %v2003, %v2002
        %v2367 = vpack.c.b16 %v2005, %v2004
        %v2368 = vpack.c.b16 %v2007, %v2006
        %v2369 = vpack.c.b16 %v2009, %v2008
        %v2370 = vpack.c.b16 %v2011, %v2010
        %v2371 = vpack.c.b16 %v2013, %v2012
        %v2372 = vpack.c.b16 %v2015, %v2014
        %v2373 = vpack.c.b16 %v2017, %v2016
        %v2374 = vpack.c.b16 %v2019, %v2018
        %v2375 = vpack.c.b16 %v2021, %v2020
        %v2376 = vpack.c.b16 %v2023, %v2022
        %v2377 = vpack.c.b16 %v2025, %v2024
        %v2378 = vpack.c.b16 %v2027, %v2026
        %v2379 = vpack.c.b16 %v2029, %v2028
        %v2380 = vpack.c.b16 %v2031, %v2030
        %v2381 = vpack.c.b16 %v2033, %v2032
        %v2382 = vpack.c.b16 %v2035, %v2034
        %v2383 = vpack.c.b16 %v2037, %v2036
        %v2384 = vpack.c.b16 %v2039, %v2038
        %v2385 = vpack.c.b16 %v2041, %v2040
        %v2386 = vpack.c.b16 %v2043, %v2042
        %v2387 = vpack.c.b16 %v2045, %v2044
        %v2388 = vpack.c.b16 %v2047, %v2046
        %v2389 = vpack.c.b16 %v2049, %v2048
        %v2390 = vpack.c.b16 %v2051, %v2050
        %v2391 = vpack.c.b16 %v2053, %v2052
        %v2392 = vpack.c.b16 %v2055, %v2054
        %v2393 = vpack.c.b16 %v2057, %v2056
        %v2394 = vpack.c.b16 %v2059, %v2058
        %v2395 = vpack.c.b16 %v2061, %v2060
        %v2396 = vpack.c.b16 %v2063, %v2062
        %v2397 = vpack.c.b16 %v2065, %v2064
        %v2398 = vpack.c.b16 %v2067, %v2066
        %v2399 = vpack.c.b16 %v2069, %v2068
        %v2400 = vpack.c.b16 %v2071, %v2070
        %v2401 = vpack.c.b16 %v2073, %v2072
        %v2402 = vpack.c.b16 %v2075, %v2074
        %v2403 = vpack.c.b16 %v2077, %v2076
        %v2404 = vpack.c.b16 %v2079, %v2078
        %v2405 = vpack.c.b16 %v2081, %v2080
        %v2406 = vpack.c.b16 %v2083, %v2082
        %v2407 = vpack.c.b16 %v2085, %v2084
        %v2408 = vpack.c.b16 %v2087, %v2086
        %v2409 = vpack.c.b16 %v2089, %v2088
        %v2410 = vpack.c.b16 %v2091, %v2090
        %v2411 = vpack.c.b16 %v2093, %v2092
        %v2412 = vpack.c.b16 %v2095, %v2094
        %v2413 = vpack.c.b16 %v2097, %v2096
        %v2414 = vpack.c.b16 %v2099, %v2098
        %v2415 = vpack.c.b16 %v2101, %v2100
        %v2416 = vpack.c.b16 %v2103, %v2102
        %v2417 = vpack.c.b16 %v2105, %v2104
        %v2418 = vpack.c.b16 %v2107, %v2106
        %v2419 = vpack.c.b16 %v2109, %v2108
        %v2420 = vpack.c.b16 %v2111, %v2110
        %v2421 = vpack.c.b16 %v2113, %v2112
        %v2422 = vpack.c.b16 %v2115, %v2114
        %v2423 = vpack.c.b16 %v2117, %v2116
        %v2424 = vpack.c.b16 %v2119, %v2118
        %v2425 = vpack.c.b16 %v2121, %v2120
        %v2426 = vpack.c.b16 %v2123, %v2122
        %v2427 = vpack.c.b16 %v2125, %v2124
        %v2428 = vpack.c.b16 %v2127, %v2126
        %v2429 = vpack.c.b16 %v2129, %v2128
        %v2430 = vpack.c.b16 %v2131, %v2130
        %v2431 = vpack.c.b16 %v2133, %v2132
        %v2432 = vpack.c.b16 %v2135, %v2134
        %v2433 = vpack.c.b16 %v2137, %v2136
        %v2434 = vpack.c.b16 %v2139, %v2138
        %v2435 = vpack.c.b16 %v2141, %v2140
        %v2436 = vpack.c.b16 %v2143, %v2142
        %v2437 = vpack.c.b16 %v2145, %v2144
        %v2438 = vpack.c.b16 %v2147, %v2146
        %v2439 = vpack.c.b16 %v2149, %v2148
        %v2440 = vpack.c.b16 %v2151, %v2150
        %v2441 = vpack.c.b16 %v2153, %v2152
        %v2442 = vpack.c.b16 %v2155, %v2154
        %v2443 = vpack.c.b16 %v2157, %v2156
        %v2444 = vpack.c.b16 %v2159, %v2158
        %v2445 = vpack.c.b16 %v2161, %v2160
        %v2446 = vpack.c.b16 %v2163, %v2162
        %v2447 = vpack.c.b16 %v2165, %v2164
        %v2448 = vpack.c.b16 %v2167, %v2166
        %v2449 = vpack.c.b16 %v2169, %v2168
        %v2450 = vpack.c.b16 %v2171, %v2170
        %v2451 = vpack.c.b16 %v2173, %v2172
        %v2452 = vpack.c.b16 %v2175, %v2174
        %v2453 = vpack.c.b16 %v2177, %v2176
        %v2454 = vpack.c.b16 %v2179, %v2178
        %v2455 = vpack.c.b16 %v2181, %v2180
        %v2456 = vpack.c.b16 %v2183, %v2182
        %v2457 = vpack.c.b16 %v2185, %v2184
        %v2458 = vpack.c.b16 %v2187, %v2186
        %v2459 = vpack.c.b16 %v2189, %v2188
        %v2460 = vpack.c.b16 %v2191, %v2190
        %v2461 = vpack.c.b16 %v2193, %v2192
        %v2462 = vpack.c.b16 %v2195, %v2194
        %v2463 = vpack.c.b16 %v2197, %v2196
        %v2464 = vpack.c.b16 %v2199, %v2198
        %v2465 = vpack.c.b16 %v2201, %v2200
        %v2466 = vpack.c.b16 %v2203, %v2202
        %v2467 = vpack.c.b16 %v2205, %v2204
        %v2468 = vpack.c.b16 %v2207, %v2206
        %v2469 = vpack.c.b16 %v2209, %v2208
        %v2470 = vpack.c.b16 %v2211, %v2210
        %v2471 = vpack.c.b16 %v2213, %v2212
        %v2472 = vpack.c.b16 %v2215, %v2214
        %v2473 = vpack.c.b16 %v2216, %v2216
        %vm2730 = vcmask 39936
        %v2732 = vsel %vm2730, %v677, 0
        %vm2734 = vcmask 1041408
        %vm2735 = vcmask 1042432
        %v2736 = vsel %vm2734, 4294967295, 65535
        %v2737 = vsel %vm2735, %v2736, 0
        %v2739 = vand.u32 %v2473, %v2737
        %2741 = vmatpush.bf16.msra.mxu0 %v2224
        %2742 = vmatpush.bf16.msra.mxu0 %v2223
        %2743 = vmatpush.bf16.msra.mxu0 %v2222
        %2744 = vmatpush.bf16.msra.mxu0 %v2221
        %2745 = vmatpush.bf16.msra.mxu0 %v2220
        %2746 = vmatpush.bf16.msra.mxu0 %v2219
        %2747 = vmatpush.bf16.msra.mxu0 %v2218
        %2748 = vmatpush.bf16.msra.mxu0 %v2217
        %2749 = vmatmul.bf16.gmra.mxu0 %v645
        %v2750 = vpop.f32.mrf.mxu0
        %v2751 = vadd.f32 0.0, %v2750
        %v2752 = vpop.f32.mrf.mxu0
        %2753 = vdwg.mxu0
        %2754 = vmatpush.bf16.msra.mxu0 %v2232
        %2755 = vmatpush.bf16.msra.mxu0 %v2231
        %2756 = vmatpush.bf16.msra.mxu0 %v2230
        %2757 = vmatpush.bf16.msra.mxu0 %v2229
        %2758 = vmatpush.bf16.msra.mxu0 %v2228
        %2759 = vmatpush.bf16.msra.mxu0 %v2227
        %2760 = vmatpush.bf16.msra.mxu0 %v2226
        %2761 = vmatpush.bf16.msra.mxu0 %v2225
        %2762 = vmatmul.bf16.gmra.mxu0 %v646
        %v2763 = vpop.f32.mrf.mxu0
        %v2764 = vadd.f32 %v2751, %v2763
        %v2765 = vpop.f32.mrf.mxu0
        %2766 = vdwg.mxu0
        %2767 = vmatpush.bf16.msra.mxu0 %v2240
        %2768 = vmatpush.bf16.msra.mxu0 %v2239
        %2769 = vmatpush.bf16.msra.mxu0 %v2238
        %2770 = vmatpush.bf16.msra.mxu0 %v2237
        %2771 = vmatpush.bf16.msra.mxu0 %v2236
        %2772 = vmatpush.bf16.msra.mxu0 %v2235
        %2773 = vmatpush.bf16.msra.mxu0 %v2234
        %2774 = vmatpush.bf16.msra.mxu0 %v2233
        %2775 = vmatmul.bf16.gmra.mxu0 %v647
        %v2776 = vpop.f32.mrf.mxu0
        %v2777 = vadd.f32 %v2764, %v2776
        %v2778 = vpop.f32.mrf.mxu0
        %2779 = vdwg.mxu0
        %2780 = vmatpush.bf16.msra.mxu0 %v2248
        %2781 = vmatpush.bf16.msra.mxu0 %v2247
        %2782 = vmatpush.bf16.msra.mxu0 %v2246
        %2783 = vmatpush.bf16.msra.mxu0 %v2245
        %2784 = vmatpush.bf16.msra.mxu0 %v2244
        %2785 = vmatpush.bf16.msra.mxu0 %v2243
        %2786 = vmatpush.bf16.msra.mxu0 %v2242
        %2787 = vmatpush.bf16.msra.mxu0 %v2241
        %2788 = vmatmul.bf16.gmra.mxu0 %v648
        %v2789 = vpop.f32.mrf.mxu0
        %v2790 = vadd.f32 %v2777, %v2789
        %v2791 = vpop.f32.mrf.mxu0
        %2792 = vdwg.mxu0
        %2793 = vmatpush.bf16.msra.mxu0 %v2256
        %2794 = vmatpush.bf16.msra.mxu0 %v2255
        %2795 = vmatpush.bf16.msra.mxu0 %v2254
        %2796 = vmatpush.bf16.msra.mxu0 %v2253
        %2797 = vmatpush.bf16.msra.mxu0 %v2252
        %2798 = vmatpush.bf16.msra.mxu0 %v2251
        %2799 = vmatpush.bf16.msra.mxu0 %v2250
        %2800 = vmatpush.bf16.msra.mxu0 %v2249
        %2801 = vmatmul.bf16.gmra.mxu0 %v649
        %v2802 = vpop.f32.mrf.mxu0
        %v2803 = vadd.f32 %v2790, %v2802
        %v2804 = vpop.f32.mrf.mxu0
        %2805 = vdwg.mxu0
        %2806 = vmatpush.bf16.msra.mxu0 %v2264
        %2807 = vmatpush.bf16.msra.mxu0 %v2263
        %2808 = vmatpush.bf16.msra.mxu0 %v2262
        %2809 = vmatpush.bf16.msra.mxu0 %v2261
        %2810 = vmatpush.bf16.msra.mxu0 %v2260
        %2811 = vmatpush.bf16.msra.mxu0 %v2259
        %2812 = vmatpush.bf16.msra.mxu0 %v2258
        %2813 = vmatpush.bf16.msra.mxu0 %v2257
        %2814 = vmatmul.bf16.gmra.mxu0 %v650
        %v2815 = vpop.f32.mrf.mxu0
        %v2816 = vadd.f32 %v2803, %v2815
        %v2817 = vpop.f32.mrf.mxu0
        %2818 = vdwg.mxu0
        %2819 = vmatpush.bf16.msra.mxu0 %v2272
        %2820 = vmatpush.bf16.msra.mxu0 %v2271
        %2821 = vmatpush.bf16.msra.mxu0 %v2270
        %2822 = vmatpush.bf16.msra.mxu0 %v2269
        %2823 = vmatpush.bf16.msra.mxu0 %v2268
        %2824 = vmatpush.bf16.msra.mxu0 %v2267
        %2825 = vmatpush.bf16.msra.mxu0 %v2266
        %2826 = vmatpush.bf16.msra.mxu0 %v2265
        %2827 = vmatmul.bf16.gmra.mxu0 %v651
        %v2828 = vpop.f32.mrf.mxu0
        %v2829 = vadd.f32 %v2816, %v2828
        %v2830 = vpop.f32.mrf.mxu0
        %2831 = vdwg.mxu0
        %2832 = vmatpush.bf16.msra.mxu0 %v2280
        %2833 = vmatpush.bf16.msra.mxu0 %v2279
        %2834 = vmatpush.bf16.msra.mxu0 %v2278
        %2835 = vmatpush.bf16.msra.mxu0 %v2277
        %2836 = vmatpush.bf16.msra.mxu0 %v2276
        %2837 = vmatpush.bf16.msra.mxu0 %v2275
        %2838 = vmatpush.bf16.msra.mxu0 %v2274
        %2839 = vmatpush.bf16.msra.mxu0 %v2273
        %2840 = vmatmul.bf16.gmra.mxu0 %v652
        %v2841 = vpop.f32.mrf.mxu0
        %v2842 = vadd.f32 %v2829, %v2841
        %v2843 = vpop.f32.mrf.mxu0
        %2844 = vdwg.mxu0
        %2845 = vmatpush.bf16.msra.mxu0 %v2288
        %2846 = vmatpush.bf16.msra.mxu0 %v2287
        %2847 = vmatpush.bf16.msra.mxu0 %v2286
        %2848 = vmatpush.bf16.msra.mxu0 %v2285
        %2849 = vmatpush.bf16.msra.mxu0 %v2284
        %2850 = vmatpush.bf16.msra.mxu0 %v2283
        %2851 = vmatpush.bf16.msra.mxu0 %v2282
        %2852 = vmatpush.bf16.msra.mxu0 %v2281
        %2853 = vmatmul.bf16.gmra.mxu0 %v653
        %v2854 = vpop.f32.mrf.mxu0
        %v2855 = vadd.f32 %v2842, %v2854
        %v2856 = vpop.f32.mrf.mxu0
        %2857 = vdwg.mxu0
        %2858 = vmatpush.bf16.msra.mxu0 %v2296
        %2859 = vmatpush.bf16.msra.mxu0 %v2295
        %2860 = vmatpush.bf16.msra.mxu0 %v2294
        %2861 = vmatpush.bf16.msra.mxu0 %v2293
        %2862 = vmatpush.bf16.msra.mxu0 %v2292
        %2863 = vmatpush.bf16.msra.mxu0 %v2291
        %2864 = vmatpush.bf16.msra.mxu0 %v2290
        %2865 = vmatpush.bf16.msra.mxu0 %v2289
        %2866 = vmatmul.bf16.gmra.mxu0 %v654
        %v2867 = vpop.f32.mrf.mxu0
        %v2868 = vadd.f32 %v2855, %v2867
        %v2869 = vpop.f32.mrf.mxu0
        %2870 = vdwg.mxu0
        %2871 = vmatpush.bf16.msra.mxu0 %v2304
        %2872 = vmatpush.bf16.msra.mxu0 %v2303
        %2873 = vmatpush.bf16.msra.mxu0 %v2302
        %2874 = vmatpush.bf16.msra.mxu0 %v2301
        %2875 = vmatpush.bf16.msra.mxu0 %v2300
        %2876 = vmatpush.bf16.msra.mxu0 %v2299
        %2877 = vmatpush.bf16.msra.mxu0 %v2298
        %2878 = vmatpush.bf16.msra.mxu0 %v2297
        %2879 = vmatmul.bf16.gmra.mxu0 %v655
        %v2880 = vpop.f32.mrf.mxu0
        %v2881 = vadd.f32 %v2868, %v2880
        %v2882 = vpop.f32.mrf.mxu0
        %2883 = vdwg.mxu0
        %2884 = vmatpush.bf16.msra.mxu0 %v2312
        %2885 = vmatpush.bf16.msra.mxu0 %v2311
        %2886 = vmatpush.bf16.msra.mxu0 %v2310
        %2887 = vmatpush.bf16.msra.mxu0 %v2309
        %2888 = vmatpush.bf16.msra.mxu0 %v2308
        %2889 = vmatpush.bf16.msra.mxu0 %v2307
        %2890 = vmatpush.bf16.msra.mxu0 %v2306
        %2891 = vmatpush.bf16.msra.mxu0 %v2305
        %2892 = vmatmul.bf16.gmra.mxu0 %v656
        %v2893 = vpop.f32.mrf.mxu0
        %v2894 = vadd.f32 %v2881, %v2893
        %v2895 = vpop.f32.mrf.mxu0
        %2896 = vdwg.mxu0
        %2897 = vmatpush.bf16.msra.mxu0 %v2320
        %2898 = vmatpush.bf16.msra.mxu0 %v2319
        %2899 = vmatpush.bf16.msra.mxu0 %v2318
        %2900 = vmatpush.bf16.msra.mxu0 %v2317
        %2901 = vmatpush.bf16.msra.mxu0 %v2316
        %2902 = vmatpush.bf16.msra.mxu0 %v2315
        %2903 = vmatpush.bf16.msra.mxu0 %v2314
        %2904 = vmatpush.bf16.msra.mxu0 %v2313
        %2905 = vmatmul.bf16.gmra.mxu0 %v657
        %v2906 = vpop.f32.mrf.mxu0
        %v2907 = vadd.f32 %v2894, %v2906
        %v2908 = vpop.f32.mrf.mxu0
        %2909 = vdwg.mxu0
        %2910 = vmatpush.bf16.msra.mxu0 %v2328
        %2911 = vmatpush.bf16.msra.mxu0 %v2327
        %2912 = vmatpush.bf16.msra.mxu0 %v2326
        %2913 = vmatpush.bf16.msra.mxu0 %v2325
        %2914 = vmatpush.bf16.msra.mxu0 %v2324
        %2915 = vmatpush.bf16.msra.mxu0 %v2323
        %2916 = vmatpush.bf16.msra.mxu0 %v2322
        %2917 = vmatpush.bf16.msra.mxu0 %v2321
        %2918 = vmatmul.bf16.gmra.mxu0 %v658
        %v2919 = vpop.f32.mrf.mxu0
        %v2920 = vadd.f32 %v2907, %v2919
        %v2921 = vpop.f32.mrf.mxu0
        %2922 = vdwg.mxu0
        %2923 = vmatpush.bf16.msra.mxu0 %v2336
        %2924 = vmatpush.bf16.msra.mxu0 %v2335
        %2925 = vmatpush.bf16.msra.mxu0 %v2334
        %2926 = vmatpush.bf16.msra.mxu0 %v2333
        %2927 = vmatpush.bf16.msra.mxu0 %v2332
        %2928 = vmatpush.bf16.msra.mxu0 %v2331
        %2929 = vmatpush.bf16.msra.mxu0 %v2330
        %2930 = vmatpush.bf16.msra.mxu0 %v2329
        %2931 = vmatmul.bf16.gmra.mxu0 %v659
        %v2932 = vpop.f32.mrf.mxu0
        %v2933 = vadd.f32 %v2920, %v2932
        %v2934 = vpop.f32.mrf.mxu0
        %2935 = vdwg.mxu0
        %2936 = vmatpush.bf16.msra.mxu0 %v2344
        %2937 = vmatpush.bf16.msra.mxu0 %v2343
        %2938 = vmatpush.bf16.msra.mxu0 %v2342
        %2939 = vmatpush.bf16.msra.mxu0 %v2341
        %2940 = vmatpush.bf16.msra.mxu0 %v2340
        %2941 = vmatpush.bf16.msra.mxu0 %v2339
        %2942 = vmatpush.bf16.msra.mxu0 %v2338
        %2943 = vmatpush.bf16.msra.mxu0 %v2337
        %2944 = vmatmul.bf16.gmra.mxu0 %v660
        %v2945 = vpop.f32.mrf.mxu0
        %v2946 = vadd.f32 %v2933, %v2945
        %v2947 = vpop.f32.mrf.mxu0
        %2948 = vdwg.mxu0
        %2949 = vmatpush.bf16.msra.mxu0 %v2352
        %2950 = vmatpush.bf16.msra.mxu0 %v2351
        %2951 = vmatpush.bf16.msra.mxu0 %v2350
        %2952 = vmatpush.bf16.msra.mxu0 %v2349
        %2953 = vmatpush.bf16.msra.mxu0 %v2348
        %2954 = vmatpush.bf16.msra.mxu0 %v2347
        %2955 = vmatpush.bf16.msra.mxu0 %v2346
        %2956 = vmatpush.bf16.msra.mxu0 %v2345
        %2957 = vmatmul.bf16.gmra.mxu0 %v661
        %v2958 = vpop.f32.mrf.mxu0
        %v2959 = vadd.f32 %v2946, %v2958
        %v2960 = vpop.f32.mrf.mxu0
        %2961 = vdwg.mxu0
        %2962 = vmatpush.bf16.msra.mxu0 %v2360
        %2963 = vmatpush.bf16.msra.mxu0 %v2359
        %2964 = vmatpush.bf16.msra.mxu0 %v2358
        %2965 = vmatpush.bf16.msra.mxu0 %v2357
        %2966 = vmatpush.bf16.msra.mxu0 %v2356
        %2967 = vmatpush.bf16.msra.mxu0 %v2355
        %2968 = vmatpush.bf16.msra.mxu0 %v2354
        %2969 = vmatpush.bf16.msra.mxu0 %v2353
        %2970 = vmatmul.bf16.gmra.mxu0 %v662
        %v2971 = vpop.f32.mrf.mxu0
        %v2972 = vadd.f32 %v2959, %v2971
        %v2973 = vpop.f32.mrf.mxu0
        %2974 = vdwg.mxu0
        %2975 = vmatpush.bf16.msra.mxu0 %v2368
        %2976 = vmatpush.bf16.msra.mxu0 %v2367
        %2977 = vmatpush.bf16.msra.mxu0 %v2366
        %2978 = vmatpush.bf16.msra.mxu0 %v2365
        %2979 = vmatpush.bf16.msra.mxu0 %v2364
        %2980 = vmatpush.bf16.msra.mxu0 %v2363
        %2981 = vmatpush.bf16.msra.mxu0 %v2362
        %2982 = vmatpush.bf16.msra.mxu0 %v2361
        %2983 = vmatmul.bf16.gmra.mxu0 %v663
        %v2984 = vpop.f32.mrf.mxu0
        %v2985 = vadd.f32 %v2972, %v2984
        %v2986 = vpop.f32.mrf.mxu0
        %2987 = vdwg.mxu0
        %2988 = vmatpush.bf16.msra.mxu0 %v2376
        %2989 = vmatpush.bf16.msra.mxu0 %v2375
        %2990 = vmatpush.bf16.msra.mxu0 %v2374
        %2991 = vmatpush.bf16.msra.mxu0 %v2373
        %2992 = vmatpush.bf16.msra.mxu0 %v2372
        %2993 = vmatpush.bf16.msra.mxu0 %v2371
        %2994 = vmatpush.bf16.msra.mxu0 %v2370
        %2995 = vmatpush.bf16.msra.mxu0 %v2369
        %2996 = vmatmul.bf16.gmra.mxu0 %v664
        %v2997 = vpop.f32.mrf.mxu0
        %v2998 = vadd.f32 %v2985, %v2997
        %v2999 = vpop.f32.mrf.mxu0
        %3000 = vdwg.mxu0
        %3001 = vmatpush.bf16.msra.mxu0 %v2384
        %3002 = vmatpush.bf16.msra.mxu0 %v2383
        %3003 = vmatpush.bf16.msra.mxu0 %v2382
        %3004 = vmatpush.bf16.msra.mxu0 %v2381
        %3005 = vmatpush.bf16.msra.mxu0 %v2380
        %3006 = vmatpush.bf16.msra.mxu0 %v2379
        %3007 = vmatpush.bf16.msra.mxu0 %v2378
        %3008 = vmatpush.bf16.msra.mxu0 %v2377
        %3009 = vmatmul.bf16.gmra.mxu0 %v665
        %v3010 = vpop.f32.mrf.mxu0
        %v3011 = vadd.f32 %v2998, %v3010
        %v3012 = vpop.f32.mrf.mxu0
        %3013 = vdwg.mxu0
        %3014 = vmatpush.bf16.msra.mxu0 %v2392
        %3015 = vmatpush.bf16.msra.mxu0 %v2391
        %3016 = vmatpush.bf16.msra.mxu0 %v2390
        %3017 = vmatpush.bf16.msra.mxu0 %v2389
        %3018 = vmatpush.bf16.msra.mxu0 %v2388
        %3019 = vmatpush.bf16.msra.mxu0 %v2387
        %3020 = vmatpush.bf16.msra.mxu0 %v2386
        %3021 = vmatpush.bf16.msra.mxu0 %v2385
        %3022 = vmatmul.bf16.gmra.mxu0 %v666
        %v3023 = vpop.f32.mrf.mxu0
        %v3024 = vadd.f32 %v3011, %v3023
        %v3025 = vpop.f32.mrf.mxu0
        %3026 = vdwg.mxu0
        %3027 = vmatpush.bf16.msra.mxu0 %v2400
        %3028 = vmatpush.bf16.msra.mxu0 %v2399
        %3029 = vmatpush.bf16.msra.mxu0 %v2398
        %3030 = vmatpush.bf16.msra.mxu0 %v2397
        %3031 = vmatpush.bf16.msra.mxu0 %v2396
        %3032 = vmatpush.bf16.msra.mxu0 %v2395
        %3033 = vmatpush.bf16.msra.mxu0 %v2394
        %3034 = vmatpush.bf16.msra.mxu0 %v2393
        %3035 = vmatmul.bf16.gmra.mxu0 %v667
        %v3036 = vpop.f32.mrf.mxu0
        %v3037 = vadd.f32 %v3024, %v3036
        %v3038 = vpop.f32.mrf.mxu0
        %3039 = vdwg.mxu0
        %3040 = vmatpush.bf16.msra.mxu0 %v2408
        %3041 = vmatpush.bf16.msra.mxu0 %v2407
        %3042 = vmatpush.bf16.msra.mxu0 %v2406
        %3043 = vmatpush.bf16.msra.mxu0 %v2405
        %3044 = vmatpush.bf16.msra.mxu0 %v2404
        %3045 = vmatpush.bf16.msra.mxu0 %v2403
        %3046 = vmatpush.bf16.msra.mxu0 %v2402
        %3047 = vmatpush.bf16.msra.mxu0 %v2401
        %3048 = vmatmul.bf16.gmra.mxu0 %v668
        %v3049 = vpop.f32.mrf.mxu0
        %v3050 = vadd.f32 %v3037, %v3049
        %v3051 = vpop.f32.mrf.mxu0
        %3052 = vdwg.mxu0
        %3053 = vmatpush.bf16.msra.mxu0 %v2416
        %3054 = vmatpush.bf16.msra.mxu0 %v2415
        %3055 = vmatpush.bf16.msra.mxu0 %v2414
        %3056 = vmatpush.bf16.msra.mxu0 %v2413
        %3057 = vmatpush.bf16.msra.mxu0 %v2412
        %3058 = vmatpush.bf16.msra.mxu0 %v2411
        %3059 = vmatpush.bf16.msra.mxu0 %v2410
        %3060 = vmatpush.bf16.msra.mxu0 %v2409
        %3061 = vmatmul.bf16.gmra.mxu0 %v669
        %v3062 = vpop.f32.mrf.mxu0
        %v3063 = vadd.f32 %v3050, %v3062
        %v3064 = vpop.f32.mrf.mxu0
        %3065 = vdwg.mxu0
        %3066 = vmatpush.bf16.msra.mxu0 %v2424
        %3067 = vmatpush.bf16.msra.mxu0 %v2423
        %3068 = vmatpush.bf16.msra.mxu0 %v2422
        %3069 = vmatpush.bf16.msra.mxu0 %v2421
        %3070 = vmatpush.bf16.msra.mxu0 %v2420
        %3071 = vmatpush.bf16.msra.mxu0 %v2419
        %3072 = vmatpush.bf16.msra.mxu0 %v2418
        %3073 = vmatpush.bf16.msra.mxu0 %v2417
        %3074 = vmatmul.bf16.gmra.mxu0 %v670
        %v3075 = vpop.f32.mrf.mxu0
        %v3076 = vadd.f32 %v3063, %v3075
        %v3077 = vpop.f32.mrf.mxu0
        %3078 = vdwg.mxu0
        %3079 = vmatpush.bf16.msra.mxu0 %v2432
        %3080 = vmatpush.bf16.msra.mxu0 %v2431
        %3081 = vmatpush.bf16.msra.mxu0 %v2430
        %3082 = vmatpush.bf16.msra.mxu0 %v2429
        %3083 = vmatpush.bf16.msra.mxu0 %v2428
        %3084 = vmatpush.bf16.msra.mxu0 %v2427
        %3085 = vmatpush.bf16.msra.mxu0 %v2426
        %3086 = vmatpush.bf16.msra.mxu0 %v2425
        %3087 = vmatmul.bf16.gmra.mxu0 %v671
        %v3088 = vpop.f32.mrf.mxu0
        %v3089 = vadd.f32 %v3076, %v3088
        %v3090 = vpop.f32.mrf.mxu0
        %3091 = vdwg.mxu0
        %3092 = vmatpush.bf16.msra.mxu0 %v2440
        %3093 = vmatpush.bf16.msra.mxu0 %v2439
        %3094 = vmatpush.bf16.msra.mxu0 %v2438
        %3095 = vmatpush.bf16.msra.mxu0 %v2437
        %3096 = vmatpush.bf16.msra.mxu0 %v2436
        %3097 = vmatpush.bf16.msra.mxu0 %v2435
        %3098 = vmatpush.bf16.msra.mxu0 %v2434
        %3099 = vmatpush.bf16.msra.mxu0 %v2433
        %3100 = vmatmul.bf16.gmra.mxu0 %v672
        %v3101 = vpop.f32.mrf.mxu0
        %v3102 = vadd.f32 %v3089, %v3101
        %v3103 = vpop.f32.mrf.mxu0
        %3104 = vdwg.mxu0
        %3105 = vmatpush.bf16.msra.mxu0 %v2448
        %3106 = vmatpush.bf16.msra.mxu0 %v2447
        %3107 = vmatpush.bf16.msra.mxu0 %v2446
        %3108 = vmatpush.bf16.msra.mxu0 %v2445
        %3109 = vmatpush.bf16.msra.mxu0 %v2444
        %3110 = vmatpush.bf16.msra.mxu0 %v2443
        %3111 = vmatpush.bf16.msra.mxu0 %v2442
        %3112 = vmatpush.bf16.msra.mxu0 %v2441
        %3113 = vmatmul.bf16.gmra.mxu0 %v673
        %v3114 = vpop.f32.mrf.mxu0
        %v3115 = vadd.f32 %v3102, %v3114
        %v3116 = vpop.f32.mrf.mxu0
        %3117 = vdwg.mxu0
        %3118 = vmatpush.bf16.msra.mxu0 %v2456
        %3119 = vmatpush.bf16.msra.mxu0 %v2455
        %3120 = vmatpush.bf16.msra.mxu0 %v2454
        %3121 = vmatpush.bf16.msra.mxu0 %v2453
        %3122 = vmatpush.bf16.msra.mxu0 %v2452
        %3123 = vmatpush.bf16.msra.mxu0 %v2451
        %3124 = vmatpush.bf16.msra.mxu0 %v2450
        %3125 = vmatpush.bf16.msra.mxu0 %v2449
        %3126 = vmatmul.bf16.gmra.mxu0 %v674
        %v3127 = vpop.f32.mrf.mxu0
        %v3128 = vadd.f32 %v3115, %v3127
        %v3129 = vpop.f32.mrf.mxu0
        %3130 = vdwg.mxu0
        %3131 = vmatpush.bf16.msra.mxu0 %v2464
        %3132 = vmatpush.bf16.msra.mxu0 %v2463
        %3133 = vmatpush.bf16.msra.mxu0 %v2462
        %3134 = vmatpush.bf16.msra.mxu0 %v2461
        %3135 = vmatpush.bf16.msra.mxu0 %v2460
        %3136 = vmatpush.bf16.msra.mxu0 %v2459
        %3137 = vmatpush.bf16.msra.mxu0 %v2458
        %3138 = vmatpush.bf16.msra.mxu0 %v2457
        %3139 = vmatmul.bf16.gmra.mxu0 %v675
        %v3140 = vpop.f32.mrf.mxu0
        %v3141 = vadd.f32 %v3128, %v3140
        %v3142 = vpop.f32.mrf.mxu0
        %3143 = vdwg.mxu0
        %3144 = vmatpush.bf16.msra.mxu0 %v2472
        %3145 = vmatpush.bf16.msra.mxu0 %v2471
        %3146 = vmatpush.bf16.msra.mxu0 %v2470
        %3147 = vmatpush.bf16.msra.mxu0 %v2469
        %3148 = vmatpush.bf16.msra.mxu0 %v2468
        %3149 = vmatpush.bf16.msra.mxu0 %v2467
        %3150 = vmatpush.bf16.msra.mxu0 %v2466
        %3151 = vmatpush.bf16.msra.mxu0 %v2465
        %3152 = vmatmul.bf16.gmra.mxu0 %v676
        %v3153 = vpop.f32.mrf.mxu0
        %v3154 = vadd.f32 %v3141, %v3153
        %v3155 = vpop.f32.mrf.mxu0
        %3156 = vdwg.mxu0
        %3157 = vmatpush.bf16.msra.mxu0 0
        %3158 = vmatpush.bf16.msra.mxu0 0
        %3159 = vmatpush.bf16.msra.mxu0 0
        %3160 = vmatpush.bf16.msra.mxu0 0
        %3161 = vmatpush.bf16.msra.mxu0 0
        %3162 = vmatpush.bf16.msra.mxu0 0
        %3163 = vmatpush.bf16.msra.mxu0 0
        %3164 = vmatpush.bf16.msra.mxu0 %v2739
        %3165 = vmatmul.bf16.gmra.mxu0 %v2732
        %v3166 = vpop.f32.mrf.mxu0
        %v3167 = vadd.f32 %v3154, %v3166
        %v3168 = vpop.f32.mrf.mxu0
        %3169 = vdwg.mxu0
        %v3186 = vunpack.c.l.b16 %v495
        %v3187 = vunpack.c.l.b16 %v496
        %v3188 = vunpack.c.l.b16 %v497
        %v3189 = vunpack.c.l.b16 %v498
        %v3190 = vunpack.c.l.b16 %v499
        %v3191 = vunpack.c.l.b16 %v500
        %v3192 = vunpack.c.l.b16 %v501
        %v3193 = vunpack.c.l.b16 %v502
        %v3194 = vunpack.c.l.b16 %v503
        %v3195 = vunpack.c.l.b16 %v504
        %v3196 = vunpack.c.l.b16 %v505
        %v3197 = vunpack.c.l.b16 %v506
        %v3198 = vunpack.c.l.b16 %v507
        %v3199 = vunpack.c.l.b16 %v508
        %v3200 = vunpack.c.l.b16 %v509
        %v3201 = vunpack.c.l.b16 %v510
        %v3202 = vpack.c.b16 %v3187, %v3186
        %v3203 = vpack.c.b16 %v3189, %v3188
        %v3204 = vpack.c.b16 %v3191, %v3190
        %v3205 = vpack.c.b16 %v3193, %v3192
        %v3206 = vpack.c.b16 %v3195, %v3194
        %v3207 = vpack.c.b16 %v3197, %v3196
        %v3208 = vpack.c.b16 %v3199, %v3198
        %v3209 = vpack.c.b16 %v3201, %v3200
        %3218 = vmatpush.bf16.msra.mxu0 %v3209
        %3219 = vmatpush.bf16.msra.mxu0 %v3208
        %3220 = vmatpush.bf16.msra.mxu0 %v3207
        %3221 = vmatpush.bf16.msra.mxu0 %v3206
        %3222 = vmatpush.bf16.msra.mxu0 %v3205
        %3223 = vmatpush.bf16.msra.mxu0 %v3204
        %3224 = vmatpush.bf16.msra.mxu0 %v3203
        %3225 = vmatpush.bf16.msra.mxu0 %v3202
        %3226 = vmatmul.bf16.gmra.mxu0 %v494
        %v3227 = vpop.f32.mrf.mxu0
        %v3228 = vadd.f32 %v3167, %v3227
        %v3229 = vpop.f32.mrf.mxu0
        %3230 = vdwg.mxu0
        %v3231 = vld [vmem:[%s431] sm:$0xff]
        %3232 = vset.pattern.permute.xlu0 0
        %3233 = vperm.xlu0 %3232, %v3231
        %v3234 = vpop.permute.xlu0 %3233
        %vm3235 = vcmp.eq.s32.totalorder %v3234, %v436
        %vm3236 = vcmp.eq.s32.totalorder %v3234, %v511
        %vm3237 = vcmp.eq.s32.totalorder %v3234, %v512
        %vm3238 = vcmp.eq.s32.totalorder %v3234, %v513
        %vm3239 = vcmp.eq.s32.totalorder %v3234, %v514
        %vm3240 = vcmp.eq.s32.totalorder %v3234, %v515
        %vm3241 = vcmp.eq.s32.totalorder %v3234, %v516
        %vm3242 = vcmp.eq.s32.totalorder %v3234, %v517
        %vm3243 = vcmp.eq.s32.totalorder %v3234, %v518
        %vm3244 = vcmp.eq.s32.totalorder %v3234, %v519
        %vm3245 = vcmp.eq.s32.totalorder %v3234, %v520
        %vm3246 = vcmp.eq.s32.totalorder %v3234, %v521
        %v3247 = vsel %vm3235, 1, 0
        %v3248 = vsel %vm3236, 1, 0
        %v3249 = vsel %vm3237, 1, 0
        %v3250 = vsel %vm3238, 1, 0
        %v3251 = vsel %vm3239, 1, 0
        %v3252 = vsel %vm3240, 1, 0
        %v3253 = vsel %vm3241, 1, 0
        %v3254 = vsel %vm3242, 1, 0
        %v3255 = vsel %vm3243, 1, 0
        %v3256 = vsel %vm3244, 1, 0
        %v3257 = vsel %vm3245, 1, 0
        %v3258 = vsel %vm3246, 1, 0
        %v3259 = vcvt.s32.f32 %v3247
        %v3260 = vcvt.s32.f32 %v3248
        %v3261 = vcvt.s32.f32 %v3249
        %v3262 = vcvt.s32.f32 %v3250
        %v3263 = vcvt.s32.f32 %v3251
        %v3264 = vcvt.s32.f32 %v3252
        %v3265 = vcvt.s32.f32 %v3253
        %v3266 = vcvt.s32.f32 %v3254
        %v3267 = vcvt.s32.f32 %v3255
        %v3268 = vcvt.s32.f32 %v3256
        %v3269 = vcvt.s32.f32 %v3257
        %v3270 = vcvt.s32.f32 %v3258
        %3271 = vset.pattern.permute.xlu0 1
        %3272 = vperm.xlu0 %3271, %v3231
        %v3273 = vpop.permute.xlu0 %3272
        %vm3274 = vcmp.eq.s32.totalorder %v3273, %v436
        %vm3275 = vcmp.eq.s32.totalorder %v3273, %v511
        %vm3276 = vcmp.eq.s32.totalorder %v3273, %v512
        %vm3277 = vcmp.eq.s32.totalorder %v3273, %v513
        %vm3278 = vcmp.eq.s32.totalorder %v3273, %v514
        %vm3279 = vcmp.eq.s32.totalorder %v3273, %v515
        %vm3280 = vcmp.eq.s32.totalorder %v3273, %v516
        %vm3281 = vcmp.eq.s32.totalorder %v3273, %v517
        %vm3282 = vcmp.eq.s32.totalorder %v3273, %v518
        %vm3283 = vcmp.eq.s32.totalorder %v3273, %v519
        %vm3284 = vcmp.eq.s32.totalorder %v3273, %v520
        %vm3285 = vcmp.eq.s32.totalorder %v3273, %v521
        %v3286 = vsel %vm3274, 1, 0
        %v3287 = vsel %vm3275, 1, 0
        %v3288 = vsel %vm3276, 1, 0
        %v3289 = vsel %vm3277, 1, 0
        %v3290 = vsel %vm3278, 1, 0
        %v3291 = vsel %vm3279, 1, 0
        %v3292 = vsel %vm3280, 1, 0
        %v3293 = vsel %vm3281, 1, 0
        %v3294 = vsel %vm3282, 1, 0
        %v3295 = vsel %vm3283, 1, 0
        %v3296 = vsel %vm3284, 1, 0
        %v3297 = vsel %vm3285, 1, 0
        %v3298 = vcvt.s32.f32 %v3286
        %v3299 = vcvt.s32.f32 %v3287
        %v3300 = vcvt.s32.f32 %v3288
        %v3301 = vcvt.s32.f32 %v3289
        %v3302 = vcvt.s32.f32 %v3290
        %v3303 = vcvt.s32.f32 %v3291
        %v3304 = vcvt.s32.f32 %v3292
        %v3305 = vcvt.s32.f32 %v3293
        %v3306 = vcvt.s32.f32 %v3294
        %v3307 = vcvt.s32.f32 %v3295
        %v3308 = vcvt.s32.f32 %v3296
        %v3309 = vcvt.s32.f32 %v3297
        %v3310 = vadd.f32 %v3259, %v3298
        %v3311 = vadd.f32 %v3260, %v3299
        %v3312 = vadd.f32 %v3261, %v3300
        %v3313 = vadd.f32 %v3262, %v3301
        %v3314 = vadd.f32 %v3263, %v3302
        %v3315 = vadd.f32 %v3264, %v3303
        %v3316 = vadd.f32 %v3265, %v3304
        %v3317 = vadd.f32 %v3266, %v3305
        %v3318 = vadd.f32 %v3267, %v3306
        %v3319 = vadd.f32 %v3268, %v3307
        %v3320 = vadd.f32 %v3269, %v3308
        %v3321 = vadd.f32 %v3270, %v3309
        %3322 = vset.pattern.permute.xlu0 2
        %3323 = vperm.xlu0 %3322, %v3231
        %v3324 = vpop.permute.xlu0 %3323
        %vm3325 = vcmp.eq.s32.totalorder %v3324, %v436
        %vm3326 = vcmp.eq.s32.totalorder %v3324, %v511
        %vm3327 = vcmp.eq.s32.totalorder %v3324, %v512
        %vm3328 = vcmp.eq.s32.totalorder %v3324, %v513
        %vm3329 = vcmp.eq.s32.totalorder %v3324, %v514
        %vm3330 = vcmp.eq.s32.totalorder %v3324, %v515
        %vm3331 = vcmp.eq.s32.totalorder %v3324, %v516
        %vm3332 = vcmp.eq.s32.totalorder %v3324, %v517
        %vm3333 = vcmp.eq.s32.totalorder %v3324, %v518
        %vm3334 = vcmp.eq.s32.totalorder %v3324, %v519
        %vm3335 = vcmp.eq.s32.totalorder %v3324, %v520
        %vm3336 = vcmp.eq.s32.totalorder %v3324, %v521
        %v3337 = vsel %vm3325, 1, 0
        %v3338 = vsel %vm3326, 1, 0
        %v3339 = vsel %vm3327, 1, 0
        %v3340 = vsel %vm3328, 1, 0
        %v3341 = vsel %vm3329, 1, 0
        %v3342 = vsel %vm3330, 1, 0
        %v3343 = vsel %vm3331, 1, 0
        %v3344 = vsel %vm3332, 1, 0
        %v3345 = vsel %vm3333, 1, 0
        %v3346 = vsel %vm3334, 1, 0
        %v3347 = vsel %vm3335, 1, 0
        %v3348 = vsel %vm3336, 1, 0
        %v3349 = vcvt.s32.f32 %v3337
        %v3350 = vcvt.s32.f32 %v3338
        %v3351 = vcvt.s32.f32 %v3339
        %v3352 = vcvt.s32.f32 %v3340
        %v3353 = vcvt.s32.f32 %v3341
        %v3354 = vcvt.s32.f32 %v3342
        %v3355 = vcvt.s32.f32 %v3343
        %v3356 = vcvt.s32.f32 %v3344
        %v3357 = vcvt.s32.f32 %v3345
        %v3358 = vcvt.s32.f32 %v3346
        %v3359 = vcvt.s32.f32 %v3347
        %v3360 = vcvt.s32.f32 %v3348
        %v3361 = vadd.f32 %v3310, %v3349
        %v3362 = vadd.f32 %v3311, %v3350
        %v3363 = vadd.f32 %v3312, %v3351
        %v3364 = vadd.f32 %v3313, %v3352
        %v3365 = vadd.f32 %v3314, %v3353
        %v3366 = vadd.f32 %v3315, %v3354
        %v3367 = vadd.f32 %v3316, %v3355
        %v3368 = vadd.f32 %v3317, %v3356
        %v3369 = vadd.f32 %v3318, %v3357
        %v3370 = vadd.f32 %v3319, %v3358
        %v3371 = vadd.f32 %v3320, %v3359
        %v3372 = vadd.f32 %v3321, %v3360
        %3373 = vset.pattern.permute.xlu0 3
        %3374 = vperm.xlu0 %3373, %v3231
        %v3375 = vpop.permute.xlu0 %3374
        %vm3376 = vcmp.eq.s32.totalorder %v3375, %v436
        %vm3377 = vcmp.eq.s32.totalorder %v3375, %v511
        %vm3378 = vcmp.eq.s32.totalorder %v3375, %v512
        %vm3379 = vcmp.eq.s32.totalorder %v3375, %v513
        %vm3380 = vcmp.eq.s32.totalorder %v3375, %v514
        %vm3381 = vcmp.eq.s32.totalorder %v3375, %v515
        %vm3382 = vcmp.eq.s32.totalorder %v3375, %v516
        %vm3383 = vcmp.eq.s32.totalorder %v3375, %v517
        %vm3384 = vcmp.eq.s32.totalorder %v3375, %v518
        %vm3385 = vcmp.eq.s32.totalorder %v3375, %v519
        %vm3386 = vcmp.eq.s32.totalorder %v3375, %v520
        %vm3387 = vcmp.eq.s32.totalorder %v3375, %v521
        %v3388 = vsel %vm3376, 1, 0
        %v3389 = vsel %vm3377, 1, 0
        %v3390 = vsel %vm3378, 1, 0
        %v3391 = vsel %vm3379, 1, 0
        %v3392 = vsel %vm3380, 1, 0
        %v3393 = vsel %vm3381, 1, 0
        %v3394 = vsel %vm3382, 1, 0
        %v3395 = vsel %vm3383, 1, 0
        %v3396 = vsel %vm3384, 1, 0
        %v3397 = vsel %vm3385, 1, 0
        %v3398 = vsel %vm3386, 1, 0
        %v3399 = vsel %vm3387, 1, 0
        %v3400 = vcvt.s32.f32 %v3388
        %v3401 = vcvt.s32.f32 %v3389
        %v3402 = vcvt.s32.f32 %v3390
        %v3403 = vcvt.s32.f32 %v3391
        %v3404 = vcvt.s32.f32 %v3392
        %v3405 = vcvt.s32.f32 %v3393
        %v3406 = vcvt.s32.f32 %v3394
        %v3407 = vcvt.s32.f32 %v3395
        %v3408 = vcvt.s32.f32 %v3396
        %v3409 = vcvt.s32.f32 %v3397
        %v3410 = vcvt.s32.f32 %v3398
        %v3411 = vcvt.s32.f32 %v3399
        %v3412 = vadd.f32 %v3361, %v3400
        %v3413 = vadd.f32 %v3362, %v3401
        %v3414 = vadd.f32 %v3363, %v3402
        %v3415 = vadd.f32 %v3364, %v3403
        %v3416 = vadd.f32 %v3365, %v3404
        %v3417 = vadd.f32 %v3366, %v3405
        %v3418 = vadd.f32 %v3367, %v3406
        %v3419 = vadd.f32 %v3368, %v3407
        %v3420 = vadd.f32 %v3369, %v3408
        %v3421 = vadd.f32 %v3370, %v3409
        %v3422 = vadd.f32 %v3371, %v3410
        %v3423 = vadd.f32 %v3372, %v3411
        %v3424 = vpack.c.bf16 %v3412, %v3412
        %v3425 = vpack.c.bf16 %v3413, %v3413
        %v3426 = vpack.c.bf16 %v3414, %v3414
        %v3427 = vpack.c.bf16 %v3415, %v3415
        %v3428 = vpack.c.bf16 %v3416, %v3416
        %v3429 = vpack.c.bf16 %v3417, %v3417
        %v3430 = vpack.c.bf16 %v3418, %v3418
        %v3431 = vpack.c.bf16 %v3419, %v3419
        %v3432 = vpack.c.bf16 %v3420, %v3420
        %v3433 = vpack.c.bf16 %v3421, %v3421
        %v3434 = vpack.c.bf16 %v3422, %v3422
        %v3435 = vpack.c.bf16 %v3423, %v3423
        %v3436 = vld [vmem:[#allocation10] sm:$0xf]
        %v3437 = vld [vmem:[#allocation10 + $0x4] sm:$0xf]
        %v3438 = vld [vmem:[#allocation10 + $0x8] sm:$0xf]
        %v3439 = vld [vmem:[#allocation10 + $0xc] sm:$0xf]
        %v3440 = vld [vmem:[#allocation10 + $0x10] sm:$0xf]
        %v3441 = vld [vmem:[#allocation10 + $0x14] sm:$0xf]
        %v3442 = vld [vmem:[#allocation10 + $0x18] sm:$0xf]
        %v3443 = vld [vmem:[#allocation10 + $0x1c] sm:$0xf]
        %v3444 = vld [vmem:[#allocation10 + $0x20] sm:$0xf]
        %v3445 = vld [vmem:[#allocation10 + $0x24] sm:$0xf]
        %v3446 = vld [vmem:[#allocation10 + $0x28] sm:$0xf]
        %v3447 = vld [vmem:[#allocation10 + $0x2c] sm:$0xf]
        %v3448 = vld [vmem:[#allocation10 + $0x30] sm:$0xf]
        %v3449 = vld [vmem:[#allocation10 + $0x34] sm:$0xf]
        %v3450 = vld [vmem:[#allocation10 + $0x38] sm:$0xf]
        %v3451 = vld [vmem:[#allocation10 + $0x3c] sm:$0xf]
        %v3452 = vld [vmem:[#allocation10 + $0x40] sm:$0xf]
        %v3453 = vld [vmem:[#allocation10 + $0x44] sm:$0xf]
        %v3454 = vld [vmem:[#allocation10 + $0x48] sm:$0xf]
        %v3455 = vld [vmem:[#allocation10 + $0x4c] sm:$0xf]
        %v3456 = vld [vmem:[#allocation10 + $0x50] sm:$0xf]
        %v3457 = vld [vmem:[#allocation10 + $0x54] sm:$0xf]
        %v3458 = vld [vmem:[#allocation10 + $0x58] sm:$0xf]
        %v3459 = vld [vmem:[#allocation10 + $0x5c] sm:$0xf]
        %v3460 = vld [vmem:[#allocation10 + $0x60] sm:$0xf]
        %v3461 = vld [vmem:[#allocation10 + $0x64] sm:$0xf]
        %v3462 = vld [vmem:[#allocation10 + $0x68] sm:$0xf]
        %v3463 = vld [vmem:[#allocation10 + $0x6c] sm:$0xf]
        %v3464 = vld [vmem:[#allocation10 + $0x70] sm:$0xf]
        %v3465 = vld [vmem:[#allocation10 + $0x74] sm:$0xf]
        %v3466 = vld [vmem:[#allocation10 + $0x78] sm:$0xf]
        %v3467 = vld [vmem:[#allocation10 + $0x7c] sm:$0xf]
        %v3468 = vld [vmem:[#allocation10 + $0x80] sm:$0xf]
        %v3469 = vld [vmem:[#allocation10 + $0x84] sm:$0xf]
        %v3470 = vld [vmem:[#allocation10 + $0x88] sm:$0xf]
        %v3471 = vld [vmem:[#allocation10 + $0x8c] sm:$0xf]
        %v3472 = vld [vmem:[#allocation10 + $0x90] sm:$0xf]
        %v3473 = vld [vmem:[#allocation10 + $0x94] sm:$0xf]
        %v3474 = vld [vmem:[#allocation10 + $0x98] sm:$0xf]
        %v3475 = vld [vmem:[#allocation10 + $0x9c] sm:$0xf]
        %v3476 = vld [vmem:[#allocation10 + $0xa0] sm:$0xf]
        %v3477 = vld [vmem:[#allocation10 + $0xa4] sm:$0xf]
        %v3478 = vld [vmem:[#allocation10 + $0xa8] sm:$0xf]
        %v3479 = vld [vmem:[#allocation10 + $0xac] sm:$0xf]
        %v3480 = vld [vmem:[#allocation10 + $0xb0] sm:$0xf]
        %v3481 = vld [vmem:[#allocation10 + $0xb4] sm:$0xf]
        %v3482 = vld [vmem:[#allocation10 + $0xb8] sm:$0xf]
        %v3483 = vld [vmem:[#allocation10 + $0xbc] sm:$0xf]
        %v3484 = vld [vmem:[#allocation10 + $0xc0] sm:$0xf]
        %v3485 = vld [vmem:[#allocation10 + $0xc4] sm:$0xf]
        %v3486 = vld [vmem:[#allocation10 + $0xc8] sm:$0xf]
        %v3487 = vld [vmem:[#allocation10 + $0xcc] sm:$0xf]
        %v3488 = vld [vmem:[#allocation10 + $0xd0] sm:$0xf]
        %v3489 = vld [vmem:[#allocation10 + $0xd4] sm:$0xf]
        %v3490 = vld [vmem:[#allocation10 + $0xd8] sm:$0xf]
        %v3491 = vld [vmem:[#allocation10 + $0xdc] sm:$0xf]
        %v3492 = vld [vmem:[#allocation10 + $0xe0] sm:$0xf]
        %v3493 = vld [vmem:[#allocation10 + $0xe4] sm:$0xf]
        %v3494 = vld [vmem:[#allocation10 + $0xe8] sm:$0xf]
        %v3495 = vld [vmem:[#allocation10 + $0xec] sm:$0xf]
        %v3496 = vld [vmem:[#allocation10 + $0xf0] sm:$0xf]
        %v3497 = vld [vmem:[#allocation10 + $0xf4] sm:$0xf]
        %v3498 = vld [vmem:[#allocation10 + $0xf8] sm:$0xf]
        %v3499 = vld [vmem:[#allocation10 + $0xfc] sm:$0xf]
        %v3500 = vld [vmem:[#allocation10 + $0x100] sm:$0xf]
        %v3501 = vld [vmem:[#allocation10 + $0x104] sm:$0xf]
        %v3502 = vld [vmem:[#allocation10 + $0x108] sm:$0xf]
        %v3503 = vld [vmem:[#allocation10 + $0x10c] sm:$0xf]
        %v3504 = vld [vmem:[#allocation10 + $0x110] sm:$0xf]
        %v3505 = vld [vmem:[#allocation10 + $0x114] sm:$0xf]
        %v3506 = vld [vmem:[#allocation10 + $0x118] sm:$0xf]
        %v3507 = vld [vmem:[#allocation10 + $0x11c] sm:$0xf]
        %v3508 = vld [vmem:[#allocation10 + $0x120] sm:$0xf]
        %v3509 = vld [vmem:[#allocation10 + $0x124] sm:$0xf]
        %v3510 = vld [vmem:[#allocation10 + $0x128] sm:$0xf]
        %v3511 = vld [vmem:[#allocation10 + $0x12c] sm:$0xf]
        %v3512 = vld [vmem:[#allocation10 + $0x130] sm:$0xf]
        %v3513 = vld [vmem:[#allocation10 + $0x134] sm:$0xf]
        %v3514 = vld [vmem:[#allocation10 + $0x138] sm:$0xf]
        %v3515 = vld [vmem:[#allocation10 + $0x13c] sm:$0xf]
        %v3516 = vld [vmem:[#allocation10 + $0x140] sm:$0xf]
        %v3517 = vld [vmem:[#allocation10 + $0x144] sm:$0xf]
        %v3518 = vld [vmem:[#allocation10 + $0x148] sm:$0xf]
        %v3519 = vld [vmem:[#allocation10 + $0x14c] sm:$0xf]
        %v3520 = vld [vmem:[#allocation10 + $0x150] sm:$0xf]
        %v3521 = vld [vmem:[#allocation10 + $0x154] sm:$0xf]
        %v3522 = vld [vmem:[#allocation10 + $0x158] sm:$0xf]
        %v3523 = vld [vmem:[#allocation10 + $0x15c] sm:$0xf]
        %v3524 = vld [vmem:[#allocation10 + $0x160] sm:$0xf]
        %v3525 = vld [vmem:[#allocation10 + $0x164] sm:$0xf]
        %v3526 = vld [vmem:[#allocation10 + $0x168] sm:$0xf]
        %v3527 = vld [vmem:[#allocation10 + $0x16c] sm:$0xf]
        %v3528 = vld [vmem:[#allocation10 + $0x170] sm:$0xf]
        %v3529 = vld [vmem:[#allocation10 + $0x174] sm:$0xf]
        %v3530 = vld [vmem:[#allocation10 + $0x178] sm:$0xf]
        %v3531 = vld [vmem:[#allocation10 + $0x17c] sm:$0xf]
        %v3532 = vld [vmem:[#allocation10 + $0x180] sm:$0xf]
        %v3533 = vld [vmem:[#allocation10 + $0x184] sm:$0xf]
        %v3534 = vld [vmem:[#allocation10 + $0x188] sm:$0xf]
        %v3535 = vld [vmem:[#allocation10 + $0x18c] sm:$0xf]
        %v3536 = vld [vmem:[#allocation10 + $0x190] sm:$0xf]
        %v3537 = vld [vmem:[#allocation10 + $0x194] sm:$0xf]
        %v3538 = vld [vmem:[#allocation10 + $0x198] sm:$0xf]
        %v3539 = vld [vmem:[#allocation10 + $0x19c] sm:$0xf]
        %v3540 = vld [vmem:[#allocation10 + $0x1a0] sm:$0xf]
        %v3541 = vld [vmem:[#allocation10 + $0x1a4] sm:$0xf]
        %v3542 = vld [vmem:[#allocation10 + $0x1a8] sm:$0xf]
        %v3543 = vld [vmem:[#allocation10 + $0x1ac] sm:$0xf]
        %v3544 = vld [vmem:[#allocation10 + $0x1b0] sm:$0xf]
        %v3545 = vld [vmem:[#allocation10 + $0x1b4] sm:$0xf]
        %v3546 = vld [vmem:[#allocation10 + $0x1b8] sm:$0xf]
        %v3547 = vld [vmem:[#allocation10 + $0x1bc] sm:$0xf]
        %v3548 = vld [vmem:[#allocation10 + $0x1c0] sm:$0xf]
        %v3549 = vld [vmem:[#allocation10 + $0x1c4] sm:$0xf]
        %v3550 = vld [vmem:[#allocation10 + $0x1c8] sm:$0xf]
        %v3551 = vld [vmem:[#allocation10 + $0x1cc] sm:$0xf]
        %v3552 = vld [vmem:[#allocation10 + $0x1d0] sm:$0xf]
        %v3553 = vld [vmem:[#allocation10 + $0x1d4] sm:$0xf]
        %v3554 = vld [vmem:[#allocation10 + $0x1d8] sm:$0xf]
        %v3555 = vld [vmem:[#allocation10 + $0x1dc] sm:$0xf]
        %v3556 = vld [vmem:[#allocation10 + $0x1e0] sm:$0xf]
        %v3557 = vld [vmem:[#allocation10 + $0x1e4] sm:$0xf]
        %v3558 = vld [vmem:[#allocation10 + $0x1e8] sm:$0xf]
        %v3559 = vld [vmem:[#allocation10 + $0x1ec] sm:$0xf]
        %v3560 = vld [vmem:[#allocation10 + $0x1f0] sm:$0xf]
        %v3561 = vld [vmem:[#allocation10 + $0x1f4] sm:$0xf]
        %v3562 = vld [vmem:[#allocation10 + $0x1f8] sm:$0xf]
        %v3563 = vld [vmem:[#allocation10 + $0x1fc] sm:$0xf]
        %v3564 = vld [vmem:[#allocation10 + $0x200] sm:$0xf]
        %v3565 = vld [vmem:[#allocation10 + $0x204] sm:$0xf]
        %v3566 = vld [vmem:[#allocation10 + $0x208] sm:$0xf]
        %v3567 = vld [vmem:[#allocation10 + $0x20c] sm:$0xf]
        %v3568 = vld [vmem:[#allocation10 + $0x210] sm:$0xf]
        %v3569 = vld [vmem:[#allocation10 + $0x214] sm:$0xf]
        %v3570 = vld [vmem:[#allocation10 + $0x218] sm:$0xf]
        %v3571 = vld [vmem:[#allocation10 + $0x21c] sm:$0xf]
        %v3572 = vld [vmem:[#allocation10 + $0x220] sm:$0xf]
        %v3573 = vld [vmem:[#allocation10 + $0x224] sm:$0xf]
        %v3574 = vld [vmem:[#allocation10 + $0x228] sm:$0xf]
        %v3575 = vld [vmem:[#allocation10 + $0x22c] sm:$0xf]
        %v3576 = vld [vmem:[#allocation10 + $0x230] sm:$0xf]
        %v3577 = vld [vmem:[#allocation10 + $0x234] sm:$0xf]
        %v3578 = vld [vmem:[#allocation10 + $0x238] sm:$0xf]
        %v3579 = vld [vmem:[#allocation10 + $0x23c] sm:$0xf]
        %v3580 = vld [vmem:[#allocation10 + $0x240] sm:$0xf]
        %v3581 = vld [vmem:[#allocation10 + $0x244] sm:$0xf]
        %v3582 = vld [vmem:[#allocation10 + $0x248] sm:$0xf]
        %v3583 = vld [vmem:[#allocation10 + $0x24c] sm:$0xf]
        %v3584 = vld [vmem:[#allocation10 + $0x250] sm:$0xf]
        %v3585 = vld [vmem:[#allocation10 + $0x254] sm:$0xf]
        %v3586 = vld [vmem:[#allocation10 + $0x258] sm:$0xf]
        %v3587 = vld [vmem:[#allocation10 + $0x25c] sm:$0xf]
        %v3588 = vld [vmem:[#allocation10 + $0x260] sm:$0xf]
        %v3589 = vld [vmem:[#allocation10 + $0x264] sm:$0xf]
        %v3590 = vld [vmem:[#allocation10 + $0x268] sm:$0xf]
        %v3591 = vld [vmem:[#allocation10 + $0x26c] sm:$0xf]
        %v3592 = vld [vmem:[#allocation10 + $0x270] sm:$0xf]
        %v3593 = vld [vmem:[#allocation10 + $0x274] sm:$0xf]
        %v3594 = vld [vmem:[#allocation10 + $0x278] sm:$0xf]
        %v3595 = vld [vmem:[#allocation10 + $0x27c] sm:$0xf]
        %v3596 = vld [vmem:[#allocation10 + $0x280] sm:$0xf]
        %v3597 = vld [vmem:[#allocation10 + $0x284] sm:$0xf]
        %v3598 = vld [vmem:[#allocation10 + $0x288] sm:$0xf]
        %v3599 = vld [vmem:[#allocation10 + $0x28c] sm:$0xf]
        %v3600 = vld [vmem:[#allocation10 + $0x290] sm:$0xf]
        %v3601 = vld [vmem:[#allocation10 + $0x294] sm:$0xf]
        %v3602 = vld [vmem:[#allocation10 + $0x298] sm:$0xf]
        %v3603 = vld [vmem:[#allocation10 + $0x29c] sm:$0xf]
        %v3604 = vld [vmem:[#allocation10 + $0x2a0] sm:$0xf]
        %v3605 = vld [vmem:[#allocation10 + $0x2a4] sm:$0xf]
        %v3606 = vld [vmem:[#allocation10 + $0x2a8] sm:$0xf]
        %v3607 = vld [vmem:[#allocation10 + $0x2ac] sm:$0xf]
        %v3608 = vld [vmem:[#allocation10 + $0x2b0] sm:$0xf]
        %v3609 = vld [vmem:[#allocation10 + $0x2b4] sm:$0xf]
        %v3610 = vld [vmem:[#allocation10 + $0x2b8] sm:$0xf]
        %v3611 = vld [vmem:[#allocation10 + $0x2bc] sm:$0xf]
        %v3612 = vld [vmem:[#allocation10 + $0x2c0] sm:$0xf]
        %v3613 = vld [vmem:[#allocation10 + $0x2c4] sm:$0xf]
        %v3614 = vld [vmem:[#allocation10 + $0x2c8] sm:$0xf]
        %v3615 = vld [vmem:[#allocation10 + $0x2cc] sm:$0xf]
        %v3616 = vld [vmem:[#allocation10 + $0x2d0] sm:$0xf]
        %v3617 = vld [vmem:[#allocation10 + $0x2d4] sm:$0xf]
        %v3618 = vld [vmem:[#allocation10 + $0x2d8] sm:$0xf]
        %v3619 = vld [vmem:[#allocation10 + $0x2dc] sm:$0xf]
        %v3620 = vld [vmem:[#allocation10 + $0x2e0] sm:$0x7]
        %v3806 = vunpack.c.l.b16 %v3436
        %v3807 = vunpack.c.l.b16 %v3437
        %v3808 = vunpack.c.l.b16 %v3438
        %v3809 = vunpack.c.l.b16 %v3439
        %v3810 = vunpack.c.l.b16 %v3440
        %v3811 = vunpack.c.l.b16 %v3441
        %v3812 = vunpack.c.l.b16 %v3442
        %v3813 = vunpack.c.l.b16 %v3443
        %v3814 = vunpack.c.l.b16 %v3444
        %v3815 = vunpack.c.l.b16 %v3445
        %v3816 = vunpack.c.l.b16 %v3446
        %v3817 = vunpack.c.l.b16 %v3447
        %v3818 = vunpack.c.l.b16 %v3448
        %v3819 = vunpack.c.l.b16 %v3449
        %v3820 = vunpack.c.l.b16 %v3450
        %v3821 = vunpack.c.l.b16 %v3451
        %v3822 = vunpack.c.l.b16 %v3452
        %v3823 = vunpack.c.l.b16 %v3453
        %v3824 = vunpack.c.l.b16 %v3454
        %v3825 = vunpack.c.l.b16 %v3455
        %v3826 = vunpack.c.l.b16 %v3456
        %v3827 = vunpack.c.l.b16 %v3457
        %v3828 = vunpack.c.l.b16 %v3458
        %v3829 = vunpack.c.l.b16 %v3459
        %v3830 = vunpack.c.l.b16 %v3460
        %v3831 = vunpack.c.l.b16 %v3461
        %v3832 = vunpack.c.l.b16 %v3462
        %v3833 = vunpack.c.l.b16 %v3463
        %v3834 = vunpack.c.l.b16 %v3464
        %v3835 = vunpack.c.l.b16 %v3465
        %v3836 = vunpack.c.l.b16 %v3466
        %v3837 = vunpack.c.l.b16 %v3467
        %v3838 = vunpack.c.l.b16 %v3468
        %v3839 = vunpack.c.l.b16 %v3469
        %v3840 = vunpack.c.l.b16 %v3470
        %v3841 = vunpack.c.l.b16 %v3471
        %v3842 = vunpack.c.l.b16 %v3472
        %v3843 = vunpack.c.l.b16 %v3473
        %v3844 = vunpack.c.l.b16 %v3474
        %v3845 = vunpack.c.l.b16 %v3475
        %v3846 = vunpack.c.l.b16 %v3476
        %v3847 = vunpack.c.l.b16 %v3477
        %v3848 = vunpack.c.l.b16 %v3478
        %v3849 = vunpack.c.l.b16 %v3479
        %v3850 = vunpack.c.l.b16 %v3480
        %v3851 = vunpack.c.l.b16 %v3481
        %v3852 = vunpack.c.l.b16 %v3482
        %v3853 = vunpack.c.l.b16 %v3483
        %v3854 = vunpack.c.l.b16 %v3484
        %v3855 = vunpack.c.l.b16 %v3485
        %v3856 = vunpack.c.l.b16 %v3486
        %v3857 = vunpack.c.l.b16 %v3487
        %v3858 = vunpack.c.l.b16 %v3488
        %v3859 = vunpack.c.l.b16 %v3489
        %v3860 = vunpack.c.l.b16 %v3490
        %v3861 = vunpack.c.l.b16 %v3491
        %v3862 = vunpack.c.l.b16 %v3492
        %v3863 = vunpack.c.l.b16 %v3493
        %v3864 = vunpack.c.l.b16 %v3494
        %v3865 = vunpack.c.l.b16 %v3495
        %v3866 = vunpack.c.l.b16 %v3496
        %v3867 = vunpack.c.l.b16 %v3497
        %v3868 = vunpack.c.l.b16 %v3498
        %v3869 = vunpack.c.l.b16 %v3499
        %v3870 = vunpack.c.l.b16 %v3500
        %v3871 = vunpack.c.l.b16 %v3501
        %v3872 = vunpack.c.l.b16 %v3502
        %v3873 = vunpack.c.l.b16 %v3503
        %v3874 = vunpack.c.l.b16 %v3504
        %v3875 = vunpack.c.l.b16 %v3505
        %v3876 = vunpack.c.l.b16 %v3506
        %v3877 = vunpack.c.l.b16 %v3507
        %v3878 = vunpack.c.l.b16 %v3508
        %v3879 = vunpack.c.l.b16 %v3509
        %v3880 = vunpack.c.l.b16 %v3510
        %v3881 = vunpack.c.l.b16 %v3511
        %v3882 = vunpack.c.l.b16 %v3512
        %v3883 = vunpack.c.l.b16 %v3513
        %v3884 = vunpack.c.l.b16 %v3514
        %v3885 = vunpack.c.l.b16 %v3515
        %v3886 = vunpack.c.l.b16 %v3516
        %v3887 = vunpack.c.l.b16 %v3517
        %v3888 = vunpack.c.l.b16 %v3518
        %v3889 = vunpack.c.l.b16 %v3519
        %v3890 = vunpack.c.l.b16 %v3520
        %v3891 = vunpack.c.l.b16 %v3521
        %v3892 = vunpack.c.l.b16 %v3522
        %v3893 = vunpack.c.l.b16 %v3523
        %v3894 = vunpack.c.l.b16 %v3524
        %v3895 = vunpack.c.l.b16 %v3525
        %v3896 = vunpack.c.l.b16 %v3526
        %v3897 = vunpack.c.l.b16 %v3527
        %v3898 = vunpack.c.l.b16 %v3528
        %v3899 = vunpack.c.l.b16 %v3529
        %v3900 = vunpack.c.l.b16 %v3530
        %v3901 = vunpack.c.l.b16 %v3531
        %v3902 = vunpack.c.l.b16 %v3532
        %v3903 = vunpack.c.l.b16 %v3533
        %v3904 = vunpack.c.l.b16 %v3534
        %v3905 = vunpack.c.l.b16 %v3535
        %v3906 = vunpack.c.l.b16 %v3536
        %v3907 = vunpack.c.l.b16 %v3537
        %v3908 = vunpack.c.l.b16 %v3538
        %v3909 = vunpack.c.l.b16 %v3539
        %v3910 = vunpack.c.l.b16 %v3540
        %v3911 = vunpack.c.l.b16 %v3541
        %v3912 = vunpack.c.l.b16 %v3542
        %v3913 = vunpack.c.l.b16 %v3543
        %v3914 = vunpack.c.l.b16 %v3544
        %v3915 = vunpack.c.l.b16 %v3545
        %v3916 = vunpack.c.l.b16 %v3546
        %v3917 = vunpack.c.l.b16 %v3547
        %v3918 = vunpack.c.l.b16 %v3548
        %v3919 = vunpack.c.l.b16 %v3549
        %v3920 = vunpack.c.l.b16 %v3550
        %v3921 = vunpack.c.l.b16 %v3551
        %v3922 = vunpack.c.l.b16 %v3552
        %v3923 = vunpack.c.l.b16 %v3553
        %v3924 = vunpack.c.l.b16 %v3554
        %v3925 = vunpack.c.l.b16 %v3555
        %v3926 = vunpack.c.l.b16 %v3556
        %v3927 = vunpack.c.l.b16 %v3557
        %v3928 = vunpack.c.l.b16 %v3558
        %v3929 = vunpack.c.l.b16 %v3559
        %v3930 = vunpack.c.l.b16 %v3560
        %v3931 = vunpack.c.l.b16 %v3561
        %v3932 = vunpack.c.l.b16 %v3562
        %v3933 = vunpack.c.l.b16 %v3563
        %v3934 = vunpack.c.l.b16 %v3564
        %v3935 = vunpack.c.l.b16 %v3565
        %v3936 = vunpack.c.l.b16 %v3566
        %v3937 = vunpack.c.l.b16 %v3567
        %v3938 = vunpack.c.l.b16 %v3568
        %v3939 = vunpack.c.l.b16 %v3569
        %v3940 = vunpack.c.l.b16 %v3570
        %v3941 = vunpack.c.l.b16 %v3571
        %v3942 = vunpack.c.l.b16 %v3572
        %v3943 = vunpack.c.l.b16 %v3573
        %v3944 = vunpack.c.l.b16 %v3574
        %v3945 = vunpack.c.l.b16 %v3575
        %v3946 = vunpack.c.l.b16 %v3576
        %v3947 = vunpack.c.l.b16 %v3577
        %v3948 = vunpack.c.l.b16 %v3578
        %v3949 = vunpack.c.l.b16 %v3579
        %v3950 = vunpack.c.l.b16 %v3580
        %v3951 = vunpack.c.l.b16 %v3581
        %v3952 = vunpack.c.l.b16 %v3582
        %v3953 = vunpack.c.l.b16 %v3583
        %v3954 = vunpack.c.l.b16 %v3584
        %v3955 = vunpack.c.l.b16 %v3585
        %v3956 = vunpack.c.l.b16 %v3586
        %v3957 = vunpack.c.l.b16 %v3587
        %v3958 = vunpack.c.l.b16 %v3588
        %v3959 = vunpack.c.l.b16 %v3589
        %v3960 = vunpack.c.l.b16 %v3590
        %v3961 = vunpack.c.l.b16 %v3591
        %v3962 = vunpack.c.l.b16 %v3592
        %v3963 = vunpack.c.l.b16 %v3593
        %v3964 = vunpack.c.l.b16 %v3594
        %v3965 = vunpack.c.l.b16 %v3595
        %v3966 = vunpack.c.l.b16 %v3596
        %v3967 = vunpack.c.l.b16 %v3597
        %v3968 = vunpack.c.l.b16 %v3598
        %v3969 = vunpack.c.l.b16 %v3599
        %v3970 = vunpack.c.l.b16 %v3600
        %v3971 = vunpack.c.l.b16 %v3601
        %v3972 = vunpack.c.l.b16 %v3602
        %v3973 = vunpack.c.l.b16 %v3603
        %v3974 = vunpack.c.l.b16 %v3604
        %v3975 = vunpack.c.l.b16 %v3605
        %v3976 = vunpack.c.l.b16 %v3606
        %v3977 = vunpack.c.l.b16 %v3607
        %v3978 = vunpack.c.l.b16 %v3608
        %v3979 = vunpack.c.l.b16 %v3609
        %v3980 = vunpack.c.l.b16 %v3610
        %v3981 = vunpack.c.l.b16 %v3611
        %v3982 = vunpack.c.l.b16 %v3612
        %v3983 = vunpack.c.l.b16 %v3613
        %v3984 = vunpack.c.l.b16 %v3614
        %v3985 = vunpack.c.l.b16 %v3615
        %v3986 = vunpack.c.l.b16 %v3616
        %v3987 = vunpack.c.l.b16 %v3617
        %v3988 = vunpack.c.l.b16 %v3618
        %v3989 = vunpack.c.l.b16 %v3619
        %v3990 = vunpack.c.l.b16 %v3620
        %v3991 = vpack.c.b16 %v3807, %v3806
        %v3992 = vpack.c.b16 %v3809, %v3808
        %v3993 = vpack.c.b16 %v3811, %v3810
        %v3994 = vpack.c.b16 %v3813, %v3812
        %v3995 = vpack.c.b16 %v3815, %v3814
        %v3996 = vpack.c.b16 %v3817, %v3816
        %v3997 = vpack.c.b16 %v3819, %v3818
        %v3998 = vpack.c.b16 %v3821, %v3820
        %v3999 = vpack.c.b16 %v3823, %v3822
        %v4000 = vpack.c.b16 %v3825, %v3824
        %v4001 = vpack.c.b16 %v3827, %v3826
        %v4002 = vpack.c.b16 %v3829, %v3828
        %v4003 = vpack.c.b16 %v3831, %v3830
        %v4004 = vpack.c.b16 %v3833, %v3832
        %v4005 = vpack.c.b16 %v3835, %v3834
        %v4006 = vpack.c.b16 %v3837, %v3836
        %v4007 = vpack.c.b16 %v3839, %v3838
        %v4008 = vpack.c.b16 %v3841, %v3840
        %v4009 = vpack.c.b16 %v3843, %v3842
        %v4010 = vpack.c.b16 %v3845, %v3844
        %v4011 = vpack.c.b16 %v3847, %v3846
        %v4012 = vpack.c.b16 %v3849, %v3848
        %v4013 = vpack.c.b16 %v3851, %v3850
        %v4014 = vpack.c.b16 %v3853, %v3852
        %v4015 = vpack.c.b16 %v3855, %v3854
        %v4016 = vpack.c.b16 %v3857, %v3856
        %v4017 = vpack.c.b16 %v3859, %v3858
        %v4018 = vpack.c.b16 %v3861, %v3860
        %v4019 = vpack.c.b16 %v3863, %v3862
        %v4020 = vpack.c.b16 %v3865, %v3864
        %v4021 = vpack.c.b16 %v3867, %v3866
        %v4022 = vpack.c.b16 %v3869, %v3868
        %v4023 = vpack.c.b16 %v3871, %v3870
        %v4024 = vpack.c.b16 %v3873, %v3872
        %v4025 = vpack.c.b16 %v3875, %v3874
        %v4026 = vpack.c.b16 %v3877, %v3876
        %v4027 = vpack.c.b16 %v3879, %v3878
        %v4028 = vpack.c.b16 %v3881, %v3880
        %v4029 = vpack.c.b16 %v3883, %v3882
        %v4030 = vpack.c.b16 %v3885, %v3884
        %v4031 = vpack.c.b16 %v3887, %v3886
        %v4032 = vpack.c.b16 %v3889, %v3888
        %v4033 = vpack.c.b16 %v3891, %v3890
        %v4034 = vpack.c.b16 %v3893, %v3892
        %v4035 = vpack.c.b16 %v3895, %v3894
        %v4036 = vpack.c.b16 %v3897, %v3896
        %v4037 = vpack.c.b16 %v3899, %v3898
        %v4038 = vpack.c.b16 %v3901, %v3900
        %v4039 = vpack.c.b16 %v3903, %v3902
        %v4040 = vpack.c.b16 %v3905, %v3904
        %v4041 = vpack.c.b16 %v3907, %v3906
        %v4042 = vpack.c.b16 %v3909, %v3908
        %v4043 = vpack.c.b16 %v3911, %v3910
        %v4044 = vpack.c.b16 %v3913, %v3912
        %v4045 = vpack.c.b16 %v3915, %v3914
        %v4046 = vpack.c.b16 %v3917, %v3916
        %v4047 = vpack.c.b16 %v3919, %v3918
        %v4048 = vpack.c.b16 %v3921, %v3920
        %v4049 = vpack.c.b16 %v3923, %v3922
        %v4050 = vpack.c.b16 %v3925, %v3924
        %v4051 = vpack.c.b16 %v3927, %v3926
        %v4052 = vpack.c.b16 %v3929, %v3928
        %v4053 = vpack.c.b16 %v3931, %v3930
        %v4054 = vpack.c.b16 %v3933, %v3932
        %v4055 = vpack.c.b16 %v3935, %v3934
        %v4056 = vpack.c.b16 %v3937, %v3936
        %v4057 = vpack.c.b16 %v3939, %v3938
        %v4058 = vpack.c.b16 %v3941, %v3940
        %v4059 = vpack.c.b16 %v3943, %v3942
        %v4060 = vpack.c.b16 %v3945, %v3944
        %v4061 = vpack.c.b16 %v3947, %v3946
        %v4062 = vpack.c.b16 %v3949, %v3948
        %v4063 = vpack.c.b16 %v3951, %v3950
        %v4064 = vpack.c.b16 %v3953, %v3952
        %v4065 = vpack.c.b16 %v3955, %v3954
        %v4066 = vpack.c.b16 %v3957, %v3956
        %v4067 = vpack.c.b16 %v3959, %v3958
        %v4068 = vpack.c.b16 %v3961, %v3960
        %v4069 = vpack.c.b16 %v3963, %v3962
        %v4070 = vpack.c.b16 %v3965, %v3964
        %v4071 = vpack.c.b16 %v3967, %v3966
        %v4072 = vpack.c.b16 %v3969, %v3968
        %v4073 = vpack.c.b16 %v3971, %v3970
        %v4074 = vpack.c.b16 %v3973, %v3972
        %v4075 = vpack.c.b16 %v3975, %v3974
        %v4076 = vpack.c.b16 %v3977, %v3976
        %v4077 = vpack.c.b16 %v3979, %v3978
        %v4078 = vpack.c.b16 %v3981, %v3980
        %v4079 = vpack.c.b16 %v3983, %v3982
        %v4080 = vpack.c.b16 %v3985, %v3984
        %v4081 = vpack.c.b16 %v3987, %v3986
        %v4082 = vpack.c.b16 %v3989, %v3988
        %v4083 = vpack.c.b16 %v3990, %v3990
        %vm4176 = vcmask 572416
        %v4178 = vsel %vm4176, %v3435, 0
        %v4181 = vsel %vm2735, %v4083, 0
        %4183 = vmatpush.bf16.msra.mxu0 %v3998
        %4184 = vmatpush.bf16.msra.mxu0 %v3997
        %4185 = vmatpush.bf16.msra.mxu0 %v3996
        %4186 = vmatpush.bf16.msra.mxu0 %v3995
        %4187 = vmatpush.bf16.msra.mxu0 %v3994
        %4188 = vmatpush.bf16.msra.mxu0 %v3993
        %4189 = vmatpush.bf16.msra.mxu0 %v3992
        %4190 = vmatpush.bf16.msra.mxu0 %v3991
        %4191 = vmatmul.bf16.gmra.mxu0 %v3424
        %v4192 = vpop.f32.mrf.mxu0
        %v4193 = vadd.f32 0.0, %v4192
        %v4194 = vpop.f32.mrf.mxu0
        %4195 = vdwg.mxu0
        %4196 = vmatpush.bf16.msra.mxu0 %v4006
        %4197 = vmatpush.bf16.msra.mxu0 %v4005
        %4198 = vmatpush.bf16.msra.mxu0 %v4004
        %4199 = vmatpush.bf16.msra.mxu0 %v4003
        %4200 = vmatpush.bf16.msra.mxu0 %v4002
        %4201 = vmatpush.bf16.msra.mxu0 %v4001
        %4202 = vmatpush.bf16.msra.mxu0 %v4000
        %4203 = vmatpush.bf16.msra.mxu0 %v3999
        %4204 = vmatmul.bf16.gmra.mxu0 %v3425
        %v4205 = vpop.f32.mrf.mxu0
        %v4206 = vadd.f32 %v4193, %v4205
        %v4207 = vpop.f32.mrf.mxu0
        %4208 = vdwg.mxu0
        %4209 = vmatpush.bf16.msra.mxu0 %v4014
        %4210 = vmatpush.bf16.msra.mxu0 %v4013
        %4211 = vmatpush.bf16.msra.mxu0 %v4012
        %4212 = vmatpush.bf16.msra.mxu0 %v4011
        %4213 = vmatpush.bf16.msra.mxu0 %v4010
        %4214 = vmatpush.bf16.msra.mxu0 %v4009
        %4215 = vmatpush.bf16.msra.mxu0 %v4008
        %4216 = vmatpush.bf16.msra.mxu0 %v4007
        %4217 = vmatmul.bf16.gmra.mxu0 %v3426
        %v4218 = vpop.f32.mrf.mxu0
        %v4219 = vadd.f32 %v4206, %v4218
        %v4220 = vpop.f32.mrf.mxu0
        %4221 = vdwg.mxu0
        %4222 = vmatpush.bf16.msra.mxu0 %v4022
        %4223 = vmatpush.bf16.msra.mxu0 %v4021
        %4224 = vmatpush.bf16.msra.mxu0 %v4020
        %4225 = vmatpush.bf16.msra.mxu0 %v4019
        %4226 = vmatpush.bf16.msra.mxu0 %v4018
        %4227 = vmatpush.bf16.msra.mxu0 %v4017
        %4228 = vmatpush.bf16.msra.mxu0 %v4016
        %4229 = vmatpush.bf16.msra.mxu0 %v4015
        %4230 = vmatmul.bf16.gmra.mxu0 %v3427
        %v4231 = vpop.f32.mrf.mxu0
        %v4232 = vadd.f32 %v4219, %v4231
        %v4233 = vpop.f32.mrf.mxu0
        %4234 = vdwg.mxu0
        %4235 = vmatpush.bf16.msra.mxu0 %v4030
        %4236 = vmatpush.bf16.msra.mxu0 %v4029
        %4237 = vmatpush.bf16.msra.mxu0 %v4028
        %4238 = vmatpush.bf16.msra.mxu0 %v4027
        %4239 = vmatpush.bf16.msra.mxu0 %v4026
        %4240 = vmatpush.bf16.msra.mxu0 %v4025
        %4241 = vmatpush.bf16.msra.mxu0 %v4024
        %4242 = vmatpush.bf16.msra.mxu0 %v4023
        %4243 = vmatmul.bf16.gmra.mxu0 %v3428
        %v4244 = vpop.f32.mrf.mxu0
        %v4245 = vadd.f32 %v4232, %v4244
        %v4246 = vpop.f32.mrf.mxu0
        %4247 = vdwg.mxu0
        %4248 = vmatpush.bf16.msra.mxu0 %v4038
        %4249 = vmatpush.bf16.msra.mxu0 %v4037
        %4250 = vmatpush.bf16.msra.mxu0 %v4036
        %4251 = vmatpush.bf16.msra.mxu0 %v4035
        %4252 = vmatpush.bf16.msra.mxu0 %v4034
        %4253 = vmatpush.bf16.msra.mxu0 %v4033
        %4254 = vmatpush.bf16.msra.mxu0 %v4032
        %4255 = vmatpush.bf16.msra.mxu0 %v4031
        %4256 = vmatmul.bf16.gmra.mxu0 %v3429
        %v4257 = vpop.f32.mrf.mxu0
        %v4258 = vadd.f32 %v4245, %v4257
        %v4259 = vpop.f32.mrf.mxu0
        %4260 = vdwg.mxu0
        %4261 = vmatpush.bf16.msra.mxu0 %v4046
        %4262 = vmatpush.bf16.msra.mxu0 %v4045
        %4263 = vmatpush.bf16.msra.mxu0 %v4044
        %4264 = vmatpush.bf16.msra.mxu0 %v4043
        %4265 = vmatpush.bf16.msra.mxu0 %v4042
        %4266 = vmatpush.bf16.msra.mxu0 %v4041
        %4267 = vmatpush.bf16.msra.mxu0 %v4040
        %4268 = vmatpush.bf16.msra.mxu0 %v4039
        %4269 = vmatmul.bf16.gmra.mxu0 %v3430
        %v4270 = vpop.f32.mrf.mxu0
        %v4271 = vadd.f32 %v4258, %v4270
        %v4272 = vpop.f32.mrf.mxu0
        %4273 = vdwg.mxu0
        %4274 = vmatpush.bf16.msra.mxu0 %v4054
        %4275 = vmatpush.bf16.msra.mxu0 %v4053
        %4276 = vmatpush.bf16.msra.mxu0 %v4052
        %4277 = vmatpush.bf16.msra.mxu0 %v4051
        %4278 = vmatpush.bf16.msra.mxu0 %v4050
        %4279 = vmatpush.bf16.msra.mxu0 %v4049
        %4280 = vmatpush.bf16.msra.mxu0 %v4048
        %4281 = vmatpush.bf16.msra.mxu0 %v4047
        %4282 = vmatmul.bf16.gmra.mxu0 %v3431
        %v4283 = vpop.f32.mrf.mxu0
        %v4284 = vadd.f32 %v4271, %v4283
        %v4285 = vpop.f32.mrf.mxu0
        %4286 = vdwg.mxu0
        %4287 = vmatpush.bf16.msra.mxu0 %v4062
        %4288 = vmatpush.bf16.msra.mxu0 %v4061
        %4289 = vmatpush.bf16.msra.mxu0 %v4060
        %4290 = vmatpush.bf16.msra.mxu0 %v4059
        %4291 = vmatpush.bf16.msra.mxu0 %v4058
        %4292 = vmatpush.bf16.msra.mxu0 %v4057
        %4293 = vmatpush.bf16.msra.mxu0 %v4056
        %4294 = vmatpush.bf16.msra.mxu0 %v4055
        %4295 = vmatmul.bf16.gmra.mxu0 %v3432
        %v4296 = vpop.f32.mrf.mxu0
        %v4297 = vadd.f32 %v4284, %v4296
        %v4298 = vpop.f32.mrf.mxu0
        %4299 = vdwg.mxu0
        %4300 = vmatpush.bf16.msra.mxu0 %v4070
        %4301 = vmatpush.bf16.msra.mxu0 %v4069
        %4302 = vmatpush.bf16.msra.mxu0 %v4068
        %4303 = vmatpush.bf16.msra.mxu0 %v4067
        %4304 = vmatpush.bf16.msra.mxu0 %v4066
        %4305 = vmatpush.bf16.msra.mxu0 %v4065
        %4306 = vmatpush.bf16.msra.mxu0 %v4064
        %4307 = vmatpush.bf16.msra.mxu0 %v4063
        %4308 = vmatmul.bf16.gmra.mxu0 %v3433
        %v4309 = vpop.f32.mrf.mxu0
        %v4310 = vadd.f32 %v4297, %v4309
        %v4311 = vpop.f32.mrf.mxu0
        %4312 = vdwg.mxu0
        %4313 = vmatpush.bf16.msra.mxu0 %v4078
        %4314 = vmatpush.bf16.msra.mxu0 %v4077
        %4315 = vmatpush.bf16.msra.mxu0 %v4076
        %4316 = vmatpush.bf16.msra.mxu0 %v4075
        %4317 = vmatpush.bf16.msra.mxu0 %v4074
        %4318 = vmatpush.bf16.msra.mxu0 %v4073
        %4319 = vmatpush.bf16.msra.mxu0 %v4072
        %4320 = vmatpush.bf16.msra.mxu0 %v4071
        %4321 = vmatmul.bf16.gmra.mxu0 %v3434
        %v4322 = vpop.f32.mrf.mxu0
        %v4323 = vadd.f32 %v4310, %v4322
        %v4324 = vpop.f32.mrf.mxu0
        %4325 = vdwg.mxu0
        %4326 = vmatpush.bf16.msra.mxu0 0
        %4327 = vmatpush.bf16.msra.mxu0 0
        %4328 = vmatpush.bf16.msra.mxu0 0
        %4329 = vmatpush.bf16.msra.mxu0 %v4181
        %4330 = vmatpush.bf16.msra.mxu0 %v4082
        %4331 = vmatpush.bf16.msra.mxu0 %v4081
        %4332 = vmatpush.bf16.msra.mxu0 %v4080
        %4333 = vmatpush.bf16.msra.mxu0 %v4079
        %4334 = vmatmul.bf16.gmra.mxu0 %v4178
        %v4335 = vpop.f32.mrf.mxu0
        %v4336 = vadd.f32 %v4323, %v4335
        %v4337 = vpop.f32.mrf.mxu0
        %4338 = vdwg.mxu0
        %v4339 = vadd.f32 %v3228, %v4336
        %v4340 = vld [vmem:[%s366] sm:$0xff]
        %4341 = vset.pattern.permute.xlu0 0
        %4342 = vperm.xlu0 %4341, %v4340
        %v4343 = vpop.permute.xlu0 %4342
        %vm4344 = vcmp.eq.s32.totalorder %v4343, %v436
        %vm4345 = vcmp.eq.s32.totalorder %v4343, %v511
        %vm4346 = vcmp.eq.s32.totalorder %v4343, %v512
        %v4347 = vsel %vm4344, 1, 0
        %v4348 = vsel %vm4345, 1, 0
        %v4349 = vsel %vm4346, 1, 0
        %v4350 = vcvt.s32.f32 %v4347
        %v4351 = vcvt.s32.f32 %v4348
        %v4352 = vcvt.s32.f32 %v4349
        %v4353 = vpack.c.bf16 %v4350, %v4350
        %v4354 = vpack.c.bf16 %v4351, %v4351
        %v4355 = vpack.c.bf16 %v4352, %v4352
        %v4356 = vld [vmem:[%s6] sm:$0xf]
        %v4357 = vld [vmem:[%s6 + $0x4] sm:$0xf]
        %v4358 = vld [vmem:[%s6 + $0x8] sm:$0xf]
        %v4359 = vld [vmem:[%s6 + $0xc] sm:$0xf]
        %v4360 = vld [vmem:[%s6 + $0x10] sm:$0xf]
        %v4361 = vld [vmem:[%s6 + $0x14] sm:$0xf]
        %v4362 = vld [vmem:[%s6 + $0x18] sm:$0xf]
        %v4363 = vld [vmem:[%s6 + $0x1c] sm:$0xf]
        %v4364 = vld [vmem:[%s6 + $0x20] sm:$0xf]
        %v4365 = vld [vmem:[%s6 + $0x24] sm:$0xf]
        %v4366 = vld [vmem:[%s6 + $0x28] sm:$0xf]
        %v4367 = vld [vmem:[%s6 + $0x2c] sm:$0xf]
        %v4368 = vld [vmem:[%s6 + $0x30] sm:$0xf]
        %v4369 = vld [vmem:[%s6 + $0x34] sm:$0xf]
        %v4370 = vld [vmem:[%s6 + $0x38] sm:$0xf]
        %v4371 = vld [vmem:[%s6 + $0x3c] sm:$0xf]
        %v4372 = vld [vmem:[%s6 + $0x40] sm:$0xf]
        %v4373 = vld [vmem:[%s6 + $0x44] sm:$0xf]
        %v4374 = vld [vmem:[%s6 + $0x48] sm:$0xf]
        %v4375 = vld [vmem:[%s6 + $0x4c] sm:$0xf]
        %v4376 = vld [vmem:[%s6 + $0x50] sm:$0xf]
        %v4377 = vld [vmem:[%s6 + $0x54] sm:$0xf]
        %v4378 = vld [vmem:[%s6 + $0x58] sm:$0xf]
        %v4379 = vld [vmem:[%s6 + $0x5c] sm:$0xf]
        %v4380 = vld [vmem:[%s6 + $0x60] sm:$0xf]
        %v4381 = vld [vmem:[%s6 + $0x64] sm:$0xf]
        %v4382 = vld [vmem:[%s6 + $0x68] sm:$0xf]
        %v4383 = vld [vmem:[%s6 + $0x6c] sm:$0xf]
        %v4384 = vld [vmem:[%s6 + $0x70] sm:$0xf]
        %v4385 = vld [vmem:[%s6 + $0x74] sm:$0xf]
        %v4386 = vld [vmem:[%s6 + $0x78] sm:$0xf]
        %v4387 = vld [vmem:[%s6 + $0x7c] sm:$0xf]
        %v4388 = vld [vmem:[%s6 + $0x80] sm:$0x3]
        %v4422 = vunpack.c.l.b16 %v4356
        %v4423 = vunpack.c.l.b16 %v4357
        %v4424 = vunpack.c.l.b16 %v4358
        %v4425 = vunpack.c.l.b16 %v4359
        %v4426 = vunpack.c.l.b16 %v4360
        %v4427 = vunpack.c.l.b16 %v4361
        %v4428 = vunpack.c.l.b16 %v4362
        %v4429 = vunpack.c.l.b16 %v4363
        %v4430 = vunpack.c.l.b16 %v4364
        %v4431 = vunpack.c.l.b16 %v4365
        %v4432 = vunpack.c.l.b16 %v4366
        %v4433 = vunpack.c.l.b16 %v4367
        %v4434 = vunpack.c.l.b16 %v4368
        %v4435 = vunpack.c.l.b16 %v4369
        %v4436 = vunpack.c.l.b16 %v4370
        %v4437 = vunpack.c.l.b16 %v4371
        %v4438 = vunpack.c.l.b16 %v4372
        %v4439 = vunpack.c.l.b16 %v4373
        %v4440 = vunpack.c.l.b16 %v4374
        %v4441 = vunpack.c.l.b16 %v4375
        %v4442 = vunpack.c.l.b16 %v4376
        %v4443 = vunpack.c.l.b16 %v4377
        %v4444 = vunpack.c.l.b16 %v4378
        %v4445 = vunpack.c.l.b16 %v4379
        %v4446 = vunpack.c.l.b16 %v4380
        %v4447 = vunpack.c.l.b16 %v4381
        %v4448 = vunpack.c.l.b16 %v4382
        %v4449 = vunpack.c.l.b16 %v4383
        %v4450 = vunpack.c.l.b16 %v4384
        %v4451 = vunpack.c.l.b16 %v4385
        %v4452 = vunpack.c.l.b16 %v4386
        %v4453 = vunpack.c.l.b16 %v4387
        %v4454 = vunpack.c.l.b16 %v4388
        %v4455 = vpack.c.b16 %v4423, %v4422
        %v4456 = vpack.c.b16 %v4425, %v4424
        %v4457 = vpack.c.b16 %v4427, %v4426
        %v4458 = vpack.c.b16 %v4429, %v4428
        %v4459 = vpack.c.b16 %v4431, %v4430
        %v4460 = vpack.c.b16 %v4433, %v4432
        %v4461 = vpack.c.b16 %v4435, %v4434
        %v4462 = vpack.c.b16 %v4437, %v4436
        %v4463 = vpack.c.b16 %v4439, %v4438
        %v4464 = vpack.c.b16 %v4441, %v4440
        %v4465 = vpack.c.b16 %v4443, %v4442
        %v4466 = vpack.c.b16 %v4445, %v4444
        %v4467 = vpack.c.b16 %v4447, %v4446
        %v4468 = vpack.c.b16 %v4449, %v4448
        %v4469 = vpack.c.b16 %v4451, %v4450
        %v4470 = vpack.c.b16 %v4453, %v4452
        %v4471 = vpack.c.b16 %v4454, %v4454
        %vm4488 = vcmask 31744
        %v4490 = vsel %vm4488, %v4355, 0
        %v4493 = vsel %vm2734, %v4471, 0
        %4495 = vmatpush.bf16.msra.mxu0 %v4462
        %4496 = vmatpush.bf16.msra.mxu0 %v4461
        %4497 = vmatpush.bf16.msra.mxu0 %v4460
        %4498 = vmatpush.bf16.msra.mxu0 %v4459
        %4499 = vmatpush.bf16.msra.mxu0 %v4458
        %4500 = vmatpush.bf16.msra.mxu0 %v4457
        %4501 = vmatpush.bf16.msra.mxu0 %v4456
        %4502 = vmatpush.bf16.msra.mxu0 %v4455
        %4503 = vmatmul.bf16.gmra.mxu0 %v4353
        %v4504 = vpop.f32.mrf.mxu0
        %v4505 = vadd.f32 0.0, %v4504
        %v4506 = vpop.f32.mrf.mxu0
        %4507 = vdwg.mxu0
        %4508 = vmatpush.bf16.msra.mxu0 %v4470
        %4509 = vmatpush.bf16.msra.mxu0 %v4469
        %4510 = vmatpush.bf16.msra.mxu0 %v4468
        %4511 = vmatpush.bf16.msra.mxu0 %v4467
        %4512 = vmatpush.bf16.msra.mxu0 %v4466
        %4513 = vmatpush.bf16.msra.mxu0 %v4465
        %4514 = vmatpush.bf16.msra.mxu0 %v4464
        %4515 = vmatpush.bf16.msra.mxu0 %v4463
        %4516 = vmatmul.bf16.gmra.mxu0 %v4354
        %v4517 = vpop.f32.mrf.mxu0
        %v4518 = vadd.f32 %v4505, %v4517
        %v4519 = vpop.f32.mrf.mxu0
        %4520 = vdwg.mxu0
        %4521 = vmatpush.bf16.msra.mxu0 0
        %4522 = vmatpush.bf16.msra.mxu0 0
        %4523 = vmatpush.bf16.msra.mxu0 0
        %4524 = vmatpush.bf16.msra.mxu0 0
        %4525 = vmatpush.bf16.msra.mxu0 0
        %4526 = vmatpush.bf16.msra.mxu0 0
        %4527 = vmatpush.bf16.msra.mxu0 0
        %4528 = vmatpush.bf16.msra.mxu0 %v4493
        %4529 = vmatmul.bf16.gmra.mxu0 %v4490
        %v4530 = vpop.f32.mrf.mxu0
        %v4531 = vadd.f32 %v4518, %v4530
        %v4532 = vpop.f32.mrf.mxu0
        %4533 = vdwg.mxu0
        %4534 = vset.pattern.permute.xlu0 1
        %4535 = vperm.xlu0 %4534, %v4340
        %v4536 = vpop.permute.xlu0 %4535
        %vm4537 = vcmp.eq.s32.totalorder %v4536, %v436
        %vm4538 = vcmp.eq.s32.totalorder %v4536, %v511
        %vm4539 = vcmp.eq.s32.totalorder %v4536, %v512
        %v4540 = vsel %vm4537, 1, 0
        %v4541 = vsel %vm4538, 1, 0
        %v4542 = vsel %vm4539, 1, 0
        %v4543 = vcvt.s32.f32 %v4540
        %v4544 = vcvt.s32.f32 %v4541
        %v4545 = vcvt.s32.f32 %v4542
        %v4546 = vpack.c.bf16 %v4543, %v4543
        %v4547 = vpack.c.bf16 %v4544, %v4544
        %v4548 = vpack.c.bf16 %v4545, %v4545
        %s4549 = scalar_lea.vmem %s6, 132
        %v4550 = vld [vmem:[%s4549] sm:$0xf]
        %v4551 = vld [vmem:[%s4549 + $0x4] sm:$0xf]
        %v4552 = vld [vmem:[%s4549 + $0x8] sm:$0xf]
        %v4553 = vld [vmem:[%s4549 + $0xc] sm:$0xf]
        %v4554 = vld [vmem:[%s4549 + $0x10] sm:$0xf]
        %v4555 = vld [vmem:[%s4549 + $0x14] sm:$0xf]
        %v4556 = vld [vmem:[%s4549 + $0x18] sm:$0xf]
        %v4557 = vld [vmem:[%s4549 + $0x1c] sm:$0xf]
        %v4558 = vld [vmem:[%s4549 + $0x20] sm:$0xf]
        %v4559 = vld [vmem:[%s4549 + $0x24] sm:$0xf]
        %v4560 = vld [vmem:[%s4549 + $0x28] sm:$0xf]
        %v4561 = vld [vmem:[%s4549 + $0x2c] sm:$0xf]
        %v4562 = vld [vmem:[%s4549 + $0x30] sm:$0xf]
        %v4563 = vld [vmem:[%s4549 + $0x34] sm:$0xf]
        %v4564 = vld [vmem:[%s4549 + $0x38] sm:$0xf]
        %v4565 = vld [vmem:[%s4549 + $0x3c] sm:$0xf]
        %v4566 = vld [vmem:[%s4549 + $0x40] sm:$0xf]
        %v4567 = vld [vmem:[%s4549 + $0x44] sm:$0xf]
        %v4568 = vld [vmem:[%s4549 + $0x48] sm:$0xf]
        %v4569 = vld [vmem:[%s4549 + $0x4c] sm:$0xf]
        %v4570 = vld [vmem:[%s4549 + $0x50] sm:$0xf]
        %v4571 = vld [vmem:[%s4549 + $0x54] sm:$0xf]
        %v4572 = vld [vmem:[%s4549 + $0x58] sm:$0xf]
        %v4573 = vld [vmem:[%s4549 + $0x5c] sm:$0xf]
        %v4574 = vld [vmem:[%s4549 + $0x60] sm:$0xf]
        %v4575 = vld [vmem:[%s4549 + $0x64] sm:$0xf]
        %v4576 = vld [vmem:[%s4549 + $0x68] sm:$0xf]
        %v4577 = vld [vmem:[%s4549 + $0x6c] sm:$0xf]
        %v4578 = vld [vmem:[%s4549 + $0x70] sm:$0xf]
        %v4579 = vld [vmem:[%s4549 + $0x74] sm:$0xf]
        %v4580 = vld [vmem:[%s4549 + $0x78] sm:$0xf]
        %v4581 = vld [vmem:[%s4549 + $0x7c] sm:$0xf]
        %v4582 = vld [vmem:[%s4549 + $0x80] sm:$0x3]
        %v4616 = vunpack.c.l.b16 %v4550
        %v4617 = vunpack.c.l.b16 %v4551
        %v4618 = vunpack.c.l.b16 %v4552
        %v4619 = vunpack.c.l.b16 %v4553
        %v4620 = vunpack.c.l.b16 %v4554
        %v4621 = vunpack.c.l.b16 %v4555
        %v4622 = vunpack.c.l.b16 %v4556
        %v4623 = vunpack.c.l.b16 %v4557
        %v4624 = vunpack.c.l.b16 %v4558
        %v4625 = vunpack.c.l.b16 %v4559
        %v4626 = vunpack.c.l.b16 %v4560
        %v4627 = vunpack.c.l.b16 %v4561
        %v4628 = vunpack.c.l.b16 %v4562
        %v4629 = vunpack.c.l.b16 %v4563
        %v4630 = vunpack.c.l.b16 %v4564
        %v4631 = vunpack.c.l.b16 %v4565
        %v4632 = vunpack.c.l.b16 %v4566
        %v4633 = vunpack.c.l.b16 %v4567
        %v4634 = vunpack.c.l.b16 %v4568
        %v4635 = vunpack.c.l.b16 %v4569
        %v4636 = vunpack.c.l.b16 %v4570
        %v4637 = vunpack.c.l.b16 %v4571
        %v4638 = vunpack.c.l.b16 %v4572
        %v4639 = vunpack.c.l.b16 %v4573
        %v4640 = vunpack.c.l.b16 %v4574
        %v4641 = vunpack.c.l.b16 %v4575
        %v4642 = vunpack.c.l.b16 %v4576
        %v4643 = vunpack.c.l.b16 %v4577
        %v4644 = vunpack.c.l.b16 %v4578
        %v4645 = vunpack.c.l.b16 %v4579
        %v4646 = vunpack.c.l.b16 %v4580
        %v4647 = vunpack.c.l.b16 %v4581
        %v4648 = vunpack.c.l.b16 %v4582
        %v4649 = vpack.c.b16 %v4617, %v4616
        %v4650 = vpack.c.b16 %v4619, %v4618
        %v4651 = vpack.c.b16 %v4621, %v4620
        %v4652 = vpack.c.b16 %v4623, %v4622
        %v4653 = vpack.c.b16 %v4625, %v4624
        %v4654 = vpack.c.b16 %v4627, %v4626
        %v4655 = vpack.c.b16 %v4629, %v4628
        %v4656 = vpack.c.b16 %v4631, %v4630
        %v4657 = vpack.c.b16 %v4633, %v4632
        %v4658 = vpack.c.b16 %v4635, %v4634
        %v4659 = vpack.c.b16 %v4637, %v4636
        %v4660 = vpack.c.b16 %v4639, %v4638
        %v4661 = vpack.c.b16 %v4641, %v4640
        %v4662 = vpack.c.b16 %v4643, %v4642
        %v4663 = vpack.c.b16 %v4645, %v4644
        %v4664 = vpack.c.b16 %v4647, %v4646
        %v4665 = vpack.c.b16 %v4648, %v4648
        %v4683 = vsel %vm4488, %v4548, 0
        %v4686 = vsel %vm2734, %v4665, 0
        %4688 = vmatpush.bf16.msra.mxu0 %v4656
        %4689 = vmatpush.bf16.msra.mxu0 %v4655
        %4690 = vmatpush.bf16.msra.mxu0 %v4654
        %4691 = vmatpush.bf16.msra.mxu0 %v4653
        %4692 = vmatpush.bf16.msra.mxu0 %v4652
        %4693 = vmatpush.bf16.msra.mxu0 %v4651
        %4694 = vmatpush.bf16.msra.mxu0 %v4650
        %4695 = vmatpush.bf16.msra.mxu0 %v4649
        %4696 = vmatmul.bf16.gmra.mxu0 %v4546
        %v4697 = vpop.f32.mrf.mxu0
        %v4698 = vadd.f32 0.0, %v4697
        %v4699 = vpop.f32.mrf.mxu0
        %4700 = vdwg.mxu0
        %4701 = vmatpush.bf16.msra.mxu0 %v4664
        %4702 = vmatpush.bf16.msra.mxu0 %v4663
        %4703 = vmatpush.bf16.msra.mxu0 %v4662
        %4704 = vmatpush.bf16.msra.mxu0 %v4661
        %4705 = vmatpush.bf16.msra.mxu0 %v4660
        %4706 = vmatpush.bf16.msra.mxu0 %v4659
        %4707 = vmatpush.bf16.msra.mxu0 %v4658
        %4708 = vmatpush.bf16.msra.mxu0 %v4657
        %4709 = vmatmul.bf16.gmra.mxu0 %v4547
        %v4710 = vpop.f32.mrf.mxu0
        %v4711 = vadd.f32 %v4698, %v4710
        %v4712 = vpop.f32.mrf.mxu0
        %4713 = vdwg.mxu0
        %4714 = vmatpush.bf16.msra.mxu0 0
        %4715 = vmatpush.bf16.msra.mxu0 0
        %4716 = vmatpush.bf16.msra.mxu0 0
        %4717 = vmatpush.bf16.msra.mxu0 0
        %4718 = vmatpush.bf16.msra.mxu0 0
        %4719 = vmatpush.bf16.msra.mxu0 0
        %4720 = vmatpush.bf16.msra.mxu0 0
        %4721 = vmatpush.bf16.msra.mxu0 %v4686
        %4722 = vmatmul.bf16.gmra.mxu0 %v4683
        %v4723 = vpop.f32.mrf.mxu0
        %v4724 = vadd.f32 %v4711, %v4723
        %v4725 = vpop.f32.mrf.mxu0
        %4726 = vdwg.mxu0
        %4727 = vset.pattern.permute.xlu0 2
        %4728 = vperm.xlu0 %4727, %v4340
        %v4729 = vpop.permute.xlu0 %4728
        %vm4730 = vcmp.eq.s32.totalorder %v4729, %v436
        %vm4731 = vcmp.eq.s32.totalorder %v4729, %v511
        %vm4732 = vcmp.eq.s32.totalorder %v4729, %v512
        %v4733 = vsel %vm4730, 1, 0
        %v4734 = vsel %vm4731, 1, 0
        %v4735 = vsel %vm4732, 1, 0
        %v4736 = vcvt.s32.f32 %v4733
        %v4737 = vcvt.s32.f32 %v4734
        %v4738 = vcvt.s32.f32 %v4735
        %v4739 = vpack.c.bf16 %v4736, %v4736
        %v4740 = vpack.c.bf16 %v4737, %v4737
        %v4741 = vpack.c.bf16 %v4738, %v4738
        %s4742 = scalar_lea.vmem %s6, 264
        %v4743 = vld [vmem:[%s4742] sm:$0xf]
        %v4744 = vld [vmem:[%s4742 + $0x4] sm:$0xf]
        %v4745 = vld [vmem:[%s4742 + $0x8] sm:$0xf]
        %v4746 = vld [vmem:[%s4742 + $0xc] sm:$0xf]
        %v4747 = vld [vmem:[%s4742 + $0x10] sm:$0xf]
        %v4748 = vld [vmem:[%s4742 + $0x14] sm:$0xf]
        %v4749 = vld [vmem:[%s4742 + $0x18] sm:$0xf]
        %v4750 = vld [vmem:[%s4742 + $0x1c] sm:$0xf]
        %v4751 = vld [vmem:[%s4742 + $0x20] sm:$0xf]
        %v4752 = vld [vmem:[%s4742 + $0x24] sm:$0xf]
        %v4753 = vld [vmem:[%s4742 + $0x28] sm:$0xf]
        %v4754 = vld [vmem:[%s4742 + $0x2c] sm:$0xf]
        %v4755 = vld [vmem:[%s4742 + $0x30] sm:$0xf]
        %v4756 = vld [vmem:[%s4742 + $0x34] sm:$0xf]
        %v4757 = vld [vmem:[%s4742 + $0x38] sm:$0xf]
        %v4758 = vld [vmem:[%s4742 + $0x3c] sm:$0xf]
        %v4759 = vld [vmem:[%s4742 + $0x40] sm:$0xf]
        %v4760 = vld [vmem:[%s4742 + $0x44] sm:$0xf]
        %v4761 = vld [vmem:[%s4742 + $0x48] sm:$0xf]
        %v4762 = vld [vmem:[%s4742 + $0x4c] sm:$0xf]
        %v4763 = vld [vmem:[%s4742 + $0x50] sm:$0xf]
        %v4764 = vld [vmem:[%s4742 + $0x54] sm:$0xf]
        %v4765 = vld [vmem:[%s4742 + $0x58] sm:$0xf]
        %v4766 = vld [vmem:[%s4742 + $0x5c] sm:$0xf]
        %v4767 = vld [vmem:[%s4742 + $0x60] sm:$0xf]
        %v4768 = vld [vmem:[%s4742 + $0x64] sm:$0xf]
        %v4769 = vld [vmem:[%s4742 + $0x68] sm:$0xf]
        %v4770 = vld [vmem:[%s4742 + $0x6c] sm:$0xf]
        %v4771 = vld [vmem:[%s4742 + $0x70] sm:$0xf]
        %v4772 = vld [vmem:[%s4742 + $0x74] sm:$0xf]
        %v4773 = vld [vmem:[%s4742 + $0x78] sm:$0xf]
        %v4774 = vld [vmem:[%s4742 + $0x7c] sm:$0xf]
        %v4775 = vld [vmem:[%s4742 + $0x80] sm:$0x3]
        %v4809 = vunpack.c.l.b16 %v4743
        %v4810 = vunpack.c.l.b16 %v4744
        %v4811 = vunpack.c.l.b16 %v4745
        %v4812 = vunpack.c.l.b16 %v4746
        %v4813 = vunpack.c.l.b16 %v4747
        %v4814 = vunpack.c.l.b16 %v4748
        %v4815 = vunpack.c.l.b16 %v4749
        %v4816 = vunpack.c.l.b16 %v4750
        %v4817 = vunpack.c.l.b16 %v4751
        %v4818 = vunpack.c.l.b16 %v4752
        %v4819 = vunpack.c.l.b16 %v4753
        %v4820 = vunpack.c.l.b16 %v4754
        %v4821 = vunpack.c.l.b16 %v4755
        %v4822 = vunpack.c.l.b16 %v4756
        %v4823 = vunpack.c.l.b16 %v4757
        %v4824 = vunpack.c.l.b16 %v4758
        %v4825 = vunpack.c.l.b16 %v4759
        %v4826 = vunpack.c.l.b16 %v4760
        %v4827 = vunpack.c.l.b16 %v4761
        %v4828 = vunpack.c.l.b16 %v4762
        %v4829 = vunpack.c.l.b16 %v4763
        %v4830 = vunpack.c.l.b16 %v4764
        %v4831 = vunpack.c.l.b16 %v4765
        %v4832 = vunpack.c.l.b16 %v4766
        %v4833 = vunpack.c.l.b16 %v4767
        %v4834 = vunpack.c.l.b16 %v4768
        %v4835 = vunpack.c.l.b16 %v4769
        %v4836 = vunpack.c.l.b16 %v4770
        %v4837 = vunpack.c.l.b16 %v4771
        %v4838 = vunpack.c.l.b16 %v4772
        %v4839 = vunpack.c.l.b16 %v4773
        %v4840 = vunpack.c.l.b16 %v4774
        %v4841 = vunpack.c.l.b16 %v4775
        %v4842 = vpack.c.b16 %v4810, %v4809
        %v4843 = vpack.c.b16 %v4812, %v4811
        %v4844 = vpack.c.b16 %v4814, %v4813
        %v4845 = vpack.c.b16 %v4816, %v4815
        %v4846 = vpack.c.b16 %v4818, %v4817
        %v4847 = vpack.c.b16 %v4820, %v4819
        %v4848 = vpack.c.b16 %v4822, %v4821
        %v4849 = vpack.c.b16 %v4824, %v4823
        %v4850 = vpack.c.b16 %v4826, %v4825
        %v4851 = vpack.c.b16 %v4828, %v4827
        %v4852 = vpack.c.b16 %v4830, %v4829
        %v4853 = vpack.c.b16 %v4832, %v4831
        %v4854 = vpack.c.b16 %v4834, %v4833
        %v4855 = vpack.c.b16 %v4836, %v4835
        %v4856 = vpack.c.b16 %v4838, %v4837
        %v4857 = vpack.c.b16 %v4840, %v4839
        %v4858 = vpack.c.b16 %v4841, %v4841
        %v4876 = vsel %vm4488, %v4741, 0
        %v4879 = vsel %vm2734, %v4858, 0
        %4881 = vmatpush.bf16.msra.mxu0 %v4849
        %4882 = vmatpush.bf16.msra.mxu0 %v4848
        %4883 = vmatpush.bf16.msra.mxu0 %v4847
        %4884 = vmatpush.bf16.msra.mxu0 %v4846
        %4885 = vmatpush.bf16.msra.mxu0 %v4845
        %4886 = vmatpush.bf16.msra.mxu0 %v4844
        %4887 = vmatpush.bf16.msra.mxu0 %v4843
        %4888 = vmatpush.bf16.msra.mxu0 %v4842
        %4889 = vmatmul.bf16.gmra.mxu0 %v4739
        %v4890 = vpop.f32.mrf.mxu0
        %v4891 = vadd.f32 0.0, %v4890
        %v4892 = vpop.f32.mrf.mxu0
        %4893 = vdwg.mxu0
        %4894 = vmatpush.bf16.msra.mxu0 %v4857
        %4895 = vmatpush.bf16.msra.mxu0 %v4856
        %4896 = vmatpush.bf16.msra.mxu0 %v4855
        %4897 = vmatpush.bf16.msra.mxu0 %v4854
        %4898 = vmatpush.bf16.msra.mxu0 %v4853
        %4899 = vmatpush.bf16.msra.mxu0 %v4852
        %4900 = vmatpush.bf16.msra.mxu0 %v4851
        %4901 = vmatpush.bf16.msra.mxu0 %v4850
        %4902 = vmatmul.bf16.gmra.mxu0 %v4740
        %v4903 = vpop.f32.mrf.mxu0
        %v4904 = vadd.f32 %v4891, %v4903
        %v4905 = vpop.f32.mrf.mxu0
        %4906 = vdwg.mxu0
        %4907 = vmatpush.bf16.msra.mxu0 0
        %4908 = vmatpush.bf16.msra.mxu0 0
        %4909 = vmatpush.bf16.msra.mxu0 0
        %4910 = vmatpush.bf16.msra.mxu0 0
        %4911 = vmatpush.bf16.msra.mxu0 0
        %4912 = vmatpush.bf16.msra.mxu0 0
        %4913 = vmatpush.bf16.msra.mxu0 0
        %4914 = vmatpush.bf16.msra.mxu0 %v4879
        %4915 = vmatmul.bf16.gmra.mxu0 %v4876
        %v4916 = vpop.f32.mrf.mxu0
        %v4917 = vadd.f32 %v4904, %v4916
        %v4918 = vpop.f32.mrf.mxu0
        %4919 = vdwg.mxu0
        %4920 = vset.pattern.permute.xlu0 3
        %4921 = vperm.xlu0 %4920, %v4340
        %v4922 = vpop.permute.xlu0 %4921
        %vm4923 = vcmp.eq.s32.totalorder %v4922, %v436
        %vm4924 = vcmp.eq.s32.totalorder %v4922, %v511
        %vm4925 = vcmp.eq.s32.totalorder %v4922, %v512
        %v4926 = vsel %vm4923, 1, 0
        %v4927 = vsel %vm4924, 1, 0
        %v4928 = vsel %vm4925, 1, 0
        %v4929 = vcvt.s32.f32 %v4926
        %v4930 = vcvt.s32.f32 %v4927
        %v4931 = vcvt.s32.f32 %v4928
        %v4932 = vpack.c.bf16 %v4929, %v4929
        %v4933 = vpack.c.bf16 %v4930, %v4930
        %v4934 = vpack.c.bf16 %v4931, %v4931
        %s4935 = scalar_lea.vmem %s6, 396
        %v4936 = vld [vmem:[%s4935] sm:$0xf]
        %v4937 = vld [vmem:[%s4935 + $0x4] sm:$0xf]
        %v4938 = vld [vmem:[%s4935 + $0x8] sm:$0xf]
        %v4939 = vld [vmem:[%s4935 + $0xc] sm:$0xf]
        %v4940 = vld [vmem:[%s4935 + $0x10] sm:$0xf]
        %v4941 = vld [vmem:[%s4935 + $0x14] sm:$0xf]
        %v4942 = vld [vmem:[%s4935 + $0x18] sm:$0xf]
        %v4943 = vld [vmem:[%s4935 + $0x1c] sm:$0xf]
        %v4944 = vld [vmem:[%s4935 + $0x20] sm:$0xf]
        %v4945 = vld [vmem:[%s4935 + $0x24] sm:$0xf]
        %v4946 = vld [vmem:[%s4935 + $0x28] sm:$0xf]
        %v4947 = vld [vmem:[%s4935 + $0x2c] sm:$0xf]
        %v4948 = vld [vmem:[%s4935 + $0x30] sm:$0xf]
        %v4949 = vld [vmem:[%s4935 + $0x34] sm:$0xf]
        %v4950 = vld [vmem:[%s4935 + $0x38] sm:$0xf]
        %v4951 = vld [vmem:[%s4935 + $0x3c] sm:$0xf]
        %v4952 = vld [vmem:[%s4935 + $0x40] sm:$0xf]
        %v4953 = vld [vmem:[%s4935 + $0x44] sm:$0xf]
        %v4954 = vld [vmem:[%s4935 + $0x48] sm:$0xf]
        %v4955 = vld [vmem:[%s4935 + $0x4c] sm:$0xf]
        %v4956 = vld [vmem:[%s4935 + $0x50] sm:$0xf]
        %v4957 = vld [vmem:[%s4935 + $0x54] sm:$0xf]
        %v4958 = vld [vmem:[%s4935 + $0x58] sm:$0xf]
        %v4959 = vld [vmem:[%s4935 + $0x5c] sm:$0xf]
        %v4960 = vld [vmem:[%s4935 + $0x60] sm:$0xf]
        %v4961 = vld [vmem:[%s4935 + $0x64] sm:$0xf]
        %v4962 = vld [vmem:[%s4935 + $0x68] sm:$0xf]
        %v4963 = vld [vmem:[%s4935 + $0x6c] sm:$0xf]
        %v4964 = vld [vmem:[%s4935 + $0x70] sm:$0xf]
        %v4965 = vld [vmem:[%s4935 + $0x74] sm:$0xf]
        %v4966 = vld [vmem:[%s4935 + $0x78] sm:$0xf]
        %v4967 = vld [vmem:[%s4935 + $0x7c] sm:$0xf]
        %v4968 = vld [vmem:[%s4935 + $0x80] sm:$0x3]
        %v5002 = vunpack.c.l.b16 %v4936
        %v5003 = vunpack.c.l.b16 %v4937
        %v5004 = vunpack.c.l.b16 %v4938
        %v5005 = vunpack.c.l.b16 %v4939
        %v5006 = vunpack.c.l.b16 %v4940
        %v5007 = vunpack.c.l.b16 %v4941
        %v5008 = vunpack.c.l.b16 %v4942
        %v5009 = vunpack.c.l.b16 %v4943
        %v5010 = vunpack.c.l.b16 %v4944
        %v5011 = vunpack.c.l.b16 %v4945
        %v5012 = vunpack.c.l.b16 %v4946
        %v5013 = vunpack.c.l.b16 %v4947
        %v5014 = vunpack.c.l.b16 %v4948
        %v5015 = vunpack.c.l.b16 %v4949
        %v5016 = vunpack.c.l.b16 %v4950
        %v5017 = vunpack.c.l.b16 %v4951
        %v5018 = vunpack.c.l.b16 %v4952
        %v5019 = vunpack.c.l.b16 %v4953
        %v5020 = vunpack.c.l.b16 %v4954
        %v5021 = vunpack.c.l.b16 %v4955
        %v5022 = vunpack.c.l.b16 %v4956
        %v5023 = vunpack.c.l.b16 %v4957
        %v5024 = vunpack.c.l.b16 %v4958
        %v5025 = vunpack.c.l.b16 %v4959
        %v5026 = vunpack.c.l.b16 %v4960
        %v5027 = vunpack.c.l.b16 %v4961
        %v5028 = vunpack.c.l.b16 %v4962
        %v5029 = vunpack.c.l.b16 %v4963
        %v5030 = vunpack.c.l.b16 %v4964
        %v5031 = vunpack.c.l.b16 %v4965
        %v5032 = vunpack.c.l.b16 %v4966
        %v5033 = vunpack.c.l.b16 %v4967
        %v5034 = vunpack.c.l.b16 %v4968
        %v5035 = vpack.c.b16 %v5003, %v5002
        %v5036 = vpack.c.b16 %v5005, %v5004
        %v5037 = vpack.c.b16 %v5007, %v5006
        %v5038 = vpack.c.b16 %v5009, %v5008
        %v5039 = vpack.c.b16 %v5011, %v5010
        %v5040 = vpack.c.b16 %v5013, %v5012
        %v5041 = vpack.c.b16 %v5015, %v5014
        %v5042 = vpack.c.b16 %v5017, %v5016
        %v5043 = vpack.c.b16 %v5019, %v5018
        %v5044 = vpack.c.b16 %v5021, %v5020
        %v5045 = vpack.c.b16 %v5023, %v5022
        %v5046 = vpack.c.b16 %v5025, %v5024
        %v5047 = vpack.c.b16 %v5027, %v5026
        %v5048 = vpack.c.b16 %v5029, %v5028
        %v5049 = vpack.c.b16 %v5031, %v5030
        %v5050 = vpack.c.b16 %v5033, %v5032
        %v5051 = vpack.c.b16 %v5034, %v5034
        %v5069 = vsel %vm4488, %v4934, 0
        %v5072 = vsel %vm2734, %v5051, 0
        %5074 = vmatpush.bf16.msra.mxu0 %v5042
        %5075 = vmatpush.bf16.msra.mxu0 %v5041
        %5076 = vmatpush.bf16.msra.mxu0 %v5040
        %5077 = vmatpush.bf16.msra.mxu0 %v5039
        %5078 = vmatpush.bf16.msra.mxu0 %v5038
        %5079 = vmatpush.bf16.msra.mxu0 %v5037
        %5080 = vmatpush.bf16.msra.mxu0 %v5036
        %5081 = vmatpush.bf16.msra.mxu0 %v5035
        %5082 = vmatmul.bf16.gmra.mxu0 %v4932
        %v5083 = vpop.f32.mrf.mxu0
        %v5084 = vadd.f32 0.0, %v5083
        %v5085 = vpop.f32.mrf.mxu0
        %5086 = vdwg.mxu0
        %5087 = vmatpush.bf16.msra.mxu0 %v5050
        %5088 = vmatpush.bf16.msra.mxu0 %v5049
        %5089 = vmatpush.bf16.msra.mxu0 %v5048
        %5090 = vmatpush.bf16.msra.mxu0 %v5047
        %5091 = vmatpush.bf16.msra.mxu0 %v5046
        %5092 = vmatpush.bf16.msra.mxu0 %v5045
        %5093 = vmatpush.bf16.msra.mxu0 %v5044
        %5094 = vmatpush.bf16.msra.mxu0 %v5043
        %5095 = vmatmul.bf16.gmra.mxu0 %v4933
        %v5096 = vpop.f32.mrf.mxu0
        %v5097 = vadd.f32 %v5084, %v5096
        %v5098 = vpop.f32.mrf.mxu0
        %5099 = vdwg.mxu0
        %5100 = vmatpush.bf16.msra.mxu0 0
        %5101 = vmatpush.bf16.msra.mxu0 0
        %5102 = vmatpush.bf16.msra.mxu0 0
        %5103 = vmatpush.bf16.msra.mxu0 0
        %5104 = vmatpush.bf16.msra.mxu0 0
        %5105 = vmatpush.bf16.msra.mxu0 0
        %5106 = vmatpush.bf16.msra.mxu0 0
        %5107 = vmatpush.bf16.msra.mxu0 %v5072
        %5108 = vmatmul.bf16.gmra.mxu0 %v5069
        %v5109 = vpop.f32.mrf.mxu0
        %v5110 = vadd.f32 %v5097, %v5109
        %v5111 = vpop.f32.mrf.mxu0
        %5112 = vdwg.mxu0
        %5113 = vset.pattern.permute.xlu0 4
        %5114 = vperm.xlu0 %5113, %v4340
        %v5115 = vpop.permute.xlu0 %5114
        %vm5116 = vcmp.eq.s32.totalorder %v5115, %v436
        %vm5117 = vcmp.eq.s32.totalorder %v5115, %v511
        %vm5118 = vcmp.eq.s32.totalorder %v5115, %v512
        %v5119 = vsel %vm5116, 1, 0
        %v5120 = vsel %vm5117, 1, 0
        %v5121 = vsel %vm5118, 1, 0
        %v5122 = vcvt.s32.f32 %v5119
        %v5123 = vcvt.s32.f32 %v5120
        %v5124 = vcvt.s32.f32 %v5121
        %v5125 = vpack.c.bf16 %v5122, %v5122
        %v5126 = vpack.c.bf16 %v5123, %v5123
        %v5127 = vpack.c.bf16 %v5124, %v5124
        %s5128 = scalar_lea.vmem %s6, 528
        %v5129 = vld [vmem:[%s5128] sm:$0xf]
        %v5130 = vld [vmem:[%s5128 + $0x4] sm:$0xf]
        %v5131 = vld [vmem:[%s5128 + $0x8] sm:$0xf]
        %v5132 = vld [vmem:[%s5128 + $0xc] sm:$0xf]
        %v5133 = vld [vmem:[%s5128 + $0x10] sm:$0xf]
        %v5134 = vld [vmem:[%s5128 + $0x14] sm:$0xf]
        %v5135 = vld [vmem:[%s5128 + $0x18] sm:$0xf]
        %v5136 = vld [vmem:[%s5128 + $0x1c] sm:$0xf]
        %v5137 = vld [vmem:[%s5128 + $0x20] sm:$0xf]
        %v5138 = vld [vmem:[%s5128 + $0x24] sm:$0xf]
        %v5139 = vld [vmem:[%s5128 + $0x28] sm:$0xf]
        %v5140 = vld [vmem:[%s5128 + $0x2c] sm:$0xf]
        %v5141 = vld [vmem:[%s5128 + $0x30] sm:$0xf]
        %v5142 = vld [vmem:[%s5128 + $0x34] sm:$0xf]
        %v5143 = vld [vmem:[%s5128 + $0x38] sm:$0xf]
        %v5144 = vld [vmem:[%s5128 + $0x3c] sm:$0xf]
        %v5145 = vld [vmem:[%s5128 + $0x40] sm:$0xf]
        %v5146 = vld [vmem:[%s5128 + $0x44] sm:$0xf]
        %v5147 = vld [vmem:[%s5128 + $0x48] sm:$0xf]
        %v5148 = vld [vmem:[%s5128 + $0x4c] sm:$0xf]
        %v5149 = vld [vmem:[%s5128 + $0x50] sm:$0xf]
        %v5150 = vld [vmem:[%s5128 + $0x54] sm:$0xf]
        %v5151 = vld [vmem:[%s5128 + $0x58] sm:$0xf]
        %v5152 = vld [vmem:[%s5128 + $0x5c] sm:$0xf]
        %v5153 = vld [vmem:[%s5128 + $0x60] sm:$0xf]
        %v5154 = vld [vmem:[%s5128 + $0x64] sm:$0xf]
        %v5155 = vld [vmem:[%s5128 + $0x68] sm:$0xf]
        %v5156 = vld [vmem:[%s5128 + $0x6c] sm:$0xf]
        %v5157 = vld [vmem:[%s5128 + $0x70] sm:$0xf]
        %v5158 = vld [vmem:[%s5128 + $0x74] sm:$0xf]
        %v5159 = vld [vmem:[%s5128 + $0x78] sm:$0xf]
        %v5160 = vld [vmem:[%s5128 + $0x7c] sm:$0xf]
        %v5161 = vld [vmem:[%s5128 + $0x80] sm:$0x3]
        %v5195 = vunpack.c.l.b16 %v5129
        %v5196 = vunpack.c.l.b16 %v5130
        %v5197 = vunpack.c.l.b16 %v5131
        %v5198 = vunpack.c.l.b16 %v5132
        %v5199 = vunpack.c.l.b16 %v5133
        %v5200 = vunpack.c.l.b16 %v5134
        %v5201 = vunpack.c.l.b16 %v5135
        %v5202 = vunpack.c.l.b16 %v5136
        %v5203 = vunpack.c.l.b16 %v5137
        %v5204 = vunpack.c.l.b16 %v5138
        %v5205 = vunpack.c.l.b16 %v5139
        %v5206 = vunpack.c.l.b16 %v5140
        %v5207 = vunpack.c.l.b16 %v5141
        %v5208 = vunpack.c.l.b16 %v5142
        %v5209 = vunpack.c.l.b16 %v5143
        %v5210 = vunpack.c.l.b16 %v5144
        %v5211 = vunpack.c.l.b16 %v5145
        %v5212 = vunpack.c.l.b16 %v5146
        %v5213 = vunpack.c.l.b16 %v5147
        %v5214 = vunpack.c.l.b16 %v5148
        %v5215 = vunpack.c.l.b16 %v5149
        %v5216 = vunpack.c.l.b16 %v5150
        %v5217 = vunpack.c.l.b16 %v5151
        %v5218 = vunpack.c.l.b16 %v5152
        %v5219 = vunpack.c.l.b16 %v5153
        %v5220 = vunpack.c.l.b16 %v5154
        %v5221 = vunpack.c.l.b16 %v5155
        %v5222 = vunpack.c.l.b16 %v5156
        %v5223 = vunpack.c.l.b16 %v5157
        %v5224 = vunpack.c.l.b16 %v5158
        %v5225 = vunpack.c.l.b16 %v5159
        %v5226 = vunpack.c.l.b16 %v5160
        %v5227 = vunpack.c.l.b16 %v5161
        %v5228 = vpack.c.b16 %v5196, %v5195
        %v5229 = vpack.c.b16 %v5198, %v5197
        %v5230 = vpack.c.b16 %v5200, %v5199
        %v5231 = vpack.c.b16 %v5202, %v5201
        %v5232 = vpack.c.b16 %v5204, %v5203
        %v5233 = vpack.c.b16 %v5206, %v5205
        %v5234 = vpack.c.b16 %v5208, %v5207
        %v5235 = vpack.c.b16 %v5210, %v5209
        %v5236 = vpack.c.b16 %v5212, %v5211
        %v5237 = vpack.c.b16 %v5214, %v5213
        %v5238 = vpack.c.b16 %v5216, %v5215
        %v5239 = vpack.c.b16 %v5218, %v5217
        %v5240 = vpack.c.b16 %v5220, %v5219
        %v5241 = vpack.c.b16 %v5222, %v5221
        %v5242 = vpack.c.b16 %v5224, %v5223
        %v5243 = vpack.c.b16 %v5226, %v5225
        %v5244 = vpack.c.b16 %v5227, %v5227
        %v5262 = vsel %vm4488, %v5127, 0
        %v5265 = vsel %vm2734, %v5244, 0
        %5267 = vmatpush.bf16.msra.mxu0 %v5235
        %5268 = vmatpush.bf16.msra.mxu0 %v5234
        %5269 = vmatpush.bf16.msra.mxu0 %v5233
        %5270 = vmatpush.bf16.msra.mxu0 %v5232
        %5271 = vmatpush.bf16.msra.mxu0 %v5231
        %5272 = vmatpush.bf16.msra.mxu0 %v5230
        %5273 = vmatpush.bf16.msra.mxu0 %v5229
        %5274 = vmatpush.bf16.msra.mxu0 %v5228
        %5275 = vmatmul.bf16.gmra.mxu0 %v5125
        %v5276 = vpop.f32.mrf.mxu0
        %v5277 = vadd.f32 0.0, %v5276
        %v5278 = vpop.f32.mrf.mxu0
        %5279 = vdwg.mxu0
        %5280 = vmatpush.bf16.msra.mxu0 %v5243
        %5281 = vmatpush.bf16.msra.mxu0 %v5242
        %5282 = vmatpush.bf16.msra.mxu0 %v5241
        %5283 = vmatpush.bf16.msra.mxu0 %v5240
        %5284 = vmatpush.bf16.msra.mxu0 %v5239
        %5285 = vmatpush.bf16.msra.mxu0 %v5238
        %5286 = vmatpush.bf16.msra.mxu0 %v5237
        %5287 = vmatpush.bf16.msra.mxu0 %v5236
        %5288 = vmatmul.bf16.gmra.mxu0 %v5126
        %v5289 = vpop.f32.mrf.mxu0
        %v5290 = vadd.f32 %v5277, %v5289
        %v5291 = vpop.f32.mrf.mxu0
        %5292 = vdwg.mxu0
        %5293 = vmatpush.bf16.msra.mxu0 0
        %5294 = vmatpush.bf16.msra.mxu0 0
        %5295 = vmatpush.bf16.msra.mxu0 0
        %5296 = vmatpush.bf16.msra.mxu0 0
        %5297 = vmatpush.bf16.msra.mxu0 0
        %5298 = vmatpush.bf16.msra.mxu0 0
        %5299 = vmatpush.bf16.msra.mxu0 0
        %5300 = vmatpush.bf16.msra.mxu0 %v5265
        %5301 = vmatmul.bf16.gmra.mxu0 %v5262
        %v5302 = vpop.f32.mrf.mxu0
        %v5303 = vadd.f32 %v5290, %v5302
        %v5304 = vpop.f32.mrf.mxu0
        %5305 = vdwg.mxu0
        %5306 = vset.pattern.permute.xlu0 5
        %5307 = vperm.xlu0 %5306, %v4340
        %v5308 = vpop.permute.xlu0 %5307
        %vm5309 = vcmp.eq.s32.totalorder %v5308, %v436
        %vm5310 = vcmp.eq.s32.totalorder %v5308, %v511
        %vm5311 = vcmp.eq.s32.totalorder %v5308, %v512
        %v5312 = vsel %vm5309, 1, 0
        %v5313 = vsel %vm5310, 1, 0
        %v5314 = vsel %vm5311, 1, 0
        %v5315 = vcvt.s32.f32 %v5312
        %v5316 = vcvt.s32.f32 %v5313
        %v5317 = vcvt.s32.f32 %v5314
        %v5318 = vpack.c.bf16 %v5315, %v5315
        %v5319 = vpack.c.bf16 %v5316, %v5316
        %v5320 = vpack.c.bf16 %v5317, %v5317
        %s5321 = scalar_lea.vmem %s6, 660
        %v5322 = vld [vmem:[%s5321] sm:$0xf]
        %v5323 = vld [vmem:[%s5321 + $0x4] sm:$0xf]
        %v5324 = vld [vmem:[%s5321 + $0x8] sm:$0xf]
        %v5325 = vld [vmem:[%s5321 + $0xc] sm:$0xf]
        %v5326 = vld [vmem:[%s5321 + $0x10] sm:$0xf]
        %v5327 = vld [vmem:[%s5321 + $0x14] sm:$0xf]
        %v5328 = vld [vmem:[%s5321 + $0x18] sm:$0xf]
        %v5329 = vld [vmem:[%s5321 + $0x1c] sm:$0xf]
        %v5330 = vld [vmem:[%s5321 + $0x20] sm:$0xf]
        %v5331 = vld [vmem:[%s5321 + $0x24] sm:$0xf]
        %v5332 = vld [vmem:[%s5321 + $0x28] sm:$0xf]
        %v5333 = vld [vmem:[%s5321 + $0x2c] sm:$0xf]
        %v5334 = vld [vmem:[%s5321 + $0x30] sm:$0xf]
        %v5335 = vld [vmem:[%s5321 + $0x34] sm:$0xf]
        %v5336 = vld [vmem:[%s5321 + $0x38] sm:$0xf]
        %v5337 = vld [vmem:[%s5321 + $0x3c] sm:$0xf]
        %v5338 = vld [vmem:[%s5321 + $0x40] sm:$0xf]
        %v5339 = vld [vmem:[%s5321 + $0x44] sm:$0xf]
        %v5340 = vld [vmem:[%s5321 + $0x48] sm:$0xf]
        %v5341 = vld [vmem:[%s5321 + $0x4c] sm:$0xf]
        %v5342 = vld [vmem:[%s5321 + $0x50] sm:$0xf]
        %v5343 = vld [vmem:[%s5321 + $0x54] sm:$0xf]
        %v5344 = vld [vmem:[%s5321 + $0x58] sm:$0xf]
        %v5345 = vld [vmem:[%s5321 + $0x5c] sm:$0xf]
        %v5346 = vld [vmem:[%s5321 + $0x60] sm:$0xf]
        %v5347 = vld [vmem:[%s5321 + $0x64] sm:$0xf]
        %v5348 = vld [vmem:[%s5321 + $0x68] sm:$0xf]
        %v5349 = vld [vmem:[%s5321 + $0x6c] sm:$0xf]
        %v5350 = vld [vmem:[%s5321 + $0x70] sm:$0xf]
        %v5351 = vld [vmem:[%s5321 + $0x74] sm:$0xf]
        %v5352 = vld [vmem:[%s5321 + $0x78] sm:$0xf]
        %v5353 = vld [vmem:[%s5321 + $0x7c] sm:$0xf]
        %v5354 = vld [vmem:[%s5321 + $0x80] sm:$0x3]
        %v5388 = vunpack.c.l.b16 %v5322
        %v5389 = vunpack.c.l.b16 %v5323
        %v5390 = vunpack.c.l.b16 %v5324
        %v5391 = vunpack.c.l.b16 %v5325
        %v5392 = vunpack.c.l.b16 %v5326
        %v5393 = vunpack.c.l.b16 %v5327
        %v5394 = vunpack.c.l.b16 %v5328
        %v5395 = vunpack.c.l.b16 %v5329
        %v5396 = vunpack.c.l.b16 %v5330
        %v5397 = vunpack.c.l.b16 %v5331
        %v5398 = vunpack.c.l.b16 %v5332
        %v5399 = vunpack.c.l.b16 %v5333
        %v5400 = vunpack.c.l.b16 %v5334
        %v5401 = vunpack.c.l.b16 %v5335
        %v5402 = vunpack.c.l.b16 %v5336
        %v5403 = vunpack.c.l.b16 %v5337
        %v5404 = vunpack.c.l.b16 %v5338
        %v5405 = vunpack.c.l.b16 %v5339
        %v5406 = vunpack.c.l.b16 %v5340
        %v5407 = vunpack.c.l.b16 %v5341
        %v5408 = vunpack.c.l.b16 %v5342
        %v5409 = vunpack.c.l.b16 %v5343
        %v5410 = vunpack.c.l.b16 %v5344
        %v5411 = vunpack.c.l.b16 %v5345
        %v5412 = vunpack.c.l.b16 %v5346
        %v5413 = vunpack.c.l.b16 %v5347
        %v5414 = vunpack.c.l.b16 %v5348
        %v5415 = vunpack.c.l.b16 %v5349
        %v5416 = vunpack.c.l.b16 %v5350
        %v5417 = vunpack.c.l.b16 %v5351
        %v5418 = vunpack.c.l.b16 %v5352
        %v5419 = vunpack.c.l.b16 %v5353
        %v5420 = vunpack.c.l.b16 %v5354
        %v5421 = vpack.c.b16 %v5389, %v5388
        %v5422 = vpack.c.b16 %v5391, %v5390
        %v5423 = vpack.c.b16 %v5393, %v5392
        %v5424 = vpack.c.b16 %v5395, %v5394
        %v5425 = vpack.c.b16 %v5397, %v5396
        %v5426 = vpack.c.b16 %v5399, %v5398
        %v5427 = vpack.c.b16 %v5401, %v5400
        %v5428 = vpack.c.b16 %v5403, %v5402
        %v5429 = vpack.c.b16 %v5405, %v5404
        %v5430 = vpack.c.b16 %v5407, %v5406
        %v5431 = vpack.c.b16 %v5409, %v5408
        %v5432 = vpack.c.b16 %v5411, %v5410
        %v5433 = vpack.c.b16 %v5413, %v5412
        %v5434 = vpack.c.b16 %v5415, %v5414
        %v5435 = vpack.c.b16 %v5417, %v5416
        %v5436 = vpack.c.b16 %v5419, %v5418
        %v5437 = vpack.c.b16 %v5420, %v5420
        %v5455 = vsel %vm4488, %v5320, 0
        %v5458 = vsel %vm2734, %v5437, 0
        %5460 = vmatpush.bf16.msra.mxu0 %v5428
        %5461 = vmatpush.bf16.msra.mxu0 %v5427
        %5462 = vmatpush.bf16.msra.mxu0 %v5426
        %5463 = vmatpush.bf16.msra.mxu0 %v5425
        %5464 = vmatpush.bf16.msra.mxu0 %v5424
        %5465 = vmatpush.bf16.msra.mxu0 %v5423
        %5466 = vmatpush.bf16.msra.mxu0 %v5422
        %5467 = vmatpush.bf16.msra.mxu0 %v5421
        %5468 = vmatmul.bf16.gmra.mxu0 %v5318
        %v5469 = vpop.f32.mrf.mxu0
        %v5470 = vadd.f32 0.0, %v5469
        %v5471 = vpop.f32.mrf.mxu0
        %5472 = vdwg.mxu0
        %5473 = vmatpush.bf16.msra.mxu0 %v5436
        %5474 = vmatpush.bf16.msra.mxu0 %v5435
        %5475 = vmatpush.bf16.msra.mxu0 %v5434
        %5476 = vmatpush.bf16.msra.mxu0 %v5433
        %5477 = vmatpush.bf16.msra.mxu0 %v5432
        %5478 = vmatpush.bf16.msra.mxu0 %v5431
        %5479 = vmatpush.bf16.msra.mxu0 %v5430
        %5480 = vmatpush.bf16.msra.mxu0 %v5429
        %5481 = vmatmul.bf16.gmra.mxu0 %v5319
        %v5482 = vpop.f32.mrf.mxu0
        %v5483 = vadd.f32 %v5470, %v5482
        %v5484 = vpop.f32.mrf.mxu0
        %5485 = vdwg.mxu0
        %5486 = vmatpush.bf16.msra.mxu0 0
        %5487 = vmatpush.bf16.msra.mxu0 0
        %5488 = vmatpush.bf16.msra.mxu0 0
        %5489 = vmatpush.bf16.msra.mxu0 0
        %5490 = vmatpush.bf16.msra.mxu0 0
        %5491 = vmatpush.bf16.msra.mxu0 0
        %5492 = vmatpush.bf16.msra.mxu0 0
        %5493 = vmatpush.bf16.msra.mxu0 %v5458
        %5494 = vmatmul.bf16.gmra.mxu0 %v5455
        %v5495 = vpop.f32.mrf.mxu0
        %v5496 = vadd.f32 %v5483, %v5495
        %v5497 = vpop.f32.mrf.mxu0
        %5498 = vdwg.mxu0
        %5499 = vset.pattern.permute.xlu0 6
        %5500 = vperm.xlu0 %5499, %v4340
        %v5501 = vpop.permute.xlu0 %5500
        %vm5502 = vcmp.eq.s32.totalorder %v5501, %v436
        %vm5503 = vcmp.eq.s32.totalorder %v5501, %v511
        %vm5504 = vcmp.eq.s32.totalorder %v5501, %v512
        %v5505 = vsel %vm5502, 1, 0
        %v5506 = vsel %vm5503, 1, 0
        %v5507 = vsel %vm5504, 1, 0
        %v5508 = vcvt.s32.f32 %v5505
        %v5509 = vcvt.s32.f32 %v5506
        %v5510 = vcvt.s32.f32 %v5507
        %v5511 = vpack.c.bf16 %v5508, %v5508
        %v5512 = vpack.c.bf16 %v5509, %v5509
        %v5513 = vpack.c.bf16 %v5510, %v5510
        %s5514 = scalar_lea.vmem %s6, 792
        %v5515 = vld [vmem:[%s5514] sm:$0xf]
        %v5516 = vld [vmem:[%s5514 + $0x4] sm:$0xf]
        %v5517 = vld [vmem:[%s5514 + $0x8] sm:$0xf]
        %v5518 = vld [vmem:[%s5514 + $0xc] sm:$0xf]
        %v5519 = vld [vmem:[%s5514 + $0x10] sm:$0xf]
        %v5520 = vld [vmem:[%s5514 + $0x14] sm:$0xf]
        %v5521 = vld [vmem:[%s5514 + $0x18] sm:$0xf]
        %v5522 = vld [vmem:[%s5514 + $0x1c] sm:$0xf]
        %v5523 = vld [vmem:[%s5514 + $0x20] sm:$0xf]
        %v5524 = vld [vmem:[%s5514 + $0x24] sm:$0xf]
        %v5525 = vld [vmem:[%s5514 + $0x28] sm:$0xf]
        %v5526 = vld [vmem:[%s5514 + $0x2c] sm:$0xf]
        %v5527 = vld [vmem:[%s5514 + $0x30] sm:$0xf]
        %v5528 = vld [vmem:[%s5514 + $0x34] sm:$0xf]
        %v5529 = vld [vmem:[%s5514 + $0x38] sm:$0xf]
        %v5530 = vld [vmem:[%s5514 + $0x3c] sm:$0xf]
        %v5531 = vld [vmem:[%s5514 + $0x40] sm:$0xf]
        %v5532 = vld [vmem:[%s5514 + $0x44] sm:$0xf]
        %v5533 = vld [vmem:[%s5514 + $0x48] sm:$0xf]
        %v5534 = vld [vmem:[%s5514 + $0x4c] sm:$0xf]
        %v5535 = vld [vmem:[%s5514 + $0x50] sm:$0xf]
        %v5536 = vld [vmem:[%s5514 + $0x54] sm:$0xf]
        %v5537 = vld [vmem:[%s5514 + $0x58] sm:$0xf]
        %v5538 = vld [vmem:[%s5514 + $0x5c] sm:$0xf]
        %v5539 = vld [vmem:[%s5514 + $0x60] sm:$0xf]
        %v5540 = vld [vmem:[%s5514 + $0x64] sm:$0xf]
        %v5541 = vld [vmem:[%s5514 + $0x68] sm:$0xf]
        %v5542 = vld [vmem:[%s5514 + $0x6c] sm:$0xf]
        %v5543 = vld [vmem:[%s5514 + $0x70] sm:$0xf]
        %v5544 = vld [vmem:[%s5514 + $0x74] sm:$0xf]
        %v5545 = vld [vmem:[%s5514 + $0x78] sm:$0xf]
        %v5546 = vld [vmem:[%s5514 + $0x7c] sm:$0xf]
        %v5547 = vld [vmem:[%s5514 + $0x80] sm:$0x3]
        %v5581 = vunpack.c.l.b16 %v5515
        %v5582 = vunpack.c.l.b16 %v5516
        %v5583 = vunpack.c.l.b16 %v5517
        %v5584 = vunpack.c.l.b16 %v5518
        %v5585 = vunpack.c.l.b16 %v5519
        %v5586 = vunpack.c.l.b16 %v5520
        %v5587 = vunpack.c.l.b16 %v5521
        %v5588 = vunpack.c.l.b16 %v5522
        %v5589 = vunpack.c.l.b16 %v5523
        %v5590 = vunpack.c.l.b16 %v5524
        %v5591 = vunpack.c.l.b16 %v5525
        %v5592 = vunpack.c.l.b16 %v5526
        %v5593 = vunpack.c.l.b16 %v5527
        %v5594 = vunpack.c.l.b16 %v5528
        %v5595 = vunpack.c.l.b16 %v5529
        %v5596 = vunpack.c.l.b16 %v5530
        %v5597 = vunpack.c.l.b16 %v5531
        %v5598 = vunpack.c.l.b16 %v5532
        %v5599 = vunpack.c.l.b16 %v5533
        %v5600 = vunpack.c.l.b16 %v5534
        %v5601 = vunpack.c.l.b16 %v5535
        %v5602 = vunpack.c.l.b16 %v5536
        %v5603 = vunpack.c.l.b16 %v5537
        %v5604 = vunpack.c.l.b16 %v5538
        %v5605 = vunpack.c.l.b16 %v5539
        %v5606 = vunpack.c.l.b16 %v5540
        %v5607 = vunpack.c.l.b16 %v5541
        %v5608 = vunpack.c.l.b16 %v5542
        %v5609 = vunpack.c.l.b16 %v5543
        %v5610 = vunpack.c.l.b16 %v5544
        %v5611 = vunpack.c.l.b16 %v5545
        %v5612 = vunpack.c.l.b16 %v5546
        %v5613 = vunpack.c.l.b16 %v5547
        %v5614 = vpack.c.b16 %v5582, %v5581
        %v5615 = vpack.c.b16 %v5584, %v5583
        %v5616 = vpack.c.b16 %v5586, %v5585
        %v5617 = vpack.c.b16 %v5588, %v5587
        %v5618 = vpack.c.b16 %v5590, %v5589
        %v5619 = vpack.c.b16 %v5592, %v5591
        %v5620 = vpack.c.b16 %v5594, %v5593
        %v5621 = vpack.c.b16 %v5596, %v5595
        %v5622 = vpack.c.b16 %v5598, %v5597
        %v5623 = vpack.c.b16 %v5600, %v5599
        %v5624 = vpack.c.b16 %v5602, %v5601
        %v5625 = vpack.c.b16 %v5604, %v5603
        %v5626 = vpack.c.b16 %v5606, %v5605
        %v5627 = vpack.c.b16 %v5608, %v5607
        %v5628 = vpack.c.b16 %v5610, %v5609
        %v5629 = vpack.c.b16 %v5612, %v5611
        %v5630 = vpack.c.b16 %v5613, %v5613
        %v5648 = vsel %vm4488, %v5513, 0
        %v5651 = vsel %vm2734, %v5630, 0
        %5653 = vmatpush.bf16.msra.mxu0 %v5621
        %5654 = vmatpush.bf16.msra.mxu0 %v5620
        %5655 = vmatpush.bf16.msra.mxu0 %v5619
        %5656 = vmatpush.bf16.msra.mxu0 %v5618
        %5657 = vmatpush.bf16.msra.mxu0 %v5617
        %5658 = vmatpush.bf16.msra.mxu0 %v5616
        %5659 = vmatpush.bf16.msra.mxu0 %v5615
        %5660 = vmatpush.bf16.msra.mxu0 %v5614
        %5661 = vmatmul.bf16.gmra.mxu0 %v5511
        %v5662 = vpop.f32.mrf.mxu0
        %v5663 = vadd.f32 0.0, %v5662
        %v5664 = vpop.f32.mrf.mxu0
        %5665 = vdwg.mxu0
        %5666 = vmatpush.bf16.msra.mxu0 %v5629
        %5667 = vmatpush.bf16.msra.mxu0 %v5628
        %5668 = vmatpush.bf16.msra.mxu0 %v5627
        %5669 = vmatpush.bf16.msra.mxu0 %v5626
        %5670 = vmatpush.bf16.msra.mxu0 %v5625
        %5671 = vmatpush.bf16.msra.mxu0 %v5624
        %5672 = vmatpush.bf16.msra.mxu0 %v5623
        %5673 = vmatpush.bf16.msra.mxu0 %v5622
        %5674 = vmatmul.bf16.gmra.mxu0 %v5512
        %v5675 = vpop.f32.mrf.mxu0
        %v5676 = vadd.f32 %v5663, %v5675
        %v5677 = vpop.f32.mrf.mxu0
        %5678 = vdwg.mxu0
        %5679 = vmatpush.bf16.msra.mxu0 0
        %5680 = vmatpush.bf16.msra.mxu0 0
        %5681 = vmatpush.bf16.msra.mxu0 0
        %5682 = vmatpush.bf16.msra.mxu0 0
        %5683 = vmatpush.bf16.msra.mxu0 0
        %5684 = vmatpush.bf16.msra.mxu0 0
        %5685 = vmatpush.bf16.msra.mxu0 0
        %5686 = vmatpush.bf16.msra.mxu0 %v5651
        %5687 = vmatmul.bf16.gmra.mxu0 %v5648
        %v5688 = vpop.f32.mrf.mxu0
        %v5689 = vadd.f32 %v5676, %v5688
        %v5690 = vpop.f32.mrf.mxu0
        %5691 = vdwg.mxu0
        %5692 = vset.pattern.permute.xlu0 7
        %5693 = vperm.xlu0 %5692, %v4340
        %v5694 = vpop.permute.xlu0 %5693
        %vm5695 = vcmp.eq.s32.totalorder %v5694, %v436
        %vm5696 = vcmp.eq.s32.totalorder %v5694, %v511
        %vm5697 = vcmp.eq.s32.totalorder %v5694, %v512
        %v5698 = vsel %vm5695, 1, 0
        %v5699 = vsel %vm5696, 1, 0
        %v5700 = vsel %vm5697, 1, 0
        %v5701 = vcvt.s32.f32 %v5698
        %v5702 = vcvt.s32.f32 %v5699
        %v5703 = vcvt.s32.f32 %v5700
        %v5704 = vpack.c.bf16 %v5701, %v5701
        %v5705 = vpack.c.bf16 %v5702, %v5702
        %v5706 = vpack.c.bf16 %v5703, %v5703
        %s5707 = scalar_lea.vmem %s6, 924
        %v5708 = vld [vmem:[%s5707] sm:$0xf]
        %v5709 = vld [vmem:[%s5707 + $0x4] sm:$0xf]
        %v5710 = vld [vmem:[%s5707 + $0x8] sm:$0xf]
        %v5711 = vld [vmem:[%s5707 + $0xc] sm:$0xf]
        %v5712 = vld [vmem:[%s5707 + $0x10] sm:$0xf]
        %v5713 = vld [vmem:[%s5707 + $0x14] sm:$0xf]
        %v5714 = vld [vmem:[%s5707 + $0x18] sm:$0xf]
        %v5715 = vld [vmem:[%s5707 + $0x1c] sm:$0xf]
        %v5716 = vld [vmem:[%s5707 + $0x20] sm:$0xf]
        %v5717 = vld [vmem:[%s5707 + $0x24] sm:$0xf]
        %v5718 = vld [vmem:[%s5707 + $0x28] sm:$0xf]
        %v5719 = vld [vmem:[%s5707 + $0x2c] sm:$0xf]
        %v5720 = vld [vmem:[%s5707 + $0x30] sm:$0xf]
        %v5721 = vld [vmem:[%s5707 + $0x34] sm:$0xf]
        %v5722 = vld [vmem:[%s5707 + $0x38] sm:$0xf]
        %v5723 = vld [vmem:[%s5707 + $0x3c] sm:$0xf]
        %v5724 = vld [vmem:[%s5707 + $0x40] sm:$0xf]
        %v5725 = vld [vmem:[%s5707 + $0x44] sm:$0xf]
        %v5726 = vld [vmem:[%s5707 + $0x48] sm:$0xf]
        %v5727 = vld [vmem:[%s5707 + $0x4c] sm:$0xf]
        %v5728 = vld [vmem:[%s5707 + $0x50] sm:$0xf]
        %v5729 = vld [vmem:[%s5707 + $0x54] sm:$0xf]
        %v5730 = vld [vmem:[%s5707 + $0x58] sm:$0xf]
        %v5731 = vld [vmem:[%s5707 + $0x5c] sm:$0xf]
        %v5732 = vld [vmem:[%s5707 + $0x60] sm:$0xf]
        %v5733 = vld [vmem:[%s5707 + $0x64] sm:$0xf]
        %v5734 = vld [vmem:[%s5707 + $0x68] sm:$0xf]
        %v5735 = vld [vmem:[%s5707 + $0x6c] sm:$0xf]
        %v5736 = vld [vmem:[%s5707 + $0x70] sm:$0xf]
        %v5737 = vld [vmem:[%s5707 + $0x74] sm:$0xf]
        %v5738 = vld [vmem:[%s5707 + $0x78] sm:$0xf]
        %v5739 = vld [vmem:[%s5707 + $0x7c] sm:$0xf]
        %v5740 = vld [vmem:[%s5707 + $0x80] sm:$0x3]
        %v5774 = vunpack.c.l.b16 %v5708
        %v5775 = vunpack.c.l.b16 %v5709
        %v5776 = vunpack.c.l.b16 %v5710
        %v5777 = vunpack.c.l.b16 %v5711
        %v5778 = vunpack.c.l.b16 %v5712
        %v5779 = vunpack.c.l.b16 %v5713
        %v5780 = vunpack.c.l.b16 %v5714
        %v5781 = vunpack.c.l.b16 %v5715
        %v5782 = vunpack.c.l.b16 %v5716
        %v5783 = vunpack.c.l.b16 %v5717
        %v5784 = vunpack.c.l.b16 %v5718
        %v5785 = vunpack.c.l.b16 %v5719
        %v5786 = vunpack.c.l.b16 %v5720
        %v5787 = vunpack.c.l.b16 %v5721
        %v5788 = vunpack.c.l.b16 %v5722
        %v5789 = vunpack.c.l.b16 %v5723
        %v5790 = vunpack.c.l.b16 %v5724
        %v5791 = vunpack.c.l.b16 %v5725
        %v5792 = vunpack.c.l.b16 %v5726
        %v5793 = vunpack.c.l.b16 %v5727
        %v5794 = vunpack.c.l.b16 %v5728
        %v5795 = vunpack.c.l.b16 %v5729
        %v5796 = vunpack.c.l.b16 %v5730
        %v5797 = vunpack.c.l.b16 %v5731
        %v5798 = vunpack.c.l.b16 %v5732
        %v5799 = vunpack.c.l.b16 %v5733
        %v5800 = vunpack.c.l.b16 %v5734
        %v5801 = vunpack.c.l.b16 %v5735
        %v5802 = vunpack.c.l.b16 %v5736
        %v5803 = vunpack.c.l.b16 %v5737
        %v5804 = vunpack.c.l.b16 %v5738
        %v5805 = vunpack.c.l.b16 %v5739
        %v5806 = vunpack.c.l.b16 %v5740
        %v5807 = vpack.c.b16 %v5775, %v5774
        %v5808 = vpack.c.b16 %v5777, %v5776
        %v5809 = vpack.c.b16 %v5779, %v5778
        %v5810 = vpack.c.b16 %v5781, %v5780
        %v5811 = vpack.c.b16 %v5783, %v5782
        %v5812 = vpack.c.b16 %v5785, %v5784
        %v5813 = vpack.c.b16 %v5787, %v5786
        %v5814 = vpack.c.b16 %v5789, %v5788
        %v5815 = vpack.c.b16 %v5791, %v5790
        %v5816 = vpack.c.b16 %v5793, %v5792
        %v5817 = vpack.c.b16 %v5795, %v5794
        %v5818 = vpack.c.b16 %v5797, %v5796
        %v5819 = vpack.c.b16 %v5799, %v5798
        %v5820 = vpack.c.b16 %v5801, %v5800
        %v5821 = vpack.c.b16 %v5803, %v5802
        %v5822 = vpack.c.b16 %v5805, %v5804
        %v5823 = vpack.c.b16 %v5806, %v5806
        %v5841 = vsel %vm4488, %v5706, 0
        %v5844 = vsel %vm2734, %v5823, 0
        %5846 = vmatpush.bf16.msra.mxu0 %v5814
        %5847 = vmatpush.bf16.msra.mxu0 %v5813
        %5848 = vmatpush.bf16.msra.mxu0 %v5812
        %5849 = vmatpush.bf16.msra.mxu0 %v5811
        %5850 = vmatpush.bf16.msra.mxu0 %v5810
        %5851 = vmatpush.bf16.msra.mxu0 %v5809
        %5852 = vmatpush.bf16.msra.mxu0 %v5808
        %5853 = vmatpush.bf16.msra.mxu0 %v5807
        %5854 = vmatmul.bf16.gmra.mxu0 %v5704
        %v5855 = vpop.f32.mrf.mxu0
        %v5856 = vadd.f32 0.0, %v5855
        %v5857 = vpop.f32.mrf.mxu0
        %5858 = vdwg.mxu0
        %5859 = vmatpush.bf16.msra.mxu0 %v5822
        %5860 = vmatpush.bf16.msra.mxu0 %v5821
        %5861 = vmatpush.bf16.msra.mxu0 %v5820
        %5862 = vmatpush.bf16.msra.mxu0 %v5819
        %5863 = vmatpush.bf16.msra.mxu0 %v5818
        %5864 = vmatpush.bf16.msra.mxu0 %v5817
        %5865 = vmatpush.bf16.msra.mxu0 %v5816
        %5866 = vmatpush.bf16.msra.mxu0 %v5815
        %5867 = vmatmul.bf16.gmra.mxu0 %v5705
        %v5868 = vpop.f32.mrf.mxu0
        %v5869 = vadd.f32 %v5856, %v5868
        %v5870 = vpop.f32.mrf.mxu0
        %5871 = vdwg.mxu0
        %5872 = vmatpush.bf16.msra.mxu0 0
        %5873 = vmatpush.bf16.msra.mxu0 0
        %5874 = vmatpush.bf16.msra.mxu0 0
        %5875 = vmatpush.bf16.msra.mxu0 0
        %5876 = vmatpush.bf16.msra.mxu0 0
        %5877 = vmatpush.bf16.msra.mxu0 0
        %5878 = vmatpush.bf16.msra.mxu0 0
        %5879 = vmatpush.bf16.msra.mxu0 %v5844
        %5880 = vmatmul.bf16.gmra.mxu0 %v5841
        %v5881 = vpop.f32.mrf.mxu0
        %v5882 = vadd.f32 %v5869, %v5881
        %v5883 = vpop.f32.mrf.mxu0
        %5884 = vdwg.mxu0
        %5886 = vrot.lane.b32.xlu0 %v4724, 4
        %v5887 = vpop.permute.xlu0 %5886
        %5890 = vrot.lane.b32.xlu0 %v4917, 8
        %v5891 = vpop.permute.xlu0 %5890
        %5894 = vrot.lane.b32.xlu0 %v5110, 12
        %v5895 = vpop.permute.xlu0 %5894
        %5898 = vrot.lane.b32.xlu0 %v5303, 16
        %v5899 = vpop.permute.xlu0 %5898
        %5902 = vrot.lane.b32.xlu0 %v5496, 20
        %v5903 = vpop.permute.xlu0 %5902
        %5906 = vrot.lane.b32.xlu0 %v5689, 24
        %v5907 = vpop.permute.xlu0 %5906
        %5910 = vrot.lane.b32.xlu0 %v5882, 28
        %v5911 = vpop.permute.xlu0 %5910
        %v5913 = vsel %vm4488, %v4531, %v5887
        %vm5914 = vcmask 64512
        %v5915 = vsel %vm5914, %v5913, %v5891
        %vm5916 = vcmask 97280
        %v5917 = vsel %vm5916, %v5915, %v5895
        %vm5918 = vcmask 130048
        %v5919 = vsel %vm5918, %v5917, %v5899
        %vm5920 = vcmask 162816
        %v5921 = vsel %vm5920, %v5919, %v5903
        %vm5922 = vcmask 195584
        %v5923 = vsel %vm5922, %v5921, %v5907
        %vm5924 = vcmask 228352
        %v5925 = vsel %vm5924, %v5923, %v5911
        %vm5926 = vcmask 261120
        %v5927 = vsel %vm5926, %v5925, 0.0
        %v5928 = vadd.f32 %v4339, %v5927
        %5929 = vst [vmem:[%s424] sm:$0xff] %v5928
        %s5930 = sand.u32 %s218, 1
        %s5931 = scalar_lea.sflag [#allocation4], %s5930
        %s5932 = sand.u32 %s218, 1
        %s5933 = smul.addr %s5932, 8
        %s5934 = scalar_lea.vmem [#allocation11], %s5933
        // Predicated region
        $region69: #{tpu_custom_call.1} parent=47 // pred_check
          %p5935 = pneg %p228
        $region70: #{tpu_custom_call.1} parent=47 // pred_check_branch
          %5937 = sbr.rel (%p5935) target = $region72
        $region71: #{tpu_custom_call.1} parent=47 // pred_region
          %5939 = vsyncadd %s5931, 0
          %s5940 = sadd.s32 %s33, %s32
          %s5941 = smul.addr %s5940, 8
          %s5942 = scalar_lea.hbm %s7, %s5941
          %s5944 = sshll.u32 %s5934, 4
          %s5945 = int_to_ptr.vmem [resolvable:$true] %s5944
          %s5946 = sshll.u32 %s5942, 4
          %s5947 = int_to_ptr.hbm [resolvable:$true] %s5946
          %5949 = dma.vmem_to_hbm [thread:$0]  %s5945, 128, %s5947, %s5931
        $region72: #{tpu_custom_call.1} parent=47 // pred_fallthru
          _
      $region48: #{tpu_custom_call.1} parent=5 // pred_fallthru
        _
      %p5950 = scmp.le.s32.totalorder 2, %s23
      // Predicated region
      $region73: #{tpu_custom_call.1} parent=5 // pred_check
        %p5951 = pneg %p5950
      $region74: #{tpu_custom_call.1} parent=5 // pred_check_branch
        %5953 = sbr.rel (%p5951) target = $region76
      $region75: #{tpu_custom_call.1} parent=5 // pred_region
        %s5954 = ssub.s32 %s23, 2
        // Predicated region
        $region77: #{tpu_custom_call.1} parent=75 // pred_check
          %p5955 = pneg %p234
        $region78: #{tpu_custom_call.1} parent=75 // pred_check_branch
          %5957 = sbr.rel (%p5955) target = $region80
        $region79: #{tpu_custom_call.1} parent=75 // pred_region
          %s5958 = sand.u32 %s219, 1
          %s5959 = scalar_lea.sflag [#allocation4], %s5958
          %s5960 = sand.u32 %s219, 1
          %s5961 = smul.addr %s5960, 8
          %s5962 = scalar_lea.vmem [#allocation11], %s5961
          %5964 = dma.done %s5959, 128
        $region80: #{tpu_custom_call.1} parent=75 // pred_fallthru
          _
      $region76: #{tpu_custom_call.1} parent=5 // pred_fallthru
        _
    $region6: #{tpu_custom_call.1} parent=1 // loop_footer
      %s27 = sadd.s32 1, %s23
    $region7: #{tpu_custom_call.1} parent=1 // loop_footer_branch
      %22 = sbr.rel target = $region3
    $region8: #{tpu_custom_call.1} parent=1 // loop_exit
      _
    %5965 = vsyncpa [#allocation3], 1
    %s5966 = scalar_lea.sflag [#allocation3], 1
    %5967 = vsyncpa %s5966, 1
    %5968 = vsyncpa [#allocation6], 1
    %s5969 = scalar_lea.sflag [#allocation6], 1
    %5970 = vsyncpa %s5969, 1
    %5971 = vsyncpa [#allocation9], 1
    %5972 = vsyncpa [#allocation4], 1
    %s5973 = scalar_lea.sflag [#allocation4], 1
    %5974 = vsyncpa %s5973, 1

</llo_original>
